<compile_context>
chip_gen: v5e
topology: v5e:2x2
jax: 0.10.0
libtpu: 0.0.40
codegen_flags: <defaults>
</compile_context>

<pallas_src>
import jax
import jax.numpy as jnp
import numpy as np
from jax.experimental import pallas as pl
from jax.experimental.pallas import tpu as pltpu

_BB = 32          # samples processed per grid step


# ---------------------------------------------------------------------------
# fused kernel
# ---------------------------------------------------------------------------

def _lenet_kernel(x_ref, w1_ref, b1_ref, w2_ref, b2_ref,
                  wf1_ref, bf1_ref, wf2_ref, bf2_ref, wf3_ref, bf3_ref, o_ref):
    f32, bf16 = jnp.float32, jnp.bfloat16
    bb = x_ref.shape[0]

    # ---- conv1: banded MXU matmuls (one per kernel row di), f32.
    #      Even / odd output columns come from separate weight banks so the
    #      width half of the 2x2 max-pool is a plain elementwise max. ----
    y1e = jnp.zeros((bb * 24, 96), f32)          # lanes = out_col(12) * 8 + chan
    y1o = jnp.zeros((bb * 24, 96), f32)
    for di in range(5):
        xs = x_ref[:, di:di + 24, :].reshape(bb * 24, 28)
        y1e = y1e + jnp.dot(xs, w1_ref[0, di], preferred_element_type=f32)
        y1o = y1o + jnp.dot(xs, w1_ref[1, di], preferred_element_type=f32)
    y1 = jnp.maximum(y1e, y1o).reshape(bb, 24, 96)

    # height half of the pool: pairwise max of adjacent rows.
    y1 = jnp.concatenate(
        [jnp.maximum(y1[:, 2 * k:2 * k + 1, :], y1[:, 2 * k + 1:2 * k + 2, :])
         for k in range(12)], axis=1)            # (BB, 12, 96)
    p1 = jnp.maximum(y1 + b1_ref[...], 0.0)      # bias after pool + ReLU

    # ---- conv2: same structure, bf16 operands / f32 accumulation ----
    y2e = jnp.zeros((bb * 8, 64), f32)           # lanes = out_col(4) * 16 + chan
    y2o = jnp.zeros((bb * 8, 64), f32)
    for di in range(5):
        ps = p1[:, di:di + 8, :].reshape(bb * 8, 96).astype(bf16)
        y2e = y2e + jnp.dot(ps, w2_ref[0, di], preferred_element_type=f32)
        y2o = y2o + jnp.dot(ps, w2_ref[1, di], preferred_element_type=f32)
    y2 = jnp.maximum(y2e, y2o).reshape(bb, 8, 64)
    y2 = jnp.concatenate(
        [jnp.maximum(y2[:, 2 * k:2 * k + 1, :], y2[:, 2 * k + 1:2 * k + 2, :])
         for k in range(4)], axis=1)             # (BB, 4, 64)
    p2 = jnp.maximum(y2 + b2_ref[...], 0.0)

    # ---- fc1 as 4 accumulating matmuls (one per pooled row) -> no flatten copy
    z = jnp.zeros((bb, 128), f32)
    for io in range(4):
        z = z + jnp.dot(p2[:, io, :].astype(bf16), wf1_ref[io],
                        preferred_element_type=f32)
    z = jnp.maximum(z + bf1_ref[...], 0.0)

    # ---- fc2 -> fc3 (lane-padded to 128; padding is mathematically inert) ----
    z = jnp.maximum(jnp.dot(z.astype(bf16), wf2_ref[...],
                            preferred_element_type=f32) + bf2_ref[...], 0.0)
    z = jnp.dot(z.astype(bf16), wf3_ref[...],
                preferred_element_type=f32) + bf3_ref[...]
    o_ref[...] = z.astype(o_ref.dtype)           # (BB, 128) lane-dense store


# ---------------------------------------------------------------------------
# parameters (PyTorch layouts) + one-time prep into kernel layouts
# ---------------------------------------------------------------------------

def init_lenet_params(key):
    ks = jax.random.split(key, 10)

    def u(k, shape, fan_in):
        bound = 1.0 / jnp.sqrt(jnp.float32(fan_in))
        return jax.random.uniform(k, shape, jnp.float32, -bound, bound)

    return {
        "conv1_w": u(ks[0], (6, 1, 5, 5), 1 * 5 * 5),
        "conv1_b": u(ks[1], (6,), 1 * 5 * 5),
        "conv2_w": u(ks[2], (16, 6, 5, 5), 6 * 5 * 5),
        "conv2_b": u(ks[3], (16,), 6 * 5 * 5),
        "fc1_w": u(ks[4], (120, 16 * 4 * 4), 16 * 4 * 4),
        "fc1_b": u(ks[5], (120,), 16 * 4 * 4),
        "fc2_w": u(ks[6], (84, 120), 120),
        "fc2_b": u(ks[7], (84,), 120),
        "fc3_w": u(ks[8], (10, 84), 84),
        "fc3_b": u(ks[9], (10,), 84),
    }


def prepare_lenet_params(p):
    """One-time build of banded / permuted / padded weights (host side)."""
    # conv1 banded weights: w1[par, di, u, k*8+c] = conv1_w[c,0,di, u - (2k+par)]
    cw1 = np.asarray(p["conv1_w"], np.float32)                 # (6,1,5,5)
    w1 = np.zeros((2, 5, 28, 12, 8), np.float32)
    for par in range(2):
        for k in range(12):
            j = 2 * k + par
            for dj in range(5):
                w1[par, :, j + dj, k, :6] = cw1[:, 0, :, dj].T  # (di, c)
    w1 = w1.reshape(2, 5, 28, 96)

    # conv2 banded weights: w2[par, di, jj*8+c, k*16+o] = conv2_w[o,c,di, jj-(2k+par)]
    cw2 = np.asarray(p["conv2_w"], np.float32)                 # (16,6,5,5)
    w2 = np.zeros((2, 5, 12, 8, 4, 16), np.float32)
    for par in range(2):
        for k in range(4):
            j = 2 * k + par
            for dj in range(5):
                w2[par, :, j + dj, :6, k, :] = np.transpose(cw2[:, :, :, dj],
                                                            (2, 1, 0))  # (di,c,o)
    w2 = w2.reshape(2, 5, 96, 64)

    # fc1: rows ordered (io, jo, o) to match the kernel's (row, col, chan) flatten;
    # torch's .view(-1, 256) ordering is c*16 + h*4 + w.
    f1 = np.asarray(p["fc1_w"], np.float32).reshape(120, 16, 4, 4)  # (m,c,h,w)
    wf1 = np.zeros((4, 4, 16, 128), np.float32)
    wf1[:, :, :, :120] = np.transpose(f1, (2, 3, 1, 0))             # (h,w,c,m)
    wf1 = wf1.reshape(4, 64, 128)

    wf2 = np.zeros((128, 128), np.float32)
    wf2[:120, :84] = np.asarray(p["fc2_w"], np.float32).T
    wf3 = np.zeros((128, 128), np.float32)
    wf3[:84, :10] = np.asarray(p["fc3_w"], np.float32).T

    # biases (added after the max-pool), laid out to match the activation lanes
    b1v = np.zeros((12, 8), np.float32)
    b1v[:, :6] = np.asarray(p["conv1_b"], np.float32)
    b2v = np.zeros((4, 16), np.float32)
    b2v[:, :] = np.asarray(p["conv2_b"], np.float32)
    bf1 = np.zeros((1, 128), np.float32); bf1[0, :120] = np.asarray(p["fc1_b"])
    bf2 = np.zeros((1, 128), np.float32); bf2[0, :84] = np.asarray(p["fc2_b"])
    bf3 = np.zeros((1, 128), np.float32); bf3[0, :10] = np.asarray(p["fc3_b"])

    return {
        "w1": jnp.asarray(w1, jnp.float32),          # conv1 kept f32 (accuracy)
        "b1": jnp.asarray(b1v.reshape(1, 96), jnp.float32),
        "w2": jnp.asarray(w2, jnp.bfloat16),
        "b2": jnp.asarray(b2v.reshape(1, 64), jnp.float32),
        "wf1": jnp.asarray(wf1, jnp.bfloat16),
        "bf1": jnp.asarray(bf1, jnp.float32),
        "wf2": jnp.asarray(wf2, jnp.bfloat16),
        "bf2": jnp.asarray(bf2, jnp.float32),
        "wf3": jnp.asarray(wf3, jnp.bfloat16),
        "bf3": jnp.asarray(bf3, jnp.float32),
    }


# ---------------------------------------------------------------------------
# fused forward
# ---------------------------------------------------------------------------

def _full_spec(shape):
    nd = len(shape)
    return pl.BlockSpec(shape, lambda b: (0,) * nd)   # grid-invariant -> DMA'd once


@jax.jit
def lenet_forward(prep, x_nchw):
    n = x_nchw.shape[0]
    assert x_nchw.shape[1:] == (1, 28, 28), "LeNet fc1 fixes the input to 1x28x28"
    x = x_nchw.reshape(n, 28, 28).astype(jnp.float32)     # squeeze channel dim
    n_pad = (-n) % _BB
    if n_pad:
        x = jnp.pad(x, ((0, n_pad), (0, 0), (0, 0)))
    npad = n + n_pad

    weights = (prep["w1"], prep["b1"], prep["w2"], prep["b2"],
               prep["wf1"], prep["bf1"], prep["wf2"], prep["bf2"],
               prep["wf3"], prep["bf3"])

    in_specs = [pl.BlockSpec((_BB, 28, 28), lambda b: (b, 0, 0))]
    in_specs += [_full_spec(w.shape) for w in weights]

    out = pl.pallas_call(
        _lenet_kernel,
        out_shape=jax.ShapeDtypeStruct((npad, 128), jnp.float32),
        grid=(npad // _BB,),
        in_specs=in_specs,
        out_specs=pl.BlockSpec((_BB, 128), lambda b: (b, 0)),
        compiler_params=pltpu.CompilerParams(
            dimension_semantics=("parallel",),           # batch axis shards across cores
            vmem_limit_bytes=32 * 1024 * 1024),          # footprint is only a few MB
    )(x, *weights)
    return out[:n, :10]


# ---------------------------------------------------------------------------
# pure-JAX reference (for correctness check)
# ---------------------------------------------------------------------------

def lenet_reference(p, x_nchw):
    dn = ("NCHW", "OIHW", "NCHW")
    hi = jax.lax.Precision.HIGHEST
    y = jax.lax.conv_general_dilated(x_nchw, p["conv1_w"], (1, 1), "VALID",
                                     dimension_numbers=dn, precision=hi)
    y = y + p["conv1_b"][None, :, None, None]
    y = jax.lax.reduce_window(y, -jnp.inf, jax.lax.max, (1, 1, 2, 2), (1, 1, 2, 2), "VALID")
    y = jnp.maximum(y, 0.0)
    y = jax.lax.conv_general_dilated(y, p["conv2_w"], (1, 1), "VALID",
                                     dimension_numbers=dn, precision=hi)
    y = y + p["conv2_b"][None, :, None, None]
    y = jax.lax.reduce_window(y, -jnp.inf, jax.lax.max, (1, 1, 2, 2), (1, 1, 2, 2), "VALID")
    y = jnp.maximum(y, 0.0)
    y = y.reshape(y.shape[0], 16 * 4 * 4)
    y = jnp.maximum(jnp.dot(y, p["fc1_w"].T, precision=hi) + p["fc1_b"], 0.0)
    y = jnp.maximum(jnp.dot(y, p["fc2_w"].T, precision=hi) + p["fc2_b"], 0.0)
    return jnp.dot(y, p["fc3_w"].T, precision=hi) + p["fc3_b"]


if __name__ == "__main__":
    key = jax.random.PRNGKey(0)
    pkey, xkey = jax.random.split(key)
    params = init_lenet_params(pkey)
    prep = prepare_lenet_params(params)

    # batch=2: single grid step with batch padding; batch=67: 3-step grid.
    for batch in (2, 67):
        x = jax.random.normal(jax.random.fold_in(xkey, batch),
                              (batch, 1, 28, 28), dtype=jnp.float32)
        out = jax.block_until_ready(lenet_forward(prep, x))
        assert out.shape == (batch, 10) and out.dtype == jnp.float32
        ref = jax.block_until_ready(lenet_reference(params, x))
        assert bool(jnp.allclose(out, ref, atol=1e-2, rtol=1e-2)), (
            batch, float(jnp.max(jnp.abs(out - ref))))
    print("KERNEL_OK")
</pallas_src>

<mosaic_0001>
module attributes {stable_mosaic.version = 11 : i64} {
  func.func @_lenet_kernel(%arg0: i32, %arg1: memref<32x28x28xf32, #tpu.memory_space<vmem>>, %arg2: memref<2x5x28x96xf32, #tpu.memory_space<vmem>>, %arg3: memref<1x96xf32, #tpu.memory_space<vmem>>, %arg4: memref<2x5x96x64xbf16, #tpu.memory_space<vmem>>, %arg5: memref<1x64xf32, #tpu.memory_space<vmem>>, %arg6: memref<4x64x128xbf16, #tpu.memory_space<vmem>>, %arg7: memref<1x128xf32, #tpu.memory_space<vmem>>, %arg8: memref<128x128xbf16, #tpu.memory_space<vmem>>, %arg9: memref<1x128xf32, #tpu.memory_space<vmem>>, %arg10: memref<128x128xbf16, #tpu.memory_space<vmem>>, %arg11: memref<1x128xf32, #tpu.memory_space<vmem>>, %arg12: memref<32x128xf32, #tpu.memory_space<vmem>>) attributes {dimension_semantics = [#tpu.dimension_semantics<parallel>], iteration_bounds = array<i64: 1>, scalar_prefetch = 0 : i64, scratch_operands = 0 : i64, tpu.core_type = #tpu.core_type<tc>, window_params = [{transform_indices = @transform_0, window_bounds = array<i64: 32, 28, 28>}, {pipeline_mode = #tpu.pipeline_mode<synchronous>, transform_indices = @transform_1, window_bounds = array<i64: 2, 5, 28, 96>}, {pipeline_mode = #tpu.pipeline_mode<synchronous>, transform_indices = @transform_2, window_bounds = array<i64: 1, 96>}, {pipeline_mode = #tpu.pipeline_mode<synchronous>, transform_indices = @transform_3, window_bounds = array<i64: 2, 5, 96, 64>}, {pipeline_mode = #tpu.pipeline_mode<synchronous>, transform_indices = @transform_4, window_bounds = array<i64: 1, 64>}, {pipeline_mode = #tpu.pipeline_mode<synchronous>, transform_indices = @transform_5, window_bounds = array<i64: 4, 64, 128>}, {pipeline_mode = #tpu.pipeline_mode<synchronous>, transform_indices = @transform_6, window_bounds = array<i64: 1, 128>}, {pipeline_mode = #tpu.pipeline_mode<synchronous>, transform_indices = @transform_7, window_bounds = array<i64: 128, 128>}, {pipeline_mode = #tpu.pipeline_mode<synchronous>, transform_indices = @transform_8, window_bounds = array<i64: 1, 128>}, {pipeline_mode = #tpu.pipeline_mode<synchronous>, transform_indices = @transform_9, window_bounds = array<i64: 128, 128>}, {pipeline_mode = #tpu.pipeline_mode<synchronous>, transform_indices = @transform_10, window_bounds = array<i64: 1, 128>}, {transform_indices = @transform_11, window_bounds = array<i64: 32, 128>}]} {
    %cst = arith.constant 0.000000e+00 : f32
    %0 = vector.broadcast %cst : f32 to vector<768x96xf32>
    %cst_0 = arith.constant 0.000000e+00 : f32
    %1 = vector.broadcast %cst_0 : f32 to vector<768x96xf32>
    %c0 = arith.constant 0 : index
    %c0_1 = arith.constant 0 : index
    %c0_2 = arith.constant 0 : index
    %2 = vector.load %arg1[%c0, %c0_1, %c0_2] : memref<32x28x28xf32, #tpu.memory_space<vmem>>, vector<32x24x28xf32>
    %3 = vector.shape_cast %2 : vector<32x24x28xf32> to vector<768x28xf32>
    %c0_3 = arith.constant 0 : index
    %c0_4 = arith.constant 0 : index
    %c0_5 = arith.constant 0 : index
    %c0_6 = arith.constant 0 : index
    %4 = vector.load %arg2[%c0_3, %c0_4, %c0_5, %c0_6] : memref<2x5x28x96xf32, #tpu.memory_space<vmem>>, vector<1x1x28x96xf32>
    %5 = vector.shape_cast %4 : vector<1x1x28x96xf32> to vector<28x96xf32>
    %cst_7 = arith.constant dense<0.000000e+00> : vector<768x96xf32>
    %6 = tpu.matmul %3, %5, %cst_7 {dimension_numbers = #tpu.dot_dimension_numbers<[1], [0], [0], [1], [0, 0, 1, 1], [], []>} : vector<768x28xf32>, vector<28x96xf32>, vector<768x96xf32> -> vector<768x96xf32>
    %7 = arith.addf %0, %6 : vector<768x96xf32>
    %c1 = arith.constant 1 : index
    %c0_8 = arith.constant 0 : index
    %c0_9 = arith.constant 0 : index
    %c0_10 = arith.constant 0 : index
    %8 = vector.load %arg2[%c1, %c0_8, %c0_9, %c0_10] : memref<2x5x28x96xf32, #tpu.memory_space<vmem>>, vector<1x1x28x96xf32>
    %9 = vector.shape_cast %8 : vector<1x1x28x96xf32> to vector<28x96xf32>
    %cst_11 = arith.constant dense<0.000000e+00> : vector<768x96xf32>
    %10 = tpu.matmul %3, %9, %cst_11 {dimension_numbers = #tpu.dot_dimension_numbers<[1], [0], [0], [1], [0, 0, 1, 1], [], []>} : vector<768x28xf32>, vector<28x96xf32>, vector<768x96xf32> -> vector<768x96xf32>
    %11 = arith.addf %1, %10 : vector<768x96xf32>
    %c0_12 = arith.constant 0 : index
    %c1_13 = arith.constant 1 : index
    %c0_14 = arith.constant 0 : index
    %12 = vector.load %arg1[%c0_12, %c1_13, %c0_14] : memref<32x28x28xf32, #tpu.memory_space<vmem>>, vector<32x24x28xf32>
    %13 = vector.shape_cast %12 : vector<32x24x28xf32> to vector<768x28xf32>
    %c0_15 = arith.constant 0 : index
    %c1_16 = arith.constant 1 : index
    %c0_17 = arith.constant 0 : index
    %c0_18 = arith.constant 0 : index
    %14 = vector.load %arg2[%c0_15, %c1_16, %c0_17, %c0_18] : memref<2x5x28x96xf32, #tpu.memory_space<vmem>>, vector<1x1x28x96xf32>
    %15 = vector.shape_cast %14 : vector<1x1x28x96xf32> to vector<28x96xf32>
    %cst_19 = arith.constant dense<0.000000e+00> : vector<768x96xf32>
    %16 = tpu.matmul %13, %15, %cst_19 {dimension_numbers = #tpu.dot_dimension_numbers<[1], [0], [0], [1], [0, 0, 1, 1], [], []>} : vector<768x28xf32>, vector<28x96xf32>, vector<768x96xf32> -> vector<768x96xf32>
    %17 = arith.addf %7, %16 : vector<768x96xf32>
    %c1_20 = arith.constant 1 : index
    %c1_21 = arith.constant 1 : index
    %c0_22 = arith.constant 0 : index
    %c0_23 = arith.constant 0 : index
    %18 = vector.load %arg2[%c1_20, %c1_21, %c0_22, %c0_23] : memref<2x5x28x96xf32, #tpu.memory_space<vmem>>, vector<1x1x28x96xf32>
    %19 = vector.shape_cast %18 : vector<1x1x28x96xf32> to vector<28x96xf32>
    %cst_24 = arith.constant dense<0.000000e+00> : vector<768x96xf32>
    %20 = tpu.matmul %13, %19, %cst_24 {dimension_numbers = #tpu.dot_dimension_numbers<[1], [0], [0], [1], [0, 0, 1, 1], [], []>} : vector<768x28xf32>, vector<28x96xf32>, vector<768x96xf32> -> vector<768x96xf32>
    %21 = arith.addf %11, %20 : vector<768x96xf32>
    %c0_25 = arith.constant 0 : index
    %c2 = arith.constant 2 : index
    %c0_26 = arith.constant 0 : index
    %22 = vector.load %arg1[%c0_25, %c2, %c0_26] : memref<32x28x28xf32, #tpu.memory_space<vmem>>, vector<32x24x28xf32>
    %23 = vector.shape_cast %22 : vector<32x24x28xf32> to vector<768x28xf32>
    %c0_27 = arith.constant 0 : index
    %c2_28 = arith.constant 2 : index
    %c0_29 = arith.constant 0 : index
    %c0_30 = arith.constant 0 : index
    %24 = vector.load %arg2[%c0_27, %c2_28, %c0_29, %c0_30] : memref<2x5x28x96xf32, #tpu.memory_space<vmem>>, vector<1x1x28x96xf32>
    %25 = vector.shape_cast %24 : vector<1x1x28x96xf32> to vector<28x96xf32>
    %cst_31 = arith.constant dense<0.000000e+00> : vector<768x96xf32>
    %26 = tpu.matmul %23, %25, %cst_31 {dimension_numbers = #tpu.dot_dimension_numbers<[1], [0], [0], [1], [0, 0, 1, 1], [], []>} : vector<768x28xf32>, vector<28x96xf32>, vector<768x96xf32> -> vector<768x96xf32>
    %27 = arith.addf %17, %26 : vector<768x96xf32>
    %c1_32 = arith.constant 1 : index
    %c2_33 = arith.constant 2 : index
    %c0_34 = arith.constant 0 : index
    %c0_35 = arith.constant 0 : index
    %28 = vector.load %arg2[%c1_32, %c2_33, %c0_34, %c0_35] : memref<2x5x28x96xf32, #tpu.memory_space<vmem>>, vector<1x1x28x96xf32>
    %29 = vector.shape_cast %28 : vector<1x1x28x96xf32> to vector<28x96xf32>
    %cst_36 = arith.constant dense<0.000000e+00> : vector<768x96xf32>
    %30 = tpu.matmul %23, %29, %cst_36 {dimension_numbers = #tpu.dot_dimension_numbers<[1], [0], [0], [1], [0, 0, 1, 1], [], []>} : vector<768x28xf32>, vector<28x96xf32>, vector<768x96xf32> -> vector<768x96xf32>
    %31 = arith.addf %21, %30 : vector<768x96xf32>
    %c0_37 = arith.constant 0 : index
    %c3 = arith.constant 3 : index
    %c0_38 = arith.constant 0 : index
    %32 = vector.load %arg1[%c0_37, %c3, %c0_38] : memref<32x28x28xf32, #tpu.memory_space<vmem>>, vector<32x24x28xf32>
    %33 = vector.shape_cast %32 : vector<32x24x28xf32> to vector<768x28xf32>
    %c0_39 = arith.constant 0 : index
    %c3_40 = arith.constant 3 : index
    %c0_41 = arith.constant 0 : index
    %c0_42 = arith.constant 0 : index
    %34 = vector.load %arg2[%c0_39, %c3_40, %c0_41, %c0_42] : memref<2x5x28x96xf32, #tpu.memory_space<vmem>>, vector<1x1x28x96xf32>
    %35 = vector.shape_cast %34 : vector<1x1x28x96xf32> to vector<28x96xf32>
    %cst_43 = arith.constant dense<0.000000e+00> : vector<768x96xf32>
    %36 = tpu.matmul %33, %35, %cst_43 {dimension_numbers = #tpu.dot_dimension_numbers<[1], [0], [0], [1], [0, 0, 1, 1], [], []>} : vector<768x28xf32>, vector<28x96xf32>, vector<768x96xf32> -> vector<768x96xf32>
    %37 = arith.addf %27, %36 : vector<768x96xf32>
    %c1_44 = arith.constant 1 : index
    %c3_45 = arith.constant 3 : index
    %c0_46 = arith.constant 0 : index
    %c0_47 = arith.constant 0 : index
    %38 = vector.load %arg2[%c1_44, %c3_45, %c0_46, %c0_47] : memref<2x5x28x96xf32, #tpu.memory_space<vmem>>, vector<1x1x28x96xf32>
    %39 = vector.shape_cast %38 : vector<1x1x28x96xf32> to vector<28x96xf32>
    %cst_48 = arith.constant dense<0.000000e+00> : vector<768x96xf32>
    %40 = tpu.matmul %33, %39, %cst_48 {dimension_numbers = #tpu.dot_dimension_numbers<[1], [0], [0], [1], [0, 0, 1, 1], [], []>} : vector<768x28xf32>, vector<28x96xf32>, vector<768x96xf32> -> vector<768x96xf32>
    %41 = arith.addf %31, %40 : vector<768x96xf32>
    %c0_49 = arith.constant 0 : index
    %c4 = arith.constant 4 : index
    %c0_50 = arith.constant 0 : index
    %42 = vector.load %arg1[%c0_49, %c4, %c0_50] : memref<32x28x28xf32, #tpu.memory_space<vmem>>, vector<32x24x28xf32>
    %43 = vector.shape_cast %42 : vector<32x24x28xf32> to vector<768x28xf32>
    %c0_51 = arith.constant 0 : index
    %c4_52 = arith.constant 4 : index
    %c0_53 = arith.constant 0 : index
    %c0_54 = arith.constant 0 : index
    %44 = vector.load %arg2[%c0_51, %c4_52, %c0_53, %c0_54] : memref<2x5x28x96xf32, #tpu.memory_space<vmem>>, vector<1x1x28x96xf32>
    %45 = vector.shape_cast %44 : vector<1x1x28x96xf32> to vector<28x96xf32>
    %cst_55 = arith.constant dense<0.000000e+00> : vector<768x96xf32>
    %46 = tpu.matmul %43, %45, %cst_55 {dimension_numbers = #tpu.dot_dimension_numbers<[1], [0], [0], [1], [0, 0, 1, 1], [], []>} : vector<768x28xf32>, vector<28x96xf32>, vector<768x96xf32> -> vector<768x96xf32>
    %47 = arith.addf %37, %46 : vector<768x96xf32>
    %c1_56 = arith.constant 1 : index
    %c4_57 = arith.constant 4 : index
    %c0_58 = arith.constant 0 : index
    %c0_59 = arith.constant 0 : index
    %48 = vector.load %arg2[%c1_56, %c4_57, %c0_58, %c0_59] : memref<2x5x28x96xf32, #tpu.memory_space<vmem>>, vector<1x1x28x96xf32>
    %49 = vector.shape_cast %48 : vector<1x1x28x96xf32> to vector<28x96xf32>
    %cst_60 = arith.constant dense<0.000000e+00> : vector<768x96xf32>
    %50 = tpu.matmul %43, %49, %cst_60 {dimension_numbers = #tpu.dot_dimension_numbers<[1], [0], [0], [1], [0, 0, 1, 1], [], []>} : vector<768x28xf32>, vector<28x96xf32>, vector<768x96xf32> -> vector<768x96xf32>
    %51 = arith.addf %41, %50 : vector<768x96xf32>
    %52 = arith.maximumf %47, %51 : vector<768x96xf32>
    %53 = vector.shape_cast %52 : vector<768x96xf32> to vector<32x24x96xf32>
    %54 = vector.extract_strided_slice %53 {offsets = [0, 0, 0], sizes = [32, 1, 96], strides = [1, 1, 1]} : vector<32x24x96xf32> to vector<32x1x96xf32>
    %55 = vector.extract_strided_slice %53 {offsets = [0, 1, 0], sizes = [32, 1, 96], strides = [1, 1, 1]} : vector<32x24x96xf32> to vector<32x1x96xf32>
    %56 = arith.maximumf %54, %55 : vector<32x1x96xf32>
    %57 = vector.extract_strided_slice %53 {offsets = [0, 2, 0], sizes = [32, 1, 96], strides = [1, 1, 1]} : vector<32x24x96xf32> to vector<32x1x96xf32>
    %58 = vector.extract_strided_slice %53 {offsets = [0, 3, 0], sizes = [32, 1, 96], strides = [1, 1, 1]} : vector<32x24x96xf32> to vector<32x1x96xf32>
    %59 = arith.maximumf %57, %58 : vector<32x1x96xf32>
    %60 = vector.extract_strided_slice %53 {offsets = [0, 4, 0], sizes = [32, 1, 96], strides = [1, 1, 1]} : vector<32x24x96xf32> to vector<32x1x96xf32>
    %61 = vector.extract_strided_slice %53 {offsets = [0, 5, 0], sizes = [32, 1, 96], strides = [1, 1, 1]} : vector<32x24x96xf32> to vector<32x1x96xf32>
    %62 = arith.maximumf %60, %61 : vector<32x1x96xf32>
    %63 = vector.extract_strided_slice %53 {offsets = [0, 6, 0], sizes = [32, 1, 96], strides = [1, 1, 1]} : vector<32x24x96xf32> to vector<32x1x96xf32>
    %64 = vector.extract_strided_slice %53 {offsets = [0, 7, 0], sizes = [32, 1, 96], strides = [1, 1, 1]} : vector<32x24x96xf32> to vector<32x1x96xf32>
    %65 = arith.maximumf %63, %64 : vector<32x1x96xf32>
    %66 = vector.extract_strided_slice %53 {offsets = [0, 8, 0], sizes = [32, 1, 96], strides = [1, 1, 1]} : vector<32x24x96xf32> to vector<32x1x96xf32>
    %67 = vector.extract_strided_slice %53 {offsets = [0, 9, 0], sizes = [32, 1, 96], strides = [1, 1, 1]} : vector<32x24x96xf32> to vector<32x1x96xf32>
    %68 = arith.maximumf %66, %67 : vector<32x1x96xf32>
    %69 = vector.extract_strided_slice %53 {offsets = [0, 10, 0], sizes = [32, 1, 96], strides = [1, 1, 1]} : vector<32x24x96xf32> to vector<32x1x96xf32>
    %70 = vector.extract_strided_slice %53 {offsets = [0, 11, 0], sizes = [32, 1, 96], strides = [1, 1, 1]} : vector<32x24x96xf32> to vector<32x1x96xf32>
    %71 = arith.maximumf %69, %70 : vector<32x1x96xf32>
    %72 = vector.extract_strided_slice %53 {offsets = [0, 12, 0], sizes = [32, 1, 96], strides = [1, 1, 1]} : vector<32x24x96xf32> to vector<32x1x96xf32>
    %73 = vector.extract_strided_slice %53 {offsets = [0, 13, 0], sizes = [32, 1, 96], strides = [1, 1, 1]} : vector<32x24x96xf32> to vector<32x1x96xf32>
    %74 = arith.maximumf %72, %73 : vector<32x1x96xf32>
    %75 = vector.extract_strided_slice %53 {offsets = [0, 14, 0], sizes = [32, 1, 96], strides = [1, 1, 1]} : vector<32x24x96xf32> to vector<32x1x96xf32>
    %76 = vector.extract_strided_slice %53 {offsets = [0, 15, 0], sizes = [32, 1, 96], strides = [1, 1, 1]} : vector<32x24x96xf32> to vector<32x1x96xf32>
    %77 = arith.maximumf %75, %76 : vector<32x1x96xf32>
    %78 = vector.extract_strided_slice %53 {offsets = [0, 16, 0], sizes = [32, 1, 96], strides = [1, 1, 1]} : vector<32x24x96xf32> to vector<32x1x96xf32>
    %79 = vector.extract_strided_slice %53 {offsets = [0, 17, 0], sizes = [32, 1, 96], strides = [1, 1, 1]} : vector<32x24x96xf32> to vector<32x1x96xf32>
    %80 = arith.maximumf %78, %79 : vector<32x1x96xf32>
    %81 = vector.extract_strided_slice %53 {offsets = [0, 18, 0], sizes = [32, 1, 96], strides = [1, 1, 1]} : vector<32x24x96xf32> to vector<32x1x96xf32>
    %82 = vector.extract_strided_slice %53 {offsets = [0, 19, 0], sizes = [32, 1, 96], strides = [1, 1, 1]} : vector<32x24x96xf32> to vector<32x1x96xf32>
    %83 = arith.maximumf %81, %82 : vector<32x1x96xf32>
    %84 = vector.extract_strided_slice %53 {offsets = [0, 20, 0], sizes = [32, 1, 96], strides = [1, 1, 1]} : vector<32x24x96xf32> to vector<32x1x96xf32>
    %85 = vector.extract_strided_slice %53 {offsets = [0, 21, 0], sizes = [32, 1, 96], strides = [1, 1, 1]} : vector<32x24x96xf32> to vector<32x1x96xf32>
    %86 = arith.maximumf %84, %85 : vector<32x1x96xf32>
    %87 = vector.extract_strided_slice %53 {offsets = [0, 22, 0], sizes = [32, 1, 96], strides = [1, 1, 1]} : vector<32x24x96xf32> to vector<32x1x96xf32>
    %88 = vector.extract_strided_slice %53 {offsets = [0, 23, 0], sizes = [32, 1, 96], strides = [1, 1, 1]} : vector<32x24x96xf32> to vector<32x1x96xf32>
    %89 = arith.maximumf %87, %88 : vector<32x1x96xf32>
    %90 = tpu.concatenate %56, %59, %62, %65, %68, %71, %74, %77, %80, %83, %86, %89 in 1 : vector<32x1x96xf32>, vector<32x1x96xf32>, vector<32x1x96xf32>, vector<32x1x96xf32>, vector<32x1x96xf32>, vector<32x1x96xf32>, vector<32x1x96xf32>, vector<32x1x96xf32>, vector<32x1x96xf32>, vector<32x1x96xf32>, vector<32x1x96xf32>, vector<32x1x96xf32> -> vector<32x12x96xf32>
    %c0_61 = arith.constant 0 : index
    %c0_62 = arith.constant 0 : index
    %91 = vector.load %arg3[%c0_61, %c0_62] : memref<1x96xf32, #tpu.memory_space<vmem>>, vector<1x96xf32>
    %92 = vector.shape_cast %91 : vector<1x96xf32> to vector<1x1x96xf32>
    %93 = vector.broadcast %92 : vector<1x1x96xf32> to vector<32x12x96xf32>
    %94 = arith.addf %90, %93 : vector<32x12x96xf32>
    %cst_63 = arith.constant 0.000000e+00 : f32
    %95 = vector.broadcast %cst_63 : f32 to vector<32x12x96xf32>
    %96 = arith.maximumf %94, %95 : vector<32x12x96xf32>
    %cst_64 = arith.constant 0.000000e+00 : f32
    %97 = vector.broadcast %cst_64 : f32 to vector<256x64xf32>
    %cst_65 = arith.constant 0.000000e+00 : f32
    %98 = vector.broadcast %cst_65 : f32 to vector<256x64xf32>
    %99 = vector.extract_strided_slice %96 {offsets = [0, 0, 0], sizes = [32, 8, 96], strides = [1, 1, 1]} : vector<32x12x96xf32> to vector<32x8x96xf32>
    %100 = vector.shape_cast %99 : vector<32x8x96xf32> to vector<256x96xf32>
    %101 = arith.truncf %100 : vector<256x96xf32> to vector<256x96xbf16>
    %c0_66 = arith.constant 0 : index
    %c0_67 = arith.constant 0 : index
    %c0_68 = arith.constant 0 : index
    %c0_69 = arith.constant 0 : index
    %102 = vector.load %arg4[%c0_66, %c0_67, %c0_68, %c0_69] : memref<2x5x96x64xbf16, #tpu.memory_space<vmem>>, vector<1x1x96x64xbf16>
    %103 = vector.shape_cast %102 : vector<1x1x96x64xbf16> to vector<96x64xbf16>
    %cst_70 = arith.constant dense<0.000000e+00> : vector<256x64xf32>
    %104 = tpu.matmul %101, %103, %cst_70 {dimension_numbers = #tpu.dot_dimension_numbers<[1], [0], [0], [1], [0, 0, 1, 1], [], []>} : vector<256x96xbf16>, vector<96x64xbf16>, vector<256x64xf32> -> vector<256x64xf32>
    %105 = arith.addf %97, %104 : vector<256x64xf32>
    %c1_71 = arith.constant 1 : index
    %c0_72 = arith.constant 0 : index
    %c0_73 = arith.constant 0 : index
    %c0_74 = arith.constant 0 : index
    %106 = vector.load %arg4[%c1_71, %c0_72, %c0_73, %c0_74] : memref<2x5x96x64xbf16, #tpu.memory_space<vmem>>, vector<1x1x96x64xbf16>
    %107 = vector.shape_cast %106 : vector<1x1x96x64xbf16> to vector<96x64xbf16>
    %cst_75 = arith.constant dense<0.000000e+00> : vector<256x64xf32>
    %108 = tpu.matmul %101, %107, %cst_75 {dimension_numbers = #tpu.dot_dimension_numbers<[1], [0], [0], [1], [0, 0, 1, 1], [], []>} : vector<256x96xbf16>, vector<96x64xbf16>, vector<256x64xf32> -> vector<256x64xf32>
    %109 = arith.addf %98, %108 : vector<256x64xf32>
    %110 = vector.extract_strided_slice %96 {offsets = [0, 1, 0], sizes = [32, 8, 96], strides = [1, 1, 1]} : vector<32x12x96xf32> to vector<32x8x96xf32>
    %111 = vector.shape_cast %110 : vector<32x8x96xf32> to vector<256x96xf32>
    %112 = arith.truncf %111 : vector<256x96xf32> to vector<256x96xbf16>
    %c0_76 = arith.constant 0 : index
    %c1_77 = arith.constant 1 : index
    %c0_78 = arith.constant 0 : index
    %c0_79 = arith.constant 0 : index
    %113 = vector.load %arg4[%c0_76, %c1_77, %c0_78, %c0_79] : memref<2x5x96x64xbf16, #tpu.memory_space<vmem>>, vector<1x1x96x64xbf16>
    %114 = vector.shape_cast %113 : vector<1x1x96x64xbf16> to vector<96x64xbf16>
    %cst_80 = arith.constant dense<0.000000e+00> : vector<256x64xf32>
    %115 = tpu.matmul %112, %114, %cst_80 {dimension_numbers = #tpu.dot_dimension_numbers<[1], [0], [0], [1], [0, 0, 1, 1], [], []>} : vector<256x96xbf16>, vector<96x64xbf16>, vector<256x64xf32> -> vector<256x64xf32>
    %116 = arith.addf %105, %115 : vector<256x64xf32>
    %c1_81 = arith.constant 1 : index
    %c1_82 = arith.constant 1 : index
    %c0_83 = arith.constant 0 : index
    %c0_84 = arith.constant 0 : index
    %117 = vector.load %arg4[%c1_81, %c1_82, %c0_83, %c0_84] : memref<2x5x96x64xbf16, #tpu.memory_space<vmem>>, vector<1x1x96x64xbf16>
    %118 = vector.shape_cast %117 : vector<1x1x96x64xbf16> to vector<96x64xbf16>
    %cst_85 = arith.constant dense<0.000000e+00> : vector<256x64xf32>
    %119 = tpu.matmul %112, %118, %cst_85 {dimension_numbers = #tpu.dot_dimension_numbers<[1], [0], [0], [1], [0, 0, 1, 1], [], []>} : vector<256x96xbf16>, vector<96x64xbf16>, vector<256x64xf32> -> vector<256x64xf32>
    %120 = arith.addf %109, %119 : vector<256x64xf32>
    %121 = vector.extract_strided_slice %96 {offsets = [0, 2, 0], sizes = [32, 8, 96], strides = [1, 1, 1]} : vector<32x12x96xf32> to vector<32x8x96xf32>
    %122 = vector.shape_cast %121 : vector<32x8x96xf32> to vector<256x96xf32>
    %123 = arith.truncf %122 : vector<256x96xf32> to vector<256x96xbf16>
    %c0_86 = arith.constant 0 : index
    %c2_87 = arith.constant 2 : index
    %c0_88 = arith.constant 0 : index
    %c0_89 = arith.constant 0 : index
    %124 = vector.load %arg4[%c0_86, %c2_87, %c0_88, %c0_89] : memref<2x5x96x64xbf16, #tpu.memory_space<vmem>>, vector<1x1x96x64xbf16>
    %125 = vector.shape_cast %124 : vector<1x1x96x64xbf16> to vector<96x64xbf16>
    %cst_90 = arith.constant dense<0.000000e+00> : vector<256x64xf32>
    %126 = tpu.matmul %123, %125, %cst_90 {dimension_numbers = #tpu.dot_dimension_numbers<[1], [0], [0], [1], [0, 0, 1, 1], [], []>} : vector<256x96xbf16>, vector<96x64xbf16>, vector<256x64xf32> -> vector<256x64xf32>
    %127 = arith.addf %116, %126 : vector<256x64xf32>
    %c1_91 = arith.constant 1 : index
    %c2_92 = arith.constant 2 : index
    %c0_93 = arith.constant 0 : index
    %c0_94 = arith.constant 0 : index
    %128 = vector.load %arg4[%c1_91, %c2_92, %c0_93, %c0_94] : memref<2x5x96x64xbf16, #tpu.memory_space<vmem>>, vector<1x1x96x64xbf16>
    %129 = vector.shape_cast %128 : vector<1x1x96x64xbf16> to vector<96x64xbf16>
    %cst_95 = arith.constant dense<0.000000e+00> : vector<256x64xf32>
    %130 = tpu.matmul %123, %129, %cst_95 {dimension_numbers = #tpu.dot_dimension_numbers<[1], [0], [0], [1], [0, 0, 1, 1], [], []>} : vector<256x96xbf16>, vector<96x64xbf16>, vector<256x64xf32> -> vector<256x64xf32>
    %131 = arith.addf %120, %130 : vector<256x64xf32>
    %132 = vector.extract_strided_slice %96 {offsets = [0, 3, 0], sizes = [32, 8, 96], strides = [1, 1, 1]} : vector<32x12x96xf32> to vector<32x8x96xf32>
    %133 = vector.shape_cast %132 : vector<32x8x96xf32> to vector<256x96xf32>
    %134 = arith.truncf %133 : vector<256x96xf32> to vector<256x96xbf16>
    %c0_96 = arith.constant 0 : index
    %c3_97 = arith.constant 3 : index
    %c0_98 = arith.constant 0 : index
    %c0_99 = arith.constant 0 : index
    %135 = vector.load %arg4[%c0_96, %c3_97, %c0_98, %c0_99] : memref<2x5x96x64xbf16, #tpu.memory_space<vmem>>, vector<1x1x96x64xbf16>
    %136 = vector.shape_cast %135 : vector<1x1x96x64xbf16> to vector<96x64xbf16>
    %cst_100 = arith.constant dense<0.000000e+00> : vector<256x64xf32>
    %137 = tpu.matmul %134, %136, %cst_100 {dimension_numbers = #tpu.dot_dimension_numbers<[1], [0], [0], [1], [0, 0, 1, 1], [], []>} : vector<256x96xbf16>, vector<96x64xbf16>, vector<256x64xf32> -> vector<256x64xf32>
    %138 = arith.addf %127, %137 : vector<256x64xf32>
    %c1_101 = arith.constant 1 : index
    %c3_102 = arith.constant 3 : index
    %c0_103 = arith.constant 0 : index
    %c0_104 = arith.constant 0 : index
    %139 = vector.load %arg4[%c1_101, %c3_102, %c0_103, %c0_104] : memref<2x5x96x64xbf16, #tpu.memory_space<vmem>>, vector<1x1x96x64xbf16>
    %140 = vector.shape_cast %139 : vector<1x1x96x64xbf16> to vector<96x64xbf16>
    %cst_105 = arith.constant dense<0.000000e+00> : vector<256x64xf32>
    %141 = tpu.matmul %134, %140, %cst_105 {dimension_numbers = #tpu.dot_dimension_numbers<[1], [0], [0], [1], [0, 0, 1, 1], [], []>} : vector<256x96xbf16>, vector<96x64xbf16>, vector<256x64xf32> -> vector<256x64xf32>
    %142 = arith.addf %131, %141 : vector<256x64xf32>
    %143 = vector.extract_strided_slice %96 {offsets = [0, 4, 0], sizes = [32, 8, 96], strides = [1, 1, 1]} : vector<32x12x96xf32> to vector<32x8x96xf32>
    %144 = vector.shape_cast %143 : vector<32x8x96xf32> to vector<256x96xf32>
    %145 = arith.truncf %144 : vector<256x96xf32> to vector<256x96xbf16>
    %c0_106 = arith.constant 0 : index
    %c4_107 = arith.constant 4 : index
    %c0_108 = arith.constant 0 : index
    %c0_109 = arith.constant 0 : index
    %146 = vector.load %arg4[%c0_106, %c4_107, %c0_108, %c0_109] : memref<2x5x96x64xbf16, #tpu.memory_space<vmem>>, vector<1x1x96x64xbf16>
    %147 = vector.shape_cast %146 : vector<1x1x96x64xbf16> to vector<96x64xbf16>
    %cst_110 = arith.constant dense<0.000000e+00> : vector<256x64xf32>
    %148 = tpu.matmul %145, %147, %cst_110 {dimension_numbers = #tpu.dot_dimension_numbers<[1], [0], [0], [1], [0, 0, 1, 1], [], []>} : vector<256x96xbf16>, vector<96x64xbf16>, vector<256x64xf32> -> vector<256x64xf32>
    %149 = arith.addf %138, %148 : vector<256x64xf32>
    %c1_111 = arith.constant 1 : index
    %c4_112 = arith.constant 4 : index
    %c0_113 = arith.constant 0 : index
    %c0_114 = arith.constant 0 : index
    %150 = vector.load %arg4[%c1_111, %c4_112, %c0_113, %c0_114] : memref<2x5x96x64xbf16, #tpu.memory_space<vmem>>, vector<1x1x96x64xbf16>
    %151 = vector.shape_cast %150 : vector<1x1x96x64xbf16> to vector<96x64xbf16>
    %cst_115 = arith.constant dense<0.000000e+00> : vector<256x64xf32>
    %152 = tpu.matmul %145, %151, %cst_115 {dimension_numbers = #tpu.dot_dimension_numbers<[1], [0], [0], [1], [0, 0, 1, 1], [], []>} : vector<256x96xbf16>, vector<96x64xbf16>, vector<256x64xf32> -> vector<256x64xf32>
    %153 = arith.addf %142, %152 : vector<256x64xf32>
    %154 = arith.maximumf %149, %153 : vector<256x64xf32>
    %155 = vector.shape_cast %154 : vector<256x64xf32> to vector<32x8x64xf32>
    %156 = vector.extract_strided_slice %155 {offsets = [0, 0, 0], sizes = [32, 1, 64], strides = [1, 1, 1]} : vector<32x8x64xf32> to vector<32x1x64xf32>
    %157 = vector.extract_strided_slice %155 {offsets = [0, 1, 0], sizes = [32, 1, 64], strides = [1, 1, 1]} : vector<32x8x64xf32> to vector<32x1x64xf32>
    %158 = arith.maximumf %156, %157 : vector<32x1x64xf32>
    %159 = vector.extract_strided_slice %155 {offsets = [0, 2, 0], sizes = [32, 1, 64], strides = [1, 1, 1]} : vector<32x8x64xf32> to vector<32x1x64xf32>
    %160 = vector.extract_strided_slice %155 {offsets = [0, 3, 0], sizes = [32, 1, 64], strides = [1, 1, 1]} : vector<32x8x64xf32> to vector<32x1x64xf32>
    %161 = arith.maximumf %159, %160 : vector<32x1x64xf32>
    %162 = vector.extract_strided_slice %155 {offsets = [0, 4, 0], sizes = [32, 1, 64], strides = [1, 1, 1]} : vector<32x8x64xf32> to vector<32x1x64xf32>
    %163 = vector.extract_strided_slice %155 {offsets = [0, 5, 0], sizes = [32, 1, 64], strides = [1, 1, 1]} : vector<32x8x64xf32> to vector<32x1x64xf32>
    %164 = arith.maximumf %162, %163 : vector<32x1x64xf32>
    %165 = vector.extract_strided_slice %155 {offsets = [0, 6, 0], sizes = [32, 1, 64], strides = [1, 1, 1]} : vector<32x8x64xf32> to vector<32x1x64xf32>
    %166 = vector.extract_strided_slice %155 {offsets = [0, 7, 0], sizes = [32, 1, 64], strides = [1, 1, 1]} : vector<32x8x64xf32> to vector<32x1x64xf32>
    %167 = arith.maximumf %165, %166 : vector<32x1x64xf32>
    %168 = tpu.concatenate %158, %161, %164, %167 in 1 : vector<32x1x64xf32>, vector<32x1x64xf32>, vector<32x1x64xf32>, vector<32x1x64xf32> -> vector<32x4x64xf32>
    %c0_116 = arith.constant 0 : index
    %c0_117 = arith.constant 0 : index
    %169 = vector.load %arg5[%c0_116, %c0_117] : memref<1x64xf32, #tpu.memory_space<vmem>>, vector<1x64xf32>
    %170 = vector.shape_cast %169 : vector<1x64xf32> to vector<1x1x64xf32>
    %171 = vector.broadcast %170 : vector<1x1x64xf32> to vector<32x4x64xf32>
    %172 = arith.addf %168, %171 : vector<32x4x64xf32>
    %cst_118 = arith.constant 0.000000e+00 : f32
    %173 = vector.broadcast %cst_118 : f32 to vector<32x4x64xf32>
    %174 = arith.maximumf %172, %173 : vector<32x4x64xf32>
    %cst_119 = arith.constant 0.000000e+00 : f32
    %175 = vector.broadcast %cst_119 : f32 to vector<32x128xf32>
    %176 = vector.extract_strided_slice %174 {offsets = [0, 0, 0], sizes = [32, 1, 64], strides = [1, 1, 1]} : vector<32x4x64xf32> to vector<32x1x64xf32>
    %177 = vector.shape_cast %176 : vector<32x1x64xf32> to vector<32x64xf32>
    %178 = arith.truncf %177 : vector<32x64xf32> to vector<32x64xbf16>
    %c0_120 = arith.constant 0 : index
    %c0_121 = arith.constant 0 : index
    %c0_122 = arith.constant 0 : index
    %179 = vector.load %arg6[%c0_120, %c0_121, %c0_122] : memref<4x64x128xbf16, #tpu.memory_space<vmem>>, vector<1x64x128xbf16>
    %180 = vector.shape_cast %179 : vector<1x64x128xbf16> to vector<64x128xbf16>
    %cst_123 = arith.constant dense<0.000000e+00> : vector<32x128xf32>
    %181 = tpu.matmul %178, %180, %cst_123 {dimension_numbers = #tpu.dot_dimension_numbers<[1], [0], [0], [1], [0, 0, 1, 1], [], []>} : vector<32x64xbf16>, vector<64x128xbf16>, vector<32x128xf32> -> vector<32x128xf32>
    %182 = arith.addf %175, %181 : vector<32x128xf32>
    %183 = vector.extract_strided_slice %174 {offsets = [0, 1, 0], sizes = [32, 1, 64], strides = [1, 1, 1]} : vector<32x4x64xf32> to vector<32x1x64xf32>
    %184 = vector.shape_cast %183 : vector<32x1x64xf32> to vector<32x64xf32>
    %185 = arith.truncf %184 : vector<32x64xf32> to vector<32x64xbf16>
    %c1_124 = arith.constant 1 : index
    %c0_125 = arith.constant 0 : index
    %c0_126 = arith.constant 0 : index
    %186 = vector.load %arg6[%c1_124, %c0_125, %c0_126] : memref<4x64x128xbf16, #tpu.memory_space<vmem>>, vector<1x64x128xbf16>
    %187 = vector.shape_cast %186 : vector<1x64x128xbf16> to vector<64x128xbf16>
    %cst_127 = arith.constant dense<0.000000e+00> : vector<32x128xf32>
    %188 = tpu.matmul %185, %187, %cst_127 {dimension_numbers = #tpu.dot_dimension_numbers<[1], [0], [0], [1], [0, 0, 1, 1], [], []>} : vector<32x64xbf16>, vector<64x128xbf16>, vector<32x128xf32> -> vector<32x128xf32>
    %189 = arith.addf %182, %188 : vector<32x128xf32>
    %190 = vector.extract_strided_slice %174 {offsets = [0, 2, 0], sizes = [32, 1, 64], strides = [1, 1, 1]} : vector<32x4x64xf32> to vector<32x1x64xf32>
    %191 = vector.shape_cast %190 : vector<32x1x64xf32> to vector<32x64xf32>
    %192 = arith.truncf %191 : vector<32x64xf32> to vector<32x64xbf16>
    %c2_128 = arith.constant 2 : index
    %c0_129 = arith.constant 0 : index
    %c0_130 = arith.constant 0 : index
    %193 = vector.load %arg6[%c2_128, %c0_129, %c0_130] : memref<4x64x128xbf16, #tpu.memory_space<vmem>>, vector<1x64x128xbf16>
    %194 = vector.shape_cast %193 : vector<1x64x128xbf16> to vector<64x128xbf16>
    %cst_131 = arith.constant dense<0.000000e+00> : vector<32x128xf32>
    %195 = tpu.matmul %192, %194, %cst_131 {dimension_numbers = #tpu.dot_dimension_numbers<[1], [0], [0], [1], [0, 0, 1, 1], [], []>} : vector<32x64xbf16>, vector<64x128xbf16>, vector<32x128xf32> -> vector<32x128xf32>
    %196 = arith.addf %189, %195 : vector<32x128xf32>
    %197 = vector.extract_strided_slice %174 {offsets = [0, 3, 0], sizes = [32, 1, 64], strides = [1, 1, 1]} : vector<32x4x64xf32> to vector<32x1x64xf32>
    %198 = vector.shape_cast %197 : vector<32x1x64xf32> to vector<32x64xf32>
    %199 = arith.truncf %198 : vector<32x64xf32> to vector<32x64xbf16>
    %c3_132 = arith.constant 3 : index
    %c0_133 = arith.constant 0 : index
    %c0_134 = arith.constant 0 : index
    %200 = vector.load %arg6[%c3_132, %c0_133, %c0_134] : memref<4x64x128xbf16, #tpu.memory_space<vmem>>, vector<1x64x128xbf16>
    %201 = vector.shape_cast %200 : vector<1x64x128xbf16> to vector<64x128xbf16>
    %cst_135 = arith.constant dense<0.000000e+00> : vector<32x128xf32>
    %202 = tpu.matmul %199, %201, %cst_135 {dimension_numbers = #tpu.dot_dimension_numbers<[1], [0], [0], [1], [0, 0, 1, 1], [], []>} : vector<32x64xbf16>, vector<64x128xbf16>, vector<32x128xf32> -> vector<32x128xf32>
    %203 = arith.addf %196, %202 : vector<32x128xf32>
    %c0_136 = arith.constant 0 : index
    %c0_137 = arith.constant 0 : index
    %204 = vector.load %arg7[%c0_136, %c0_137] : memref<1x128xf32, #tpu.memory_space<vmem>>, vector<1x128xf32>
    %205 = vector.broadcast %204 : vector<1x128xf32> to vector<32x128xf32>
    %206 = arith.addf %203, %205 : vector<32x128xf32>
    %cst_138 = arith.constant 0.000000e+00 : f32
    %207 = vector.broadcast %cst_138 : f32 to vector<32x128xf32>
    %208 = arith.maximumf %206, %207 : vector<32x128xf32>
    %209 = arith.truncf %208 : vector<32x128xf32> to vector<32x128xbf16>
    %c0_139 = arith.constant 0 : index
    %c0_140 = arith.constant 0 : index
    %210 = vector.load %arg8[%c0_139, %c0_140] : memref<128x128xbf16, #tpu.memory_space<vmem>>, vector<128x128xbf16>
    %cst_141 = arith.constant dense<0.000000e+00> : vector<32x128xf32>
    %211 = tpu.matmul %209, %210, %cst_141 {dimension_numbers = #tpu.dot_dimension_numbers<[1], [0], [0], [1], [0, 0, 1, 1], [], []>} : vector<32x128xbf16>, vector<128x128xbf16>, vector<32x128xf32> -> vector<32x128xf32>
    %c0_142 = arith.constant 0 : index
    %c0_143 = arith.constant 0 : index
    %212 = vector.load %arg9[%c0_142, %c0_143] : memref<1x128xf32, #tpu.memory_space<vmem>>, vector<1x128xf32>
    %213 = vector.broadcast %212 : vector<1x128xf32> to vector<32x128xf32>
    %214 = arith.addf %211, %213 : vector<32x128xf32>
    %cst_144 = arith.constant 0.000000e+00 : f32
    %215 = vector.broadcast %cst_144 : f32 to vector<32x128xf32>
    %216 = arith.maximumf %214, %215 : vector<32x128xf32>
    %217 = arith.truncf %216 : vector<32x128xf32> to vector<32x128xbf16>
    %c0_145 = arith.constant 0 : index
    %c0_146 = arith.constant 0 : index
    %218 = vector.load %arg10[%c0_145, %c0_146] : memref<128x128xbf16, #tpu.memory_space<vmem>>, vector<128x128xbf16>
    %cst_147 = arith.constant dense<0.000000e+00> : vector<32x128xf32>
    %219 = tpu.matmul %217, %218, %cst_147 {dimension_numbers = #tpu.dot_dimension_numbers<[1], [0], [0], [1], [0, 0, 1, 1], [], []>} : vector<32x128xbf16>, vector<128x128xbf16>, vector<32x128xf32> -> vector<32x128xf32>
    %c0_148 = arith.constant 0 : index
    %c0_149 = arith.constant 0 : index
    %220 = vector.load %arg11[%c0_148, %c0_149] : memref<1x128xf32, #tpu.memory_space<vmem>>, vector<1x128xf32>
    %221 = vector.broadcast %220 : vector<1x128xf32> to vector<32x128xf32>
    %222 = arith.addf %219, %221 : vector<32x128xf32>
    %c0_150 = arith.constant 0 : index
    %c0_151 = arith.constant 0 : index
    %223 = vector.load %arg12[%c0_150, %c0_151] : memref<32x128xf32, #tpu.memory_space<vmem>>, vector<32x128xf32>
    tpu.vector_store %arg12[%c0_150, %c0_151], %222 {strides = array<i32>} : memref<32x128xf32, #tpu.memory_space<vmem>>, vector<32x128xf32>,
    return
  }
  func.func @transform_0(%arg0: i32) -> (i32, i32, i32) {
    %c0_i32 = arith.constant 0 : i32
    %c0_i32_0 = arith.constant 0 : i32
    %c0_i32_1 = arith.constant 0 : i32
    return %arg0, %c0_i32, %c0_i32_0 : i32, i32, i32
  }
  func.func @transform_1(%arg0: i32) -> (i32, i32, i32, i32) {
    %c0_i32 = arith.constant 0 : i32
    %c0_i32_0 = arith.constant 0 : i32
    %c0_i32_1 = arith.constant 0 : i32
    %c0_i32_2 = arith.constant 0 : i32
    %c0_i32_3 = arith.constant 0 : i32
    return %c0_i32, %c0_i32_0, %c0_i32_1, %c0_i32_2 : i32, i32, i32, i32
  }
  func.func @transform_2(%arg0: i32) -> (i32, i32) {
    %c0_i32 = arith.constant 0 : i32
    %c0_i32_0 = arith.constant 0 : i32
    %c0_i32_1 = arith.constant 0 : i32
    return %c0_i32, %c0_i32_0 : i32, i32
  }
  func.func @transform_3(%arg0: i32) -> (i32, i32, i32, i32) {
    %c0_i32 = arith.constant 0 : i32
    %c0_i32_0 = arith.constant 0 : i32
    %c0_i32_1 = arith.constant 0 : i32
    %c0_i32_2 = arith.constant 0 : i32
    %c0_i32_3 = arith.constant 0 : i32
    return %c0_i32, %c0_i32_0, %c0_i32_1, %c0_i32_2 : i32, i32, i32, i32
  }
  func.func @transform_4(%arg0: i32) -> (i32, i32) {
    %c0_i32 = arith.constant 0 : i32
    %c0_i32_0 = arith.constant 0 : i32
    %c0_i32_1 = arith.constant 0 : i32
    return %c0_i32, %c0_i32_0 : i32, i32
  }
  func.func @transform_5(%arg0: i32) -> (i32, i32, i32) {
    %c0_i32 = arith.constant 0 : i32
    %c0_i32_0 = arith.constant 0 : i32
    %c0_i32_1 = arith.constant 0 : i32
    %c0_i32_2 = arith.constant 0 : i32
    return %c0_i32, %c0_i32_0, %c0_i32_1 : i32, i32, i32
  }
  func.func @transform_6(%arg0: i32) -> (i32, i32) {
    %c0_i32 = arith.constant 0 : i32
    %c0_i32_0 = arith.constant 0 : i32
    %c0_i32_1 = arith.constant 0 : i32
    return %c0_i32, %c0_i32_0 : i32, i32
  }
  func.func @transform_7(%arg0: i32) -> (i32, i32) {
    %c0_i32 = arith.constant 0 : i32
    %c0_i32_0 = arith.constant 0 : i32
    %c0_i32_1 = arith.constant 0 : i32
    return %c0_i32, %c0_i32_0 : i32, i32
  }
  func.func @transform_8(%arg0: i32) -> (i32, i32) {
    %c0_i32 = arith.constant 0 : i32
    %c0_i32_0 = arith.constant 0 : i32
    %c0_i32_1 = arith.constant 0 : i32
    return %c0_i32, %c0_i32_0 : i32, i32
  }
  func.func @transform_9(%arg0: i32) -> (i32, i32) {
    %c0_i32 = arith.constant 0 : i32
    %c0_i32_0 = arith.constant 0 : i32
    %c0_i32_1 = arith.constant 0 : i32
    return %c0_i32, %c0_i32_0 : i32, i32
  }
  func.func @transform_10(%arg0: i32) -> (i32, i32) {
    %c0_i32 = arith.constant 0 : i32
    %c0_i32_0 = arith.constant 0 : i32
    %c0_i32_1 = arith.constant 0 : i32
    return %c0_i32, %c0_i32_0 : i32, i32
  }
  func.func @transform_11(%arg0: i32) -> (i32, i32) {
    %c0_i32 = arith.constant 0 : i32
    %c0_i32_0 = arith.constant 0 : i32
    return %arg0, %c0_i32 : i32, i32
  }
}

</mosaic_0001>

<llo_original>
// kernel: lenet_forward.1
$region0: #{lenet_forward.1}
  #allocation0 [shape = 'u32[]', space=smem, size = 0x4, offset = 0x4, fixed_abs, tag = 'smem constant byte address 0x4 - core index']
  #allocation1 [shape = 'u32[72,128]{1,0:T(1,128)}', space=vmem, size = 0x9000, scoped, tag = 'internal scratch']
  %s0 = inlined_call_operand.vmem [shape: f32[32,28,28], index: 0, kind: input, shape index: {}]
  %s1 = inlined_call_operand.vmem [shape: f32[2,5,28,96], index: 1, kind: input, shape index: {}]
  %s2 = inlined_call_operand.vmem [shape: f32[1,96], index: 2, kind: input, shape index: {}]
  %s3 = inlined_call_operand.vmem [shape: bf16[2,5,96,64], index: 3, kind: input, shape index: {}]
  %s4 = inlined_call_operand.vmem [shape: f32[1,64], index: 4, kind: input, shape index: {}]
  %s5 = inlined_call_operand.vmem [shape: bf16[4,64,128], index: 5, kind: input, shape index: {}]
  %s6 = inlined_call_operand.vmem [shape: f32[1,128], index: 6, kind: input, shape index: {}]
  %s7 = inlined_call_operand.vmem [shape: bf16[128,128], index: 7, kind: input, shape index: {}]
  %s8 = inlined_call_operand.vmem [shape: f32[1,128], index: 8, kind: input, shape index: {}]
  %s9 = inlined_call_operand.vmem [shape: bf16[128,128], index: 9, kind: input, shape index: {}]
  %s10 = inlined_call_operand.vmem [shape: f32[1,128], index: 10, kind: input, shape index: {}]
  %s11 = inlined_call_operand.vmem [shape: f32[32,128], index: 11, kind: output, shape index: {}]
  %s12 = sld [smem:[#allocation0]]
  $region54: #{lenet_forward.1} parent=0
    _
  %s14 = ssub.s32 1, %s12
  %s15 = scalar_select 0, %s14, %s12
  // Predicated region
  $region2: #{lenet_forward.1} parent=0 // pred_check
    _
  $region3: #{lenet_forward.1} parent=0 // pred_check_branch
    %17 = sbr.rel (0) target = $region5
  $region4: #{lenet_forward.1} parent=0 // pred_region
    _
  $region5: #{lenet_forward.1} parent=0 // pred_fallthru
    _
  // Predicated region
  $region6: #{lenet_forward.1} parent=0 // pred_check
    _
  $region7: #{lenet_forward.1} parent=0 // pred_check_branch
    %19 = sbr.rel (0) target = $region9
  $region8: #{lenet_forward.1} parent=0 // pred_region
    _
  $region9: #{lenet_forward.1} parent=0 // pred_fallthru
    _
  // Predicated region
  $region10: #{lenet_forward.1} parent=0 // pred_check
    _
  $region11: #{lenet_forward.1} parent=0 // pred_check_branch
    %21 = sbr.rel (0) target = $region13
  $region12: #{lenet_forward.1} parent=0 // pred_region
    _
  $region13: #{lenet_forward.1} parent=0 // pred_fallthru
    _
  // Predicated region
  $region14: #{lenet_forward.1} parent=0 // pred_check
    _
  $region15: #{lenet_forward.1} parent=0 // pred_check_branch
    %23 = sbr.rel (0) target = $region17
  $region16: #{lenet_forward.1} parent=0 // pred_region
    _
  $region17: #{lenet_forward.1} parent=0 // pred_fallthru
    _
  // Predicated region
  $region18: #{lenet_forward.1} parent=0 // pred_check
    _
  $region19: #{lenet_forward.1} parent=0 // pred_check_branch
    %25 = sbr.rel (0) target = $region21
  $region20: #{lenet_forward.1} parent=0 // pred_region
    _
  $region21: #{lenet_forward.1} parent=0 // pred_fallthru
    _
  // Predicated region
  $region22: #{lenet_forward.1} parent=0 // pred_check
    _
  $region23: #{lenet_forward.1} parent=0 // pred_check_branch
    %27 = sbr.rel (0) target = $region25
  $region24: #{lenet_forward.1} parent=0 // pred_region
    _
  $region25: #{lenet_forward.1} parent=0 // pred_fallthru
    _
  // Predicated region
  $region26: #{lenet_forward.1} parent=0 // pred_check
    _
  $region27: #{lenet_forward.1} parent=0 // pred_check_branch
    %29 = sbr.rel (0) target = $region29
  $region28: #{lenet_forward.1} parent=0 // pred_region
    _
  $region29: #{lenet_forward.1} parent=0 // pred_fallthru
    _
  // Predicated region
  $region30: #{lenet_forward.1} parent=0 // pred_check
    _
  $region31: #{lenet_forward.1} parent=0 // pred_check_branch
    %31 = sbr.rel (0) target = $region33
  $region32: #{lenet_forward.1} parent=0 // pred_region
    _
  $region33: #{lenet_forward.1} parent=0 // pred_fallthru
    _
  // Predicated region
  $region34: #{lenet_forward.1} parent=0 // pred_check
    _
  $region35: #{lenet_forward.1} parent=0 // pred_check_branch
    %33 = sbr.rel (0) target = $region37
  $region36: #{lenet_forward.1} parent=0 // pred_region
    _
  $region37: #{lenet_forward.1} parent=0 // pred_fallthru
    _
  // Predicated region
  $region38: #{lenet_forward.1} parent=0 // pred_check
    _
  $region39: #{lenet_forward.1} parent=0 // pred_check_branch
    %35 = sbr.rel (0) target = $region41
  $region40: #{lenet_forward.1} parent=0 // pred_region
    _
  $region41: #{lenet_forward.1} parent=0 // pred_fallthru
    _
  // Predicated region
  $region42: #{lenet_forward.1} parent=0 // pred_check
    _
  $region43: #{lenet_forward.1} parent=0 // pred_check_branch
    %37 = sbr.rel (0) target = $region45
  $region44: #{lenet_forward.1} parent=0 // pred_region
    _
  $region45: #{lenet_forward.1} parent=0 // pred_fallthru
    _
  %v39 = vld [vmem:[%s0] sm:$0xff]
  %v40 = vld [vmem:[%s0 + $0x8] sm:$0xff]
  %v41 = vld [vmem:[%s0 + $0x10] sm:$0xff]
  %v42 = vld [vmem:[%s0 + $0x20] sm:$0xff]
  %v43 = vld [vmem:[%s0 + $0x28] sm:$0xff]
  %v44 = vld [vmem:[%s0 + $0x30] sm:$0xff]
  %v45 = vld [vmem:[%s0 + $0x40] sm:$0xff]
  %v46 = vld [vmem:[%s0 + $0x48] sm:$0xff]
  %v47 = vld [vmem:[%s0 + $0x50] sm:$0xff]
  %v48 = vld [vmem:[%s0 + $0x60] sm:$0xff]
  %v49 = vld [vmem:[%s0 + $0x68] sm:$0xff]
  %v50 = vld [vmem:[%s0 + $0x70] sm:$0xff]
  %v51 = vld [vmem:[%s0 + $0x80] sm:$0xff]
  %v52 = vld [vmem:[%s0 + $0x88] sm:$0xff]
  %v53 = vld [vmem:[%s0 + $0x90] sm:$0xff]
  %v54 = vld [vmem:[%s0 + $0xa0] sm:$0xff]
  %v55 = vld [vmem:[%s0 + $0xa8] sm:$0xff]
  %v56 = vld [vmem:[%s0 + $0xb0] sm:$0xff]
  %v57 = vld [vmem:[%s0 + $0xc0] sm:$0xff]
  %v58 = vld [vmem:[%s0 + $0xc8] sm:$0xff]
  %v59 = vld [vmem:[%s0 + $0xd0] sm:$0xff]
  %v60 = vld [vmem:[%s0 + $0xe0] sm:$0xff]
  %v61 = vld [vmem:[%s0 + $0xe8] sm:$0xff]
  %v62 = vld [vmem:[%s0 + $0xf0] sm:$0xff]
  %v63 = vld [vmem:[%s0 + $0x100] sm:$0xff]
  %v64 = vld [vmem:[%s0 + $0x108] sm:$0xff]
  %v65 = vld [vmem:[%s0 + $0x110] sm:$0xff]
  %v66 = vld [vmem:[%s0 + $0x120] sm:$0xff]
  %v67 = vld [vmem:[%s0 + $0x128] sm:$0xff]
  %v68 = vld [vmem:[%s0 + $0x130] sm:$0xff]
  %v69 = vld [vmem:[%s0 + $0x140] sm:$0xff]
  %v70 = vld [vmem:[%s0 + $0x148] sm:$0xff]
  %v71 = vld [vmem:[%s0 + $0x150] sm:$0xff]
  %v72 = vld [vmem:[%s0 + $0x160] sm:$0xff]
  %v73 = vld [vmem:[%s0 + $0x168] sm:$0xff]
  %v74 = vld [vmem:[%s0 + $0x170] sm:$0xff]
  %v75 = vld [vmem:[%s0 + $0x180] sm:$0xff]
  %v76 = vld [vmem:[%s0 + $0x188] sm:$0xff]
  %v77 = vld [vmem:[%s0 + $0x190] sm:$0xff]
  %v78 = vld [vmem:[%s0 + $0x1a0] sm:$0xff]
  %v79 = vld [vmem:[%s0 + $0x1a8] sm:$0xff]
  %v80 = vld [vmem:[%s0 + $0x1b0] sm:$0xff]
  %v81 = vld [vmem:[%s0 + $0x1c0] sm:$0xff]
  %v82 = vld [vmem:[%s0 + $0x1c8] sm:$0xff]
  %v83 = vld [vmem:[%s0 + $0x1d0] sm:$0xff]
  %v84 = vld [vmem:[%s0 + $0x1e0] sm:$0xff]
  %v85 = vld [vmem:[%s0 + $0x1e8] sm:$0xff]
  %v86 = vld [vmem:[%s0 + $0x1f0] sm:$0xff]
  %v87 = vld [vmem:[%s0 + $0x200] sm:$0xff]
  %v88 = vld [vmem:[%s0 + $0x208] sm:$0xff]
  %v89 = vld [vmem:[%s0 + $0x210] sm:$0xff]
  %v90 = vld [vmem:[%s0 + $0x220] sm:$0xff]
  %v91 = vld [vmem:[%s0 + $0x228] sm:$0xff]
  %v92 = vld [vmem:[%s0 + $0x230] sm:$0xff]
  %v93 = vld [vmem:[%s0 + $0x240] sm:$0xff]
  %v94 = vld [vmem:[%s0 + $0x248] sm:$0xff]
  %v95 = vld [vmem:[%s0 + $0x250] sm:$0xff]
  %v96 = vld [vmem:[%s0 + $0x260] sm:$0xff]
  %v97 = vld [vmem:[%s0 + $0x268] sm:$0xff]
  %v98 = vld [vmem:[%s0 + $0x270] sm:$0xff]
  %v99 = vld [vmem:[%s0 + $0x280] sm:$0xff]
  %v100 = vld [vmem:[%s0 + $0x288] sm:$0xff]
  %v101 = vld [vmem:[%s0 + $0x290] sm:$0xff]
  %v102 = vld [vmem:[%s0 + $0x2a0] sm:$0xff]
  %v103 = vld [vmem:[%s0 + $0x2a8] sm:$0xff]
  %v104 = vld [vmem:[%s0 + $0x2b0] sm:$0xff]
  %v105 = vld [vmem:[%s0 + $0x2c0] sm:$0xff]
  %v106 = vld [vmem:[%s0 + $0x2c8] sm:$0xff]
  %v107 = vld [vmem:[%s0 + $0x2d0] sm:$0xff]
  %v108 = vld [vmem:[%s0 + $0x2e0] sm:$0xff]
  %v109 = vld [vmem:[%s0 + $0x2e8] sm:$0xff]
  %v110 = vld [vmem:[%s0 + $0x2f0] sm:$0xff]
  %v111 = vld [vmem:[%s0 + $0x300] sm:$0xff]
  %v112 = vld [vmem:[%s0 + $0x308] sm:$0xff]
  %v113 = vld [vmem:[%s0 + $0x310] sm:$0xff]
  %v114 = vld [vmem:[%s0 + $0x320] sm:$0xff]
  %v115 = vld [vmem:[%s0 + $0x328] sm:$0xff]
  %v116 = vld [vmem:[%s0 + $0x330] sm:$0xff]
  %v117 = vld [vmem:[%s0 + $0x340] sm:$0xff]
  %v118 = vld [vmem:[%s0 + $0x348] sm:$0xff]
  %v119 = vld [vmem:[%s0 + $0x350] sm:$0xff]
  %v120 = vld [vmem:[%s0 + $0x360] sm:$0xff]
  %v121 = vld [vmem:[%s0 + $0x368] sm:$0xff]
  %v122 = vld [vmem:[%s0 + $0x370] sm:$0xff]
  %v123 = vld [vmem:[%s0 + $0x380] sm:$0xff]
  %v124 = vld [vmem:[%s0 + $0x388] sm:$0xff]
  %v125 = vld [vmem:[%s0 + $0x390] sm:$0xff]
  %v126 = vld [vmem:[%s0 + $0x3a0] sm:$0xff]
  %v127 = vld [vmem:[%s0 + $0x3a8] sm:$0xff]
  %v128 = vld [vmem:[%s0 + $0x3b0] sm:$0xff]
  %v129 = vld [vmem:[%s0 + $0x3c0] sm:$0xff]
  %v130 = vld [vmem:[%s0 + $0x3c8] sm:$0xff]
  %v131 = vld [vmem:[%s0 + $0x3d0] sm:$0xff]
  %v132 = vld [vmem:[%s0 + $0x3e0] sm:$0xff]
  %v133 = vld [vmem:[%s0 + $0x3e8] sm:$0xff]
  %v134 = vld [vmem:[%s0 + $0x3f0] sm:$0xff]
  %v135 = vld [vmem:[%s1] sm:$0xff]
  %v136 = vld [vmem:[%s1 + $0x8] sm:$0xff]
  %v137 = vld [vmem:[%s1 + $0x10] sm:$0xff]
  %v138 = vld [vmem:[%s1 + $0x18] sm:$0xf]
  %s139 = scalar_lea.vmem %s1, 160
  %v140 = vld [vmem:[%s139] sm:$0xff]
  %v141 = vld [vmem:[%s139 + $0x8] sm:$0xff]
  %v142 = vld [vmem:[%s139 + $0x10] sm:$0xff]
  %v143 = vld [vmem:[%s139 + $0x18] sm:$0xf]
  %v144 = vld [vmem:[%s0 + $0x1] sm:$0xff]
  %v145 = vld [vmem:[%s0 + $0x9] sm:$0xff]
  %v146 = vld [vmem:[%s0 + $0x11] sm:$0xff]
  %v147 = vld [vmem:[%s0 + $0x21] sm:$0xff]
  %v148 = vld [vmem:[%s0 + $0x29] sm:$0xff]
  %v149 = vld [vmem:[%s0 + $0x31] sm:$0xff]
  %v150 = vld [vmem:[%s0 + $0x41] sm:$0xff]
  %v151 = vld [vmem:[%s0 + $0x49] sm:$0xff]
  %v152 = vld [vmem:[%s0 + $0x51] sm:$0xff]
  %v153 = vld [vmem:[%s0 + $0x61] sm:$0xff]
  %v154 = vld [vmem:[%s0 + $0x69] sm:$0xff]
  %v155 = vld [vmem:[%s0 + $0x71] sm:$0xff]
  %v156 = vld [vmem:[%s0 + $0x81] sm:$0xff]
  %v157 = vld [vmem:[%s0 + $0x89] sm:$0xff]
  %v158 = vld [vmem:[%s0 + $0x91] sm:$0xff]
  %v159 = vld [vmem:[%s0 + $0xa1] sm:$0xff]
  %v160 = vld [vmem:[%s0 + $0xa9] sm:$0xff]
  %v161 = vld [vmem:[%s0 + $0xb1] sm:$0xff]
  %v162 = vld [vmem:[%s0 + $0xc1] sm:$0xff]
  %v163 = vld [vmem:[%s0 + $0xc9] sm:$0xff]
  %v164 = vld [vmem:[%s0 + $0xd1] sm:$0xff]
  %v165 = vld [vmem:[%s0 + $0xe1] sm:$0xff]
  %v166 = vld [vmem:[%s0 + $0xe9] sm:$0xff]
  %v167 = vld [vmem:[%s0 + $0xf1] sm:$0xff]
  %v168 = vld [vmem:[%s0 + $0x101] sm:$0xff]
  %v169 = vld [vmem:[%s0 + $0x109] sm:$0xff]
  %v170 = vld [vmem:[%s0 + $0x111] sm:$0xff]
  %v171 = vld [vmem:[%s0 + $0x121] sm:$0xff]
  %v172 = vld [vmem:[%s0 + $0x129] sm:$0xff]
  %v173 = vld [vmem:[%s0 + $0x131] sm:$0xff]
  %v174 = vld [vmem:[%s0 + $0x141] sm:$0xff]
  %v175 = vld [vmem:[%s0 + $0x149] sm:$0xff]
  %v176 = vld [vmem:[%s0 + $0x151] sm:$0xff]
  %v177 = vld [vmem:[%s0 + $0x161] sm:$0xff]
  %v178 = vld [vmem:[%s0 + $0x169] sm:$0xff]
  %v179 = vld [vmem:[%s0 + $0x171] sm:$0xff]
  %v180 = vld [vmem:[%s0 + $0x181] sm:$0xff]
  %v181 = vld [vmem:[%s0 + $0x189] sm:$0xff]
  %v182 = vld [vmem:[%s0 + $0x191] sm:$0xff]
  %v183 = vld [vmem:[%s0 + $0x1a1] sm:$0xff]
  %v184 = vld [vmem:[%s0 + $0x1a9] sm:$0xff]
  %v185 = vld [vmem:[%s0 + $0x1b1] sm:$0xff]
  %v186 = vld [vmem:[%s0 + $0x1c1] sm:$0xff]
  %v187 = vld [vmem:[%s0 + $0x1c9] sm:$0xff]
  %v188 = vld [vmem:[%s0 + $0x1d1] sm:$0xff]
  %v189 = vld [vmem:[%s0 + $0x1e1] sm:$0xff]
  %v190 = vld [vmem:[%s0 + $0x1e9] sm:$0xff]
  %v191 = vld [vmem:[%s0 + $0x1f1] sm:$0xff]
  %v192 = vld [vmem:[%s0 + $0x201] sm:$0xff]
  %v193 = vld [vmem:[%s0 + $0x209] sm:$0xff]
  %v194 = vld [vmem:[%s0 + $0x211] sm:$0xff]
  %v195 = vld [vmem:[%s0 + $0x221] sm:$0xff]
  %v196 = vld [vmem:[%s0 + $0x229] sm:$0xff]
  %v197 = vld [vmem:[%s0 + $0x231] sm:$0xff]
  %v198 = vld [vmem:[%s0 + $0x241] sm:$0xff]
  %v199 = vld [vmem:[%s0 + $0x249] sm:$0xff]
  %v200 = vld [vmem:[%s0 + $0x251] sm:$0xff]
  %v201 = vld [vmem:[%s0 + $0x261] sm:$0xff]
  %v202 = vld [vmem:[%s0 + $0x269] sm:$0xff]
  %v203 = vld [vmem:[%s0 + $0x271] sm:$0xff]
  %v204 = vld [vmem:[%s0 + $0x281] sm:$0xff]
  %v205 = vld [vmem:[%s0 + $0x289] sm:$0xff]
  %v206 = vld [vmem:[%s0 + $0x291] sm:$0xff]
  %v207 = vld [vmem:[%s0 + $0x2a1] sm:$0xff]
  %v208 = vld [vmem:[%s0 + $0x2a9] sm:$0xff]
  %v209 = vld [vmem:[%s0 + $0x2b1] sm:$0xff]
  %v210 = vld [vmem:[%s0 + $0x2c1] sm:$0xff]
  %v211 = vld [vmem:[%s0 + $0x2c9] sm:$0xff]
  %v212 = vld [vmem:[%s0 + $0x2d1] sm:$0xff]
  %v213 = vld [vmem:[%s0 + $0x2e1] sm:$0xff]
  %v214 = vld [vmem:[%s0 + $0x2e9] sm:$0xff]
  %v215 = vld [vmem:[%s0 + $0x2f1] sm:$0xff]
  %v216 = vld [vmem:[%s0 + $0x301] sm:$0xff]
  %v217 = vld [vmem:[%s0 + $0x309] sm:$0xff]
  %v218 = vld [vmem:[%s0 + $0x311] sm:$0xff]
  %v219 = vld [vmem:[%s0 + $0x321] sm:$0xff]
  %v220 = vld [vmem:[%s0 + $0x329] sm:$0xff]
  %v221 = vld [vmem:[%s0 + $0x331] sm:$0xff]
  %v222 = vld [vmem:[%s0 + $0x341] sm:$0xff]
  %v223 = vld [vmem:[%s0 + $0x349] sm:$0xff]
  %v224 = vld [vmem:[%s0 + $0x351] sm:$0xff]
  %v225 = vld [vmem:[%s0 + $0x361] sm:$0xff]
  %v226 = vld [vmem:[%s0 + $0x369] sm:$0xff]
  %v227 = vld [vmem:[%s0 + $0x371] sm:$0xff]
  %v228 = vld [vmem:[%s0 + $0x381] sm:$0xff]
  %v229 = vld [vmem:[%s0 + $0x389] sm:$0xff]
  %v230 = vld [vmem:[%s0 + $0x391] sm:$0xff]
  %v231 = vld [vmem:[%s0 + $0x3a1] sm:$0xff]
  %v232 = vld [vmem:[%s0 + $0x3a9] sm:$0xff]
  %v233 = vld [vmem:[%s0 + $0x3b1] sm:$0xff]
  %v234 = vld [vmem:[%s0 + $0x3c1] sm:$0xff]
  %v235 = vld [vmem:[%s0 + $0x3c9] sm:$0xff]
  %v236 = vld [vmem:[%s0 + $0x3d1] sm:$0xff]
  %v237 = vld [vmem:[%s0 + $0x3e1] sm:$0xff]
  %v238 = vld [vmem:[%s0 + $0x3e9] sm:$0xff]
  %v239 = vld [vmem:[%s0 + $0x3f1] sm:$0xff]
  %s240 = scalar_lea.vmem %s1, 32
  %v241 = vld [vmem:[%s240] sm:$0xff]
  %v242 = vld [vmem:[%s240 + $0x8] sm:$0xff]
  %v243 = vld [vmem:[%s240 + $0x10] sm:$0xff]
  %v244 = vld [vmem:[%s240 + $0x18] sm:$0xf]
  %vm245 = vcmask 228352
  %v247 = vsel %vm245, %v144, 0
  %v250 = vsel %vm245, %v145, 0
  %v253 = vsel %vm245, %v146, 0
  %v256 = vsel %vm245, %v147, 0
  %v259 = vsel %vm245, %v148, 0
  %v262 = vsel %vm245, %v149, 0
  %v265 = vsel %vm245, %v150, 0
  %v268 = vsel %vm245, %v151, 0
  %v271 = vsel %vm245, %v152, 0
  %v274 = vsel %vm245, %v153, 0
  %v277 = vsel %vm245, %v154, 0
  %v280 = vsel %vm245, %v155, 0
  %v283 = vsel %vm245, %v156, 0
  %v286 = vsel %vm245, %v157, 0
  %v289 = vsel %vm245, %v158, 0
  %v292 = vsel %vm245, %v159, 0
  %v295 = vsel %vm245, %v160, 0
  %v298 = vsel %vm245, %v161, 0
  %v301 = vsel %vm245, %v162, 0
  %v304 = vsel %vm245, %v163, 0
  %v307 = vsel %vm245, %v164, 0
  %v310 = vsel %vm245, %v165, 0
  %v313 = vsel %vm245, %v166, 0
  %v316 = vsel %vm245, %v167, 0
  %v319 = vsel %vm245, %v168, 0
  %v322 = vsel %vm245, %v169, 0
  %v325 = vsel %vm245, %v170, 0
  %v328 = vsel %vm245, %v171, 0
  %v331 = vsel %vm245, %v172, 0
  %v334 = vsel %vm245, %v173, 0
  %v337 = vsel %vm245, %v174, 0
  %v340 = vsel %vm245, %v175, 0
  %v343 = vsel %vm245, %v176, 0
  %v346 = vsel %vm245, %v177, 0
  %v349 = vsel %vm245, %v178, 0
  %v352 = vsel %vm245, %v179, 0
  %v355 = vsel %vm245, %v180, 0
  %v358 = vsel %vm245, %v181, 0
  %v361 = vsel %vm245, %v182, 0
  %v364 = vsel %vm245, %v183, 0
  %v367 = vsel %vm245, %v184, 0
  %v370 = vsel %vm245, %v185, 0
  %v373 = vsel %vm245, %v186, 0
  %v376 = vsel %vm245, %v187, 0
  %v379 = vsel %vm245, %v188, 0
  %v382 = vsel %vm245, %v189, 0
  %v385 = vsel %vm245, %v190, 0
  %v388 = vsel %vm245, %v191, 0
  %v391 = vsel %vm245, %v192, 0
  %v394 = vsel %vm245, %v193, 0
  %v397 = vsel %vm245, %v194, 0
  %v400 = vsel %vm245, %v195, 0
  %v403 = vsel %vm245, %v196, 0
  %v406 = vsel %vm245, %v197, 0
  %v409 = vsel %vm245, %v198, 0
  %v412 = vsel %vm245, %v199, 0
  %v415 = vsel %vm245, %v200, 0
  %v418 = vsel %vm245, %v201, 0
  %v421 = vsel %vm245, %v202, 0
  %v424 = vsel %vm245, %v203, 0
  %v427 = vsel %vm245, %v204, 0
  %v430 = vsel %vm245, %v205, 0
  %v433 = vsel %vm245, %v206, 0
  %v436 = vsel %vm245, %v207, 0
  %v439 = vsel %vm245, %v208, 0
  %v442 = vsel %vm245, %v209, 0
  %v445 = vsel %vm245, %v210, 0
  %v448 = vsel %vm245, %v211, 0
  %v451 = vsel %vm245, %v212, 0
  %v454 = vsel %vm245, %v213, 0
  %v457 = vsel %vm245, %v214, 0
  %v460 = vsel %vm245, %v215, 0
  %v463 = vsel %vm245, %v216, 0
  %v466 = vsel %vm245, %v217, 0
  %v469 = vsel %vm245, %v218, 0
  %v472 = vsel %vm245, %v219, 0
  %v475 = vsel %vm245, %v220, 0
  %v478 = vsel %vm245, %v221, 0
  %v481 = vsel %vm245, %v222, 0
  %v484 = vsel %vm245, %v223, 0
  %v487 = vsel %vm245, %v224, 0
  %v490 = vsel %vm245, %v225, 0
  %v493 = vsel %vm245, %v226, 0
  %v496 = vsel %vm245, %v227, 0
  %v499 = vsel %vm245, %v228, 0
  %v502 = vsel %vm245, %v229, 0
  %v505 = vsel %vm245, %v230, 0
  %v508 = vsel %vm245, %v231, 0
  %v511 = vsel %vm245, %v232, 0
  %v514 = vsel %vm245, %v233, 0
  %v517 = vsel %vm245, %v234, 0
  %v520 = vsel %vm245, %v235, 0
  %v523 = vsel %vm245, %v236, 0
  %v526 = vsel %vm245, %v237, 0
  %v529 = vsel %vm245, %v238, 0
  %v532 = vsel %vm245, %v239, 0
  %vm534 = vcmask 1043456
  %v536 = vsel %vm534, %v244, 0
  %538 = vmatpush.msra.mxu0 0.0
  %539 = vmatpush.msra.mxu0 0.0
  %540 = vmatpush.msra.mxu0 0.0
  %541 = vmatpush.msra.mxu0 0.0
  %542 = vmatpush.msra.mxu0 0.0
  %543 = vmatpush.msra.mxu0 0.0
  %544 = vmatpush.msra.mxu0 0.0
  %545 = vmatpush.msra.mxu0 0.0
  %546 = vmatpush.msra.mxu0 0.0
  %547 = vmatpush.msra.mxu0 0.0
  %548 = vmatpush.msra.mxu0 0.0
  %549 = vmatpush.msra.mxu0 0.0
  %550 = vmatpush.msra.mxu0 %v536
  %551 = vmatpush.msra.mxu0 %v243
  %552 = vmatpush.msra.mxu0 %v242
  %553 = vmatpush.msra.mxu0 %v241
  %554 = vmatmul.f32.gmra.mxu0 %v247
  %v555 = vpop.f32.mrf.mxu0
  %v556 = vadd.f32 0.0, %v555
  %557 = vmatmul.f32.gmra.mxu0 %v250
  %v558 = vpop.f32.mrf.mxu0
  %v559 = vadd.f32 0.0, %v558
  %560 = vmatmul.f32.gmra.mxu0 %v253
  %v561 = vpop.f32.mrf.mxu0
  %v562 = vadd.f32 0.0, %v561
  %563 = vmatmul.f32.gmra.mxu0 %v256
  %v564 = vpop.f32.mrf.mxu0
  %v565 = vadd.f32 0.0, %v564
  %566 = vmatmul.f32.gmra.mxu0 %v259
  %v567 = vpop.f32.mrf.mxu0
  %v568 = vadd.f32 0.0, %v567
  %569 = vmatmul.f32.gmra.mxu0 %v262
  %v570 = vpop.f32.mrf.mxu0
  %v571 = vadd.f32 0.0, %v570
  %572 = vmatmul.f32.gmra.mxu0 %v265
  %v573 = vpop.f32.mrf.mxu0
  %v574 = vadd.f32 0.0, %v573
  %575 = vmatmul.f32.gmra.mxu0 %v268
  %v576 = vpop.f32.mrf.mxu0
  %v577 = vadd.f32 0.0, %v576
  %578 = vmatmul.f32.gmra.mxu0 %v271
  %v579 = vpop.f32.mrf.mxu0
  %v580 = vadd.f32 0.0, %v579
  %581 = vmatmul.f32.gmra.mxu0 %v274
  %v582 = vpop.f32.mrf.mxu0
  %v583 = vadd.f32 0.0, %v582
  %584 = vmatmul.f32.gmra.mxu0 %v277
  %v585 = vpop.f32.mrf.mxu0
  %v586 = vadd.f32 0.0, %v585
  %587 = vmatmul.f32.gmra.mxu0 %v280
  %v588 = vpop.f32.mrf.mxu0
  %v589 = vadd.f32 0.0, %v588
  %590 = vmatmul.f32.gmra.mxu0 %v283
  %v591 = vpop.f32.mrf.mxu0
  %v592 = vadd.f32 0.0, %v591
  %593 = vmatmul.f32.gmra.mxu0 %v286
  %v594 = vpop.f32.mrf.mxu0
  %v595 = vadd.f32 0.0, %v594
  %596 = vmatmul.f32.gmra.mxu0 %v289
  %v597 = vpop.f32.mrf.mxu0
  %v598 = vadd.f32 0.0, %v597
  %599 = vmatmul.f32.gmra.mxu0 %v292
  %v600 = vpop.f32.mrf.mxu0
  %v601 = vadd.f32 0.0, %v600
  %602 = vmatmul.f32.gmra.mxu0 %v295
  %v603 = vpop.f32.mrf.mxu0
  %v604 = vadd.f32 0.0, %v603
  %605 = vmatmul.f32.gmra.mxu0 %v298
  %v606 = vpop.f32.mrf.mxu0
  %v607 = vadd.f32 0.0, %v606
  %608 = vmatmul.f32.gmra.mxu0 %v301
  %v609 = vpop.f32.mrf.mxu0
  %v610 = vadd.f32 0.0, %v609
  %611 = vmatmul.f32.gmra.mxu0 %v304
  %v612 = vpop.f32.mrf.mxu0
  %v613 = vadd.f32 0.0, %v612
  %614 = vmatmul.f32.gmra.mxu0 %v307
  %v615 = vpop.f32.mrf.mxu0
  %v616 = vadd.f32 0.0, %v615
  %617 = vmatmul.f32.gmra.mxu0 %v310
  %v618 = vpop.f32.mrf.mxu0
  %v619 = vadd.f32 0.0, %v618
  %620 = vmatmul.f32.gmra.mxu0 %v313
  %v621 = vpop.f32.mrf.mxu0
  %v622 = vadd.f32 0.0, %v621
  %623 = vmatmul.f32.gmra.mxu0 %v316
  %v624 = vpop.f32.mrf.mxu0
  %v625 = vadd.f32 0.0, %v624
  %626 = vmatmul.f32.gmra.mxu0 %v319
  %v627 = vpop.f32.mrf.mxu0
  %v628 = vadd.f32 0.0, %v627
  %629 = vmatmul.f32.gmra.mxu0 %v322
  %v630 = vpop.f32.mrf.mxu0
  %v631 = vadd.f32 0.0, %v630
  %632 = vmatmul.f32.gmra.mxu0 %v325
  %v633 = vpop.f32.mrf.mxu0
  %v634 = vadd.f32 0.0, %v633
  %635 = vmatmul.f32.gmra.mxu0 %v328
  %v636 = vpop.f32.mrf.mxu0
  %v637 = vadd.f32 0.0, %v636
  %638 = vmatmul.f32.gmra.mxu0 %v331
  %v639 = vpop.f32.mrf.mxu0
  %v640 = vadd.f32 0.0, %v639
  %641 = vmatmul.f32.gmra.mxu0 %v334
  %v642 = vpop.f32.mrf.mxu0
  %v643 = vadd.f32 0.0, %v642
  %644 = vmatmul.f32.gmra.mxu0 %v337
  %v645 = vpop.f32.mrf.mxu0
  %v646 = vadd.f32 0.0, %v645
  %647 = vmatmul.f32.gmra.mxu0 %v340
  %v648 = vpop.f32.mrf.mxu0
  %v649 = vadd.f32 0.0, %v648
  %650 = vmatmul.f32.gmra.mxu0 %v343
  %v651 = vpop.f32.mrf.mxu0
  %v652 = vadd.f32 0.0, %v651
  %653 = vmatmul.f32.gmra.mxu0 %v346
  %v654 = vpop.f32.mrf.mxu0
  %v655 = vadd.f32 0.0, %v654
  %656 = vmatmul.f32.gmra.mxu0 %v349
  %v657 = vpop.f32.mrf.mxu0
  %v658 = vadd.f32 0.0, %v657
  %659 = vmatmul.f32.gmra.mxu0 %v352
  %v660 = vpop.f32.mrf.mxu0
  %v661 = vadd.f32 0.0, %v660
  %662 = vmatmul.f32.gmra.mxu0 %v355
  %v663 = vpop.f32.mrf.mxu0
  %v664 = vadd.f32 0.0, %v663
  %665 = vmatmul.f32.gmra.mxu0 %v358
  %v666 = vpop.f32.mrf.mxu0
  %v667 = vadd.f32 0.0, %v666
  %668 = vmatmul.f32.gmra.mxu0 %v361
  %v669 = vpop.f32.mrf.mxu0
  %v670 = vadd.f32 0.0, %v669
  %671 = vmatmul.f32.gmra.mxu0 %v364
  %v672 = vpop.f32.mrf.mxu0
  %v673 = vadd.f32 0.0, %v672
  %674 = vmatmul.f32.gmra.mxu0 %v367
  %v675 = vpop.f32.mrf.mxu0
  %v676 = vadd.f32 0.0, %v675
  %677 = vmatmul.f32.gmra.mxu0 %v370
  %v678 = vpop.f32.mrf.mxu0
  %v679 = vadd.f32 0.0, %v678
  %680 = vmatmul.f32.gmra.mxu0 %v373
  %v681 = vpop.f32.mrf.mxu0
  %v682 = vadd.f32 0.0, %v681
  %683 = vmatmul.f32.gmra.mxu0 %v376
  %v684 = vpop.f32.mrf.mxu0
  %v685 = vadd.f32 0.0, %v684
  %686 = vmatmul.f32.gmra.mxu0 %v379
  %v687 = vpop.f32.mrf.mxu0
  %v688 = vadd.f32 0.0, %v687
  %689 = vmatmul.f32.gmra.mxu0 %v382
  %v690 = vpop.f32.mrf.mxu0
  %v691 = vadd.f32 0.0, %v690
  %692 = vmatmul.f32.gmra.mxu0 %v385
  %v693 = vpop.f32.mrf.mxu0
  %v694 = vadd.f32 0.0, %v693
  %695 = vmatmul.f32.gmra.mxu0 %v388
  %v696 = vpop.f32.mrf.mxu0
  %v697 = vadd.f32 0.0, %v696
  %698 = vmatmul.f32.gmra.mxu0 %v391
  %v699 = vpop.f32.mrf.mxu0
  %v700 = vadd.f32 0.0, %v699
  %701 = vmatmul.f32.gmra.mxu0 %v394
  %v702 = vpop.f32.mrf.mxu0
  %v703 = vadd.f32 0.0, %v702
  %704 = vmatmul.f32.gmra.mxu0 %v397
  %v705 = vpop.f32.mrf.mxu0
  %v706 = vadd.f32 0.0, %v705
  %707 = vmatmul.f32.gmra.mxu0 %v400
  %v708 = vpop.f32.mrf.mxu0
  %v709 = vadd.f32 0.0, %v708
  %710 = vmatmul.f32.gmra.mxu0 %v403
  %v711 = vpop.f32.mrf.mxu0
  %v712 = vadd.f32 0.0, %v711
  %713 = vmatmul.f32.gmra.mxu0 %v406
  %v714 = vpop.f32.mrf.mxu0
  %v715 = vadd.f32 0.0, %v714
  %716 = vmatmul.f32.gmra.mxu0 %v409
  %v717 = vpop.f32.mrf.mxu0
  %v718 = vadd.f32 0.0, %v717
  %719 = vmatmul.f32.gmra.mxu0 %v412
  %v720 = vpop.f32.mrf.mxu0
  %v721 = vadd.f32 0.0, %v720
  %722 = vmatmul.f32.gmra.mxu0 %v415
  %v723 = vpop.f32.mrf.mxu0
  %v724 = vadd.f32 0.0, %v723
  %725 = vmatmul.f32.gmra.mxu0 %v418
  %v726 = vpop.f32.mrf.mxu0
  %v727 = vadd.f32 0.0, %v726
  %728 = vmatmul.f32.gmra.mxu0 %v421
  %v729 = vpop.f32.mrf.mxu0
  %v730 = vadd.f32 0.0, %v729
  %731 = vmatmul.f32.gmra.mxu0 %v424
  %v732 = vpop.f32.mrf.mxu0
  %v733 = vadd.f32 0.0, %v732
  %734 = vmatmul.f32.gmra.mxu0 %v427
  %v735 = vpop.f32.mrf.mxu0
  %v736 = vadd.f32 0.0, %v735
  %737 = vmatmul.f32.gmra.mxu0 %v430
  %v738 = vpop.f32.mrf.mxu0
  %v739 = vadd.f32 0.0, %v738
  %740 = vmatmul.f32.gmra.mxu0 %v433
  %v741 = vpop.f32.mrf.mxu0
  %v742 = vadd.f32 0.0, %v741
  %743 = vmatmul.f32.gmra.mxu0 %v436
  %v744 = vpop.f32.mrf.mxu0
  %v745 = vadd.f32 0.0, %v744
  %746 = vmatmul.f32.gmra.mxu0 %v439
  %v747 = vpop.f32.mrf.mxu0
  %v748 = vadd.f32 0.0, %v747
  %749 = vmatmul.f32.gmra.mxu0 %v442
  %v750 = vpop.f32.mrf.mxu0
  %v751 = vadd.f32 0.0, %v750
  %752 = vmatmul.f32.gmra.mxu0 %v445
  %v753 = vpop.f32.mrf.mxu0
  %v754 = vadd.f32 0.0, %v753
  %755 = vmatmul.f32.gmra.mxu0 %v448
  %v756 = vpop.f32.mrf.mxu0
  %v757 = vadd.f32 0.0, %v756
  %758 = vmatmul.f32.gmra.mxu0 %v451
  %v759 = vpop.f32.mrf.mxu0
  %v760 = vadd.f32 0.0, %v759
  %761 = vmatmul.f32.gmra.mxu0 %v454
  %v762 = vpop.f32.mrf.mxu0
  %v763 = vadd.f32 0.0, %v762
  %764 = vmatmul.f32.gmra.mxu0 %v457
  %v765 = vpop.f32.mrf.mxu0
  %v766 = vadd.f32 0.0, %v765
  %767 = vmatmul.f32.gmra.mxu0 %v460
  %v768 = vpop.f32.mrf.mxu0
  %v769 = vadd.f32 0.0, %v768
  %770 = vmatmul.f32.gmra.mxu0 %v463
  %v771 = vpop.f32.mrf.mxu0
  %v772 = vadd.f32 0.0, %v771
  %773 = vmatmul.f32.gmra.mxu0 %v466
  %v774 = vpop.f32.mrf.mxu0
  %v775 = vadd.f32 0.0, %v774
  %776 = vmatmul.f32.gmra.mxu0 %v469
  %v777 = vpop.f32.mrf.mxu0
  %v778 = vadd.f32 0.0, %v777
  %779 = vmatmul.f32.gmra.mxu0 %v472
  %v780 = vpop.f32.mrf.mxu0
  %v781 = vadd.f32 0.0, %v780
  %782 = vmatmul.f32.gmra.mxu0 %v475
  %v783 = vpop.f32.mrf.mxu0
  %v784 = vadd.f32 0.0, %v783
  %785 = vmatmul.f32.gmra.mxu0 %v478
  %v786 = vpop.f32.mrf.mxu0
  %v787 = vadd.f32 0.0, %v786
  %788 = vmatmul.f32.gmra.mxu0 %v481
  %v789 = vpop.f32.mrf.mxu0
  %v790 = vadd.f32 0.0, %v789
  %791 = vmatmul.f32.gmra.mxu0 %v484
  %v792 = vpop.f32.mrf.mxu0
  %v793 = vadd.f32 0.0, %v792
  %794 = vmatmul.f32.gmra.mxu0 %v487
  %v795 = vpop.f32.mrf.mxu0
  %v796 = vadd.f32 0.0, %v795
  %797 = vmatmul.f32.gmra.mxu0 %v490
  %v798 = vpop.f32.mrf.mxu0
  %v799 = vadd.f32 0.0, %v798
  %800 = vmatmul.f32.gmra.mxu0 %v493
  %v801 = vpop.f32.mrf.mxu0
  %v802 = vadd.f32 0.0, %v801
  %803 = vmatmul.f32.gmra.mxu0 %v496
  %v804 = vpop.f32.mrf.mxu0
  %v805 = vadd.f32 0.0, %v804
  %806 = vmatmul.f32.gmra.mxu0 %v499
  %v807 = vpop.f32.mrf.mxu0
  %v808 = vadd.f32 0.0, %v807
  %809 = vmatmul.f32.gmra.mxu0 %v502
  %v810 = vpop.f32.mrf.mxu0
  %v811 = vadd.f32 0.0, %v810
  %812 = vmatmul.f32.gmra.mxu0 %v505
  %v813 = vpop.f32.mrf.mxu0
  %v814 = vadd.f32 0.0, %v813
  %815 = vmatmul.f32.gmra.mxu0 %v508
  %v816 = vpop.f32.mrf.mxu0
  %v817 = vadd.f32 0.0, %v816
  %818 = vmatmul.f32.gmra.mxu0 %v511
  %v819 = vpop.f32.mrf.mxu0
  %v820 = vadd.f32 0.0, %v819
  %821 = vmatmul.f32.gmra.mxu0 %v514
  %v822 = vpop.f32.mrf.mxu0
  %v823 = vadd.f32 0.0, %v822
  %824 = vmatmul.f32.gmra.mxu0 %v517
  %v825 = vpop.f32.mrf.mxu0
  %v826 = vadd.f32 0.0, %v825
  %827 = vmatmul.f32.gmra.mxu0 %v520
  %v828 = vpop.f32.mrf.mxu0
  %v829 = vadd.f32 0.0, %v828
  %830 = vmatmul.f32.gmra.mxu0 %v523
  %v831 = vpop.f32.mrf.mxu0
  %v832 = vadd.f32 0.0, %v831
  %833 = vmatmul.f32.gmra.mxu0 %v526
  %v834 = vpop.f32.mrf.mxu0
  %v835 = vadd.f32 0.0, %v834
  %836 = vmatmul.f32.gmra.mxu0 %v529
  %v837 = vpop.f32.mrf.mxu0
  %v838 = vadd.f32 0.0, %v837
  %839 = vmatmul.f32.gmra.mxu0 %v532
  %v840 = vpop.f32.mrf.mxu0
  %v841 = vadd.f32 0.0, %v840
  %842 = vdwg.mxu0
  %v844 = vsel %vm245, %v39, 0
  %v847 = vsel %vm245, %v40, 0
  %v850 = vsel %vm245, %v41, 0
  %v853 = vsel %vm245, %v42, 0
  %v856 = vsel %vm245, %v43, 0
  %v859 = vsel %vm245, %v44, 0
  %v862 = vsel %vm245, %v45, 0
  %v865 = vsel %vm245, %v46, 0
  %v868 = vsel %vm245, %v47, 0
  %v871 = vsel %vm245, %v48, 0
  %v874 = vsel %vm245, %v49, 0
  %v877 = vsel %vm245, %v50, 0
  %v880 = vsel %vm245, %v51, 0
  %v883 = vsel %vm245, %v52, 0
  %v886 = vsel %vm245, %v53, 0
  %v889 = vsel %vm245, %v54, 0
  %v892 = vsel %vm245, %v55, 0
  %v895 = vsel %vm245, %v56, 0
  %v898 = vsel %vm245, %v57, 0
  %v901 = vsel %vm245, %v58, 0
  %v904 = vsel %vm245, %v59, 0
  %v907 = vsel %vm245, %v60, 0
  %v910 = vsel %vm245, %v61, 0
  %v913 = vsel %vm245, %v62, 0
  %v916 = vsel %vm245, %v63, 0
  %v919 = vsel %vm245, %v64, 0
  %v922 = vsel %vm245, %v65, 0
  %v925 = vsel %vm245, %v66, 0
  %v928 = vsel %vm245, %v67, 0
  %v931 = vsel %vm245, %v68, 0
  %v934 = vsel %vm245, %v69, 0
  %v937 = vsel %vm245, %v70, 0
  %v940 = vsel %vm245, %v71, 0
  %v943 = vsel %vm245, %v72, 0
  %v946 = vsel %vm245, %v73, 0
  %v949 = vsel %vm245, %v74, 0
  %v952 = vsel %vm245, %v75, 0
  %v955 = vsel %vm245, %v76, 0
  %v958 = vsel %vm245, %v77, 0
  %v961 = vsel %vm245, %v78, 0
  %v964 = vsel %vm245, %v79, 0
  %v967 = vsel %vm245, %v80, 0
  %v970 = vsel %vm245, %v81, 0
  %v973 = vsel %vm245, %v82, 0
  %v976 = vsel %vm245, %v83, 0
  %v979 = vsel %vm245, %v84, 0
  %v982 = vsel %vm245, %v85, 0
  %v985 = vsel %vm245, %v86, 0
  %v988 = vsel %vm245, %v87, 0
  %v991 = vsel %vm245, %v88, 0
  %v994 = vsel %vm245, %v89, 0
  %v997 = vsel %vm245, %v90, 0
  %v1000 = vsel %vm245, %v91, 0
  %v1003 = vsel %vm245, %v92, 0
  %v1006 = vsel %vm245, %v93, 0
  %v1009 = vsel %vm245, %v94, 0
  %v1012 = vsel %vm245, %v95, 0
  %v1015 = vsel %vm245, %v96, 0
  %v1018 = vsel %vm245, %v97, 0
  %v1021 = vsel %vm245, %v98, 0
  %v1024 = vsel %vm245, %v99, 0
  %v1027 = vsel %vm245, %v100, 0
  %v1030 = vsel %vm245, %v101, 0
  %v1033 = vsel %vm245, %v102, 0
  %v1036 = vsel %vm245, %v103, 0
  %v1039 = vsel %vm245, %v104, 0
  %v1042 = vsel %vm245, %v105, 0
  %v1045 = vsel %vm245, %v106, 0
  %v1048 = vsel %vm245, %v107, 0
  %v1051 = vsel %vm245, %v108, 0
  %v1054 = vsel %vm245, %v109, 0
  %v1057 = vsel %vm245, %v110, 0
  %v1060 = vsel %vm245, %v111, 0
  %v1063 = vsel %vm245, %v112, 0
  %v1066 = vsel %vm245, %v113, 0
  %v1069 = vsel %vm245, %v114, 0
  %v1072 = vsel %vm245, %v115, 0
  %v1075 = vsel %vm245, %v116, 0
  %v1078 = vsel %vm245, %v117, 0
  %v1081 = vsel %vm245, %v118, 0
  %v1084 = vsel %vm245, %v119, 0
  %v1087 = vsel %vm245, %v120, 0
  %v1090 = vsel %vm245, %v121, 0
  %v1093 = vsel %vm245, %v122, 0
  %v1096 = vsel %vm245, %v123, 0
  %v1099 = vsel %vm245, %v124, 0
  %v1102 = vsel %vm245, %v125, 0
  %v1105 = vsel %vm245, %v126, 0
  %v1108 = vsel %vm245, %v127, 0
  %v1111 = vsel %vm245, %v128, 0
  %v1114 = vsel %vm245, %v129, 0
  %v1117 = vsel %vm245, %v130, 0
  %v1120 = vsel %vm245, %v131, 0
  %v1123 = vsel %vm245, %v132, 0
  %v1126 = vsel %vm245, %v133, 0
  %v1129 = vsel %vm245, %v134, 0
  %v1132 = vsel %vm534, %v138, 0
  %1134 = vmatpush.msra.mxu0 0.0
  %1135 = vmatpush.msra.mxu0 0.0
  %1136 = vmatpush.msra.mxu0 0.0
  %1137 = vmatpush.msra.mxu0 0.0
  %1138 = vmatpush.msra.mxu0 0.0
  %1139 = vmatpush.msra.mxu0 0.0
  %1140 = vmatpush.msra.mxu0 0.0
  %1141 = vmatpush.msra.mxu0 0.0
  %1142 = vmatpush.msra.mxu0 0.0
  %1143 = vmatpush.msra.mxu0 0.0
  %1144 = vmatpush.msra.mxu0 0.0
  %1145 = vmatpush.msra.mxu0 0.0
  %1146 = vmatpush.msra.mxu0 %v1132
  %1147 = vmatpush.msra.mxu0 %v137
  %1148 = vmatpush.msra.mxu0 %v136
  %1149 = vmatpush.msra.mxu0 %v135
  %1150 = vmatmul.f32.gmra.mxu0 %v844
  %v1151 = vpop.f32.mrf.mxu0
  %v1152 = vadd.f32 %v556, %v1151
  %1153 = vmatmul.f32.gmra.mxu0 %v847
  %v1154 = vpop.f32.mrf.mxu0
  %v1155 = vadd.f32 %v559, %v1154
  %1156 = vmatmul.f32.gmra.mxu0 %v850
  %v1157 = vpop.f32.mrf.mxu0
  %v1158 = vadd.f32 %v562, %v1157
  %1159 = vmatmul.f32.gmra.mxu0 %v853
  %v1160 = vpop.f32.mrf.mxu0
  %v1161 = vadd.f32 %v565, %v1160
  %1162 = vmatmul.f32.gmra.mxu0 %v856
  %v1163 = vpop.f32.mrf.mxu0
  %v1164 = vadd.f32 %v568, %v1163
  %1165 = vmatmul.f32.gmra.mxu0 %v859
  %v1166 = vpop.f32.mrf.mxu0
  %v1167 = vadd.f32 %v571, %v1166
  %1168 = vmatmul.f32.gmra.mxu0 %v862
  %v1169 = vpop.f32.mrf.mxu0
  %v1170 = vadd.f32 %v574, %v1169
  %1171 = vmatmul.f32.gmra.mxu0 %v865
  %v1172 = vpop.f32.mrf.mxu0
  %v1173 = vadd.f32 %v577, %v1172
  %1174 = vmatmul.f32.gmra.mxu0 %v868
  %v1175 = vpop.f32.mrf.mxu0
  %v1176 = vadd.f32 %v580, %v1175
  %1177 = vmatmul.f32.gmra.mxu0 %v871
  %v1178 = vpop.f32.mrf.mxu0
  %v1179 = vadd.f32 %v583, %v1178
  %1180 = vmatmul.f32.gmra.mxu0 %v874
  %v1181 = vpop.f32.mrf.mxu0
  %v1182 = vadd.f32 %v586, %v1181
  %1183 = vmatmul.f32.gmra.mxu0 %v877
  %v1184 = vpop.f32.mrf.mxu0
  %v1185 = vadd.f32 %v589, %v1184
  %1186 = vmatmul.f32.gmra.mxu0 %v880
  %v1187 = vpop.f32.mrf.mxu0
  %v1188 = vadd.f32 %v592, %v1187
  %1189 = vmatmul.f32.gmra.mxu0 %v883
  %v1190 = vpop.f32.mrf.mxu0
  %v1191 = vadd.f32 %v595, %v1190
  %1192 = vmatmul.f32.gmra.mxu0 %v886
  %v1193 = vpop.f32.mrf.mxu0
  %v1194 = vadd.f32 %v598, %v1193
  %1195 = vmatmul.f32.gmra.mxu0 %v889
  %v1196 = vpop.f32.mrf.mxu0
  %v1197 = vadd.f32 %v601, %v1196
  %1198 = vmatmul.f32.gmra.mxu0 %v892
  %v1199 = vpop.f32.mrf.mxu0
  %v1200 = vadd.f32 %v604, %v1199
  %1201 = vmatmul.f32.gmra.mxu0 %v895
  %v1202 = vpop.f32.mrf.mxu0
  %v1203 = vadd.f32 %v607, %v1202
  %1204 = vmatmul.f32.gmra.mxu0 %v898
  %v1205 = vpop.f32.mrf.mxu0
  %v1206 = vadd.f32 %v610, %v1205
  %1207 = vmatmul.f32.gmra.mxu0 %v901
  %v1208 = vpop.f32.mrf.mxu0
  %v1209 = vadd.f32 %v613, %v1208
  %1210 = vmatmul.f32.gmra.mxu0 %v904
  %v1211 = vpop.f32.mrf.mxu0
  %v1212 = vadd.f32 %v616, %v1211
  %1213 = vmatmul.f32.gmra.mxu0 %v907
  %v1214 = vpop.f32.mrf.mxu0
  %v1215 = vadd.f32 %v619, %v1214
  %1216 = vmatmul.f32.gmra.mxu0 %v910
  %v1217 = vpop.f32.mrf.mxu0
  %v1218 = vadd.f32 %v622, %v1217
  %1219 = vmatmul.f32.gmra.mxu0 %v913
  %v1220 = vpop.f32.mrf.mxu0
  %v1221 = vadd.f32 %v625, %v1220
  %1222 = vmatmul.f32.gmra.mxu0 %v916
  %v1223 = vpop.f32.mrf.mxu0
  %v1224 = vadd.f32 %v628, %v1223
  %1225 = vmatmul.f32.gmra.mxu0 %v919
  %v1226 = vpop.f32.mrf.mxu0
  %v1227 = vadd.f32 %v631, %v1226
  %1228 = vmatmul.f32.gmra.mxu0 %v922
  %v1229 = vpop.f32.mrf.mxu0
  %v1230 = vadd.f32 %v634, %v1229
  %1231 = vmatmul.f32.gmra.mxu0 %v925
  %v1232 = vpop.f32.mrf.mxu0
  %v1233 = vadd.f32 %v637, %v1232
  %1234 = vmatmul.f32.gmra.mxu0 %v928
  %v1235 = vpop.f32.mrf.mxu0
  %v1236 = vadd.f32 %v640, %v1235
  %1237 = vmatmul.f32.gmra.mxu0 %v931
  %v1238 = vpop.f32.mrf.mxu0
  %v1239 = vadd.f32 %v643, %v1238
  %1240 = vmatmul.f32.gmra.mxu0 %v934
  %v1241 = vpop.f32.mrf.mxu0
  %v1242 = vadd.f32 %v646, %v1241
  %1243 = vmatmul.f32.gmra.mxu0 %v937
  %v1244 = vpop.f32.mrf.mxu0
  %v1245 = vadd.f32 %v649, %v1244
  %1246 = vmatmul.f32.gmra.mxu0 %v940
  %v1247 = vpop.f32.mrf.mxu0
  %v1248 = vadd.f32 %v652, %v1247
  %1249 = vmatmul.f32.gmra.mxu0 %v943
  %v1250 = vpop.f32.mrf.mxu0
  %v1251 = vadd.f32 %v655, %v1250
  %1252 = vmatmul.f32.gmra.mxu0 %v946
  %v1253 = vpop.f32.mrf.mxu0
  %v1254 = vadd.f32 %v658, %v1253
  %1255 = vmatmul.f32.gmra.mxu0 %v949
  %v1256 = vpop.f32.mrf.mxu0
  %v1257 = vadd.f32 %v661, %v1256
  %1258 = vmatmul.f32.gmra.mxu0 %v952
  %v1259 = vpop.f32.mrf.mxu0
  %v1260 = vadd.f32 %v664, %v1259
  %1261 = vmatmul.f32.gmra.mxu0 %v955
  %v1262 = vpop.f32.mrf.mxu0
  %v1263 = vadd.f32 %v667, %v1262
  %1264 = vmatmul.f32.gmra.mxu0 %v958
  %v1265 = vpop.f32.mrf.mxu0
  %v1266 = vadd.f32 %v670, %v1265
  %1267 = vmatmul.f32.gmra.mxu0 %v961
  %v1268 = vpop.f32.mrf.mxu0
  %v1269 = vadd.f32 %v673, %v1268
  %1270 = vmatmul.f32.gmra.mxu0 %v964
  %v1271 = vpop.f32.mrf.mxu0
  %v1272 = vadd.f32 %v676, %v1271
  %1273 = vmatmul.f32.gmra.mxu0 %v967
  %v1274 = vpop.f32.mrf.mxu0
  %v1275 = vadd.f32 %v679, %v1274
  %1276 = vmatmul.f32.gmra.mxu0 %v970
  %v1277 = vpop.f32.mrf.mxu0
  %v1278 = vadd.f32 %v682, %v1277
  %1279 = vmatmul.f32.gmra.mxu0 %v973
  %v1280 = vpop.f32.mrf.mxu0
  %v1281 = vadd.f32 %v685, %v1280
  %1282 = vmatmul.f32.gmra.mxu0 %v976
  %v1283 = vpop.f32.mrf.mxu0
  %v1284 = vadd.f32 %v688, %v1283
  %1285 = vmatmul.f32.gmra.mxu0 %v979
  %v1286 = vpop.f32.mrf.mxu0
  %v1287 = vadd.f32 %v691, %v1286
  %1288 = vmatmul.f32.gmra.mxu0 %v982
  %v1289 = vpop.f32.mrf.mxu0
  %v1290 = vadd.f32 %v694, %v1289
  %1291 = vmatmul.f32.gmra.mxu0 %v985
  %v1292 = vpop.f32.mrf.mxu0
  %v1293 = vadd.f32 %v697, %v1292
  %1294 = vmatmul.f32.gmra.mxu0 %v988
  %v1295 = vpop.f32.mrf.mxu0
  %v1296 = vadd.f32 %v700, %v1295
  %1297 = vmatmul.f32.gmra.mxu0 %v991
  %v1298 = vpop.f32.mrf.mxu0
  %v1299 = vadd.f32 %v703, %v1298
  %1300 = vmatmul.f32.gmra.mxu0 %v994
  %v1301 = vpop.f32.mrf.mxu0
  %v1302 = vadd.f32 %v706, %v1301
  %1303 = vmatmul.f32.gmra.mxu0 %v997
  %v1304 = vpop.f32.mrf.mxu0
  %v1305 = vadd.f32 %v709, %v1304
  %1306 = vmatmul.f32.gmra.mxu0 %v1000
  %v1307 = vpop.f32.mrf.mxu0
  %v1308 = vadd.f32 %v712, %v1307
  %1309 = vmatmul.f32.gmra.mxu0 %v1003
  %v1310 = vpop.f32.mrf.mxu0
  %v1311 = vadd.f32 %v715, %v1310
  %1312 = vmatmul.f32.gmra.mxu0 %v1006
  %v1313 = vpop.f32.mrf.mxu0
  %v1314 = vadd.f32 %v718, %v1313
  %1315 = vmatmul.f32.gmra.mxu0 %v1009
  %v1316 = vpop.f32.mrf.mxu0
  %v1317 = vadd.f32 %v721, %v1316
  %1318 = vmatmul.f32.gmra.mxu0 %v1012
  %v1319 = vpop.f32.mrf.mxu0
  %v1320 = vadd.f32 %v724, %v1319
  %1321 = vmatmul.f32.gmra.mxu0 %v1015
  %v1322 = vpop.f32.mrf.mxu0
  %v1323 = vadd.f32 %v727, %v1322
  %1324 = vmatmul.f32.gmra.mxu0 %v1018
  %v1325 = vpop.f32.mrf.mxu0
  %v1326 = vadd.f32 %v730, %v1325
  %1327 = vmatmul.f32.gmra.mxu0 %v1021
  %v1328 = vpop.f32.mrf.mxu0
  %v1329 = vadd.f32 %v733, %v1328
  %1330 = vmatmul.f32.gmra.mxu0 %v1024
  %v1331 = vpop.f32.mrf.mxu0
  %v1332 = vadd.f32 %v736, %v1331
  %1333 = vmatmul.f32.gmra.mxu0 %v1027
  %v1334 = vpop.f32.mrf.mxu0
  %v1335 = vadd.f32 %v739, %v1334
  %1336 = vmatmul.f32.gmra.mxu0 %v1030
  %v1337 = vpop.f32.mrf.mxu0
  %v1338 = vadd.f32 %v742, %v1337
  %1339 = vmatmul.f32.gmra.mxu0 %v1033
  %v1340 = vpop.f32.mrf.mxu0
  %v1341 = vadd.f32 %v745, %v1340
  %1342 = vmatmul.f32.gmra.mxu0 %v1036
  %v1343 = vpop.f32.mrf.mxu0
  %v1344 = vadd.f32 %v748, %v1343
  %1345 = vmatmul.f32.gmra.mxu0 %v1039
  %v1346 = vpop.f32.mrf.mxu0
  %v1347 = vadd.f32 %v751, %v1346
  %1348 = vmatmul.f32.gmra.mxu0 %v1042
  %v1349 = vpop.f32.mrf.mxu0
  %v1350 = vadd.f32 %v754, %v1349
  %1351 = vmatmul.f32.gmra.mxu0 %v1045
  %v1352 = vpop.f32.mrf.mxu0
  %v1353 = vadd.f32 %v757, %v1352
  %1354 = vmatmul.f32.gmra.mxu0 %v1048
  %v1355 = vpop.f32.mrf.mxu0
  %v1356 = vadd.f32 %v760, %v1355
  %1357 = vmatmul.f32.gmra.mxu0 %v1051
  %v1358 = vpop.f32.mrf.mxu0
  %v1359 = vadd.f32 %v763, %v1358
  %1360 = vmatmul.f32.gmra.mxu0 %v1054
  %v1361 = vpop.f32.mrf.mxu0
  %v1362 = vadd.f32 %v766, %v1361
  %1363 = vmatmul.f32.gmra.mxu0 %v1057
  %v1364 = vpop.f32.mrf.mxu0
  %v1365 = vadd.f32 %v769, %v1364
  %1366 = vmatmul.f32.gmra.mxu0 %v1060
  %v1367 = vpop.f32.mrf.mxu0
  %v1368 = vadd.f32 %v772, %v1367
  %1369 = vmatmul.f32.gmra.mxu0 %v1063
  %v1370 = vpop.f32.mrf.mxu0
  %v1371 = vadd.f32 %v775, %v1370
  %1372 = vmatmul.f32.gmra.mxu0 %v1066
  %v1373 = vpop.f32.mrf.mxu0
  %v1374 = vadd.f32 %v778, %v1373
  %1375 = vmatmul.f32.gmra.mxu0 %v1069
  %v1376 = vpop.f32.mrf.mxu0
  %v1377 = vadd.f32 %v781, %v1376
  %1378 = vmatmul.f32.gmra.mxu0 %v1072
  %v1379 = vpop.f32.mrf.mxu0
  %v1380 = vadd.f32 %v784, %v1379
  %1381 = vmatmul.f32.gmra.mxu0 %v1075
  %v1382 = vpop.f32.mrf.mxu0
  %v1383 = vadd.f32 %v787, %v1382
  %1384 = vmatmul.f32.gmra.mxu0 %v1078
  %v1385 = vpop.f32.mrf.mxu0
  %v1386 = vadd.f32 %v790, %v1385
  %1387 = vmatmul.f32.gmra.mxu0 %v1081
  %v1388 = vpop.f32.mrf.mxu0
  %v1389 = vadd.f32 %v793, %v1388
  %1390 = vmatmul.f32.gmra.mxu0 %v1084
  %v1391 = vpop.f32.mrf.mxu0
  %v1392 = vadd.f32 %v796, %v1391
  %1393 = vmatmul.f32.gmra.mxu0 %v1087
  %v1394 = vpop.f32.mrf.mxu0
  %v1395 = vadd.f32 %v799, %v1394
  %1396 = vmatmul.f32.gmra.mxu0 %v1090
  %v1397 = vpop.f32.mrf.mxu0
  %v1398 = vadd.f32 %v802, %v1397
  %1399 = vmatmul.f32.gmra.mxu0 %v1093
  %v1400 = vpop.f32.mrf.mxu0
  %v1401 = vadd.f32 %v805, %v1400
  %1402 = vmatmul.f32.gmra.mxu0 %v1096
  %v1403 = vpop.f32.mrf.mxu0
  %v1404 = vadd.f32 %v808, %v1403
  %1405 = vmatmul.f32.gmra.mxu0 %v1099
  %v1406 = vpop.f32.mrf.mxu0
  %v1407 = vadd.f32 %v811, %v1406
  %1408 = vmatmul.f32.gmra.mxu0 %v1102
  %v1409 = vpop.f32.mrf.mxu0
  %v1410 = vadd.f32 %v814, %v1409
  %1411 = vmatmul.f32.gmra.mxu0 %v1105
  %v1412 = vpop.f32.mrf.mxu0
  %v1413 = vadd.f32 %v817, %v1412
  %1414 = vmatmul.f32.gmra.mxu0 %v1108
  %v1415 = vpop.f32.mrf.mxu0
  %v1416 = vadd.f32 %v820, %v1415
  %1417 = vmatmul.f32.gmra.mxu0 %v1111
  %v1418 = vpop.f32.mrf.mxu0
  %v1419 = vadd.f32 %v823, %v1418
  %1420 = vmatmul.f32.gmra.mxu0 %v1114
  %v1421 = vpop.f32.mrf.mxu0
  %v1422 = vadd.f32 %v826, %v1421
  %1423 = vmatmul.f32.gmra.mxu0 %v1117
  %v1424 = vpop.f32.mrf.mxu0
  %v1425 = vadd.f32 %v829, %v1424
  %1426 = vmatmul.f32.gmra.mxu0 %v1120
  %v1427 = vpop.f32.mrf.mxu0
  %v1428 = vadd.f32 %v832, %v1427
  %1429 = vmatmul.f32.gmra.mxu0 %v1123
  %v1430 = vpop.f32.mrf.mxu0
  %v1431 = vadd.f32 %v835, %v1430
  %1432 = vmatmul.f32.gmra.mxu0 %v1126
  %v1433 = vpop.f32.mrf.mxu0
  %v1434 = vadd.f32 %v838, %v1433
  %1435 = vmatmul.f32.gmra.mxu0 %v1129
  %v1436 = vpop.f32.mrf.mxu0
  %v1437 = vadd.f32 %v841, %v1436
  %1438 = vdwg.mxu0
  %s1439 = scalar_lea.vmem %s1, 192
  %v1440 = vld [vmem:[%s1439] sm:$0xff]
  %v1441 = vld [vmem:[%s1439 + $0x8] sm:$0xff]
  %v1442 = vld [vmem:[%s1439 + $0x10] sm:$0xff]
  %v1443 = vld [vmem:[%s1439 + $0x18] sm:$0xf]
  %v1445 = vsel %vm534, %v1443, 0
  %1447 = vmatpush.msra.mxu0 0.0
  %1448 = vmatpush.msra.mxu0 0.0
  %1449 = vmatpush.msra.mxu0 0.0
  %1450 = vmatpush.msra.mxu0 0.0
  %1451 = vmatpush.msra.mxu0 0.0
  %1452 = vmatpush.msra.mxu0 0.0
  %1453 = vmatpush.msra.mxu0 0.0
  %1454 = vmatpush.msra.mxu0 0.0
  %1455 = vmatpush.msra.mxu0 0.0
  %1456 = vmatpush.msra.mxu0 0.0
  %1457 = vmatpush.msra.mxu0 0.0
  %1458 = vmatpush.msra.mxu0 0.0
  %1459 = vmatpush.msra.mxu0 %v1445
  %1460 = vmatpush.msra.mxu0 %v1442
  %1461 = vmatpush.msra.mxu0 %v1441
  %1462 = vmatpush.msra.mxu0 %v1440
  %1463 = vmatmul.f32.gmra.mxu0 %v247
  %v1464 = vpop.f32.mrf.mxu0
  %v1465 = vadd.f32 0.0, %v1464
  %1466 = vmatmul.f32.gmra.mxu0 %v250
  %v1467 = vpop.f32.mrf.mxu0
  %v1468 = vadd.f32 0.0, %v1467
  %1469 = vmatmul.f32.gmra.mxu0 %v253
  %v1470 = vpop.f32.mrf.mxu0
  %v1471 = vadd.f32 0.0, %v1470
  %1472 = vmatmul.f32.gmra.mxu0 %v256
  %v1473 = vpop.f32.mrf.mxu0
  %v1474 = vadd.f32 0.0, %v1473
  %1475 = vmatmul.f32.gmra.mxu0 %v259
  %v1476 = vpop.f32.mrf.mxu0
  %v1477 = vadd.f32 0.0, %v1476
  %1478 = vmatmul.f32.gmra.mxu0 %v262
  %v1479 = vpop.f32.mrf.mxu0
  %v1480 = vadd.f32 0.0, %v1479
  %1481 = vmatmul.f32.gmra.mxu0 %v265
  %v1482 = vpop.f32.mrf.mxu0
  %v1483 = vadd.f32 0.0, %v1482
  %1484 = vmatmul.f32.gmra.mxu0 %v268
  %v1485 = vpop.f32.mrf.mxu0
  %v1486 = vadd.f32 0.0, %v1485
  %1487 = vmatmul.f32.gmra.mxu0 %v271
  %v1488 = vpop.f32.mrf.mxu0
  %v1489 = vadd.f32 0.0, %v1488
  %1490 = vmatmul.f32.gmra.mxu0 %v274
  %v1491 = vpop.f32.mrf.mxu0
  %v1492 = vadd.f32 0.0, %v1491
  %1493 = vmatmul.f32.gmra.mxu0 %v277
  %v1494 = vpop.f32.mrf.mxu0
  %v1495 = vadd.f32 0.0, %v1494
  %1496 = vmatmul.f32.gmra.mxu0 %v280
  %v1497 = vpop.f32.mrf.mxu0
  %v1498 = vadd.f32 0.0, %v1497
  %1499 = vmatmul.f32.gmra.mxu0 %v283
  %v1500 = vpop.f32.mrf.mxu0
  %v1501 = vadd.f32 0.0, %v1500
  %1502 = vmatmul.f32.gmra.mxu0 %v286
  %v1503 = vpop.f32.mrf.mxu0
  %v1504 = vadd.f32 0.0, %v1503
  %1505 = vmatmul.f32.gmra.mxu0 %v289
  %v1506 = vpop.f32.mrf.mxu0
  %v1507 = vadd.f32 0.0, %v1506
  %1508 = vmatmul.f32.gmra.mxu0 %v292
  %v1509 = vpop.f32.mrf.mxu0
  %v1510 = vadd.f32 0.0, %v1509
  %1511 = vmatmul.f32.gmra.mxu0 %v295
  %v1512 = vpop.f32.mrf.mxu0
  %v1513 = vadd.f32 0.0, %v1512
  %1514 = vmatmul.f32.gmra.mxu0 %v298
  %v1515 = vpop.f32.mrf.mxu0
  %v1516 = vadd.f32 0.0, %v1515
  %1517 = vmatmul.f32.gmra.mxu0 %v301
  %v1518 = vpop.f32.mrf.mxu0
  %v1519 = vadd.f32 0.0, %v1518
  %1520 = vmatmul.f32.gmra.mxu0 %v304
  %v1521 = vpop.f32.mrf.mxu0
  %v1522 = vadd.f32 0.0, %v1521
  %1523 = vmatmul.f32.gmra.mxu0 %v307
  %v1524 = vpop.f32.mrf.mxu0
  %v1525 = vadd.f32 0.0, %v1524
  %1526 = vmatmul.f32.gmra.mxu0 %v310
  %v1527 = vpop.f32.mrf.mxu0
  %v1528 = vadd.f32 0.0, %v1527
  %1529 = vmatmul.f32.gmra.mxu0 %v313
  %v1530 = vpop.f32.mrf.mxu0
  %v1531 = vadd.f32 0.0, %v1530
  %1532 = vmatmul.f32.gmra.mxu0 %v316
  %v1533 = vpop.f32.mrf.mxu0
  %v1534 = vadd.f32 0.0, %v1533
  %1535 = vmatmul.f32.gmra.mxu0 %v319
  %v1536 = vpop.f32.mrf.mxu0
  %v1537 = vadd.f32 0.0, %v1536
  %1538 = vmatmul.f32.gmra.mxu0 %v322
  %v1539 = vpop.f32.mrf.mxu0
  %v1540 = vadd.f32 0.0, %v1539
  %1541 = vmatmul.f32.gmra.mxu0 %v325
  %v1542 = vpop.f32.mrf.mxu0
  %v1543 = vadd.f32 0.0, %v1542
  %1544 = vmatmul.f32.gmra.mxu0 %v328
  %v1545 = vpop.f32.mrf.mxu0
  %v1546 = vadd.f32 0.0, %v1545
  %1547 = vmatmul.f32.gmra.mxu0 %v331
  %v1548 = vpop.f32.mrf.mxu0
  %v1549 = vadd.f32 0.0, %v1548
  %1550 = vmatmul.f32.gmra.mxu0 %v334
  %v1551 = vpop.f32.mrf.mxu0
  %v1552 = vadd.f32 0.0, %v1551
  %1553 = vmatmul.f32.gmra.mxu0 %v337
  %v1554 = vpop.f32.mrf.mxu0
  %v1555 = vadd.f32 0.0, %v1554
  %1556 = vmatmul.f32.gmra.mxu0 %v340
  %v1557 = vpop.f32.mrf.mxu0
  %v1558 = vadd.f32 0.0, %v1557
  %1559 = vmatmul.f32.gmra.mxu0 %v343
  %v1560 = vpop.f32.mrf.mxu0
  %v1561 = vadd.f32 0.0, %v1560
  %1562 = vmatmul.f32.gmra.mxu0 %v346
  %v1563 = vpop.f32.mrf.mxu0
  %v1564 = vadd.f32 0.0, %v1563
  %1565 = vmatmul.f32.gmra.mxu0 %v349
  %v1566 = vpop.f32.mrf.mxu0
  %v1567 = vadd.f32 0.0, %v1566
  %1568 = vmatmul.f32.gmra.mxu0 %v352
  %v1569 = vpop.f32.mrf.mxu0
  %v1570 = vadd.f32 0.0, %v1569
  %1571 = vmatmul.f32.gmra.mxu0 %v355
  %v1572 = vpop.f32.mrf.mxu0
  %v1573 = vadd.f32 0.0, %v1572
  %1574 = vmatmul.f32.gmra.mxu0 %v358
  %v1575 = vpop.f32.mrf.mxu0
  %v1576 = vadd.f32 0.0, %v1575
  %1577 = vmatmul.f32.gmra.mxu0 %v361
  %v1578 = vpop.f32.mrf.mxu0
  %v1579 = vadd.f32 0.0, %v1578
  %1580 = vmatmul.f32.gmra.mxu0 %v364
  %v1581 = vpop.f32.mrf.mxu0
  %v1582 = vadd.f32 0.0, %v1581
  %1583 = vmatmul.f32.gmra.mxu0 %v367
  %v1584 = vpop.f32.mrf.mxu0
  %v1585 = vadd.f32 0.0, %v1584
  %1586 = vmatmul.f32.gmra.mxu0 %v370
  %v1587 = vpop.f32.mrf.mxu0
  %v1588 = vadd.f32 0.0, %v1587
  %1589 = vmatmul.f32.gmra.mxu0 %v373
  %v1590 = vpop.f32.mrf.mxu0
  %v1591 = vadd.f32 0.0, %v1590
  %1592 = vmatmul.f32.gmra.mxu0 %v376
  %v1593 = vpop.f32.mrf.mxu0
  %v1594 = vadd.f32 0.0, %v1593
  %1595 = vmatmul.f32.gmra.mxu0 %v379
  %v1596 = vpop.f32.mrf.mxu0
  %v1597 = vadd.f32 0.0, %v1596
  %1598 = vmatmul.f32.gmra.mxu0 %v382
  %v1599 = vpop.f32.mrf.mxu0
  %v1600 = vadd.f32 0.0, %v1599
  %1601 = vmatmul.f32.gmra.mxu0 %v385
  %v1602 = vpop.f32.mrf.mxu0
  %v1603 = vadd.f32 0.0, %v1602
  %1604 = vmatmul.f32.gmra.mxu0 %v388
  %v1605 = vpop.f32.mrf.mxu0
  %v1606 = vadd.f32 0.0, %v1605
  %1607 = vmatmul.f32.gmra.mxu0 %v391
  %v1608 = vpop.f32.mrf.mxu0
  %v1609 = vadd.f32 0.0, %v1608
  %1610 = vmatmul.f32.gmra.mxu0 %v394
  %v1611 = vpop.f32.mrf.mxu0
  %v1612 = vadd.f32 0.0, %v1611
  %1613 = vmatmul.f32.gmra.mxu0 %v397
  %v1614 = vpop.f32.mrf.mxu0
  %v1615 = vadd.f32 0.0, %v1614
  %1616 = vmatmul.f32.gmra.mxu0 %v400
  %v1617 = vpop.f32.mrf.mxu0
  %v1618 = vadd.f32 0.0, %v1617
  %1619 = vmatmul.f32.gmra.mxu0 %v403
  %v1620 = vpop.f32.mrf.mxu0
  %v1621 = vadd.f32 0.0, %v1620
  %1622 = vmatmul.f32.gmra.mxu0 %v406
  %v1623 = vpop.f32.mrf.mxu0
  %v1624 = vadd.f32 0.0, %v1623
  %1625 = vmatmul.f32.gmra.mxu0 %v409
  %v1626 = vpop.f32.mrf.mxu0
  %v1627 = vadd.f32 0.0, %v1626
  %1628 = vmatmul.f32.gmra.mxu0 %v412
  %v1629 = vpop.f32.mrf.mxu0
  %v1630 = vadd.f32 0.0, %v1629
  %1631 = vmatmul.f32.gmra.mxu0 %v415
  %v1632 = vpop.f32.mrf.mxu0
  %v1633 = vadd.f32 0.0, %v1632
  %1634 = vmatmul.f32.gmra.mxu0 %v418
  %v1635 = vpop.f32.mrf.mxu0
  %v1636 = vadd.f32 0.0, %v1635
  %1637 = vmatmul.f32.gmra.mxu0 %v421
  %v1638 = vpop.f32.mrf.mxu0
  %v1639 = vadd.f32 0.0, %v1638
  %1640 = vmatmul.f32.gmra.mxu0 %v424
  %v1641 = vpop.f32.mrf.mxu0
  %v1642 = vadd.f32 0.0, %v1641
  %1643 = vmatmul.f32.gmra.mxu0 %v427
  %v1644 = vpop.f32.mrf.mxu0
  %v1645 = vadd.f32 0.0, %v1644
  %1646 = vmatmul.f32.gmra.mxu0 %v430
  %v1647 = vpop.f32.mrf.mxu0
  %v1648 = vadd.f32 0.0, %v1647
  %1649 = vmatmul.f32.gmra.mxu0 %v433
  %v1650 = vpop.f32.mrf.mxu0
  %v1651 = vadd.f32 0.0, %v1650
  %1652 = vmatmul.f32.gmra.mxu0 %v436
  %v1653 = vpop.f32.mrf.mxu0
  %v1654 = vadd.f32 0.0, %v1653
  %1655 = vmatmul.f32.gmra.mxu0 %v439
  %v1656 = vpop.f32.mrf.mxu0
  %v1657 = vadd.f32 0.0, %v1656
  %1658 = vmatmul.f32.gmra.mxu0 %v442
  %v1659 = vpop.f32.mrf.mxu0
  %v1660 = vadd.f32 0.0, %v1659
  %1661 = vmatmul.f32.gmra.mxu0 %v445
  %v1662 = vpop.f32.mrf.mxu0
  %v1663 = vadd.f32 0.0, %v1662
  %1664 = vmatmul.f32.gmra.mxu0 %v448
  %v1665 = vpop.f32.mrf.mxu0
  %v1666 = vadd.f32 0.0, %v1665
  %1667 = vmatmul.f32.gmra.mxu0 %v451
  %v1668 = vpop.f32.mrf.mxu0
  %v1669 = vadd.f32 0.0, %v1668
  %1670 = vmatmul.f32.gmra.mxu0 %v454
  %v1671 = vpop.f32.mrf.mxu0
  %v1672 = vadd.f32 0.0, %v1671
  %1673 = vmatmul.f32.gmra.mxu0 %v457
  %v1674 = vpop.f32.mrf.mxu0
  %v1675 = vadd.f32 0.0, %v1674
  %1676 = vmatmul.f32.gmra.mxu0 %v460
  %v1677 = vpop.f32.mrf.mxu0
  %v1678 = vadd.f32 0.0, %v1677
  %1679 = vmatmul.f32.gmra.mxu0 %v463
  %v1680 = vpop.f32.mrf.mxu0
  %v1681 = vadd.f32 0.0, %v1680
  %1682 = vmatmul.f32.gmra.mxu0 %v466
  %v1683 = vpop.f32.mrf.mxu0
  %v1684 = vadd.f32 0.0, %v1683
  %1685 = vmatmul.f32.gmra.mxu0 %v469
  %v1686 = vpop.f32.mrf.mxu0
  %v1687 = vadd.f32 0.0, %v1686
  %1688 = vmatmul.f32.gmra.mxu0 %v472
  %v1689 = vpop.f32.mrf.mxu0
  %v1690 = vadd.f32 0.0, %v1689
  %1691 = vmatmul.f32.gmra.mxu0 %v475
  %v1692 = vpop.f32.mrf.mxu0
  %v1693 = vadd.f32 0.0, %v1692
  %1694 = vmatmul.f32.gmra.mxu0 %v478
  %v1695 = vpop.f32.mrf.mxu0
  %v1696 = vadd.f32 0.0, %v1695
  %1697 = vmatmul.f32.gmra.mxu0 %v481
  %v1698 = vpop.f32.mrf.mxu0
  %v1699 = vadd.f32 0.0, %v1698
  %1700 = vmatmul.f32.gmra.mxu0 %v484
  %v1701 = vpop.f32.mrf.mxu0
  %v1702 = vadd.f32 0.0, %v1701
  %1703 = vmatmul.f32.gmra.mxu0 %v487
  %v1704 = vpop.f32.mrf.mxu0
  %v1705 = vadd.f32 0.0, %v1704
  %1706 = vmatmul.f32.gmra.mxu0 %v490
  %v1707 = vpop.f32.mrf.mxu0
  %v1708 = vadd.f32 0.0, %v1707
  %1709 = vmatmul.f32.gmra.mxu0 %v493
  %v1710 = vpop.f32.mrf.mxu0
  %v1711 = vadd.f32 0.0, %v1710
  %1712 = vmatmul.f32.gmra.mxu0 %v496
  %v1713 = vpop.f32.mrf.mxu0
  %v1714 = vadd.f32 0.0, %v1713
  %1715 = vmatmul.f32.gmra.mxu0 %v499
  %v1716 = vpop.f32.mrf.mxu0
  %v1717 = vadd.f32 0.0, %v1716
  %1718 = vmatmul.f32.gmra.mxu0 %v502
  %v1719 = vpop.f32.mrf.mxu0
  %v1720 = vadd.f32 0.0, %v1719
  %1721 = vmatmul.f32.gmra.mxu0 %v505
  %v1722 = vpop.f32.mrf.mxu0
  %v1723 = vadd.f32 0.0, %v1722
  %1724 = vmatmul.f32.gmra.mxu0 %v508
  %v1725 = vpop.f32.mrf.mxu0
  %v1726 = vadd.f32 0.0, %v1725
  %1727 = vmatmul.f32.gmra.mxu0 %v511
  %v1728 = vpop.f32.mrf.mxu0
  %v1729 = vadd.f32 0.0, %v1728
  %1730 = vmatmul.f32.gmra.mxu0 %v514
  %v1731 = vpop.f32.mrf.mxu0
  %v1732 = vadd.f32 0.0, %v1731
  %1733 = vmatmul.f32.gmra.mxu0 %v517
  %v1734 = vpop.f32.mrf.mxu0
  %v1735 = vadd.f32 0.0, %v1734
  %1736 = vmatmul.f32.gmra.mxu0 %v520
  %v1737 = vpop.f32.mrf.mxu0
  %v1738 = vadd.f32 0.0, %v1737
  %1739 = vmatmul.f32.gmra.mxu0 %v523
  %v1740 = vpop.f32.mrf.mxu0
  %v1741 = vadd.f32 0.0, %v1740
  %1742 = vmatmul.f32.gmra.mxu0 %v526
  %v1743 = vpop.f32.mrf.mxu0
  %v1744 = vadd.f32 0.0, %v1743
  %1745 = vmatmul.f32.gmra.mxu0 %v529
  %v1746 = vpop.f32.mrf.mxu0
  %v1747 = vadd.f32 0.0, %v1746
  %1748 = vmatmul.f32.gmra.mxu0 %v532
  %v1749 = vpop.f32.mrf.mxu0
  %v1750 = vadd.f32 0.0, %v1749
  %1751 = vdwg.mxu0
  %v1753 = vsel %vm534, %v143, 0
  %1755 = vmatpush.msra.mxu0 0.0
  %1756 = vmatpush.msra.mxu0 0.0
  %1757 = vmatpush.msra.mxu0 0.0
  %1758 = vmatpush.msra.mxu0 0.0
  %1759 = vmatpush.msra.mxu0 0.0
  %1760 = vmatpush.msra.mxu0 0.0
  %1761 = vmatpush.msra.mxu0 0.0
  %1762 = vmatpush.msra.mxu0 0.0
  %1763 = vmatpush.msra.mxu0 0.0
  %1764 = vmatpush.msra.mxu0 0.0
  %1765 = vmatpush.msra.mxu0 0.0
  %1766 = vmatpush.msra.mxu0 0.0
  %1767 = vmatpush.msra.mxu0 %v1753
  %1768 = vmatpush.msra.mxu0 %v142
  %1769 = vmatpush.msra.mxu0 %v141
  %1770 = vmatpush.msra.mxu0 %v140
  %1771 = vmatmul.f32.gmra.mxu0 %v844
  %v1772 = vpop.f32.mrf.mxu0
  %v1773 = vadd.f32 %v1465, %v1772
  %1774 = vmatmul.f32.gmra.mxu0 %v847
  %v1775 = vpop.f32.mrf.mxu0
  %v1776 = vadd.f32 %v1468, %v1775
  %1777 = vmatmul.f32.gmra.mxu0 %v850
  %v1778 = vpop.f32.mrf.mxu0
  %v1779 = vadd.f32 %v1471, %v1778
  %1780 = vmatmul.f32.gmra.mxu0 %v853
  %v1781 = vpop.f32.mrf.mxu0
  %v1782 = vadd.f32 %v1474, %v1781
  %1783 = vmatmul.f32.gmra.mxu0 %v856
  %v1784 = vpop.f32.mrf.mxu0
  %v1785 = vadd.f32 %v1477, %v1784
  %1786 = vmatmul.f32.gmra.mxu0 %v859
  %v1787 = vpop.f32.mrf.mxu0
  %v1788 = vadd.f32 %v1480, %v1787
  %1789 = vmatmul.f32.gmra.mxu0 %v862
  %v1790 = vpop.f32.mrf.mxu0
  %v1791 = vadd.f32 %v1483, %v1790
  %1792 = vmatmul.f32.gmra.mxu0 %v865
  %v1793 = vpop.f32.mrf.mxu0
  %v1794 = vadd.f32 %v1486, %v1793
  %1795 = vmatmul.f32.gmra.mxu0 %v868
  %v1796 = vpop.f32.mrf.mxu0
  %v1797 = vadd.f32 %v1489, %v1796
  %1798 = vmatmul.f32.gmra.mxu0 %v871
  %v1799 = vpop.f32.mrf.mxu0
  %v1800 = vadd.f32 %v1492, %v1799
  %1801 = vmatmul.f32.gmra.mxu0 %v874
  %v1802 = vpop.f32.mrf.mxu0
  %v1803 = vadd.f32 %v1495, %v1802
  %1804 = vmatmul.f32.gmra.mxu0 %v877
  %v1805 = vpop.f32.mrf.mxu0
  %v1806 = vadd.f32 %v1498, %v1805
  %1807 = vmatmul.f32.gmra.mxu0 %v880
  %v1808 = vpop.f32.mrf.mxu0
  %v1809 = vadd.f32 %v1501, %v1808
  %1810 = vmatmul.f32.gmra.mxu0 %v883
  %v1811 = vpop.f32.mrf.mxu0
  %v1812 = vadd.f32 %v1504, %v1811
  %1813 = vmatmul.f32.gmra.mxu0 %v886
  %v1814 = vpop.f32.mrf.mxu0
  %v1815 = vadd.f32 %v1507, %v1814
  %1816 = vmatmul.f32.gmra.mxu0 %v889
  %v1817 = vpop.f32.mrf.mxu0
  %v1818 = vadd.f32 %v1510, %v1817
  %1819 = vmatmul.f32.gmra.mxu0 %v892
  %v1820 = vpop.f32.mrf.mxu0
  %v1821 = vadd.f32 %v1513, %v1820
  %1822 = vmatmul.f32.gmra.mxu0 %v895
  %v1823 = vpop.f32.mrf.mxu0
  %v1824 = vadd.f32 %v1516, %v1823
  %1825 = vmatmul.f32.gmra.mxu0 %v898
  %v1826 = vpop.f32.mrf.mxu0
  %v1827 = vadd.f32 %v1519, %v1826
  %1828 = vmatmul.f32.gmra.mxu0 %v901
  %v1829 = vpop.f32.mrf.mxu0
  %v1830 = vadd.f32 %v1522, %v1829
  %1831 = vmatmul.f32.gmra.mxu0 %v904
  %v1832 = vpop.f32.mrf.mxu0
  %v1833 = vadd.f32 %v1525, %v1832
  %1834 = vmatmul.f32.gmra.mxu0 %v907
  %v1835 = vpop.f32.mrf.mxu0
  %v1836 = vadd.f32 %v1528, %v1835
  %1837 = vmatmul.f32.gmra.mxu0 %v910
  %v1838 = vpop.f32.mrf.mxu0
  %v1839 = vadd.f32 %v1531, %v1838
  %1840 = vmatmul.f32.gmra.mxu0 %v913
  %v1841 = vpop.f32.mrf.mxu0
  %v1842 = vadd.f32 %v1534, %v1841
  %1843 = vmatmul.f32.gmra.mxu0 %v916
  %v1844 = vpop.f32.mrf.mxu0
  %v1845 = vadd.f32 %v1537, %v1844
  %1846 = vmatmul.f32.gmra.mxu0 %v919
  %v1847 = vpop.f32.mrf.mxu0
  %v1848 = vadd.f32 %v1540, %v1847
  %1849 = vmatmul.f32.gmra.mxu0 %v922
  %v1850 = vpop.f32.mrf.mxu0
  %v1851 = vadd.f32 %v1543, %v1850
  %1852 = vmatmul.f32.gmra.mxu0 %v925
  %v1853 = vpop.f32.mrf.mxu0
  %v1854 = vadd.f32 %v1546, %v1853
  %1855 = vmatmul.f32.gmra.mxu0 %v928
  %v1856 = vpop.f32.mrf.mxu0
  %v1857 = vadd.f32 %v1549, %v1856
  %1858 = vmatmul.f32.gmra.mxu0 %v931
  %v1859 = vpop.f32.mrf.mxu0
  %v1860 = vadd.f32 %v1552, %v1859
  %1861 = vmatmul.f32.gmra.mxu0 %v934
  %v1862 = vpop.f32.mrf.mxu0
  %v1863 = vadd.f32 %v1555, %v1862
  %1864 = vmatmul.f32.gmra.mxu0 %v937
  %v1865 = vpop.f32.mrf.mxu0
  %v1866 = vadd.f32 %v1558, %v1865
  %1867 = vmatmul.f32.gmra.mxu0 %v940
  %v1868 = vpop.f32.mrf.mxu0
  %v1869 = vadd.f32 %v1561, %v1868
  %1870 = vmatmul.f32.gmra.mxu0 %v943
  %v1871 = vpop.f32.mrf.mxu0
  %v1872 = vadd.f32 %v1564, %v1871
  %1873 = vmatmul.f32.gmra.mxu0 %v946
  %v1874 = vpop.f32.mrf.mxu0
  %v1875 = vadd.f32 %v1567, %v1874
  %1876 = vmatmul.f32.gmra.mxu0 %v949
  %v1877 = vpop.f32.mrf.mxu0
  %v1878 = vadd.f32 %v1570, %v1877
  %1879 = vmatmul.f32.gmra.mxu0 %v952
  %v1880 = vpop.f32.mrf.mxu0
  %v1881 = vadd.f32 %v1573, %v1880
  %1882 = vmatmul.f32.gmra.mxu0 %v955
  %v1883 = vpop.f32.mrf.mxu0
  %v1884 = vadd.f32 %v1576, %v1883
  %1885 = vmatmul.f32.gmra.mxu0 %v958
  %v1886 = vpop.f32.mrf.mxu0
  %v1887 = vadd.f32 %v1579, %v1886
  %1888 = vmatmul.f32.gmra.mxu0 %v961
  %v1889 = vpop.f32.mrf.mxu0
  %v1890 = vadd.f32 %v1582, %v1889
  %1891 = vmatmul.f32.gmra.mxu0 %v964
  %v1892 = vpop.f32.mrf.mxu0
  %v1893 = vadd.f32 %v1585, %v1892
  %1894 = vmatmul.f32.gmra.mxu0 %v967
  %v1895 = vpop.f32.mrf.mxu0
  %v1896 = vadd.f32 %v1588, %v1895
  %1897 = vmatmul.f32.gmra.mxu0 %v970
  %v1898 = vpop.f32.mrf.mxu0
  %v1899 = vadd.f32 %v1591, %v1898
  %1900 = vmatmul.f32.gmra.mxu0 %v973
  %v1901 = vpop.f32.mrf.mxu0
  %v1902 = vadd.f32 %v1594, %v1901
  %1903 = vmatmul.f32.gmra.mxu0 %v976
  %v1904 = vpop.f32.mrf.mxu0
  %v1905 = vadd.f32 %v1597, %v1904
  %1906 = vmatmul.f32.gmra.mxu0 %v979
  %v1907 = vpop.f32.mrf.mxu0
  %v1908 = vadd.f32 %v1600, %v1907
  %1909 = vmatmul.f32.gmra.mxu0 %v982
  %v1910 = vpop.f32.mrf.mxu0
  %v1911 = vadd.f32 %v1603, %v1910
  %1912 = vmatmul.f32.gmra.mxu0 %v985
  %v1913 = vpop.f32.mrf.mxu0
  %v1914 = vadd.f32 %v1606, %v1913
  %1915 = vmatmul.f32.gmra.mxu0 %v988
  %v1916 = vpop.f32.mrf.mxu0
  %v1917 = vadd.f32 %v1609, %v1916
  %1918 = vmatmul.f32.gmra.mxu0 %v991
  %v1919 = vpop.f32.mrf.mxu0
  %v1920 = vadd.f32 %v1612, %v1919
  %1921 = vmatmul.f32.gmra.mxu0 %v994
  %v1922 = vpop.f32.mrf.mxu0
  %v1923 = vadd.f32 %v1615, %v1922
  %1924 = vmatmul.f32.gmra.mxu0 %v997
  %v1925 = vpop.f32.mrf.mxu0
  %v1926 = vadd.f32 %v1618, %v1925
  %1927 = vmatmul.f32.gmra.mxu0 %v1000
  %v1928 = vpop.f32.mrf.mxu0
  %v1929 = vadd.f32 %v1621, %v1928
  %1930 = vmatmul.f32.gmra.mxu0 %v1003
  %v1931 = vpop.f32.mrf.mxu0
  %v1932 = vadd.f32 %v1624, %v1931
  %1933 = vmatmul.f32.gmra.mxu0 %v1006
  %v1934 = vpop.f32.mrf.mxu0
  %v1935 = vadd.f32 %v1627, %v1934
  %1936 = vmatmul.f32.gmra.mxu0 %v1009
  %v1937 = vpop.f32.mrf.mxu0
  %v1938 = vadd.f32 %v1630, %v1937
  %1939 = vmatmul.f32.gmra.mxu0 %v1012
  %v1940 = vpop.f32.mrf.mxu0
  %v1941 = vadd.f32 %v1633, %v1940
  %1942 = vmatmul.f32.gmra.mxu0 %v1015
  %v1943 = vpop.f32.mrf.mxu0
  %v1944 = vadd.f32 %v1636, %v1943
  %1945 = vmatmul.f32.gmra.mxu0 %v1018
  %v1946 = vpop.f32.mrf.mxu0
  %v1947 = vadd.f32 %v1639, %v1946
  %1948 = vmatmul.f32.gmra.mxu0 %v1021
  %v1949 = vpop.f32.mrf.mxu0
  %v1950 = vadd.f32 %v1642, %v1949
  %1951 = vmatmul.f32.gmra.mxu0 %v1024
  %v1952 = vpop.f32.mrf.mxu0
  %v1953 = vadd.f32 %v1645, %v1952
  %1954 = vmatmul.f32.gmra.mxu0 %v1027
  %v1955 = vpop.f32.mrf.mxu0
  %v1956 = vadd.f32 %v1648, %v1955
  %1957 = vmatmul.f32.gmra.mxu0 %v1030
  %v1958 = vpop.f32.mrf.mxu0
  %v1959 = vadd.f32 %v1651, %v1958
  %1960 = vmatmul.f32.gmra.mxu0 %v1033
  %v1961 = vpop.f32.mrf.mxu0
  %v1962 = vadd.f32 %v1654, %v1961
  %1963 = vmatmul.f32.gmra.mxu0 %v1036
  %v1964 = vpop.f32.mrf.mxu0
  %v1965 = vadd.f32 %v1657, %v1964
  %1966 = vmatmul.f32.gmra.mxu0 %v1039
  %v1967 = vpop.f32.mrf.mxu0
  %v1968 = vadd.f32 %v1660, %v1967
  %1969 = vmatmul.f32.gmra.mxu0 %v1042
  %v1970 = vpop.f32.mrf.mxu0
  %v1971 = vadd.f32 %v1663, %v1970
  %1972 = vmatmul.f32.gmra.mxu0 %v1045
  %v1973 = vpop.f32.mrf.mxu0
  %v1974 = vadd.f32 %v1666, %v1973
  %1975 = vmatmul.f32.gmra.mxu0 %v1048
  %v1976 = vpop.f32.mrf.mxu0
  %v1977 = vadd.f32 %v1669, %v1976
  %1978 = vmatmul.f32.gmra.mxu0 %v1051
  %v1979 = vpop.f32.mrf.mxu0
  %v1980 = vadd.f32 %v1672, %v1979
  %1981 = vmatmul.f32.gmra.mxu0 %v1054
  %v1982 = vpop.f32.mrf.mxu0
  %v1983 = vadd.f32 %v1675, %v1982
  %1984 = vmatmul.f32.gmra.mxu0 %v1057
  %v1985 = vpop.f32.mrf.mxu0
  %v1986 = vadd.f32 %v1678, %v1985
  %1987 = vmatmul.f32.gmra.mxu0 %v1060
  %v1988 = vpop.f32.mrf.mxu0
  %v1989 = vadd.f32 %v1681, %v1988
  %1990 = vmatmul.f32.gmra.mxu0 %v1063
  %v1991 = vpop.f32.mrf.mxu0
  %v1992 = vadd.f32 %v1684, %v1991
  %1993 = vmatmul.f32.gmra.mxu0 %v1066
  %v1994 = vpop.f32.mrf.mxu0
  %v1995 = vadd.f32 %v1687, %v1994
  %1996 = vmatmul.f32.gmra.mxu0 %v1069
  %v1997 = vpop.f32.mrf.mxu0
  %v1998 = vadd.f32 %v1690, %v1997
  %1999 = vmatmul.f32.gmra.mxu0 %v1072
  %v2000 = vpop.f32.mrf.mxu0
  %v2001 = vadd.f32 %v1693, %v2000
  %2002 = vmatmul.f32.gmra.mxu0 %v1075
  %v2003 = vpop.f32.mrf.mxu0
  %v2004 = vadd.f32 %v1696, %v2003
  %2005 = vmatmul.f32.gmra.mxu0 %v1078
  %v2006 = vpop.f32.mrf.mxu0
  %v2007 = vadd.f32 %v1699, %v2006
  %2008 = vmatmul.f32.gmra.mxu0 %v1081
  %v2009 = vpop.f32.mrf.mxu0
  %v2010 = vadd.f32 %v1702, %v2009
  %2011 = vmatmul.f32.gmra.mxu0 %v1084
  %v2012 = vpop.f32.mrf.mxu0
  %v2013 = vadd.f32 %v1705, %v2012
  %2014 = vmatmul.f32.gmra.mxu0 %v1087
  %v2015 = vpop.f32.mrf.mxu0
  %v2016 = vadd.f32 %v1708, %v2015
  %2017 = vmatmul.f32.gmra.mxu0 %v1090
  %v2018 = vpop.f32.mrf.mxu0
  %v2019 = vadd.f32 %v1711, %v2018
  %2020 = vmatmul.f32.gmra.mxu0 %v1093
  %v2021 = vpop.f32.mrf.mxu0
  %v2022 = vadd.f32 %v1714, %v2021
  %2023 = vmatmul.f32.gmra.mxu0 %v1096
  %v2024 = vpop.f32.mrf.mxu0
  %v2025 = vadd.f32 %v1717, %v2024
  %2026 = vmatmul.f32.gmra.mxu0 %v1099
  %v2027 = vpop.f32.mrf.mxu0
  %v2028 = vadd.f32 %v1720, %v2027
  %2029 = vmatmul.f32.gmra.mxu0 %v1102
  %v2030 = vpop.f32.mrf.mxu0
  %v2031 = vadd.f32 %v1723, %v2030
  %2032 = vmatmul.f32.gmra.mxu0 %v1105
  %v2033 = vpop.f32.mrf.mxu0
  %v2034 = vadd.f32 %v1726, %v2033
  %2035 = vmatmul.f32.gmra.mxu0 %v1108
  %v2036 = vpop.f32.mrf.mxu0
  %v2037 = vadd.f32 %v1729, %v2036
  %2038 = vmatmul.f32.gmra.mxu0 %v1111
  %v2039 = vpop.f32.mrf.mxu0
  %v2040 = vadd.f32 %v1732, %v2039
  %2041 = vmatmul.f32.gmra.mxu0 %v1114
  %v2042 = vpop.f32.mrf.mxu0
  %v2043 = vadd.f32 %v1735, %v2042
  %2044 = vmatmul.f32.gmra.mxu0 %v1117
  %v2045 = vpop.f32.mrf.mxu0
  %v2046 = vadd.f32 %v1738, %v2045
  %2047 = vmatmul.f32.gmra.mxu0 %v1120
  %v2048 = vpop.f32.mrf.mxu0
  %v2049 = vadd.f32 %v1741, %v2048
  %2050 = vmatmul.f32.gmra.mxu0 %v1123
  %v2051 = vpop.f32.mrf.mxu0
  %v2052 = vadd.f32 %v1744, %v2051
  %2053 = vmatmul.f32.gmra.mxu0 %v1126
  %v2054 = vpop.f32.mrf.mxu0
  %v2055 = vadd.f32 %v1747, %v2054
  %2056 = vmatmul.f32.gmra.mxu0 %v1129
  %v2057 = vpop.f32.mrf.mxu0
  %v2058 = vadd.f32 %v1750, %v2057
  %2059 = vdwg.mxu0
  %v2060 = vld [vmem:[%s0 + $0x2] sm:$0xff]
  %v2061 = vld [vmem:[%s0 + $0xa] sm:$0xff]
  %v2062 = vld [vmem:[%s0 + $0x12] sm:$0xff]
  %v2063 = vld [vmem:[%s0 + $0x22] sm:$0xff]
  %v2064 = vld [vmem:[%s0 + $0x2a] sm:$0xff]
  %v2065 = vld [vmem:[%s0 + $0x32] sm:$0xff]
  %v2066 = vld [vmem:[%s0 + $0x42] sm:$0xff]
  %v2067 = vld [vmem:[%s0 + $0x4a] sm:$0xff]
  %v2068 = vld [vmem:[%s0 + $0x52] sm:$0xff]
  %v2069 = vld [vmem:[%s0 + $0x62] sm:$0xff]
  %v2070 = vld [vmem:[%s0 + $0x6a] sm:$0xff]
  %v2071 = vld [vmem:[%s0 + $0x72] sm:$0xff]
  %v2072 = vld [vmem:[%s0 + $0x82] sm:$0xff]
  %v2073 = vld [vmem:[%s0 + $0x8a] sm:$0xff]
  %v2074 = vld [vmem:[%s0 + $0x92] sm:$0xff]
  %v2075 = vld [vmem:[%s0 + $0xa2] sm:$0xff]
  %v2076 = vld [vmem:[%s0 + $0xaa] sm:$0xff]
  %v2077 = vld [vmem:[%s0 + $0xb2] sm:$0xff]
  %v2078 = vld [vmem:[%s0 + $0xc2] sm:$0xff]
  %v2079 = vld [vmem:[%s0 + $0xca] sm:$0xff]
  %v2080 = vld [vmem:[%s0 + $0xd2] sm:$0xff]
  %v2081 = vld [vmem:[%s0 + $0xe2] sm:$0xff]
  %v2082 = vld [vmem:[%s0 + $0xea] sm:$0xff]
  %v2083 = vld [vmem:[%s0 + $0xf2] sm:$0xff]
  %v2084 = vld [vmem:[%s0 + $0x102] sm:$0xff]
  %v2085 = vld [vmem:[%s0 + $0x10a] sm:$0xff]
  %v2086 = vld [vmem:[%s0 + $0x112] sm:$0xff]
  %v2087 = vld [vmem:[%s0 + $0x122] sm:$0xff]
  %v2088 = vld [vmem:[%s0 + $0x12a] sm:$0xff]
  %v2089 = vld [vmem:[%s0 + $0x132] sm:$0xff]
  %v2090 = vld [vmem:[%s0 + $0x142] sm:$0xff]
  %v2091 = vld [vmem:[%s0 + $0x14a] sm:$0xff]
  %v2092 = vld [vmem:[%s0 + $0x152] sm:$0xff]
  %v2093 = vld [vmem:[%s0 + $0x162] sm:$0xff]
  %v2094 = vld [vmem:[%s0 + $0x16a] sm:$0xff]
  %v2095 = vld [vmem:[%s0 + $0x172] sm:$0xff]
  %v2096 = vld [vmem:[%s0 + $0x182] sm:$0xff]
  %v2097 = vld [vmem:[%s0 + $0x18a] sm:$0xff]
  %v2098 = vld [vmem:[%s0 + $0x192] sm:$0xff]
  %v2099 = vld [vmem:[%s0 + $0x1a2] sm:$0xff]
  %v2100 = vld [vmem:[%s0 + $0x1aa] sm:$0xff]
  %v2101 = vld [vmem:[%s0 + $0x1b2] sm:$0xff]
  %v2102 = vld [vmem:[%s0 + $0x1c2] sm:$0xff]
  %v2103 = vld [vmem:[%s0 + $0x1ca] sm:$0xff]
  %v2104 = vld [vmem:[%s0 + $0x1d2] sm:$0xff]
  %v2105 = vld [vmem:[%s0 + $0x1e2] sm:$0xff]
  %v2106 = vld [vmem:[%s0 + $0x1ea] sm:$0xff]
  %v2107 = vld [vmem:[%s0 + $0x1f2] sm:$0xff]
  %v2108 = vld [vmem:[%s0 + $0x202] sm:$0xff]
  %v2109 = vld [vmem:[%s0 + $0x20a] sm:$0xff]
  %v2110 = vld [vmem:[%s0 + $0x212] sm:$0xff]
  %v2111 = vld [vmem:[%s0 + $0x222] sm:$0xff]
  %v2112 = vld [vmem:[%s0 + $0x22a] sm:$0xff]
  %v2113 = vld [vmem:[%s0 + $0x232] sm:$0xff]
  %v2114 = vld [vmem:[%s0 + $0x242] sm:$0xff]
  %v2115 = vld [vmem:[%s0 + $0x24a] sm:$0xff]
  %v2116 = vld [vmem:[%s0 + $0x252] sm:$0xff]
  %v2117 = vld [vmem:[%s0 + $0x262] sm:$0xff]
  %v2118 = vld [vmem:[%s0 + $0x26a] sm:$0xff]
  %v2119 = vld [vmem:[%s0 + $0x272] sm:$0xff]
  %v2120 = vld [vmem:[%s0 + $0x282] sm:$0xff]
  %v2121 = vld [vmem:[%s0 + $0x28a] sm:$0xff]
  %v2122 = vld [vmem:[%s0 + $0x292] sm:$0xff]
  %v2123 = vld [vmem:[%s0 + $0x2a2] sm:$0xff]
  %v2124 = vld [vmem:[%s0 + $0x2aa] sm:$0xff]
  %v2125 = vld [vmem:[%s0 + $0x2b2] sm:$0xff]
  %v2126 = vld [vmem:[%s0 + $0x2c2] sm:$0xff]
  %v2127 = vld [vmem:[%s0 + $0x2ca] sm:$0xff]
  %v2128 = vld [vmem:[%s0 + $0x2d2] sm:$0xff]
  %v2129 = vld [vmem:[%s0 + $0x2e2] sm:$0xff]
  %v2130 = vld [vmem:[%s0 + $0x2ea] sm:$0xff]
  %v2131 = vld [vmem:[%s0 + $0x2f2] sm:$0xff]
  %v2132 = vld [vmem:[%s0 + $0x302] sm:$0xff]
  %v2133 = vld [vmem:[%s0 + $0x30a] sm:$0xff]
  %v2134 = vld [vmem:[%s0 + $0x312] sm:$0xff]
  %v2135 = vld [vmem:[%s0 + $0x322] sm:$0xff]
  %v2136 = vld [vmem:[%s0 + $0x32a] sm:$0xff]
  %v2137 = vld [vmem:[%s0 + $0x332] sm:$0xff]
  %v2138 = vld [vmem:[%s0 + $0x342] sm:$0xff]
  %v2139 = vld [vmem:[%s0 + $0x34a] sm:$0xff]
  %v2140 = vld [vmem:[%s0 + $0x352] sm:$0xff]
  %v2141 = vld [vmem:[%s0 + $0x362] sm:$0xff]
  %v2142 = vld [vmem:[%s0 + $0x36a] sm:$0xff]
  %v2143 = vld [vmem:[%s0 + $0x372] sm:$0xff]
  %v2144 = vld [vmem:[%s0 + $0x382] sm:$0xff]
  %v2145 = vld [vmem:[%s0 + $0x38a] sm:$0xff]
  %v2146 = vld [vmem:[%s0 + $0x392] sm:$0xff]
  %v2147 = vld [vmem:[%s0 + $0x3a2] sm:$0xff]
  %v2148 = vld [vmem:[%s0 + $0x3aa] sm:$0xff]
  %v2149 = vld [vmem:[%s0 + $0x3b2] sm:$0xff]
  %v2150 = vld [vmem:[%s0 + $0x3c2] sm:$0xff]
  %v2151 = vld [vmem:[%s0 + $0x3ca] sm:$0xff]
  %v2152 = vld [vmem:[%s0 + $0x3d2] sm:$0xff]
  %v2153 = vld [vmem:[%s0 + $0x3e2] sm:$0xff]
  %v2154 = vld [vmem:[%s0 + $0x3ea] sm:$0xff]
  %v2155 = vld [vmem:[%s0 + $0x3f2] sm:$0xff]
  %s2156 = scalar_lea.vmem %s1, 64
  %v2157 = vld [vmem:[%s2156] sm:$0xff]
  %v2158 = vld [vmem:[%s2156 + $0x8] sm:$0xff]
  %v2159 = vld [vmem:[%s2156 + $0x10] sm:$0xff]
  %v2160 = vld [vmem:[%s2156 + $0x18] sm:$0xf]
  %v2162 = vsel %vm245, %v2060, 0
  %v2165 = vsel %vm245, %v2061, 0
  %v2168 = vsel %vm245, %v2062, 0
  %v2171 = vsel %vm245, %v2063, 0
  %v2174 = vsel %vm245, %v2064, 0
  %v2177 = vsel %vm245, %v2065, 0
  %v2180 = vsel %vm245, %v2066, 0
  %v2183 = vsel %vm245, %v2067, 0
  %v2186 = vsel %vm245, %v2068, 0
  %v2189 = vsel %vm245, %v2069, 0
  %v2192 = vsel %vm245, %v2070, 0
  %v2195 = vsel %vm245, %v2071, 0
  %v2198 = vsel %vm245, %v2072, 0
  %v2201 = vsel %vm245, %v2073, 0
  %v2204 = vsel %vm245, %v2074, 0
  %v2207 = vsel %vm245, %v2075, 0
  %v2210 = vsel %vm245, %v2076, 0
  %v2213 = vsel %vm245, %v2077, 0
  %v2216 = vsel %vm245, %v2078, 0
  %v2219 = vsel %vm245, %v2079, 0
  %v2222 = vsel %vm245, %v2080, 0
  %v2225 = vsel %vm245, %v2081, 0
  %v2228 = vsel %vm245, %v2082, 0
  %v2231 = vsel %vm245, %v2083, 0
  %v2234 = vsel %vm245, %v2084, 0
  %v2237 = vsel %vm245, %v2085, 0
  %v2240 = vsel %vm245, %v2086, 0
  %v2243 = vsel %vm245, %v2087, 0
  %v2246 = vsel %vm245, %v2088, 0
  %v2249 = vsel %vm245, %v2089, 0
  %v2252 = vsel %vm245, %v2090, 0
  %v2255 = vsel %vm245, %v2091, 0
  %v2258 = vsel %vm245, %v2092, 0
  %v2261 = vsel %vm245, %v2093, 0
  %v2264 = vsel %vm245, %v2094, 0
  %v2267 = vsel %vm245, %v2095, 0
  %v2270 = vsel %vm245, %v2096, 0
  %v2273 = vsel %vm245, %v2097, 0
  %v2276 = vsel %vm245, %v2098, 0
  %v2279 = vsel %vm245, %v2099, 0
  %v2282 = vsel %vm245, %v2100, 0
  %v2285 = vsel %vm245, %v2101, 0
  %v2288 = vsel %vm245, %v2102, 0
  %v2291 = vsel %vm245, %v2103, 0
  %v2294 = vsel %vm245, %v2104, 0
  %v2297 = vsel %vm245, %v2105, 0
  %v2300 = vsel %vm245, %v2106, 0
  %v2303 = vsel %vm245, %v2107, 0
  %v2306 = vsel %vm245, %v2108, 0
  %v2309 = vsel %vm245, %v2109, 0
  %v2312 = vsel %vm245, %v2110, 0
  %v2315 = vsel %vm245, %v2111, 0
  %v2318 = vsel %vm245, %v2112, 0
  %v2321 = vsel %vm245, %v2113, 0
  %v2324 = vsel %vm245, %v2114, 0
  %v2327 = vsel %vm245, %v2115, 0
  %v2330 = vsel %vm245, %v2116, 0
  %v2333 = vsel %vm245, %v2117, 0
  %v2336 = vsel %vm245, %v2118, 0
  %v2339 = vsel %vm245, %v2119, 0
  %v2342 = vsel %vm245, %v2120, 0
  %v2345 = vsel %vm245, %v2121, 0
  %v2348 = vsel %vm245, %v2122, 0
  %v2351 = vsel %vm245, %v2123, 0
  %v2354 = vsel %vm245, %v2124, 0
  %v2357 = vsel %vm245, %v2125, 0
  %v2360 = vsel %vm245, %v2126, 0
  %v2363 = vsel %vm245, %v2127, 0
  %v2366 = vsel %vm245, %v2128, 0
  %v2369 = vsel %vm245, %v2129, 0
  %v2372 = vsel %vm245, %v2130, 0
  %v2375 = vsel %vm245, %v2131, 0
  %v2378 = vsel %vm245, %v2132, 0
  %v2381 = vsel %vm245, %v2133, 0
  %v2384 = vsel %vm245, %v2134, 0
  %v2387 = vsel %vm245, %v2135, 0
  %v2390 = vsel %vm245, %v2136, 0
  %v2393 = vsel %vm245, %v2137, 0
  %v2396 = vsel %vm245, %v2138, 0
  %v2399 = vsel %vm245, %v2139, 0
  %v2402 = vsel %vm245, %v2140, 0
  %v2405 = vsel %vm245, %v2141, 0
  %v2408 = vsel %vm245, %v2142, 0
  %v2411 = vsel %vm245, %v2143, 0
  %v2414 = vsel %vm245, %v2144, 0
  %v2417 = vsel %vm245, %v2145, 0
  %v2420 = vsel %vm245, %v2146, 0
  %v2423 = vsel %vm245, %v2147, 0
  %v2426 = vsel %vm245, %v2148, 0
  %v2429 = vsel %vm245, %v2149, 0
  %v2432 = vsel %vm245, %v2150, 0
  %v2435 = vsel %vm245, %v2151, 0
  %v2438 = vsel %vm245, %v2152, 0
  %v2441 = vsel %vm245, %v2153, 0
  %v2444 = vsel %vm245, %v2154, 0
  %v2447 = vsel %vm245, %v2155, 0
  %v2450 = vsel %vm534, %v2160, 0
  %2452 = vmatpush.msra.mxu0 0.0
  %2453 = vmatpush.msra.mxu0 0.0
  %2454 = vmatpush.msra.mxu0 0.0
  %2455 = vmatpush.msra.mxu0 0.0
  %2456 = vmatpush.msra.mxu0 0.0
  %2457 = vmatpush.msra.mxu0 0.0
  %2458 = vmatpush.msra.mxu0 0.0
  %2459 = vmatpush.msra.mxu0 0.0
  %2460 = vmatpush.msra.mxu0 0.0
  %2461 = vmatpush.msra.mxu0 0.0
  %2462 = vmatpush.msra.mxu0 0.0
  %2463 = vmatpush.msra.mxu0 0.0
  %2464 = vmatpush.msra.mxu0 %v2450
  %2465 = vmatpush.msra.mxu0 %v2159
  %2466 = vmatpush.msra.mxu0 %v2158
  %2467 = vmatpush.msra.mxu0 %v2157
  %2468 = vmatmul.f32.gmra.mxu0 %v2162
  %v2469 = vpop.f32.mrf.mxu0
  %v2470 = vadd.f32 0.0, %v2469
  %2471 = vmatmul.f32.gmra.mxu0 %v2165
  %v2472 = vpop.f32.mrf.mxu0
  %v2473 = vadd.f32 0.0, %v2472
  %2474 = vmatmul.f32.gmra.mxu0 %v2168
  %v2475 = vpop.f32.mrf.mxu0
  %v2476 = vadd.f32 0.0, %v2475
  %2477 = vmatmul.f32.gmra.mxu0 %v2171
  %v2478 = vpop.f32.mrf.mxu0
  %v2479 = vadd.f32 0.0, %v2478
  %2480 = vmatmul.f32.gmra.mxu0 %v2174
  %v2481 = vpop.f32.mrf.mxu0
  %v2482 = vadd.f32 0.0, %v2481
  %2483 = vmatmul.f32.gmra.mxu0 %v2177
  %v2484 = vpop.f32.mrf.mxu0
  %v2485 = vadd.f32 0.0, %v2484
  %2486 = vmatmul.f32.gmra.mxu0 %v2180
  %v2487 = vpop.f32.mrf.mxu0
  %v2488 = vadd.f32 0.0, %v2487
  %2489 = vmatmul.f32.gmra.mxu0 %v2183
  %v2490 = vpop.f32.mrf.mxu0
  %v2491 = vadd.f32 0.0, %v2490
  %2492 = vmatmul.f32.gmra.mxu0 %v2186
  %v2493 = vpop.f32.mrf.mxu0
  %v2494 = vadd.f32 0.0, %v2493
  %2495 = vmatmul.f32.gmra.mxu0 %v2189
  %v2496 = vpop.f32.mrf.mxu0
  %v2497 = vadd.f32 0.0, %v2496
  %2498 = vmatmul.f32.gmra.mxu0 %v2192
  %v2499 = vpop.f32.mrf.mxu0
  %v2500 = vadd.f32 0.0, %v2499
  %2501 = vmatmul.f32.gmra.mxu0 %v2195
  %v2502 = vpop.f32.mrf.mxu0
  %v2503 = vadd.f32 0.0, %v2502
  %2504 = vmatmul.f32.gmra.mxu0 %v2198
  %v2505 = vpop.f32.mrf.mxu0
  %v2506 = vadd.f32 0.0, %v2505
  %2507 = vmatmul.f32.gmra.mxu0 %v2201
  %v2508 = vpop.f32.mrf.mxu0
  %v2509 = vadd.f32 0.0, %v2508
  %2510 = vmatmul.f32.gmra.mxu0 %v2204
  %v2511 = vpop.f32.mrf.mxu0
  %v2512 = vadd.f32 0.0, %v2511
  %2513 = vmatmul.f32.gmra.mxu0 %v2207
  %v2514 = vpop.f32.mrf.mxu0
  %v2515 = vadd.f32 0.0, %v2514
  %2516 = vmatmul.f32.gmra.mxu0 %v2210
  %v2517 = vpop.f32.mrf.mxu0
  %v2518 = vadd.f32 0.0, %v2517
  %2519 = vmatmul.f32.gmra.mxu0 %v2213
  %v2520 = vpop.f32.mrf.mxu0
  %v2521 = vadd.f32 0.0, %v2520
  %2522 = vmatmul.f32.gmra.mxu0 %v2216
  %v2523 = vpop.f32.mrf.mxu0
  %v2524 = vadd.f32 0.0, %v2523
  %2525 = vmatmul.f32.gmra.mxu0 %v2219
  %v2526 = vpop.f32.mrf.mxu0
  %v2527 = vadd.f32 0.0, %v2526
  %2528 = vmatmul.f32.gmra.mxu0 %v2222
  %v2529 = vpop.f32.mrf.mxu0
  %v2530 = vadd.f32 0.0, %v2529
  %2531 = vmatmul.f32.gmra.mxu0 %v2225
  %v2532 = vpop.f32.mrf.mxu0
  %v2533 = vadd.f32 0.0, %v2532
  %2534 = vmatmul.f32.gmra.mxu0 %v2228
  %v2535 = vpop.f32.mrf.mxu0
  %v2536 = vadd.f32 0.0, %v2535
  %2537 = vmatmul.f32.gmra.mxu0 %v2231
  %v2538 = vpop.f32.mrf.mxu0
  %v2539 = vadd.f32 0.0, %v2538
  %2540 = vmatmul.f32.gmra.mxu0 %v2234
  %v2541 = vpop.f32.mrf.mxu0
  %v2542 = vadd.f32 0.0, %v2541
  %2543 = vmatmul.f32.gmra.mxu0 %v2237
  %v2544 = vpop.f32.mrf.mxu0
  %v2545 = vadd.f32 0.0, %v2544
  %2546 = vmatmul.f32.gmra.mxu0 %v2240
  %v2547 = vpop.f32.mrf.mxu0
  %v2548 = vadd.f32 0.0, %v2547
  %2549 = vmatmul.f32.gmra.mxu0 %v2243
  %v2550 = vpop.f32.mrf.mxu0
  %v2551 = vadd.f32 0.0, %v2550
  %2552 = vmatmul.f32.gmra.mxu0 %v2246
  %v2553 = vpop.f32.mrf.mxu0
  %v2554 = vadd.f32 0.0, %v2553
  %2555 = vmatmul.f32.gmra.mxu0 %v2249
  %v2556 = vpop.f32.mrf.mxu0
  %v2557 = vadd.f32 0.0, %v2556
  %2558 = vmatmul.f32.gmra.mxu0 %v2252
  %v2559 = vpop.f32.mrf.mxu0
  %v2560 = vadd.f32 0.0, %v2559
  %2561 = vmatmul.f32.gmra.mxu0 %v2255
  %v2562 = vpop.f32.mrf.mxu0
  %v2563 = vadd.f32 0.0, %v2562
  %2564 = vmatmul.f32.gmra.mxu0 %v2258
  %v2565 = vpop.f32.mrf.mxu0
  %v2566 = vadd.f32 0.0, %v2565
  %2567 = vmatmul.f32.gmra.mxu0 %v2261
  %v2568 = vpop.f32.mrf.mxu0
  %v2569 = vadd.f32 0.0, %v2568
  %2570 = vmatmul.f32.gmra.mxu0 %v2264
  %v2571 = vpop.f32.mrf.mxu0
  %v2572 = vadd.f32 0.0, %v2571
  %2573 = vmatmul.f32.gmra.mxu0 %v2267
  %v2574 = vpop.f32.mrf.mxu0
  %v2575 = vadd.f32 0.0, %v2574
  %2576 = vmatmul.f32.gmra.mxu0 %v2270
  %v2577 = vpop.f32.mrf.mxu0
  %v2578 = vadd.f32 0.0, %v2577
  %2579 = vmatmul.f32.gmra.mxu0 %v2273
  %v2580 = vpop.f32.mrf.mxu0
  %v2581 = vadd.f32 0.0, %v2580
  %2582 = vmatmul.f32.gmra.mxu0 %v2276
  %v2583 = vpop.f32.mrf.mxu0
  %v2584 = vadd.f32 0.0, %v2583
  %2585 = vmatmul.f32.gmra.mxu0 %v2279
  %v2586 = vpop.f32.mrf.mxu0
  %v2587 = vadd.f32 0.0, %v2586
  %2588 = vmatmul.f32.gmra.mxu0 %v2282
  %v2589 = vpop.f32.mrf.mxu0
  %v2590 = vadd.f32 0.0, %v2589
  %2591 = vmatmul.f32.gmra.mxu0 %v2285
  %v2592 = vpop.f32.mrf.mxu0
  %v2593 = vadd.f32 0.0, %v2592
  %2594 = vmatmul.f32.gmra.mxu0 %v2288
  %v2595 = vpop.f32.mrf.mxu0
  %v2596 = vadd.f32 0.0, %v2595
  %2597 = vmatmul.f32.gmra.mxu0 %v2291
  %v2598 = vpop.f32.mrf.mxu0
  %v2599 = vadd.f32 0.0, %v2598
  %2600 = vmatmul.f32.gmra.mxu0 %v2294
  %v2601 = vpop.f32.mrf.mxu0
  %v2602 = vadd.f32 0.0, %v2601
  %2603 = vmatmul.f32.gmra.mxu0 %v2297
  %v2604 = vpop.f32.mrf.mxu0
  %v2605 = vadd.f32 0.0, %v2604
  %2606 = vmatmul.f32.gmra.mxu0 %v2300
  %v2607 = vpop.f32.mrf.mxu0
  %v2608 = vadd.f32 0.0, %v2607
  %2609 = vmatmul.f32.gmra.mxu0 %v2303
  %v2610 = vpop.f32.mrf.mxu0
  %v2611 = vadd.f32 0.0, %v2610
  %2612 = vmatmul.f32.gmra.mxu0 %v2306
  %v2613 = vpop.f32.mrf.mxu0
  %v2614 = vadd.f32 0.0, %v2613
  %2615 = vmatmul.f32.gmra.mxu0 %v2309
  %v2616 = vpop.f32.mrf.mxu0
  %v2617 = vadd.f32 0.0, %v2616
  %2618 = vmatmul.f32.gmra.mxu0 %v2312
  %v2619 = vpop.f32.mrf.mxu0
  %v2620 = vadd.f32 0.0, %v2619
  %2621 = vmatmul.f32.gmra.mxu0 %v2315
  %v2622 = vpop.f32.mrf.mxu0
  %v2623 = vadd.f32 0.0, %v2622
  %2624 = vmatmul.f32.gmra.mxu0 %v2318
  %v2625 = vpop.f32.mrf.mxu0
  %v2626 = vadd.f32 0.0, %v2625
  %2627 = vmatmul.f32.gmra.mxu0 %v2321
  %v2628 = vpop.f32.mrf.mxu0
  %v2629 = vadd.f32 0.0, %v2628
  %2630 = vmatmul.f32.gmra.mxu0 %v2324
  %v2631 = vpop.f32.mrf.mxu0
  %v2632 = vadd.f32 0.0, %v2631
  %2633 = vmatmul.f32.gmra.mxu0 %v2327
  %v2634 = vpop.f32.mrf.mxu0
  %v2635 = vadd.f32 0.0, %v2634
  %2636 = vmatmul.f32.gmra.mxu0 %v2330
  %v2637 = vpop.f32.mrf.mxu0
  %v2638 = vadd.f32 0.0, %v2637
  %2639 = vmatmul.f32.gmra.mxu0 %v2333
  %v2640 = vpop.f32.mrf.mxu0
  %v2641 = vadd.f32 0.0, %v2640
  %2642 = vmatmul.f32.gmra.mxu0 %v2336
  %v2643 = vpop.f32.mrf.mxu0
  %v2644 = vadd.f32 0.0, %v2643
  %2645 = vmatmul.f32.gmra.mxu0 %v2339
  %v2646 = vpop.f32.mrf.mxu0
  %v2647 = vadd.f32 0.0, %v2646
  %2648 = vmatmul.f32.gmra.mxu0 %v2342
  %v2649 = vpop.f32.mrf.mxu0
  %v2650 = vadd.f32 0.0, %v2649
  %2651 = vmatmul.f32.gmra.mxu0 %v2345
  %v2652 = vpop.f32.mrf.mxu0
  %v2653 = vadd.f32 0.0, %v2652
  %2654 = vmatmul.f32.gmra.mxu0 %v2348
  %v2655 = vpop.f32.mrf.mxu0
  %v2656 = vadd.f32 0.0, %v2655
  %2657 = vmatmul.f32.gmra.mxu0 %v2351
  %v2658 = vpop.f32.mrf.mxu0
  %v2659 = vadd.f32 0.0, %v2658
  %2660 = vmatmul.f32.gmra.mxu0 %v2354
  %v2661 = vpop.f32.mrf.mxu0
  %v2662 = vadd.f32 0.0, %v2661
  %2663 = vmatmul.f32.gmra.mxu0 %v2357
  %v2664 = vpop.f32.mrf.mxu0
  %v2665 = vadd.f32 0.0, %v2664
  %2666 = vmatmul.f32.gmra.mxu0 %v2360
  %v2667 = vpop.f32.mrf.mxu0
  %v2668 = vadd.f32 0.0, %v2667
  %2669 = vmatmul.f32.gmra.mxu0 %v2363
  %v2670 = vpop.f32.mrf.mxu0
  %v2671 = vadd.f32 0.0, %v2670
  %2672 = vmatmul.f32.gmra.mxu0 %v2366
  %v2673 = vpop.f32.mrf.mxu0
  %v2674 = vadd.f32 0.0, %v2673
  %2675 = vmatmul.f32.gmra.mxu0 %v2369
  %v2676 = vpop.f32.mrf.mxu0
  %v2677 = vadd.f32 0.0, %v2676
  %2678 = vmatmul.f32.gmra.mxu0 %v2372
  %v2679 = vpop.f32.mrf.mxu0
  %v2680 = vadd.f32 0.0, %v2679
  %2681 = vmatmul.f32.gmra.mxu0 %v2375
  %v2682 = vpop.f32.mrf.mxu0
  %v2683 = vadd.f32 0.0, %v2682
  %2684 = vmatmul.f32.gmra.mxu0 %v2378
  %v2685 = vpop.f32.mrf.mxu0
  %v2686 = vadd.f32 0.0, %v2685
  %2687 = vmatmul.f32.gmra.mxu0 %v2381
  %v2688 = vpop.f32.mrf.mxu0
  %v2689 = vadd.f32 0.0, %v2688
  %2690 = vmatmul.f32.gmra.mxu0 %v2384
  %v2691 = vpop.f32.mrf.mxu0
  %v2692 = vadd.f32 0.0, %v2691
  %2693 = vmatmul.f32.gmra.mxu0 %v2387
  %v2694 = vpop.f32.mrf.mxu0
  %v2695 = vadd.f32 0.0, %v2694
  %2696 = vmatmul.f32.gmra.mxu0 %v2390
  %v2697 = vpop.f32.mrf.mxu0
  %v2698 = vadd.f32 0.0, %v2697
  %2699 = vmatmul.f32.gmra.mxu0 %v2393
  %v2700 = vpop.f32.mrf.mxu0
  %v2701 = vadd.f32 0.0, %v2700
  %2702 = vmatmul.f32.gmra.mxu0 %v2396
  %v2703 = vpop.f32.mrf.mxu0
  %v2704 = vadd.f32 0.0, %v2703
  %2705 = vmatmul.f32.gmra.mxu0 %v2399
  %v2706 = vpop.f32.mrf.mxu0
  %v2707 = vadd.f32 0.0, %v2706
  %2708 = vmatmul.f32.gmra.mxu0 %v2402
  %v2709 = vpop.f32.mrf.mxu0
  %v2710 = vadd.f32 0.0, %v2709
  %2711 = vmatmul.f32.gmra.mxu0 %v2405
  %v2712 = vpop.f32.mrf.mxu0
  %v2713 = vadd.f32 0.0, %v2712
  %2714 = vmatmul.f32.gmra.mxu0 %v2408
  %v2715 = vpop.f32.mrf.mxu0
  %v2716 = vadd.f32 0.0, %v2715
  %2717 = vmatmul.f32.gmra.mxu0 %v2411
  %v2718 = vpop.f32.mrf.mxu0
  %v2719 = vadd.f32 0.0, %v2718
  %2720 = vmatmul.f32.gmra.mxu0 %v2414
  %v2721 = vpop.f32.mrf.mxu0
  %v2722 = vadd.f32 0.0, %v2721
  %2723 = vmatmul.f32.gmra.mxu0 %v2417
  %v2724 = vpop.f32.mrf.mxu0
  %v2725 = vadd.f32 0.0, %v2724
  %2726 = vmatmul.f32.gmra.mxu0 %v2420
  %v2727 = vpop.f32.mrf.mxu0
  %v2728 = vadd.f32 0.0, %v2727
  %2729 = vmatmul.f32.gmra.mxu0 %v2423
  %v2730 = vpop.f32.mrf.mxu0
  %v2731 = vadd.f32 0.0, %v2730
  %2732 = vmatmul.f32.gmra.mxu0 %v2426
  %v2733 = vpop.f32.mrf.mxu0
  %v2734 = vadd.f32 0.0, %v2733
  %2735 = vmatmul.f32.gmra.mxu0 %v2429
  %v2736 = vpop.f32.mrf.mxu0
  %v2737 = vadd.f32 0.0, %v2736
  %2738 = vmatmul.f32.gmra.mxu0 %v2432
  %v2739 = vpop.f32.mrf.mxu0
  %v2740 = vadd.f32 0.0, %v2739
  %2741 = vmatmul.f32.gmra.mxu0 %v2435
  %v2742 = vpop.f32.mrf.mxu0
  %v2743 = vadd.f32 0.0, %v2742
  %2744 = vmatmul.f32.gmra.mxu0 %v2438
  %v2745 = vpop.f32.mrf.mxu0
  %v2746 = vadd.f32 0.0, %v2745
  %2747 = vmatmul.f32.gmra.mxu0 %v2441
  %v2748 = vpop.f32.mrf.mxu0
  %v2749 = vadd.f32 0.0, %v2748
  %2750 = vmatmul.f32.gmra.mxu0 %v2444
  %v2751 = vpop.f32.mrf.mxu0
  %v2752 = vadd.f32 0.0, %v2751
  %2753 = vmatmul.f32.gmra.mxu0 %v2447
  %v2754 = vpop.f32.mrf.mxu0
  %v2755 = vadd.f32 0.0, %v2754
  %2756 = vdwg.mxu0
  %v2757 = vadd.f32 %v1152, %v2470
  %v2758 = vadd.f32 %v1155, %v2473
  %v2759 = vadd.f32 %v1158, %v2476
  %v2760 = vadd.f32 %v1161, %v2479
  %v2761 = vadd.f32 %v1164, %v2482
  %v2762 = vadd.f32 %v1167, %v2485
  %v2763 = vadd.f32 %v1170, %v2488
  %v2764 = vadd.f32 %v1173, %v2491
  %v2765 = vadd.f32 %v1176, %v2494
  %v2766 = vadd.f32 %v1179, %v2497
  %v2767 = vadd.f32 %v1182, %v2500
  %v2768 = vadd.f32 %v1185, %v2503
  %v2769 = vadd.f32 %v1188, %v2506
  %v2770 = vadd.f32 %v1191, %v2509
  %v2771 = vadd.f32 %v1194, %v2512
  %v2772 = vadd.f32 %v1197, %v2515
  %v2773 = vadd.f32 %v1200, %v2518
  %v2774 = vadd.f32 %v1203, %v2521
  %v2775 = vadd.f32 %v1206, %v2524
  %v2776 = vadd.f32 %v1209, %v2527
  %v2777 = vadd.f32 %v1212, %v2530
  %v2778 = vadd.f32 %v1215, %v2533
  %v2779 = vadd.f32 %v1218, %v2536
  %v2780 = vadd.f32 %v1221, %v2539
  %v2781 = vadd.f32 %v1224, %v2542
  %v2782 = vadd.f32 %v1227, %v2545
  %v2783 = vadd.f32 %v1230, %v2548
  %v2784 = vadd.f32 %v1233, %v2551
  %v2785 = vadd.f32 %v1236, %v2554
  %v2786 = vadd.f32 %v1239, %v2557
  %v2787 = vadd.f32 %v1242, %v2560
  %v2788 = vadd.f32 %v1245, %v2563
  %v2789 = vadd.f32 %v1248, %v2566
  %v2790 = vadd.f32 %v1251, %v2569
  %v2791 = vadd.f32 %v1254, %v2572
  %v2792 = vadd.f32 %v1257, %v2575
  %v2793 = vadd.f32 %v1260, %v2578
  %v2794 = vadd.f32 %v1263, %v2581
  %v2795 = vadd.f32 %v1266, %v2584
  %v2796 = vadd.f32 %v1269, %v2587
  %v2797 = vadd.f32 %v1272, %v2590
  %v2798 = vadd.f32 %v1275, %v2593
  %v2799 = vadd.f32 %v1278, %v2596
  %v2800 = vadd.f32 %v1281, %v2599
  %v2801 = vadd.f32 %v1284, %v2602
  %v2802 = vadd.f32 %v1287, %v2605
  %v2803 = vadd.f32 %v1290, %v2608
  %v2804 = vadd.f32 %v1293, %v2611
  %v2805 = vadd.f32 %v1296, %v2614
  %v2806 = vadd.f32 %v1299, %v2617
  %v2807 = vadd.f32 %v1302, %v2620
  %v2808 = vadd.f32 %v1305, %v2623
  %v2809 = vadd.f32 %v1308, %v2626
  %v2810 = vadd.f32 %v1311, %v2629
  %v2811 = vadd.f32 %v1314, %v2632
  %v2812 = vadd.f32 %v1317, %v2635
  %v2813 = vadd.f32 %v1320, %v2638
  %v2814 = vadd.f32 %v1323, %v2641
  %v2815 = vadd.f32 %v1326, %v2644
  %v2816 = vadd.f32 %v1329, %v2647
  %v2817 = vadd.f32 %v1332, %v2650
  %v2818 = vadd.f32 %v1335, %v2653
  %v2819 = vadd.f32 %v1338, %v2656
  %v2820 = vadd.f32 %v1341, %v2659
  %v2821 = vadd.f32 %v1344, %v2662
  %v2822 = vadd.f32 %v1347, %v2665
  %v2823 = vadd.f32 %v1350, %v2668
  %v2824 = vadd.f32 %v1353, %v2671
  %v2825 = vadd.f32 %v1356, %v2674
  %v2826 = vadd.f32 %v1359, %v2677
  %v2827 = vadd.f32 %v1362, %v2680
  %v2828 = vadd.f32 %v1365, %v2683
  %v2829 = vadd.f32 %v1368, %v2686
  %v2830 = vadd.f32 %v1371, %v2689
  %v2831 = vadd.f32 %v1374, %v2692
  %v2832 = vadd.f32 %v1377, %v2695
  %v2833 = vadd.f32 %v1380, %v2698
  %v2834 = vadd.f32 %v1383, %v2701
  %v2835 = vadd.f32 %v1386, %v2704
  %v2836 = vadd.f32 %v1389, %v2707
  %v2837 = vadd.f32 %v1392, %v2710
  %v2838 = vadd.f32 %v1395, %v2713
  %v2839 = vadd.f32 %v1398, %v2716
  %v2840 = vadd.f32 %v1401, %v2719
  %v2841 = vadd.f32 %v1404, %v2722
  %v2842 = vadd.f32 %v1407, %v2725
  %v2843 = vadd.f32 %v1410, %v2728
  %v2844 = vadd.f32 %v1413, %v2731
  %v2845 = vadd.f32 %v1416, %v2734
  %v2846 = vadd.f32 %v1419, %v2737
  %v2847 = vadd.f32 %v1422, %v2740
  %v2848 = vadd.f32 %v1425, %v2743
  %v2849 = vadd.f32 %v1428, %v2746
  %v2850 = vadd.f32 %v1431, %v2749
  %v2851 = vadd.f32 %v1434, %v2752
  %v2852 = vadd.f32 %v1437, %v2755
  %s2853 = scalar_lea.vmem %s1, 224
  %v2854 = vld [vmem:[%s2853] sm:$0xff]
  %v2855 = vld [vmem:[%s2853 + $0x8] sm:$0xff]
  %v2856 = vld [vmem:[%s2853 + $0x10] sm:$0xff]
  %v2857 = vld [vmem:[%s2853 + $0x18] sm:$0xf]
  %v2859 = vsel %vm534, %v2857, 0
  %2861 = vmatpush.msra.mxu0 0.0
  %2862 = vmatpush.msra.mxu0 0.0
  %2863 = vmatpush.msra.mxu0 0.0
  %2864 = vmatpush.msra.mxu0 0.0
  %2865 = vmatpush.msra.mxu0 0.0
  %2866 = vmatpush.msra.mxu0 0.0
  %2867 = vmatpush.msra.mxu0 0.0
  %2868 = vmatpush.msra.mxu0 0.0
  %2869 = vmatpush.msra.mxu0 0.0
  %2870 = vmatpush.msra.mxu0 0.0
  %2871 = vmatpush.msra.mxu0 0.0
  %2872 = vmatpush.msra.mxu0 0.0
  %2873 = vmatpush.msra.mxu0 %v2859
  %2874 = vmatpush.msra.mxu0 %v2856
  %2875 = vmatpush.msra.mxu0 %v2855
  %2876 = vmatpush.msra.mxu0 %v2854
  %2877 = vmatmul.f32.gmra.mxu0 %v2162
  %v2878 = vpop.f32.mrf.mxu0
  %v2879 = vadd.f32 0.0, %v2878
  %2880 = vmatmul.f32.gmra.mxu0 %v2165
  %v2881 = vpop.f32.mrf.mxu0
  %v2882 = vadd.f32 0.0, %v2881
  %2883 = vmatmul.f32.gmra.mxu0 %v2168
  %v2884 = vpop.f32.mrf.mxu0
  %v2885 = vadd.f32 0.0, %v2884
  %2886 = vmatmul.f32.gmra.mxu0 %v2171
  %v2887 = vpop.f32.mrf.mxu0
  %v2888 = vadd.f32 0.0, %v2887
  %2889 = vmatmul.f32.gmra.mxu0 %v2174
  %v2890 = vpop.f32.mrf.mxu0
  %v2891 = vadd.f32 0.0, %v2890
  %2892 = vmatmul.f32.gmra.mxu0 %v2177
  %v2893 = vpop.f32.mrf.mxu0
  %v2894 = vadd.f32 0.0, %v2893
  %2895 = vmatmul.f32.gmra.mxu0 %v2180
  %v2896 = vpop.f32.mrf.mxu0
  %v2897 = vadd.f32 0.0, %v2896
  %2898 = vmatmul.f32.gmra.mxu0 %v2183
  %v2899 = vpop.f32.mrf.mxu0
  %v2900 = vadd.f32 0.0, %v2899
  %2901 = vmatmul.f32.gmra.mxu0 %v2186
  %v2902 = vpop.f32.mrf.mxu0
  %v2903 = vadd.f32 0.0, %v2902
  %2904 = vmatmul.f32.gmra.mxu0 %v2189
  %v2905 = vpop.f32.mrf.mxu0
  %v2906 = vadd.f32 0.0, %v2905
  %2907 = vmatmul.f32.gmra.mxu0 %v2192
  %v2908 = vpop.f32.mrf.mxu0
  %v2909 = vadd.f32 0.0, %v2908
  %2910 = vmatmul.f32.gmra.mxu0 %v2195
  %v2911 = vpop.f32.mrf.mxu0
  %v2912 = vadd.f32 0.0, %v2911
  %2913 = vmatmul.f32.gmra.mxu0 %v2198
  %v2914 = vpop.f32.mrf.mxu0
  %v2915 = vadd.f32 0.0, %v2914
  %2916 = vmatmul.f32.gmra.mxu0 %v2201
  %v2917 = vpop.f32.mrf.mxu0
  %v2918 = vadd.f32 0.0, %v2917
  %2919 = vmatmul.f32.gmra.mxu0 %v2204
  %v2920 = vpop.f32.mrf.mxu0
  %v2921 = vadd.f32 0.0, %v2920
  %2922 = vmatmul.f32.gmra.mxu0 %v2207
  %v2923 = vpop.f32.mrf.mxu0
  %v2924 = vadd.f32 0.0, %v2923
  %2925 = vmatmul.f32.gmra.mxu0 %v2210
  %v2926 = vpop.f32.mrf.mxu0
  %v2927 = vadd.f32 0.0, %v2926
  %2928 = vmatmul.f32.gmra.mxu0 %v2213
  %v2929 = vpop.f32.mrf.mxu0
  %v2930 = vadd.f32 0.0, %v2929
  %2931 = vmatmul.f32.gmra.mxu0 %v2216
  %v2932 = vpop.f32.mrf.mxu0
  %v2933 = vadd.f32 0.0, %v2932
  %2934 = vmatmul.f32.gmra.mxu0 %v2219
  %v2935 = vpop.f32.mrf.mxu0
  %v2936 = vadd.f32 0.0, %v2935
  %2937 = vmatmul.f32.gmra.mxu0 %v2222
  %v2938 = vpop.f32.mrf.mxu0
  %v2939 = vadd.f32 0.0, %v2938
  %2940 = vmatmul.f32.gmra.mxu0 %v2225
  %v2941 = vpop.f32.mrf.mxu0
  %v2942 = vadd.f32 0.0, %v2941
  %2943 = vmatmul.f32.gmra.mxu0 %v2228
  %v2944 = vpop.f32.mrf.mxu0
  %v2945 = vadd.f32 0.0, %v2944
  %2946 = vmatmul.f32.gmra.mxu0 %v2231
  %v2947 = vpop.f32.mrf.mxu0
  %v2948 = vadd.f32 0.0, %v2947
  %2949 = vmatmul.f32.gmra.mxu0 %v2234
  %v2950 = vpop.f32.mrf.mxu0
  %v2951 = vadd.f32 0.0, %v2950
  %2952 = vmatmul.f32.gmra.mxu0 %v2237
  %v2953 = vpop.f32.mrf.mxu0
  %v2954 = vadd.f32 0.0, %v2953
  %2955 = vmatmul.f32.gmra.mxu0 %v2240
  %v2956 = vpop.f32.mrf.mxu0
  %v2957 = vadd.f32 0.0, %v2956
  %2958 = vmatmul.f32.gmra.mxu0 %v2243
  %v2959 = vpop.f32.mrf.mxu0
  %v2960 = vadd.f32 0.0, %v2959
  %2961 = vmatmul.f32.gmra.mxu0 %v2246
  %v2962 = vpop.f32.mrf.mxu0
  %v2963 = vadd.f32 0.0, %v2962
  %2964 = vmatmul.f32.gmra.mxu0 %v2249
  %v2965 = vpop.f32.mrf.mxu0
  %v2966 = vadd.f32 0.0, %v2965
  %2967 = vmatmul.f32.gmra.mxu0 %v2252
  %v2968 = vpop.f32.mrf.mxu0
  %v2969 = vadd.f32 0.0, %v2968
  %2970 = vmatmul.f32.gmra.mxu0 %v2255
  %v2971 = vpop.f32.mrf.mxu0
  %v2972 = vadd.f32 0.0, %v2971
  %2973 = vmatmul.f32.gmra.mxu0 %v2258
  %v2974 = vpop.f32.mrf.mxu0
  %v2975 = vadd.f32 0.0, %v2974
  %2976 = vmatmul.f32.gmra.mxu0 %v2261
  %v2977 = vpop.f32.mrf.mxu0
  %v2978 = vadd.f32 0.0, %v2977
  %2979 = vmatmul.f32.gmra.mxu0 %v2264
  %v2980 = vpop.f32.mrf.mxu0
  %v2981 = vadd.f32 0.0, %v2980
  %2982 = vmatmul.f32.gmra.mxu0 %v2267
  %v2983 = vpop.f32.mrf.mxu0
  %v2984 = vadd.f32 0.0, %v2983
  %2985 = vmatmul.f32.gmra.mxu0 %v2270
  %v2986 = vpop.f32.mrf.mxu0
  %v2987 = vadd.f32 0.0, %v2986
  %2988 = vmatmul.f32.gmra.mxu0 %v2273
  %v2989 = vpop.f32.mrf.mxu0
  %v2990 = vadd.f32 0.0, %v2989
  %2991 = vmatmul.f32.gmra.mxu0 %v2276
  %v2992 = vpop.f32.mrf.mxu0
  %v2993 = vadd.f32 0.0, %v2992
  %2994 = vmatmul.f32.gmra.mxu0 %v2279
  %v2995 = vpop.f32.mrf.mxu0
  %v2996 = vadd.f32 0.0, %v2995
  %2997 = vmatmul.f32.gmra.mxu0 %v2282
  %v2998 = vpop.f32.mrf.mxu0
  %v2999 = vadd.f32 0.0, %v2998
  %3000 = vmatmul.f32.gmra.mxu0 %v2285
  %v3001 = vpop.f32.mrf.mxu0
  %v3002 = vadd.f32 0.0, %v3001
  %3003 = vmatmul.f32.gmra.mxu0 %v2288
  %v3004 = vpop.f32.mrf.mxu0
  %v3005 = vadd.f32 0.0, %v3004
  %3006 = vmatmul.f32.gmra.mxu0 %v2291
  %v3007 = vpop.f32.mrf.mxu0
  %v3008 = vadd.f32 0.0, %v3007
  %3009 = vmatmul.f32.gmra.mxu0 %v2294
  %v3010 = vpop.f32.mrf.mxu0
  %v3011 = vadd.f32 0.0, %v3010
  %3012 = vmatmul.f32.gmra.mxu0 %v2297
  %v3013 = vpop.f32.mrf.mxu0
  %v3014 = vadd.f32 0.0, %v3013
  %3015 = vmatmul.f32.gmra.mxu0 %v2300
  %v3016 = vpop.f32.mrf.mxu0
  %v3017 = vadd.f32 0.0, %v3016
  %3018 = vmatmul.f32.gmra.mxu0 %v2303
  %v3019 = vpop.f32.mrf.mxu0
  %v3020 = vadd.f32 0.0, %v3019
  %3021 = vmatmul.f32.gmra.mxu0 %v2306
  %v3022 = vpop.f32.mrf.mxu0
  %v3023 = vadd.f32 0.0, %v3022
  %3024 = vmatmul.f32.gmra.mxu0 %v2309
  %v3025 = vpop.f32.mrf.mxu0
  %v3026 = vadd.f32 0.0, %v3025
  %3027 = vmatmul.f32.gmra.mxu0 %v2312
  %v3028 = vpop.f32.mrf.mxu0
  %v3029 = vadd.f32 0.0, %v3028
  %3030 = vmatmul.f32.gmra.mxu0 %v2315
  %v3031 = vpop.f32.mrf.mxu0
  %v3032 = vadd.f32 0.0, %v3031
  %3033 = vmatmul.f32.gmra.mxu0 %v2318
  %v3034 = vpop.f32.mrf.mxu0
  %v3035 = vadd.f32 0.0, %v3034
  %3036 = vmatmul.f32.gmra.mxu0 %v2321
  %v3037 = vpop.f32.mrf.mxu0
  %v3038 = vadd.f32 0.0, %v3037
  %3039 = vmatmul.f32.gmra.mxu0 %v2324
  %v3040 = vpop.f32.mrf.mxu0
  %v3041 = vadd.f32 0.0, %v3040
  %3042 = vmatmul.f32.gmra.mxu0 %v2327
  %v3043 = vpop.f32.mrf.mxu0
  %v3044 = vadd.f32 0.0, %v3043
  %3045 = vmatmul.f32.gmra.mxu0 %v2330
  %v3046 = vpop.f32.mrf.mxu0
  %v3047 = vadd.f32 0.0, %v3046
  %3048 = vmatmul.f32.gmra.mxu0 %v2333
  %v3049 = vpop.f32.mrf.mxu0
  %v3050 = vadd.f32 0.0, %v3049
  %3051 = vmatmul.f32.gmra.mxu0 %v2336
  %v3052 = vpop.f32.mrf.mxu0
  %v3053 = vadd.f32 0.0, %v3052
  %3054 = vmatmul.f32.gmra.mxu0 %v2339
  %v3055 = vpop.f32.mrf.mxu0
  %v3056 = vadd.f32 0.0, %v3055
  %3057 = vmatmul.f32.gmra.mxu0 %v2342
  %v3058 = vpop.f32.mrf.mxu0
  %v3059 = vadd.f32 0.0, %v3058
  %3060 = vmatmul.f32.gmra.mxu0 %v2345
  %v3061 = vpop.f32.mrf.mxu0
  %v3062 = vadd.f32 0.0, %v3061
  %3063 = vmatmul.f32.gmra.mxu0 %v2348
  %v3064 = vpop.f32.mrf.mxu0
  %v3065 = vadd.f32 0.0, %v3064
  %3066 = vmatmul.f32.gmra.mxu0 %v2351
  %v3067 = vpop.f32.mrf.mxu0
  %v3068 = vadd.f32 0.0, %v3067
  %3069 = vmatmul.f32.gmra.mxu0 %v2354
  %v3070 = vpop.f32.mrf.mxu0
  %v3071 = vadd.f32 0.0, %v3070
  %3072 = vmatmul.f32.gmra.mxu0 %v2357
  %v3073 = vpop.f32.mrf.mxu0
  %v3074 = vadd.f32 0.0, %v3073
  %3075 = vmatmul.f32.gmra.mxu0 %v2360
  %v3076 = vpop.f32.mrf.mxu0
  %v3077 = vadd.f32 0.0, %v3076
  %3078 = vmatmul.f32.gmra.mxu0 %v2363
  %v3079 = vpop.f32.mrf.mxu0
  %v3080 = vadd.f32 0.0, %v3079
  %3081 = vmatmul.f32.gmra.mxu0 %v2366
  %v3082 = vpop.f32.mrf.mxu0
  %v3083 = vadd.f32 0.0, %v3082
  %3084 = vmatmul.f32.gmra.mxu0 %v2369
  %v3085 = vpop.f32.mrf.mxu0
  %v3086 = vadd.f32 0.0, %v3085
  %3087 = vmatmul.f32.gmra.mxu0 %v2372
  %v3088 = vpop.f32.mrf.mxu0
  %v3089 = vadd.f32 0.0, %v3088
  %3090 = vmatmul.f32.gmra.mxu0 %v2375
  %v3091 = vpop.f32.mrf.mxu0
  %v3092 = vadd.f32 0.0, %v3091
  %3093 = vmatmul.f32.gmra.mxu0 %v2378
  %v3094 = vpop.f32.mrf.mxu0
  %v3095 = vadd.f32 0.0, %v3094
  %3096 = vmatmul.f32.gmra.mxu0 %v2381
  %v3097 = vpop.f32.mrf.mxu0
  %v3098 = vadd.f32 0.0, %v3097
  %3099 = vmatmul.f32.gmra.mxu0 %v2384
  %v3100 = vpop.f32.mrf.mxu0
  %v3101 = vadd.f32 0.0, %v3100
  %3102 = vmatmul.f32.gmra.mxu0 %v2387
  %v3103 = vpop.f32.mrf.mxu0
  %v3104 = vadd.f32 0.0, %v3103
  %3105 = vmatmul.f32.gmra.mxu0 %v2390
  %v3106 = vpop.f32.mrf.mxu0
  %v3107 = vadd.f32 0.0, %v3106
  %3108 = vmatmul.f32.gmra.mxu0 %v2393
  %v3109 = vpop.f32.mrf.mxu0
  %v3110 = vadd.f32 0.0, %v3109
  %3111 = vmatmul.f32.gmra.mxu0 %v2396
  %v3112 = vpop.f32.mrf.mxu0
  %v3113 = vadd.f32 0.0, %v3112
  %3114 = vmatmul.f32.gmra.mxu0 %v2399
  %v3115 = vpop.f32.mrf.mxu0
  %v3116 = vadd.f32 0.0, %v3115
  %3117 = vmatmul.f32.gmra.mxu0 %v2402
  %v3118 = vpop.f32.mrf.mxu0
  %v3119 = vadd.f32 0.0, %v3118
  %3120 = vmatmul.f32.gmra.mxu0 %v2405
  %v3121 = vpop.f32.mrf.mxu0
  %v3122 = vadd.f32 0.0, %v3121
  %3123 = vmatmul.f32.gmra.mxu0 %v2408
  %v3124 = vpop.f32.mrf.mxu0
  %v3125 = vadd.f32 0.0, %v3124
  %3126 = vmatmul.f32.gmra.mxu0 %v2411
  %v3127 = vpop.f32.mrf.mxu0
  %v3128 = vadd.f32 0.0, %v3127
  %3129 = vmatmul.f32.gmra.mxu0 %v2414
  %v3130 = vpop.f32.mrf.mxu0
  %v3131 = vadd.f32 0.0, %v3130
  %3132 = vmatmul.f32.gmra.mxu0 %v2417
  %v3133 = vpop.f32.mrf.mxu0
  %v3134 = vadd.f32 0.0, %v3133
  %3135 = vmatmul.f32.gmra.mxu0 %v2420
  %v3136 = vpop.f32.mrf.mxu0
  %v3137 = vadd.f32 0.0, %v3136
  %3138 = vmatmul.f32.gmra.mxu0 %v2423
  %v3139 = vpop.f32.mrf.mxu0
  %v3140 = vadd.f32 0.0, %v3139
  %3141 = vmatmul.f32.gmra.mxu0 %v2426
  %v3142 = vpop.f32.mrf.mxu0
  %v3143 = vadd.f32 0.0, %v3142
  %3144 = vmatmul.f32.gmra.mxu0 %v2429
  %v3145 = vpop.f32.mrf.mxu0
  %v3146 = vadd.f32 0.0, %v3145
  %3147 = vmatmul.f32.gmra.mxu0 %v2432
  %v3148 = vpop.f32.mrf.mxu0
  %v3149 = vadd.f32 0.0, %v3148
  %3150 = vmatmul.f32.gmra.mxu0 %v2435
  %v3151 = vpop.f32.mrf.mxu0
  %v3152 = vadd.f32 0.0, %v3151
  %3153 = vmatmul.f32.gmra.mxu0 %v2438
  %v3154 = vpop.f32.mrf.mxu0
  %v3155 = vadd.f32 0.0, %v3154
  %3156 = vmatmul.f32.gmra.mxu0 %v2441
  %v3157 = vpop.f32.mrf.mxu0
  %v3158 = vadd.f32 0.0, %v3157
  %3159 = vmatmul.f32.gmra.mxu0 %v2444
  %v3160 = vpop.f32.mrf.mxu0
  %v3161 = vadd.f32 0.0, %v3160
  %3162 = vmatmul.f32.gmra.mxu0 %v2447
  %v3163 = vpop.f32.mrf.mxu0
  %v3164 = vadd.f32 0.0, %v3163
  %3165 = vdwg.mxu0
  %v3166 = vadd.f32 %v1773, %v2879
  %v3167 = vadd.f32 %v1776, %v2882
  %v3168 = vadd.f32 %v1779, %v2885
  %v3169 = vadd.f32 %v1782, %v2888
  %v3170 = vadd.f32 %v1785, %v2891
  %v3171 = vadd.f32 %v1788, %v2894
  %v3172 = vadd.f32 %v1791, %v2897
  %v3173 = vadd.f32 %v1794, %v2900
  %v3174 = vadd.f32 %v1797, %v2903
  %v3175 = vadd.f32 %v1800, %v2906
  %v3176 = vadd.f32 %v1803, %v2909
  %v3177 = vadd.f32 %v1806, %v2912
  %v3178 = vadd.f32 %v1809, %v2915
  %v3179 = vadd.f32 %v1812, %v2918
  %v3180 = vadd.f32 %v1815, %v2921
  %v3181 = vadd.f32 %v1818, %v2924
  %v3182 = vadd.f32 %v1821, %v2927
  %v3183 = vadd.f32 %v1824, %v2930
  %v3184 = vadd.f32 %v1827, %v2933
  %v3185 = vadd.f32 %v1830, %v2936
  %v3186 = vadd.f32 %v1833, %v2939
  %v3187 = vadd.f32 %v1836, %v2942
  %v3188 = vadd.f32 %v1839, %v2945
  %v3189 = vadd.f32 %v1842, %v2948
  %v3190 = vadd.f32 %v1845, %v2951
  %v3191 = vadd.f32 %v1848, %v2954
  %v3192 = vadd.f32 %v1851, %v2957
  %v3193 = vadd.f32 %v1854, %v2960
  %v3194 = vadd.f32 %v1857, %v2963
  %v3195 = vadd.f32 %v1860, %v2966
  %v3196 = vadd.f32 %v1863, %v2969
  %v3197 = vadd.f32 %v1866, %v2972
  %v3198 = vadd.f32 %v1869, %v2975
  %v3199 = vadd.f32 %v1872, %v2978
  %v3200 = vadd.f32 %v1875, %v2981
  %v3201 = vadd.f32 %v1878, %v2984
  %v3202 = vadd.f32 %v1881, %v2987
  %v3203 = vadd.f32 %v1884, %v2990
  %v3204 = vadd.f32 %v1887, %v2993
  %v3205 = vadd.f32 %v1890, %v2996
  %v3206 = vadd.f32 %v1893, %v2999
  %v3207 = vadd.f32 %v1896, %v3002
  %v3208 = vadd.f32 %v1899, %v3005
  %v3209 = vadd.f32 %v1902, %v3008
  %v3210 = vadd.f32 %v1905, %v3011
  %v3211 = vadd.f32 %v1908, %v3014
  %v3212 = vadd.f32 %v1911, %v3017
  %v3213 = vadd.f32 %v1914, %v3020
  %v3214 = vadd.f32 %v1917, %v3023
  %v3215 = vadd.f32 %v1920, %v3026
  %v3216 = vadd.f32 %v1923, %v3029
  %v3217 = vadd.f32 %v1926, %v3032
  %v3218 = vadd.f32 %v1929, %v3035
  %v3219 = vadd.f32 %v1932, %v3038
  %v3220 = vadd.f32 %v1935, %v3041
  %v3221 = vadd.f32 %v1938, %v3044
  %v3222 = vadd.f32 %v1941, %v3047
  %v3223 = vadd.f32 %v1944, %v3050
  %v3224 = vadd.f32 %v1947, %v3053
  %v3225 = vadd.f32 %v1950, %v3056
  %v3226 = vadd.f32 %v1953, %v3059
  %v3227 = vadd.f32 %v1956, %v3062
  %v3228 = vadd.f32 %v1959, %v3065
  %v3229 = vadd.f32 %v1962, %v3068
  %v3230 = vadd.f32 %v1965, %v3071
  %v3231 = vadd.f32 %v1968, %v3074
  %v3232 = vadd.f32 %v1971, %v3077
  %v3233 = vadd.f32 %v1974, %v3080
  %v3234 = vadd.f32 %v1977, %v3083
  %v3235 = vadd.f32 %v1980, %v3086
  %v3236 = vadd.f32 %v1983, %v3089
  %v3237 = vadd.f32 %v1986, %v3092
  %v3238 = vadd.f32 %v1989, %v3095
  %v3239 = vadd.f32 %v1992, %v3098
  %v3240 = vadd.f32 %v1995, %v3101
  %v3241 = vadd.f32 %v1998, %v3104
  %v3242 = vadd.f32 %v2001, %v3107
  %v3243 = vadd.f32 %v2004, %v3110
  %v3244 = vadd.f32 %v2007, %v3113
  %v3245 = vadd.f32 %v2010, %v3116
  %v3246 = vadd.f32 %v2013, %v3119
  %v3247 = vadd.f32 %v2016, %v3122
  %v3248 = vadd.f32 %v2019, %v3125
  %v3249 = vadd.f32 %v2022, %v3128
  %v3250 = vadd.f32 %v2025, %v3131
  %v3251 = vadd.f32 %v2028, %v3134
  %v3252 = vadd.f32 %v2031, %v3137
  %v3253 = vadd.f32 %v2034, %v3140
  %v3254 = vadd.f32 %v2037, %v3143
  %v3255 = vadd.f32 %v2040, %v3146
  %v3256 = vadd.f32 %v2043, %v3149
  %v3257 = vadd.f32 %v2046, %v3152
  %v3258 = vadd.f32 %v2049, %v3155
  %v3259 = vadd.f32 %v2052, %v3158
  %v3260 = vadd.f32 %v2055, %v3161
  %v3261 = vadd.f32 %v2058, %v3164
  %v3262 = vld [vmem:[%s0 + $0x3] sm:$0xff]
  %v3263 = vld [vmem:[%s0 + $0xb] sm:$0xff]
  %v3264 = vld [vmem:[%s0 + $0x13] sm:$0xff]
  %v3265 = vld [vmem:[%s0 + $0x23] sm:$0xff]
  %v3266 = vld [vmem:[%s0 + $0x2b] sm:$0xff]
  %v3267 = vld [vmem:[%s0 + $0x33] sm:$0xff]
  %v3268 = vld [vmem:[%s0 + $0x43] sm:$0xff]
  %v3269 = vld [vmem:[%s0 + $0x4b] sm:$0xff]
  %v3270 = vld [vmem:[%s0 + $0x53] sm:$0xff]
  %v3271 = vld [vmem:[%s0 + $0x63] sm:$0xff]
  %v3272 = vld [vmem:[%s0 + $0x6b] sm:$0xff]
  %v3273 = vld [vmem:[%s0 + $0x73] sm:$0xff]
  %v3274 = vld [vmem:[%s0 + $0x83] sm:$0xff]
  %v3275 = vld [vmem:[%s0 + $0x8b] sm:$0xff]
  %v3276 = vld [vmem:[%s0 + $0x93] sm:$0xff]
  %v3277 = vld [vmem:[%s0 + $0xa3] sm:$0xff]
  %v3278 = vld [vmem:[%s0 + $0xab] sm:$0xff]
  %v3279 = vld [vmem:[%s0 + $0xb3] sm:$0xff]
  %v3280 = vld [vmem:[%s0 + $0xc3] sm:$0xff]
  %v3281 = vld [vmem:[%s0 + $0xcb] sm:$0xff]
  %v3282 = vld [vmem:[%s0 + $0xd3] sm:$0xff]
  %v3283 = vld [vmem:[%s0 + $0xe3] sm:$0xff]
  %v3284 = vld [vmem:[%s0 + $0xeb] sm:$0xff]
  %v3285 = vld [vmem:[%s0 + $0xf3] sm:$0xff]
  %v3286 = vld [vmem:[%s0 + $0x103] sm:$0xff]
  %v3287 = vld [vmem:[%s0 + $0x10b] sm:$0xff]
  %v3288 = vld [vmem:[%s0 + $0x113] sm:$0xff]
  %v3289 = vld [vmem:[%s0 + $0x123] sm:$0xff]
  %v3290 = vld [vmem:[%s0 + $0x12b] sm:$0xff]
  %v3291 = vld [vmem:[%s0 + $0x133] sm:$0xff]
  %v3292 = vld [vmem:[%s0 + $0x143] sm:$0xff]
  %v3293 = vld [vmem:[%s0 + $0x14b] sm:$0xff]
  %v3294 = vld [vmem:[%s0 + $0x153] sm:$0xff]
  %v3295 = vld [vmem:[%s0 + $0x163] sm:$0xff]
  %v3296 = vld [vmem:[%s0 + $0x16b] sm:$0xff]
  %v3297 = vld [vmem:[%s0 + $0x173] sm:$0xff]
  %v3298 = vld [vmem:[%s0 + $0x183] sm:$0xff]
  %v3299 = vld [vmem:[%s0 + $0x18b] sm:$0xff]
  %v3300 = vld [vmem:[%s0 + $0x193] sm:$0xff]
  %v3301 = vld [vmem:[%s0 + $0x1a3] sm:$0xff]
  %v3302 = vld [vmem:[%s0 + $0x1ab] sm:$0xff]
  %v3303 = vld [vmem:[%s0 + $0x1b3] sm:$0xff]
  %v3304 = vld [vmem:[%s0 + $0x1c3] sm:$0xff]
  %v3305 = vld [vmem:[%s0 + $0x1cb] sm:$0xff]
  %v3306 = vld [vmem:[%s0 + $0x1d3] sm:$0xff]
  %v3307 = vld [vmem:[%s0 + $0x1e3] sm:$0xff]
  %v3308 = vld [vmem:[%s0 + $0x1eb] sm:$0xff]
  %v3309 = vld [vmem:[%s0 + $0x1f3] sm:$0xff]
  %v3310 = vld [vmem:[%s0 + $0x203] sm:$0xff]
  %v3311 = vld [vmem:[%s0 + $0x20b] sm:$0xff]
  %v3312 = vld [vmem:[%s0 + $0x213] sm:$0xff]
  %v3313 = vld [vmem:[%s0 + $0x223] sm:$0xff]
  %v3314 = vld [vmem:[%s0 + $0x22b] sm:$0xff]
  %v3315 = vld [vmem:[%s0 + $0x233] sm:$0xff]
  %v3316 = vld [vmem:[%s0 + $0x243] sm:$0xff]
  %v3317 = vld [vmem:[%s0 + $0x24b] sm:$0xff]
  %v3318 = vld [vmem:[%s0 + $0x253] sm:$0xff]
  %v3319 = vld [vmem:[%s0 + $0x263] sm:$0xff]
  %v3320 = vld [vmem:[%s0 + $0x26b] sm:$0xff]
  %v3321 = vld [vmem:[%s0 + $0x273] sm:$0xff]
  %v3322 = vld [vmem:[%s0 + $0x283] sm:$0xff]
  %v3323 = vld [vmem:[%s0 + $0x28b] sm:$0xff]
  %v3324 = vld [vmem:[%s0 + $0x293] sm:$0xff]
  %v3325 = vld [vmem:[%s0 + $0x2a3] sm:$0xff]
  %v3326 = vld [vmem:[%s0 + $0x2ab] sm:$0xff]
  %v3327 = vld [vmem:[%s0 + $0x2b3] sm:$0xff]
  %v3328 = vld [vmem:[%s0 + $0x2c3] sm:$0xff]
  %v3329 = vld [vmem:[%s0 + $0x2cb] sm:$0xff]
  %v3330 = vld [vmem:[%s0 + $0x2d3] sm:$0xff]
  %v3331 = vld [vmem:[%s0 + $0x2e3] sm:$0xff]
  %v3332 = vld [vmem:[%s0 + $0x2eb] sm:$0xff]
  %v3333 = vld [vmem:[%s0 + $0x2f3] sm:$0xff]
  %v3334 = vld [vmem:[%s0 + $0x303] sm:$0xff]
  %v3335 = vld [vmem:[%s0 + $0x30b] sm:$0xff]
  %v3336 = vld [vmem:[%s0 + $0x313] sm:$0xff]
  %v3337 = vld [vmem:[%s0 + $0x323] sm:$0xff]
  %v3338 = vld [vmem:[%s0 + $0x32b] sm:$0xff]
  %v3339 = vld [vmem:[%s0 + $0x333] sm:$0xff]
  %v3340 = vld [vmem:[%s0 + $0x343] sm:$0xff]
  %v3341 = vld [vmem:[%s0 + $0x34b] sm:$0xff]
  %v3342 = vld [vmem:[%s0 + $0x353] sm:$0xff]
  %v3343 = vld [vmem:[%s0 + $0x363] sm:$0xff]
  %v3344 = vld [vmem:[%s0 + $0x36b] sm:$0xff]
  %v3345 = vld [vmem:[%s0 + $0x373] sm:$0xff]
  %v3346 = vld [vmem:[%s0 + $0x383] sm:$0xff]
  %v3347 = vld [vmem:[%s0 + $0x38b] sm:$0xff]
  %v3348 = vld [vmem:[%s0 + $0x393] sm:$0xff]
  %v3349 = vld [vmem:[%s0 + $0x3a3] sm:$0xff]
  %v3350 = vld [vmem:[%s0 + $0x3ab] sm:$0xff]
  %v3351 = vld [vmem:[%s0 + $0x3b3] sm:$0xff]
  %v3352 = vld [vmem:[%s0 + $0x3c3] sm:$0xff]
  %v3353 = vld [vmem:[%s0 + $0x3cb] sm:$0xff]
  %v3354 = vld [vmem:[%s0 + $0x3d3] sm:$0xff]
  %v3355 = vld [vmem:[%s0 + $0x3e3] sm:$0xff]
  %v3356 = vld [vmem:[%s0 + $0x3eb] sm:$0xff]
  %v3357 = vld [vmem:[%s0 + $0x3f3] sm:$0xff]
  %s3358 = scalar_lea.vmem %s1, 96
  %v3359 = vld [vmem:[%s3358] sm:$0xff]
  %v3360 = vld [vmem:[%s3358 + $0x8] sm:$0xff]
  %v3361 = vld [vmem:[%s3358 + $0x10] sm:$0xff]
  %v3362 = vld [vmem:[%s3358 + $0x18] sm:$0xf]
  %v3364 = vsel %vm245, %v3262, 0
  %v3367 = vsel %vm245, %v3263, 0
  %v3370 = vsel %vm245, %v3264, 0
  %v3373 = vsel %vm245, %v3265, 0
  %v3376 = vsel %vm245, %v3266, 0
  %v3379 = vsel %vm245, %v3267, 0
  %v3382 = vsel %vm245, %v3268, 0
  %v3385 = vsel %vm245, %v3269, 0
  %v3388 = vsel %vm245, %v3270, 0
  %v3391 = vsel %vm245, %v3271, 0
  %v3394 = vsel %vm245, %v3272, 0
  %v3397 = vsel %vm245, %v3273, 0
  %v3400 = vsel %vm245, %v3274, 0
  %v3403 = vsel %vm245, %v3275, 0
  %v3406 = vsel %vm245, %v3276, 0
  %v3409 = vsel %vm245, %v3277, 0
  %v3412 = vsel %vm245, %v3278, 0
  %v3415 = vsel %vm245, %v3279, 0
  %v3418 = vsel %vm245, %v3280, 0
  %v3421 = vsel %vm245, %v3281, 0
  %v3424 = vsel %vm245, %v3282, 0
  %v3427 = vsel %vm245, %v3283, 0
  %v3430 = vsel %vm245, %v3284, 0
  %v3433 = vsel %vm245, %v3285, 0
  %v3436 = vsel %vm245, %v3286, 0
  %v3439 = vsel %vm245, %v3287, 0
  %v3442 = vsel %vm245, %v3288, 0
  %v3445 = vsel %vm245, %v3289, 0
  %v3448 = vsel %vm245, %v3290, 0
  %v3451 = vsel %vm245, %v3291, 0
  %v3454 = vsel %vm245, %v3292, 0
  %v3457 = vsel %vm245, %v3293, 0
  %v3460 = vsel %vm245, %v3294, 0
  %v3463 = vsel %vm245, %v3295, 0
  %v3466 = vsel %vm245, %v3296, 0
  %v3469 = vsel %vm245, %v3297, 0
  %v3472 = vsel %vm245, %v3298, 0
  %v3475 = vsel %vm245, %v3299, 0
  %v3478 = vsel %vm245, %v3300, 0
  %v3481 = vsel %vm245, %v3301, 0
  %v3484 = vsel %vm245, %v3302, 0
  %v3487 = vsel %vm245, %v3303, 0
  %v3490 = vsel %vm245, %v3304, 0
  %v3493 = vsel %vm245, %v3305, 0
  %v3496 = vsel %vm245, %v3306, 0
  %v3499 = vsel %vm245, %v3307, 0
  %v3502 = vsel %vm245, %v3308, 0
  %v3505 = vsel %vm245, %v3309, 0
  %v3508 = vsel %vm245, %v3310, 0
  %v3511 = vsel %vm245, %v3311, 0
  %v3514 = vsel %vm245, %v3312, 0
  %v3517 = vsel %vm245, %v3313, 0
  %v3520 = vsel %vm245, %v3314, 0
  %v3523 = vsel %vm245, %v3315, 0
  %v3526 = vsel %vm245, %v3316, 0
  %v3529 = vsel %vm245, %v3317, 0
  %v3532 = vsel %vm245, %v3318, 0
  %v3535 = vsel %vm245, %v3319, 0
  %v3538 = vsel %vm245, %v3320, 0
  %v3541 = vsel %vm245, %v3321, 0
  %v3544 = vsel %vm245, %v3322, 0
  %v3547 = vsel %vm245, %v3323, 0
  %v3550 = vsel %vm245, %v3324, 0
  %v3553 = vsel %vm245, %v3325, 0
  %v3556 = vsel %vm245, %v3326, 0
  %v3559 = vsel %vm245, %v3327, 0
  %v3562 = vsel %vm245, %v3328, 0
  %v3565 = vsel %vm245, %v3329, 0
  %v3568 = vsel %vm245, %v3330, 0
  %v3571 = vsel %vm245, %v3331, 0
  %v3574 = vsel %vm245, %v3332, 0
  %v3577 = vsel %vm245, %v3333, 0
  %v3580 = vsel %vm245, %v3334, 0
  %v3583 = vsel %vm245, %v3335, 0
  %v3586 = vsel %vm245, %v3336, 0
  %v3589 = vsel %vm245, %v3337, 0
  %v3592 = vsel %vm245, %v3338, 0
  %v3595 = vsel %vm245, %v3339, 0
  %v3598 = vsel %vm245, %v3340, 0
  %v3601 = vsel %vm245, %v3341, 0
  %v3604 = vsel %vm245, %v3342, 0
  %v3607 = vsel %vm245, %v3343, 0
  %v3610 = vsel %vm245, %v3344, 0
  %v3613 = vsel %vm245, %v3345, 0
  %v3616 = vsel %vm245, %v3346, 0
  %v3619 = vsel %vm245, %v3347, 0
  %v3622 = vsel %vm245, %v3348, 0
  %v3625 = vsel %vm245, %v3349, 0
  %v3628 = vsel %vm245, %v3350, 0
  %v3631 = vsel %vm245, %v3351, 0
  %v3634 = vsel %vm245, %v3352, 0
  %v3637 = vsel %vm245, %v3353, 0
  %v3640 = vsel %vm245, %v3354, 0
  %v3643 = vsel %vm245, %v3355, 0
  %v3646 = vsel %vm245, %v3356, 0
  %v3649 = vsel %vm245, %v3357, 0
  %v3652 = vsel %vm534, %v3362, 0
  %3654 = vmatpush.msra.mxu0 0.0
  %3655 = vmatpush.msra.mxu0 0.0
  %3656 = vmatpush.msra.mxu0 0.0
  %3657 = vmatpush.msra.mxu0 0.0
  %3658 = vmatpush.msra.mxu0 0.0
  %3659 = vmatpush.msra.mxu0 0.0
  %3660 = vmatpush.msra.mxu0 0.0
  %3661 = vmatpush.msra.mxu0 0.0
  %3662 = vmatpush.msra.mxu0 0.0
  %3663 = vmatpush.msra.mxu0 0.0
  %3664 = vmatpush.msra.mxu0 0.0
  %3665 = vmatpush.msra.mxu0 0.0
  %3666 = vmatpush.msra.mxu0 %v3652
  %3667 = vmatpush.msra.mxu0 %v3361
  %3668 = vmatpush.msra.mxu0 %v3360
  %3669 = vmatpush.msra.mxu0 %v3359
  %3670 = vmatmul.f32.gmra.mxu0 %v3364
  %v3671 = vpop.f32.mrf.mxu0
  %v3672 = vadd.f32 0.0, %v3671
  %3673 = vmatmul.f32.gmra.mxu0 %v3367
  %v3674 = vpop.f32.mrf.mxu0
  %v3675 = vadd.f32 0.0, %v3674
  %3676 = vmatmul.f32.gmra.mxu0 %v3370
  %v3677 = vpop.f32.mrf.mxu0
  %v3678 = vadd.f32 0.0, %v3677
  %3679 = vmatmul.f32.gmra.mxu0 %v3373
  %v3680 = vpop.f32.mrf.mxu0
  %v3681 = vadd.f32 0.0, %v3680
  %3682 = vmatmul.f32.gmra.mxu0 %v3376
  %v3683 = vpop.f32.mrf.mxu0
  %v3684 = vadd.f32 0.0, %v3683
  %3685 = vmatmul.f32.gmra.mxu0 %v3379
  %v3686 = vpop.f32.mrf.mxu0
  %v3687 = vadd.f32 0.0, %v3686
  %3688 = vmatmul.f32.gmra.mxu0 %v3382
  %v3689 = vpop.f32.mrf.mxu0
  %v3690 = vadd.f32 0.0, %v3689
  %3691 = vmatmul.f32.gmra.mxu0 %v3385
  %v3692 = vpop.f32.mrf.mxu0
  %v3693 = vadd.f32 0.0, %v3692
  %3694 = vmatmul.f32.gmra.mxu0 %v3388
  %v3695 = vpop.f32.mrf.mxu0
  %v3696 = vadd.f32 0.0, %v3695
  %3697 = vmatmul.f32.gmra.mxu0 %v3391
  %v3698 = vpop.f32.mrf.mxu0
  %v3699 = vadd.f32 0.0, %v3698
  %3700 = vmatmul.f32.gmra.mxu0 %v3394
  %v3701 = vpop.f32.mrf.mxu0
  %v3702 = vadd.f32 0.0, %v3701
  %3703 = vmatmul.f32.gmra.mxu0 %v3397
  %v3704 = vpop.f32.mrf.mxu0
  %v3705 = vadd.f32 0.0, %v3704
  %3706 = vmatmul.f32.gmra.mxu0 %v3400
  %v3707 = vpop.f32.mrf.mxu0
  %v3708 = vadd.f32 0.0, %v3707
  %3709 = vmatmul.f32.gmra.mxu0 %v3403
  %v3710 = vpop.f32.mrf.mxu0
  %v3711 = vadd.f32 0.0, %v3710
  %3712 = vmatmul.f32.gmra.mxu0 %v3406
  %v3713 = vpop.f32.mrf.mxu0
  %v3714 = vadd.f32 0.0, %v3713
  %3715 = vmatmul.f32.gmra.mxu0 %v3409
  %v3716 = vpop.f32.mrf.mxu0
  %v3717 = vadd.f32 0.0, %v3716
  %3718 = vmatmul.f32.gmra.mxu0 %v3412
  %v3719 = vpop.f32.mrf.mxu0
  %v3720 = vadd.f32 0.0, %v3719
  %3721 = vmatmul.f32.gmra.mxu0 %v3415
  %v3722 = vpop.f32.mrf.mxu0
  %v3723 = vadd.f32 0.0, %v3722
  %3724 = vmatmul.f32.gmra.mxu0 %v3418
  %v3725 = vpop.f32.mrf.mxu0
  %v3726 = vadd.f32 0.0, %v3725
  %3727 = vmatmul.f32.gmra.mxu0 %v3421
  %v3728 = vpop.f32.mrf.mxu0
  %v3729 = vadd.f32 0.0, %v3728
  %3730 = vmatmul.f32.gmra.mxu0 %v3424
  %v3731 = vpop.f32.mrf.mxu0
  %v3732 = vadd.f32 0.0, %v3731
  %3733 = vmatmul.f32.gmra.mxu0 %v3427
  %v3734 = vpop.f32.mrf.mxu0
  %v3735 = vadd.f32 0.0, %v3734
  %3736 = vmatmul.f32.gmra.mxu0 %v3430
  %v3737 = vpop.f32.mrf.mxu0
  %v3738 = vadd.f32 0.0, %v3737
  %3739 = vmatmul.f32.gmra.mxu0 %v3433
  %v3740 = vpop.f32.mrf.mxu0
  %v3741 = vadd.f32 0.0, %v3740
  %3742 = vmatmul.f32.gmra.mxu0 %v3436
  %v3743 = vpop.f32.mrf.mxu0
  %v3744 = vadd.f32 0.0, %v3743
  %3745 = vmatmul.f32.gmra.mxu0 %v3439
  %v3746 = vpop.f32.mrf.mxu0
  %v3747 = vadd.f32 0.0, %v3746
  %3748 = vmatmul.f32.gmra.mxu0 %v3442
  %v3749 = vpop.f32.mrf.mxu0
  %v3750 = vadd.f32 0.0, %v3749
  %3751 = vmatmul.f32.gmra.mxu0 %v3445
  %v3752 = vpop.f32.mrf.mxu0
  %v3753 = vadd.f32 0.0, %v3752
  %3754 = vmatmul.f32.gmra.mxu0 %v3448
  %v3755 = vpop.f32.mrf.mxu0
  %v3756 = vadd.f32 0.0, %v3755
  %3757 = vmatmul.f32.gmra.mxu0 %v3451
  %v3758 = vpop.f32.mrf.mxu0
  %v3759 = vadd.f32 0.0, %v3758
  %3760 = vmatmul.f32.gmra.mxu0 %v3454
  %v3761 = vpop.f32.mrf.mxu0
  %v3762 = vadd.f32 0.0, %v3761
  %3763 = vmatmul.f32.gmra.mxu0 %v3457
  %v3764 = vpop.f32.mrf.mxu0
  %v3765 = vadd.f32 0.0, %v3764
  %3766 = vmatmul.f32.gmra.mxu0 %v3460
  %v3767 = vpop.f32.mrf.mxu0
  %v3768 = vadd.f32 0.0, %v3767
  %3769 = vmatmul.f32.gmra.mxu0 %v3463
  %v3770 = vpop.f32.mrf.mxu0
  %v3771 = vadd.f32 0.0, %v3770
  %3772 = vmatmul.f32.gmra.mxu0 %v3466
  %v3773 = vpop.f32.mrf.mxu0
  %v3774 = vadd.f32 0.0, %v3773
  %3775 = vmatmul.f32.gmra.mxu0 %v3469
  %v3776 = vpop.f32.mrf.mxu0
  %v3777 = vadd.f32 0.0, %v3776
  %3778 = vmatmul.f32.gmra.mxu0 %v3472
  %v3779 = vpop.f32.mrf.mxu0
  %v3780 = vadd.f32 0.0, %v3779
  %3781 = vmatmul.f32.gmra.mxu0 %v3475
  %v3782 = vpop.f32.mrf.mxu0
  %v3783 = vadd.f32 0.0, %v3782
  %3784 = vmatmul.f32.gmra.mxu0 %v3478
  %v3785 = vpop.f32.mrf.mxu0
  %v3786 = vadd.f32 0.0, %v3785
  %3787 = vmatmul.f32.gmra.mxu0 %v3481
  %v3788 = vpop.f32.mrf.mxu0
  %v3789 = vadd.f32 0.0, %v3788
  %3790 = vmatmul.f32.gmra.mxu0 %v3484
  %v3791 = vpop.f32.mrf.mxu0
  %v3792 = vadd.f32 0.0, %v3791
  %3793 = vmatmul.f32.gmra.mxu0 %v3487
  %v3794 = vpop.f32.mrf.mxu0
  %v3795 = vadd.f32 0.0, %v3794
  %3796 = vmatmul.f32.gmra.mxu0 %v3490
  %v3797 = vpop.f32.mrf.mxu0
  %v3798 = vadd.f32 0.0, %v3797
  %3799 = vmatmul.f32.gmra.mxu0 %v3493
  %v3800 = vpop.f32.mrf.mxu0
  %v3801 = vadd.f32 0.0, %v3800
  %3802 = vmatmul.f32.gmra.mxu0 %v3496
  %v3803 = vpop.f32.mrf.mxu0
  %v3804 = vadd.f32 0.0, %v3803
  %3805 = vmatmul.f32.gmra.mxu0 %v3499
  %v3806 = vpop.f32.mrf.mxu0
  %v3807 = vadd.f32 0.0, %v3806
  %3808 = vmatmul.f32.gmra.mxu0 %v3502
  %v3809 = vpop.f32.mrf.mxu0
  %v3810 = vadd.f32 0.0, %v3809
  %3811 = vmatmul.f32.gmra.mxu0 %v3505
  %v3812 = vpop.f32.mrf.mxu0
  %v3813 = vadd.f32 0.0, %v3812
  %3814 = vmatmul.f32.gmra.mxu0 %v3508
  %v3815 = vpop.f32.mrf.mxu0
  %v3816 = vadd.f32 0.0, %v3815
  %3817 = vmatmul.f32.gmra.mxu0 %v3511
  %v3818 = vpop.f32.mrf.mxu0
  %v3819 = vadd.f32 0.0, %v3818
  %3820 = vmatmul.f32.gmra.mxu0 %v3514
  %v3821 = vpop.f32.mrf.mxu0
  %v3822 = vadd.f32 0.0, %v3821
  %3823 = vmatmul.f32.gmra.mxu0 %v3517
  %v3824 = vpop.f32.mrf.mxu0
  %v3825 = vadd.f32 0.0, %v3824
  %3826 = vmatmul.f32.gmra.mxu0 %v3520
  %v3827 = vpop.f32.mrf.mxu0
  %v3828 = vadd.f32 0.0, %v3827
  %3829 = vmatmul.f32.gmra.mxu0 %v3523
  %v3830 = vpop.f32.mrf.mxu0
  %v3831 = vadd.f32 0.0, %v3830
  %3832 = vmatmul.f32.gmra.mxu0 %v3526
  %v3833 = vpop.f32.mrf.mxu0
  %v3834 = vadd.f32 0.0, %v3833
  %3835 = vmatmul.f32.gmra.mxu0 %v3529
  %v3836 = vpop.f32.mrf.mxu0
  %v3837 = vadd.f32 0.0, %v3836
  %3838 = vmatmul.f32.gmra.mxu0 %v3532
  %v3839 = vpop.f32.mrf.mxu0
  %v3840 = vadd.f32 0.0, %v3839
  %3841 = vmatmul.f32.gmra.mxu0 %v3535
  %v3842 = vpop.f32.mrf.mxu0
  %v3843 = vadd.f32 0.0, %v3842
  %3844 = vmatmul.f32.gmra.mxu0 %v3538
  %v3845 = vpop.f32.mrf.mxu0
  %v3846 = vadd.f32 0.0, %v3845
  %3847 = vmatmul.f32.gmra.mxu0 %v3541
  %v3848 = vpop.f32.mrf.mxu0
  %v3849 = vadd.f32 0.0, %v3848
  %3850 = vmatmul.f32.gmra.mxu0 %v3544
  %v3851 = vpop.f32.mrf.mxu0
  %v3852 = vadd.f32 0.0, %v3851
  %3853 = vmatmul.f32.gmra.mxu0 %v3547
  %v3854 = vpop.f32.mrf.mxu0
  %v3855 = vadd.f32 0.0, %v3854
  %3856 = vmatmul.f32.gmra.mxu0 %v3550
  %v3857 = vpop.f32.mrf.mxu0
  %v3858 = vadd.f32 0.0, %v3857
  %3859 = vmatmul.f32.gmra.mxu0 %v3553
  %v3860 = vpop.f32.mrf.mxu0
  %v3861 = vadd.f32 0.0, %v3860
  %3862 = vmatmul.f32.gmra.mxu0 %v3556
  %v3863 = vpop.f32.mrf.mxu0
  %v3864 = vadd.f32 0.0, %v3863
  %3865 = vmatmul.f32.gmra.mxu0 %v3559
  %v3866 = vpop.f32.mrf.mxu0
  %v3867 = vadd.f32 0.0, %v3866
  %3868 = vmatmul.f32.gmra.mxu0 %v3562
  %v3869 = vpop.f32.mrf.mxu0
  %v3870 = vadd.f32 0.0, %v3869
  %3871 = vmatmul.f32.gmra.mxu0 %v3565
  %v3872 = vpop.f32.mrf.mxu0
  %v3873 = vadd.f32 0.0, %v3872
  %3874 = vmatmul.f32.gmra.mxu0 %v3568
  %v3875 = vpop.f32.mrf.mxu0
  %v3876 = vadd.f32 0.0, %v3875
  %3877 = vmatmul.f32.gmra.mxu0 %v3571
  %v3878 = vpop.f32.mrf.mxu0
  %v3879 = vadd.f32 0.0, %v3878
  %3880 = vmatmul.f32.gmra.mxu0 %v3574
  %v3881 = vpop.f32.mrf.mxu0
  %v3882 = vadd.f32 0.0, %v3881
  %3883 = vmatmul.f32.gmra.mxu0 %v3577
  %v3884 = vpop.f32.mrf.mxu0
  %v3885 = vadd.f32 0.0, %v3884
  %3886 = vmatmul.f32.gmra.mxu0 %v3580
  %v3887 = vpop.f32.mrf.mxu0
  %v3888 = vadd.f32 0.0, %v3887
  %3889 = vmatmul.f32.gmra.mxu0 %v3583
  %v3890 = vpop.f32.mrf.mxu0
  %v3891 = vadd.f32 0.0, %v3890
  %3892 = vmatmul.f32.gmra.mxu0 %v3586
  %v3893 = vpop.f32.mrf.mxu0
  %v3894 = vadd.f32 0.0, %v3893
  %3895 = vmatmul.f32.gmra.mxu0 %v3589
  %v3896 = vpop.f32.mrf.mxu0
  %v3897 = vadd.f32 0.0, %v3896
  %3898 = vmatmul.f32.gmra.mxu0 %v3592
  %v3899 = vpop.f32.mrf.mxu0
  %v3900 = vadd.f32 0.0, %v3899
  %3901 = vmatmul.f32.gmra.mxu0 %v3595
  %v3902 = vpop.f32.mrf.mxu0
  %v3903 = vadd.f32 0.0, %v3902
  %3904 = vmatmul.f32.gmra.mxu0 %v3598
  %v3905 = vpop.f32.mrf.mxu0
  %v3906 = vadd.f32 0.0, %v3905
  %3907 = vmatmul.f32.gmra.mxu0 %v3601
  %v3908 = vpop.f32.mrf.mxu0
  %v3909 = vadd.f32 0.0, %v3908
  %3910 = vmatmul.f32.gmra.mxu0 %v3604
  %v3911 = vpop.f32.mrf.mxu0
  %v3912 = vadd.f32 0.0, %v3911
  %3913 = vmatmul.f32.gmra.mxu0 %v3607
  %v3914 = vpop.f32.mrf.mxu0
  %v3915 = vadd.f32 0.0, %v3914
  %3916 = vmatmul.f32.gmra.mxu0 %v3610
  %v3917 = vpop.f32.mrf.mxu0
  %v3918 = vadd.f32 0.0, %v3917
  %3919 = vmatmul.f32.gmra.mxu0 %v3613
  %v3920 = vpop.f32.mrf.mxu0
  %v3921 = vadd.f32 0.0, %v3920
  %3922 = vmatmul.f32.gmra.mxu0 %v3616
  %v3923 = vpop.f32.mrf.mxu0
  %v3924 = vadd.f32 0.0, %v3923
  %3925 = vmatmul.f32.gmra.mxu0 %v3619
  %v3926 = vpop.f32.mrf.mxu0
  %v3927 = vadd.f32 0.0, %v3926
  %3928 = vmatmul.f32.gmra.mxu0 %v3622
  %v3929 = vpop.f32.mrf.mxu0
  %v3930 = vadd.f32 0.0, %v3929
  %3931 = vmatmul.f32.gmra.mxu0 %v3625
  %v3932 = vpop.f32.mrf.mxu0
  %v3933 = vadd.f32 0.0, %v3932
  %3934 = vmatmul.f32.gmra.mxu0 %v3628
  %v3935 = vpop.f32.mrf.mxu0
  %v3936 = vadd.f32 0.0, %v3935
  %3937 = vmatmul.f32.gmra.mxu0 %v3631
  %v3938 = vpop.f32.mrf.mxu0
  %v3939 = vadd.f32 0.0, %v3938
  %3940 = vmatmul.f32.gmra.mxu0 %v3634
  %v3941 = vpop.f32.mrf.mxu0
  %v3942 = vadd.f32 0.0, %v3941
  %3943 = vmatmul.f32.gmra.mxu0 %v3637
  %v3944 = vpop.f32.mrf.mxu0
  %v3945 = vadd.f32 0.0, %v3944
  %3946 = vmatmul.f32.gmra.mxu0 %v3640
  %v3947 = vpop.f32.mrf.mxu0
  %v3948 = vadd.f32 0.0, %v3947
  %3949 = vmatmul.f32.gmra.mxu0 %v3643
  %v3950 = vpop.f32.mrf.mxu0
  %v3951 = vadd.f32 0.0, %v3950
  %3952 = vmatmul.f32.gmra.mxu0 %v3646
  %v3953 = vpop.f32.mrf.mxu0
  %v3954 = vadd.f32 0.0, %v3953
  %3955 = vmatmul.f32.gmra.mxu0 %v3649
  %v3956 = vpop.f32.mrf.mxu0
  %v3957 = vadd.f32 0.0, %v3956
  %3958 = vdwg.mxu0
  %v3959 = vadd.f32 %v2757, %v3672
  %v3960 = vadd.f32 %v2758, %v3675
  %v3961 = vadd.f32 %v2759, %v3678
  %v3962 = vadd.f32 %v2760, %v3681
  %v3963 = vadd.f32 %v2761, %v3684
  %v3964 = vadd.f32 %v2762, %v3687
  %v3965 = vadd.f32 %v2763, %v3690
  %v3966 = vadd.f32 %v2764, %v3693
  %v3967 = vadd.f32 %v2765, %v3696
  %v3968 = vadd.f32 %v2766, %v3699
  %v3969 = vadd.f32 %v2767, %v3702
  %v3970 = vadd.f32 %v2768, %v3705
  %v3971 = vadd.f32 %v2769, %v3708
  %v3972 = vadd.f32 %v2770, %v3711
  %v3973 = vadd.f32 %v2771, %v3714
  %v3974 = vadd.f32 %v2772, %v3717
  %v3975 = vadd.f32 %v2773, %v3720
  %v3976 = vadd.f32 %v2774, %v3723
  %v3977 = vadd.f32 %v2775, %v3726
  %v3978 = vadd.f32 %v2776, %v3729
  %v3979 = vadd.f32 %v2777, %v3732
  %v3980 = vadd.f32 %v2778, %v3735
  %v3981 = vadd.f32 %v2779, %v3738
  %v3982 = vadd.f32 %v2780, %v3741
  %v3983 = vadd.f32 %v2781, %v3744
  %v3984 = vadd.f32 %v2782, %v3747
  %v3985 = vadd.f32 %v2783, %v3750
  %v3986 = vadd.f32 %v2784, %v3753
  %v3987 = vadd.f32 %v2785, %v3756
  %v3988 = vadd.f32 %v2786, %v3759
  %v3989 = vadd.f32 %v2787, %v3762
  %v3990 = vadd.f32 %v2788, %v3765
  %v3991 = vadd.f32 %v2789, %v3768
  %v3992 = vadd.f32 %v2790, %v3771
  %v3993 = vadd.f32 %v2791, %v3774
  %v3994 = vadd.f32 %v2792, %v3777
  %v3995 = vadd.f32 %v2793, %v3780
  %v3996 = vadd.f32 %v2794, %v3783
  %v3997 = vadd.f32 %v2795, %v3786
  %v3998 = vadd.f32 %v2796, %v3789
  %v3999 = vadd.f32 %v2797, %v3792
  %v4000 = vadd.f32 %v2798, %v3795
  %v4001 = vadd.f32 %v2799, %v3798
  %v4002 = vadd.f32 %v2800, %v3801
  %v4003 = vadd.f32 %v2801, %v3804
  %v4004 = vadd.f32 %v2802, %v3807
  %v4005 = vadd.f32 %v2803, %v3810
  %v4006 = vadd.f32 %v2804, %v3813
  %v4007 = vadd.f32 %v2805, %v3816
  %v4008 = vadd.f32 %v2806, %v3819
  %v4009 = vadd.f32 %v2807, %v3822
  %v4010 = vadd.f32 %v2808, %v3825
  %v4011 = vadd.f32 %v2809, %v3828
  %v4012 = vadd.f32 %v2810, %v3831
  %v4013 = vadd.f32 %v2811, %v3834
  %v4014 = vadd.f32 %v2812, %v3837
  %v4015 = vadd.f32 %v2813, %v3840
  %v4016 = vadd.f32 %v2814, %v3843
  %v4017 = vadd.f32 %v2815, %v3846
  %v4018 = vadd.f32 %v2816, %v3849
  %v4019 = vadd.f32 %v2817, %v3852
  %v4020 = vadd.f32 %v2818, %v3855
  %v4021 = vadd.f32 %v2819, %v3858
  %v4022 = vadd.f32 %v2820, %v3861
  %v4023 = vadd.f32 %v2821, %v3864
  %v4024 = vadd.f32 %v2822, %v3867
  %v4025 = vadd.f32 %v2823, %v3870
  %v4026 = vadd.f32 %v2824, %v3873
  %v4027 = vadd.f32 %v2825, %v3876
  %v4028 = vadd.f32 %v2826, %v3879
  %v4029 = vadd.f32 %v2827, %v3882
  %v4030 = vadd.f32 %v2828, %v3885
  %v4031 = vadd.f32 %v2829, %v3888
  %v4032 = vadd.f32 %v2830, %v3891
  %v4033 = vadd.f32 %v2831, %v3894
  %v4034 = vadd.f32 %v2832, %v3897
  %v4035 = vadd.f32 %v2833, %v3900
  %v4036 = vadd.f32 %v2834, %v3903
  %v4037 = vadd.f32 %v2835, %v3906
  %v4038 = vadd.f32 %v2836, %v3909
  %v4039 = vadd.f32 %v2837, %v3912
  %v4040 = vadd.f32 %v2838, %v3915
  %v4041 = vadd.f32 %v2839, %v3918
  %v4042 = vadd.f32 %v2840, %v3921
  %v4043 = vadd.f32 %v2841, %v3924
  %v4044 = vadd.f32 %v2842, %v3927
  %v4045 = vadd.f32 %v2843, %v3930
  %v4046 = vadd.f32 %v2844, %v3933
  %v4047 = vadd.f32 %v2845, %v3936
  %v4048 = vadd.f32 %v2846, %v3939
  %v4049 = vadd.f32 %v2847, %v3942
  %v4050 = vadd.f32 %v2848, %v3945
  %v4051 = vadd.f32 %v2849, %v3948
  %v4052 = vadd.f32 %v2850, %v3951
  %v4053 = vadd.f32 %v2851, %v3954
  %v4054 = vadd.f32 %v2852, %v3957
  %s4055 = scalar_lea.vmem %s1, 256
  %v4056 = vld [vmem:[%s4055] sm:$0xff]
  %v4057 = vld [vmem:[%s4055 + $0x8] sm:$0xff]
  %v4058 = vld [vmem:[%s4055 + $0x10] sm:$0xff]
  %v4059 = vld [vmem:[%s4055 + $0x18] sm:$0xf]
  %v4061 = vsel %vm534, %v4059, 0
  %4063 = vmatpush.msra.mxu0 0.0
  %4064 = vmatpush.msra.mxu0 0.0
  %4065 = vmatpush.msra.mxu0 0.0
  %4066 = vmatpush.msra.mxu0 0.0
  %4067 = vmatpush.msra.mxu0 0.0
  %4068 = vmatpush.msra.mxu0 0.0
  %4069 = vmatpush.msra.mxu0 0.0
  %4070 = vmatpush.msra.mxu0 0.0
  %4071 = vmatpush.msra.mxu0 0.0
  %4072 = vmatpush.msra.mxu0 0.0
  %4073 = vmatpush.msra.mxu0 0.0
  %4074 = vmatpush.msra.mxu0 0.0
  %4075 = vmatpush.msra.mxu0 %v4061
  %4076 = vmatpush.msra.mxu0 %v4058
  %4077 = vmatpush.msra.mxu0 %v4057
  %4078 = vmatpush.msra.mxu0 %v4056
  %4079 = vmatmul.f32.gmra.mxu0 %v3364
  %v4080 = vpop.f32.mrf.mxu0
  %v4081 = vadd.f32 0.0, %v4080
  %4082 = vmatmul.f32.gmra.mxu0 %v3367
  %v4083 = vpop.f32.mrf.mxu0
  %v4084 = vadd.f32 0.0, %v4083
  %4085 = vmatmul.f32.gmra.mxu0 %v3370
  %v4086 = vpop.f32.mrf.mxu0
  %v4087 = vadd.f32 0.0, %v4086
  %4088 = vmatmul.f32.gmra.mxu0 %v3373
  %v4089 = vpop.f32.mrf.mxu0
  %v4090 = vadd.f32 0.0, %v4089
  %4091 = vmatmul.f32.gmra.mxu0 %v3376
  %v4092 = vpop.f32.mrf.mxu0
  %v4093 = vadd.f32 0.0, %v4092
  %4094 = vmatmul.f32.gmra.mxu0 %v3379
  %v4095 = vpop.f32.mrf.mxu0
  %v4096 = vadd.f32 0.0, %v4095
  %4097 = vmatmul.f32.gmra.mxu0 %v3382
  %v4098 = vpop.f32.mrf.mxu0
  %v4099 = vadd.f32 0.0, %v4098
  %4100 = vmatmul.f32.gmra.mxu0 %v3385
  %v4101 = vpop.f32.mrf.mxu0
  %v4102 = vadd.f32 0.0, %v4101
  %4103 = vmatmul.f32.gmra.mxu0 %v3388
  %v4104 = vpop.f32.mrf.mxu0
  %v4105 = vadd.f32 0.0, %v4104
  %4106 = vmatmul.f32.gmra.mxu0 %v3391
  %v4107 = vpop.f32.mrf.mxu0
  %v4108 = vadd.f32 0.0, %v4107
  %4109 = vmatmul.f32.gmra.mxu0 %v3394
  %v4110 = vpop.f32.mrf.mxu0
  %v4111 = vadd.f32 0.0, %v4110
  %4112 = vmatmul.f32.gmra.mxu0 %v3397
  %v4113 = vpop.f32.mrf.mxu0
  %v4114 = vadd.f32 0.0, %v4113
  %4115 = vmatmul.f32.gmra.mxu0 %v3400
  %v4116 = vpop.f32.mrf.mxu0
  %v4117 = vadd.f32 0.0, %v4116
  %4118 = vmatmul.f32.gmra.mxu0 %v3403
  %v4119 = vpop.f32.mrf.mxu0
  %v4120 = vadd.f32 0.0, %v4119
  %4121 = vmatmul.f32.gmra.mxu0 %v3406
  %v4122 = vpop.f32.mrf.mxu0
  %v4123 = vadd.f32 0.0, %v4122
  %4124 = vmatmul.f32.gmra.mxu0 %v3409
  %v4125 = vpop.f32.mrf.mxu0
  %v4126 = vadd.f32 0.0, %v4125
  %4127 = vmatmul.f32.gmra.mxu0 %v3412
  %v4128 = vpop.f32.mrf.mxu0
  %v4129 = vadd.f32 0.0, %v4128
  %4130 = vmatmul.f32.gmra.mxu0 %v3415
  %v4131 = vpop.f32.mrf.mxu0
  %v4132 = vadd.f32 0.0, %v4131
  %4133 = vmatmul.f32.gmra.mxu0 %v3418
  %v4134 = vpop.f32.mrf.mxu0
  %v4135 = vadd.f32 0.0, %v4134
  %4136 = vmatmul.f32.gmra.mxu0 %v3421
  %v4137 = vpop.f32.mrf.mxu0
  %v4138 = vadd.f32 0.0, %v4137
  %4139 = vmatmul.f32.gmra.mxu0 %v3424
  %v4140 = vpop.f32.mrf.mxu0
  %v4141 = vadd.f32 0.0, %v4140
  %4142 = vmatmul.f32.gmra.mxu0 %v3427
  %v4143 = vpop.f32.mrf.mxu0
  %v4144 = vadd.f32 0.0, %v4143
  %4145 = vmatmul.f32.gmra.mxu0 %v3430
  %v4146 = vpop.f32.mrf.mxu0
  %v4147 = vadd.f32 0.0, %v4146
  %4148 = vmatmul.f32.gmra.mxu0 %v3433
  %v4149 = vpop.f32.mrf.mxu0
  %v4150 = vadd.f32 0.0, %v4149
  %4151 = vmatmul.f32.gmra.mxu0 %v3436
  %v4152 = vpop.f32.mrf.mxu0
  %v4153 = vadd.f32 0.0, %v4152
  %4154 = vmatmul.f32.gmra.mxu0 %v3439
  %v4155 = vpop.f32.mrf.mxu0
  %v4156 = vadd.f32 0.0, %v4155
  %4157 = vmatmul.f32.gmra.mxu0 %v3442
  %v4158 = vpop.f32.mrf.mxu0
  %v4159 = vadd.f32 0.0, %v4158
  %4160 = vmatmul.f32.gmra.mxu0 %v3445
  %v4161 = vpop.f32.mrf.mxu0
  %v4162 = vadd.f32 0.0, %v4161
  %4163 = vmatmul.f32.gmra.mxu0 %v3448
  %v4164 = vpop.f32.mrf.mxu0
  %v4165 = vadd.f32 0.0, %v4164
  %4166 = vmatmul.f32.gmra.mxu0 %v3451
  %v4167 = vpop.f32.mrf.mxu0
  %v4168 = vadd.f32 0.0, %v4167
  %4169 = vmatmul.f32.gmra.mxu0 %v3454
  %v4170 = vpop.f32.mrf.mxu0
  %v4171 = vadd.f32 0.0, %v4170
  %4172 = vmatmul.f32.gmra.mxu0 %v3457
  %v4173 = vpop.f32.mrf.mxu0
  %v4174 = vadd.f32 0.0, %v4173
  %4175 = vmatmul.f32.gmra.mxu0 %v3460
  %v4176 = vpop.f32.mrf.mxu0
  %v4177 = vadd.f32 0.0, %v4176
  %4178 = vmatmul.f32.gmra.mxu0 %v3463
  %v4179 = vpop.f32.mrf.mxu0
  %v4180 = vadd.f32 0.0, %v4179
  %4181 = vmatmul.f32.gmra.mxu0 %v3466
  %v4182 = vpop.f32.mrf.mxu0
  %v4183 = vadd.f32 0.0, %v4182
  %4184 = vmatmul.f32.gmra.mxu0 %v3469
  %v4185 = vpop.f32.mrf.mxu0
  %v4186 = vadd.f32 0.0, %v4185
  %4187 = vmatmul.f32.gmra.mxu0 %v3472
  %v4188 = vpop.f32.mrf.mxu0
  %v4189 = vadd.f32 0.0, %v4188
  %4190 = vmatmul.f32.gmra.mxu0 %v3475
  %v4191 = vpop.f32.mrf.mxu0
  %v4192 = vadd.f32 0.0, %v4191
  %4193 = vmatmul.f32.gmra.mxu0 %v3478
  %v4194 = vpop.f32.mrf.mxu0
  %v4195 = vadd.f32 0.0, %v4194
  %4196 = vmatmul.f32.gmra.mxu0 %v3481
  %v4197 = vpop.f32.mrf.mxu0
  %v4198 = vadd.f32 0.0, %v4197
  %4199 = vmatmul.f32.gmra.mxu0 %v3484
  %v4200 = vpop.f32.mrf.mxu0
  %v4201 = vadd.f32 0.0, %v4200
  %4202 = vmatmul.f32.gmra.mxu0 %v3487
  %v4203 = vpop.f32.mrf.mxu0
  %v4204 = vadd.f32 0.0, %v4203
  %4205 = vmatmul.f32.gmra.mxu0 %v3490
  %v4206 = vpop.f32.mrf.mxu0
  %v4207 = vadd.f32 0.0, %v4206
  %4208 = vmatmul.f32.gmra.mxu0 %v3493
  %v4209 = vpop.f32.mrf.mxu0
  %v4210 = vadd.f32 0.0, %v4209
  %4211 = vmatmul.f32.gmra.mxu0 %v3496
  %v4212 = vpop.f32.mrf.mxu0
  %v4213 = vadd.f32 0.0, %v4212
  %4214 = vmatmul.f32.gmra.mxu0 %v3499
  %v4215 = vpop.f32.mrf.mxu0
  %v4216 = vadd.f32 0.0, %v4215
  %4217 = vmatmul.f32.gmra.mxu0 %v3502
  %v4218 = vpop.f32.mrf.mxu0
  %v4219 = vadd.f32 0.0, %v4218
  %4220 = vmatmul.f32.gmra.mxu0 %v3505
  %v4221 = vpop.f32.mrf.mxu0
  %v4222 = vadd.f32 0.0, %v4221
  %4223 = vmatmul.f32.gmra.mxu0 %v3508
  %v4224 = vpop.f32.mrf.mxu0
  %v4225 = vadd.f32 0.0, %v4224
  %4226 = vmatmul.f32.gmra.mxu0 %v3511
  %v4227 = vpop.f32.mrf.mxu0
  %v4228 = vadd.f32 0.0, %v4227
  %4229 = vmatmul.f32.gmra.mxu0 %v3514
  %v4230 = vpop.f32.mrf.mxu0
  %v4231 = vadd.f32 0.0, %v4230
  %4232 = vmatmul.f32.gmra.mxu0 %v3517
  %v4233 = vpop.f32.mrf.mxu0
  %v4234 = vadd.f32 0.0, %v4233
  %4235 = vmatmul.f32.gmra.mxu0 %v3520
  %v4236 = vpop.f32.mrf.mxu0
  %v4237 = vadd.f32 0.0, %v4236
  %4238 = vmatmul.f32.gmra.mxu0 %v3523
  %v4239 = vpop.f32.mrf.mxu0
  %v4240 = vadd.f32 0.0, %v4239
  %4241 = vmatmul.f32.gmra.mxu0 %v3526
  %v4242 = vpop.f32.mrf.mxu0
  %v4243 = vadd.f32 0.0, %v4242
  %4244 = vmatmul.f32.gmra.mxu0 %v3529
  %v4245 = vpop.f32.mrf.mxu0
  %v4246 = vadd.f32 0.0, %v4245
  %4247 = vmatmul.f32.gmra.mxu0 %v3532
  %v4248 = vpop.f32.mrf.mxu0
  %v4249 = vadd.f32 0.0, %v4248
  %4250 = vmatmul.f32.gmra.mxu0 %v3535
  %v4251 = vpop.f32.mrf.mxu0
  %v4252 = vadd.f32 0.0, %v4251
  %4253 = vmatmul.f32.gmra.mxu0 %v3538
  %v4254 = vpop.f32.mrf.mxu0
  %v4255 = vadd.f32 0.0, %v4254
  %4256 = vmatmul.f32.gmra.mxu0 %v3541
  %v4257 = vpop.f32.mrf.mxu0
  %v4258 = vadd.f32 0.0, %v4257
  %4259 = vmatmul.f32.gmra.mxu0 %v3544
  %v4260 = vpop.f32.mrf.mxu0
  %v4261 = vadd.f32 0.0, %v4260
  %4262 = vmatmul.f32.gmra.mxu0 %v3547
  %v4263 = vpop.f32.mrf.mxu0
  %v4264 = vadd.f32 0.0, %v4263
  %4265 = vmatmul.f32.gmra.mxu0 %v3550
  %v4266 = vpop.f32.mrf.mxu0
  %v4267 = vadd.f32 0.0, %v4266
  %4268 = vmatmul.f32.gmra.mxu0 %v3553
  %v4269 = vpop.f32.mrf.mxu0
  %v4270 = vadd.f32 0.0, %v4269
  %4271 = vmatmul.f32.gmra.mxu0 %v3556
  %v4272 = vpop.f32.mrf.mxu0
  %v4273 = vadd.f32 0.0, %v4272
  %4274 = vmatmul.f32.gmra.mxu0 %v3559
  %v4275 = vpop.f32.mrf.mxu0
  %v4276 = vadd.f32 0.0, %v4275
  %4277 = vmatmul.f32.gmra.mxu0 %v3562
  %v4278 = vpop.f32.mrf.mxu0
  %v4279 = vadd.f32 0.0, %v4278
  %4280 = vmatmul.f32.gmra.mxu0 %v3565
  %v4281 = vpop.f32.mrf.mxu0
  %v4282 = vadd.f32 0.0, %v4281
  %4283 = vmatmul.f32.gmra.mxu0 %v3568
  %v4284 = vpop.f32.mrf.mxu0
  %v4285 = vadd.f32 0.0, %v4284
  %4286 = vmatmul.f32.gmra.mxu0 %v3571
  %v4287 = vpop.f32.mrf.mxu0
  %v4288 = vadd.f32 0.0, %v4287
  %4289 = vmatmul.f32.gmra.mxu0 %v3574
  %v4290 = vpop.f32.mrf.mxu0
  %v4291 = vadd.f32 0.0, %v4290
  %4292 = vmatmul.f32.gmra.mxu0 %v3577
  %v4293 = vpop.f32.mrf.mxu0
  %v4294 = vadd.f32 0.0, %v4293
  %4295 = vmatmul.f32.gmra.mxu0 %v3580
  %v4296 = vpop.f32.mrf.mxu0
  %v4297 = vadd.f32 0.0, %v4296
  %4298 = vmatmul.f32.gmra.mxu0 %v3583
  %v4299 = vpop.f32.mrf.mxu0
  %v4300 = vadd.f32 0.0, %v4299
  %4301 = vmatmul.f32.gmra.mxu0 %v3586
  %v4302 = vpop.f32.mrf.mxu0
  %v4303 = vadd.f32 0.0, %v4302
  %4304 = vmatmul.f32.gmra.mxu0 %v3589
  %v4305 = vpop.f32.mrf.mxu0
  %v4306 = vadd.f32 0.0, %v4305
  %4307 = vmatmul.f32.gmra.mxu0 %v3592
  %v4308 = vpop.f32.mrf.mxu0
  %v4309 = vadd.f32 0.0, %v4308
  %4310 = vmatmul.f32.gmra.mxu0 %v3595
  %v4311 = vpop.f32.mrf.mxu0
  %v4312 = vadd.f32 0.0, %v4311
  %4313 = vmatmul.f32.gmra.mxu0 %v3598
  %v4314 = vpop.f32.mrf.mxu0
  %v4315 = vadd.f32 0.0, %v4314
  %4316 = vmatmul.f32.gmra.mxu0 %v3601
  %v4317 = vpop.f32.mrf.mxu0
  %v4318 = vadd.f32 0.0, %v4317
  %4319 = vmatmul.f32.gmra.mxu0 %v3604
  %v4320 = vpop.f32.mrf.mxu0
  %v4321 = vadd.f32 0.0, %v4320
  %4322 = vmatmul.f32.gmra.mxu0 %v3607
  %v4323 = vpop.f32.mrf.mxu0
  %v4324 = vadd.f32 0.0, %v4323
  %4325 = vmatmul.f32.gmra.mxu0 %v3610
  %v4326 = vpop.f32.mrf.mxu0
  %v4327 = vadd.f32 0.0, %v4326
  %4328 = vmatmul.f32.gmra.mxu0 %v3613
  %v4329 = vpop.f32.mrf.mxu0
  %v4330 = vadd.f32 0.0, %v4329
  %4331 = vmatmul.f32.gmra.mxu0 %v3616
  %v4332 = vpop.f32.mrf.mxu0
  %v4333 = vadd.f32 0.0, %v4332
  %4334 = vmatmul.f32.gmra.mxu0 %v3619
  %v4335 = vpop.f32.mrf.mxu0
  %v4336 = vadd.f32 0.0, %v4335
  %4337 = vmatmul.f32.gmra.mxu0 %v3622
  %v4338 = vpop.f32.mrf.mxu0
  %v4339 = vadd.f32 0.0, %v4338
  %4340 = vmatmul.f32.gmra.mxu0 %v3625
  %v4341 = vpop.f32.mrf.mxu0
  %v4342 = vadd.f32 0.0, %v4341
  %4343 = vmatmul.f32.gmra.mxu0 %v3628
  %v4344 = vpop.f32.mrf.mxu0
  %v4345 = vadd.f32 0.0, %v4344
  %4346 = vmatmul.f32.gmra.mxu0 %v3631
  %v4347 = vpop.f32.mrf.mxu0
  %v4348 = vadd.f32 0.0, %v4347
  %4349 = vmatmul.f32.gmra.mxu0 %v3634
  %v4350 = vpop.f32.mrf.mxu0
  %v4351 = vadd.f32 0.0, %v4350
  %4352 = vmatmul.f32.gmra.mxu0 %v3637
  %v4353 = vpop.f32.mrf.mxu0
  %v4354 = vadd.f32 0.0, %v4353
  %4355 = vmatmul.f32.gmra.mxu0 %v3640
  %v4356 = vpop.f32.mrf.mxu0
  %v4357 = vadd.f32 0.0, %v4356
  %4358 = vmatmul.f32.gmra.mxu0 %v3643
  %v4359 = vpop.f32.mrf.mxu0
  %v4360 = vadd.f32 0.0, %v4359
  %4361 = vmatmul.f32.gmra.mxu0 %v3646
  %v4362 = vpop.f32.mrf.mxu0
  %v4363 = vadd.f32 0.0, %v4362
  %4364 = vmatmul.f32.gmra.mxu0 %v3649
  %v4365 = vpop.f32.mrf.mxu0
  %v4366 = vadd.f32 0.0, %v4365
  %4367 = vdwg.mxu0
  %v4368 = vadd.f32 %v3166, %v4081
  %v4369 = vadd.f32 %v3167, %v4084
  %v4370 = vadd.f32 %v3168, %v4087
  %v4371 = vadd.f32 %v3169, %v4090
  %v4372 = vadd.f32 %v3170, %v4093
  %v4373 = vadd.f32 %v3171, %v4096
  %v4374 = vadd.f32 %v3172, %v4099
  %v4375 = vadd.f32 %v3173, %v4102
  %v4376 = vadd.f32 %v3174, %v4105
  %v4377 = vadd.f32 %v3175, %v4108
  %v4378 = vadd.f32 %v3176, %v4111
  %v4379 = vadd.f32 %v3177, %v4114
  %v4380 = vadd.f32 %v3178, %v4117
  %v4381 = vadd.f32 %v3179, %v4120
  %v4382 = vadd.f32 %v3180, %v4123
  %v4383 = vadd.f32 %v3181, %v4126
  %v4384 = vadd.f32 %v3182, %v4129
  %v4385 = vadd.f32 %v3183, %v4132
  %v4386 = vadd.f32 %v3184, %v4135
  %v4387 = vadd.f32 %v3185, %v4138
  %v4388 = vadd.f32 %v3186, %v4141
  %v4389 = vadd.f32 %v3187, %v4144
  %v4390 = vadd.f32 %v3188, %v4147
  %v4391 = vadd.f32 %v3189, %v4150
  %v4392 = vadd.f32 %v3190, %v4153
  %v4393 = vadd.f32 %v3191, %v4156
  %v4394 = vadd.f32 %v3192, %v4159
  %v4395 = vadd.f32 %v3193, %v4162
  %v4396 = vadd.f32 %v3194, %v4165
  %v4397 = vadd.f32 %v3195, %v4168
  %v4398 = vadd.f32 %v3196, %v4171
  %v4399 = vadd.f32 %v3197, %v4174
  %v4400 = vadd.f32 %v3198, %v4177
  %v4401 = vadd.f32 %v3199, %v4180
  %v4402 = vadd.f32 %v3200, %v4183
  %v4403 = vadd.f32 %v3201, %v4186
  %v4404 = vadd.f32 %v3202, %v4189
  %v4405 = vadd.f32 %v3203, %v4192
  %v4406 = vadd.f32 %v3204, %v4195
  %v4407 = vadd.f32 %v3205, %v4198
  %v4408 = vadd.f32 %v3206, %v4201
  %v4409 = vadd.f32 %v3207, %v4204
  %v4410 = vadd.f32 %v3208, %v4207
  %v4411 = vadd.f32 %v3209, %v4210
  %v4412 = vadd.f32 %v3210, %v4213
  %v4413 = vadd.f32 %v3211, %v4216
  %v4414 = vadd.f32 %v3212, %v4219
  %v4415 = vadd.f32 %v3213, %v4222
  %v4416 = vadd.f32 %v3214, %v4225
  %v4417 = vadd.f32 %v3215, %v4228
  %v4418 = vadd.f32 %v3216, %v4231
  %v4419 = vadd.f32 %v3217, %v4234
  %v4420 = vadd.f32 %v3218, %v4237
  %v4421 = vadd.f32 %v3219, %v4240
  %v4422 = vadd.f32 %v3220, %v4243
  %v4423 = vadd.f32 %v3221, %v4246
  %v4424 = vadd.f32 %v3222, %v4249
  %v4425 = vadd.f32 %v3223, %v4252
  %v4426 = vadd.f32 %v3224, %v4255
  %v4427 = vadd.f32 %v3225, %v4258
  %v4428 = vadd.f32 %v3226, %v4261
  %v4429 = vadd.f32 %v3227, %v4264
  %v4430 = vadd.f32 %v3228, %v4267
  %v4431 = vadd.f32 %v3229, %v4270
  %v4432 = vadd.f32 %v3230, %v4273
  %v4433 = vadd.f32 %v3231, %v4276
  %v4434 = vadd.f32 %v3232, %v4279
  %v4435 = vadd.f32 %v3233, %v4282
  %v4436 = vadd.f32 %v3234, %v4285
  %v4437 = vadd.f32 %v3235, %v4288
  %v4438 = vadd.f32 %v3236, %v4291
  %v4439 = vadd.f32 %v3237, %v4294
  %v4440 = vadd.f32 %v3238, %v4297
  %v4441 = vadd.f32 %v3239, %v4300
  %v4442 = vadd.f32 %v3240, %v4303
  %v4443 = vadd.f32 %v3241, %v4306
  %v4444 = vadd.f32 %v3242, %v4309
  %v4445 = vadd.f32 %v3243, %v4312
  %v4446 = vadd.f32 %v3244, %v4315
  %v4447 = vadd.f32 %v3245, %v4318
  %v4448 = vadd.f32 %v3246, %v4321
  %v4449 = vadd.f32 %v3247, %v4324
  %v4450 = vadd.f32 %v3248, %v4327
  %v4451 = vadd.f32 %v3249, %v4330
  %v4452 = vadd.f32 %v3250, %v4333
  %v4453 = vadd.f32 %v3251, %v4336
  %v4454 = vadd.f32 %v3252, %v4339
  %v4455 = vadd.f32 %v3253, %v4342
  %v4456 = vadd.f32 %v3254, %v4345
  %v4457 = vadd.f32 %v3255, %v4348
  %v4458 = vadd.f32 %v3256, %v4351
  %v4459 = vadd.f32 %v3257, %v4354
  %v4460 = vadd.f32 %v3258, %v4357
  %v4461 = vadd.f32 %v3259, %v4360
  %v4462 = vadd.f32 %v3260, %v4363
  %v4463 = vadd.f32 %v3261, %v4366
  %v4464 = vld [vmem:[%s0 + $0x4] sm:$0xff]
  %v4465 = vld [vmem:[%s0 + $0xc] sm:$0xff]
  %v4466 = vld [vmem:[%s0 + $0x14] sm:$0xff]
  %v4467 = vld [vmem:[%s0 + $0x24] sm:$0xff]
  %v4468 = vld [vmem:[%s0 + $0x2c] sm:$0xff]
  %v4469 = vld [vmem:[%s0 + $0x34] sm:$0xff]
  %v4470 = vld [vmem:[%s0 + $0x44] sm:$0xff]
  %v4471 = vld [vmem:[%s0 + $0x4c] sm:$0xff]
  %v4472 = vld [vmem:[%s0 + $0x54] sm:$0xff]
  %v4473 = vld [vmem:[%s0 + $0x64] sm:$0xff]
  %v4474 = vld [vmem:[%s0 + $0x6c] sm:$0xff]
  %v4475 = vld [vmem:[%s0 + $0x74] sm:$0xff]
  %v4476 = vld [vmem:[%s0 + $0x84] sm:$0xff]
  %v4477 = vld [vmem:[%s0 + $0x8c] sm:$0xff]
  %v4478 = vld [vmem:[%s0 + $0x94] sm:$0xff]
  %v4479 = vld [vmem:[%s0 + $0xa4] sm:$0xff]
  %v4480 = vld [vmem:[%s0 + $0xac] sm:$0xff]
  %v4481 = vld [vmem:[%s0 + $0xb4] sm:$0xff]
  %v4482 = vld [vmem:[%s0 + $0xc4] sm:$0xff]
  %v4483 = vld [vmem:[%s0 + $0xcc] sm:$0xff]
  %v4484 = vld [vmem:[%s0 + $0xd4] sm:$0xff]
  %v4485 = vld [vmem:[%s0 + $0xe4] sm:$0xff]
  %v4486 = vld [vmem:[%s0 + $0xec] sm:$0xff]
  %v4487 = vld [vmem:[%s0 + $0xf4] sm:$0xff]
  %v4488 = vld [vmem:[%s0 + $0x104] sm:$0xff]
  %v4489 = vld [vmem:[%s0 + $0x10c] sm:$0xff]
  %v4490 = vld [vmem:[%s0 + $0x114] sm:$0xff]
  %v4491 = vld [vmem:[%s0 + $0x124] sm:$0xff]
  %v4492 = vld [vmem:[%s0 + $0x12c] sm:$0xff]
  %v4493 = vld [vmem:[%s0 + $0x134] sm:$0xff]
  %v4494 = vld [vmem:[%s0 + $0x144] sm:$0xff]
  %v4495 = vld [vmem:[%s0 + $0x14c] sm:$0xff]
  %v4496 = vld [vmem:[%s0 + $0x154] sm:$0xff]
  %v4497 = vld [vmem:[%s0 + $0x164] sm:$0xff]
  %v4498 = vld [vmem:[%s0 + $0x16c] sm:$0xff]
  %v4499 = vld [vmem:[%s0 + $0x174] sm:$0xff]
  %v4500 = vld [vmem:[%s0 + $0x184] sm:$0xff]
  %v4501 = vld [vmem:[%s0 + $0x18c] sm:$0xff]
  %v4502 = vld [vmem:[%s0 + $0x194] sm:$0xff]
  %v4503 = vld [vmem:[%s0 + $0x1a4] sm:$0xff]
  %v4504 = vld [vmem:[%s0 + $0x1ac] sm:$0xff]
  %v4505 = vld [vmem:[%s0 + $0x1b4] sm:$0xff]
  %v4506 = vld [vmem:[%s0 + $0x1c4] sm:$0xff]
  %v4507 = vld [vmem:[%s0 + $0x1cc] sm:$0xff]
  %v4508 = vld [vmem:[%s0 + $0x1d4] sm:$0xff]
  %v4509 = vld [vmem:[%s0 + $0x1e4] sm:$0xff]
  %v4510 = vld [vmem:[%s0 + $0x1ec] sm:$0xff]
  %v4511 = vld [vmem:[%s0 + $0x1f4] sm:$0xff]
  %v4512 = vld [vmem:[%s0 + $0x204] sm:$0xff]
  %v4513 = vld [vmem:[%s0 + $0x20c] sm:$0xff]
  %v4514 = vld [vmem:[%s0 + $0x214] sm:$0xff]
  %v4515 = vld [vmem:[%s0 + $0x224] sm:$0xff]
  %v4516 = vld [vmem:[%s0 + $0x22c] sm:$0xff]
  %v4517 = vld [vmem:[%s0 + $0x234] sm:$0xff]
  %v4518 = vld [vmem:[%s0 + $0x244] sm:$0xff]
  %v4519 = vld [vmem:[%s0 + $0x24c] sm:$0xff]
  %v4520 = vld [vmem:[%s0 + $0x254] sm:$0xff]
  %v4521 = vld [vmem:[%s0 + $0x264] sm:$0xff]
  %v4522 = vld [vmem:[%s0 + $0x26c] sm:$0xff]
  %v4523 = vld [vmem:[%s0 + $0x274] sm:$0xff]
  %v4524 = vld [vmem:[%s0 + $0x284] sm:$0xff]
  %v4525 = vld [vmem:[%s0 + $0x28c] sm:$0xff]
  %v4526 = vld [vmem:[%s0 + $0x294] sm:$0xff]
  %v4527 = vld [vmem:[%s0 + $0x2a4] sm:$0xff]
  %v4528 = vld [vmem:[%s0 + $0x2ac] sm:$0xff]
  %v4529 = vld [vmem:[%s0 + $0x2b4] sm:$0xff]
  %v4530 = vld [vmem:[%s0 + $0x2c4] sm:$0xff]
  %v4531 = vld [vmem:[%s0 + $0x2cc] sm:$0xff]
  %v4532 = vld [vmem:[%s0 + $0x2d4] sm:$0xff]
  %v4533 = vld [vmem:[%s0 + $0x2e4] sm:$0xff]
  %v4534 = vld [vmem:[%s0 + $0x2ec] sm:$0xff]
  %v4535 = vld [vmem:[%s0 + $0x2f4] sm:$0xff]
  %v4536 = vld [vmem:[%s0 + $0x304] sm:$0xff]
  %v4537 = vld [vmem:[%s0 + $0x30c] sm:$0xff]
  %v4538 = vld [vmem:[%s0 + $0x314] sm:$0xff]
  %v4539 = vld [vmem:[%s0 + $0x324] sm:$0xff]
  %v4540 = vld [vmem:[%s0 + $0x32c] sm:$0xff]
  %v4541 = vld [vmem:[%s0 + $0x334] sm:$0xff]
  %v4542 = vld [vmem:[%s0 + $0x344] sm:$0xff]
  %v4543 = vld [vmem:[%s0 + $0x34c] sm:$0xff]
  %v4544 = vld [vmem:[%s0 + $0x354] sm:$0xff]
  %v4545 = vld [vmem:[%s0 + $0x364] sm:$0xff]
  %v4546 = vld [vmem:[%s0 + $0x36c] sm:$0xff]
  %v4547 = vld [vmem:[%s0 + $0x374] sm:$0xff]
  %v4548 = vld [vmem:[%s0 + $0x384] sm:$0xff]
  %v4549 = vld [vmem:[%s0 + $0x38c] sm:$0xff]
  %v4550 = vld [vmem:[%s0 + $0x394] sm:$0xff]
  %v4551 = vld [vmem:[%s0 + $0x3a4] sm:$0xff]
  %v4552 = vld [vmem:[%s0 + $0x3ac] sm:$0xff]
  %v4553 = vld [vmem:[%s0 + $0x3b4] sm:$0xff]
  %v4554 = vld [vmem:[%s0 + $0x3c4] sm:$0xff]
  %v4555 = vld [vmem:[%s0 + $0x3cc] sm:$0xff]
  %v4556 = vld [vmem:[%s0 + $0x3d4] sm:$0xff]
  %v4557 = vld [vmem:[%s0 + $0x3e4] sm:$0xff]
  %v4558 = vld [vmem:[%s0 + $0x3ec] sm:$0xff]
  %v4559 = vld [vmem:[%s0 + $0x3f4] sm:$0xff]
  %s4560 = scalar_lea.vmem %s1, 128
  %v4561 = vld [vmem:[%s4560] sm:$0xff]
  %v4562 = vld [vmem:[%s4560 + $0x8] sm:$0xff]
  %v4563 = vld [vmem:[%s4560 + $0x10] sm:$0xff]
  %v4564 = vld [vmem:[%s4560 + $0x18] sm:$0xf]
  %v4566 = vsel %vm245, %v4464, 0
  %v4569 = vsel %vm245, %v4465, 0
  %v4572 = vsel %vm245, %v4466, 0
  %v4575 = vsel %vm245, %v4467, 0
  %v4578 = vsel %vm245, %v4468, 0
  %v4581 = vsel %vm245, %v4469, 0
  %v4584 = vsel %vm245, %v4470, 0
  %v4587 = vsel %vm245, %v4471, 0
  %v4590 = vsel %vm245, %v4472, 0
  %v4593 = vsel %vm245, %v4473, 0
  %v4596 = vsel %vm245, %v4474, 0
  %v4599 = vsel %vm245, %v4475, 0
  %v4602 = vsel %vm245, %v4476, 0
  %v4605 = vsel %vm245, %v4477, 0
  %v4608 = vsel %vm245, %v4478, 0
  %v4611 = vsel %vm245, %v4479, 0
  %v4614 = vsel %vm245, %v4480, 0
  %v4617 = vsel %vm245, %v4481, 0
  %v4620 = vsel %vm245, %v4482, 0
  %v4623 = vsel %vm245, %v4483, 0
  %v4626 = vsel %vm245, %v4484, 0
  %v4629 = vsel %vm245, %v4485, 0
  %v4632 = vsel %vm245, %v4486, 0
  %v4635 = vsel %vm245, %v4487, 0
  %v4638 = vsel %vm245, %v4488, 0
  %v4641 = vsel %vm245, %v4489, 0
  %v4644 = vsel %vm245, %v4490, 0
  %v4647 = vsel %vm245, %v4491, 0
  %v4650 = vsel %vm245, %v4492, 0
  %v4653 = vsel %vm245, %v4493, 0
  %v4656 = vsel %vm245, %v4494, 0
  %v4659 = vsel %vm245, %v4495, 0
  %v4662 = vsel %vm245, %v4496, 0
  %v4665 = vsel %vm245, %v4497, 0
  %v4668 = vsel %vm245, %v4498, 0
  %v4671 = vsel %vm245, %v4499, 0
  %v4674 = vsel %vm245, %v4500, 0
  %v4677 = vsel %vm245, %v4501, 0
  %v4680 = vsel %vm245, %v4502, 0
  %v4683 = vsel %vm245, %v4503, 0
  %v4686 = vsel %vm245, %v4504, 0
  %v4689 = vsel %vm245, %v4505, 0
  %v4692 = vsel %vm245, %v4506, 0
  %v4695 = vsel %vm245, %v4507, 0
  %v4698 = vsel %vm245, %v4508, 0
  %v4701 = vsel %vm245, %v4509, 0
  %v4704 = vsel %vm245, %v4510, 0
  %v4707 = vsel %vm245, %v4511, 0
  %v4710 = vsel %vm245, %v4512, 0
  %v4713 = vsel %vm245, %v4513, 0
  %v4716 = vsel %vm245, %v4514, 0
  %v4719 = vsel %vm245, %v4515, 0
  %v4722 = vsel %vm245, %v4516, 0
  %v4725 = vsel %vm245, %v4517, 0
  %v4728 = vsel %vm245, %v4518, 0
  %v4731 = vsel %vm245, %v4519, 0
  %v4734 = vsel %vm245, %v4520, 0
  %v4737 = vsel %vm245, %v4521, 0
  %v4740 = vsel %vm245, %v4522, 0
  %v4743 = vsel %vm245, %v4523, 0
  %v4746 = vsel %vm245, %v4524, 0
  %v4749 = vsel %vm245, %v4525, 0
  %v4752 = vsel %vm245, %v4526, 0
  %v4755 = vsel %vm245, %v4527, 0
  %v4758 = vsel %vm245, %v4528, 0
  %v4761 = vsel %vm245, %v4529, 0
  %v4764 = vsel %vm245, %v4530, 0
  %v4767 = vsel %vm245, %v4531, 0
  %v4770 = vsel %vm245, %v4532, 0
  %v4773 = vsel %vm245, %v4533, 0
  %v4776 = vsel %vm245, %v4534, 0
  %v4779 = vsel %vm245, %v4535, 0
  %v4782 = vsel %vm245, %v4536, 0
  %v4785 = vsel %vm245, %v4537, 0
  %v4788 = vsel %vm245, %v4538, 0
  %v4791 = vsel %vm245, %v4539, 0
  %v4794 = vsel %vm245, %v4540, 0
  %v4797 = vsel %vm245, %v4541, 0
  %v4800 = vsel %vm245, %v4542, 0
  %v4803 = vsel %vm245, %v4543, 0
  %v4806 = vsel %vm245, %v4544, 0
  %v4809 = vsel %vm245, %v4545, 0
  %v4812 = vsel %vm245, %v4546, 0
  %v4815 = vsel %vm245, %v4547, 0
  %v4818 = vsel %vm245, %v4548, 0
  %v4821 = vsel %vm245, %v4549, 0
  %v4824 = vsel %vm245, %v4550, 0
  %v4827 = vsel %vm245, %v4551, 0
  %v4830 = vsel %vm245, %v4552, 0
  %v4833 = vsel %vm245, %v4553, 0
  %v4836 = vsel %vm245, %v4554, 0
  %v4839 = vsel %vm245, %v4555, 0
  %v4842 = vsel %vm245, %v4556, 0
  %v4845 = vsel %vm245, %v4557, 0
  %v4848 = vsel %vm245, %v4558, 0
  %v4851 = vsel %vm245, %v4559, 0
  %v4854 = vsel %vm534, %v4564, 0
  %4856 = vmatpush.msra.mxu0 0.0
  %4857 = vmatpush.msra.mxu0 0.0
  %4858 = vmatpush.msra.mxu0 0.0
  %4859 = vmatpush.msra.mxu0 0.0
  %4860 = vmatpush.msra.mxu0 0.0
  %4861 = vmatpush.msra.mxu0 0.0
  %4862 = vmatpush.msra.mxu0 0.0
  %4863 = vmatpush.msra.mxu0 0.0
  %4864 = vmatpush.msra.mxu0 0.0
  %4865 = vmatpush.msra.mxu0 0.0
  %4866 = vmatpush.msra.mxu0 0.0
  %4867 = vmatpush.msra.mxu0 0.0
  %4868 = vmatpush.msra.mxu0 %v4854
  %4869 = vmatpush.msra.mxu0 %v4563
  %4870 = vmatpush.msra.mxu0 %v4562
  %4871 = vmatpush.msra.mxu0 %v4561
  %4872 = vmatmul.f32.gmra.mxu0 %v4566
  %v4873 = vpop.f32.mrf.mxu0
  %v4874 = vadd.f32 0.0, %v4873
  %4875 = vmatmul.f32.gmra.mxu0 %v4569
  %v4876 = vpop.f32.mrf.mxu0
  %v4877 = vadd.f32 0.0, %v4876
  %4878 = vmatmul.f32.gmra.mxu0 %v4572
  %v4879 = vpop.f32.mrf.mxu0
  %v4880 = vadd.f32 0.0, %v4879
  %4881 = vmatmul.f32.gmra.mxu0 %v4575
  %v4882 = vpop.f32.mrf.mxu0
  %v4883 = vadd.f32 0.0, %v4882
  %4884 = vmatmul.f32.gmra.mxu0 %v4578
  %v4885 = vpop.f32.mrf.mxu0
  %v4886 = vadd.f32 0.0, %v4885
  %4887 = vmatmul.f32.gmra.mxu0 %v4581
  %v4888 = vpop.f32.mrf.mxu0
  %v4889 = vadd.f32 0.0, %v4888
  %4890 = vmatmul.f32.gmra.mxu0 %v4584
  %v4891 = vpop.f32.mrf.mxu0
  %v4892 = vadd.f32 0.0, %v4891
  %4893 = vmatmul.f32.gmra.mxu0 %v4587
  %v4894 = vpop.f32.mrf.mxu0
  %v4895 = vadd.f32 0.0, %v4894
  %4896 = vmatmul.f32.gmra.mxu0 %v4590
  %v4897 = vpop.f32.mrf.mxu0
  %v4898 = vadd.f32 0.0, %v4897
  %4899 = vmatmul.f32.gmra.mxu0 %v4593
  %v4900 = vpop.f32.mrf.mxu0
  %v4901 = vadd.f32 0.0, %v4900
  %4902 = vmatmul.f32.gmra.mxu0 %v4596
  %v4903 = vpop.f32.mrf.mxu0
  %v4904 = vadd.f32 0.0, %v4903
  %4905 = vmatmul.f32.gmra.mxu0 %v4599
  %v4906 = vpop.f32.mrf.mxu0
  %v4907 = vadd.f32 0.0, %v4906
  %4908 = vmatmul.f32.gmra.mxu0 %v4602
  %v4909 = vpop.f32.mrf.mxu0
  %v4910 = vadd.f32 0.0, %v4909
  %4911 = vmatmul.f32.gmra.mxu0 %v4605
  %v4912 = vpop.f32.mrf.mxu0
  %v4913 = vadd.f32 0.0, %v4912
  %4914 = vmatmul.f32.gmra.mxu0 %v4608
  %v4915 = vpop.f32.mrf.mxu0
  %v4916 = vadd.f32 0.0, %v4915
  %4917 = vmatmul.f32.gmra.mxu0 %v4611
  %v4918 = vpop.f32.mrf.mxu0
  %v4919 = vadd.f32 0.0, %v4918
  %4920 = vmatmul.f32.gmra.mxu0 %v4614
  %v4921 = vpop.f32.mrf.mxu0
  %v4922 = vadd.f32 0.0, %v4921
  %4923 = vmatmul.f32.gmra.mxu0 %v4617
  %v4924 = vpop.f32.mrf.mxu0
  %v4925 = vadd.f32 0.0, %v4924
  %4926 = vmatmul.f32.gmra.mxu0 %v4620
  %v4927 = vpop.f32.mrf.mxu0
  %v4928 = vadd.f32 0.0, %v4927
  %4929 = vmatmul.f32.gmra.mxu0 %v4623
  %v4930 = vpop.f32.mrf.mxu0
  %v4931 = vadd.f32 0.0, %v4930
  %4932 = vmatmul.f32.gmra.mxu0 %v4626
  %v4933 = vpop.f32.mrf.mxu0
  %v4934 = vadd.f32 0.0, %v4933
  %4935 = vmatmul.f32.gmra.mxu0 %v4629
  %v4936 = vpop.f32.mrf.mxu0
  %v4937 = vadd.f32 0.0, %v4936
  %4938 = vmatmul.f32.gmra.mxu0 %v4632
  %v4939 = vpop.f32.mrf.mxu0
  %v4940 = vadd.f32 0.0, %v4939
  %4941 = vmatmul.f32.gmra.mxu0 %v4635
  %v4942 = vpop.f32.mrf.mxu0
  %v4943 = vadd.f32 0.0, %v4942
  %4944 = vmatmul.f32.gmra.mxu0 %v4638
  %v4945 = vpop.f32.mrf.mxu0
  %v4946 = vadd.f32 0.0, %v4945
  %4947 = vmatmul.f32.gmra.mxu0 %v4641
  %v4948 = vpop.f32.mrf.mxu0
  %v4949 = vadd.f32 0.0, %v4948
  %4950 = vmatmul.f32.gmra.mxu0 %v4644
  %v4951 = vpop.f32.mrf.mxu0
  %v4952 = vadd.f32 0.0, %v4951
  %4953 = vmatmul.f32.gmra.mxu0 %v4647
  %v4954 = vpop.f32.mrf.mxu0
  %v4955 = vadd.f32 0.0, %v4954
  %4956 = vmatmul.f32.gmra.mxu0 %v4650
  %v4957 = vpop.f32.mrf.mxu0
  %v4958 = vadd.f32 0.0, %v4957
  %4959 = vmatmul.f32.gmra.mxu0 %v4653
  %v4960 = vpop.f32.mrf.mxu0
  %v4961 = vadd.f32 0.0, %v4960
  %4962 = vmatmul.f32.gmra.mxu0 %v4656
  %v4963 = vpop.f32.mrf.mxu0
  %v4964 = vadd.f32 0.0, %v4963
  %4965 = vmatmul.f32.gmra.mxu0 %v4659
  %v4966 = vpop.f32.mrf.mxu0
  %v4967 = vadd.f32 0.0, %v4966
  %4968 = vmatmul.f32.gmra.mxu0 %v4662
  %v4969 = vpop.f32.mrf.mxu0
  %v4970 = vadd.f32 0.0, %v4969
  %4971 = vmatmul.f32.gmra.mxu0 %v4665
  %v4972 = vpop.f32.mrf.mxu0
  %v4973 = vadd.f32 0.0, %v4972
  %4974 = vmatmul.f32.gmra.mxu0 %v4668
  %v4975 = vpop.f32.mrf.mxu0
  %v4976 = vadd.f32 0.0, %v4975
  %4977 = vmatmul.f32.gmra.mxu0 %v4671
  %v4978 = vpop.f32.mrf.mxu0
  %v4979 = vadd.f32 0.0, %v4978
  %4980 = vmatmul.f32.gmra.mxu0 %v4674
  %v4981 = vpop.f32.mrf.mxu0
  %v4982 = vadd.f32 0.0, %v4981
  %4983 = vmatmul.f32.gmra.mxu0 %v4677
  %v4984 = vpop.f32.mrf.mxu0
  %v4985 = vadd.f32 0.0, %v4984
  %4986 = vmatmul.f32.gmra.mxu0 %v4680
  %v4987 = vpop.f32.mrf.mxu0
  %v4988 = vadd.f32 0.0, %v4987
  %4989 = vmatmul.f32.gmra.mxu0 %v4683
  %v4990 = vpop.f32.mrf.mxu0
  %v4991 = vadd.f32 0.0, %v4990
  %4992 = vmatmul.f32.gmra.mxu0 %v4686
  %v4993 = vpop.f32.mrf.mxu0
  %v4994 = vadd.f32 0.0, %v4993
  %4995 = vmatmul.f32.gmra.mxu0 %v4689
  %v4996 = vpop.f32.mrf.mxu0
  %v4997 = vadd.f32 0.0, %v4996
  %4998 = vmatmul.f32.gmra.mxu0 %v4692
  %v4999 = vpop.f32.mrf.mxu0
  %v5000 = vadd.f32 0.0, %v4999
  %5001 = vmatmul.f32.gmra.mxu0 %v4695
  %v5002 = vpop.f32.mrf.mxu0
  %v5003 = vadd.f32 0.0, %v5002
  %5004 = vmatmul.f32.gmra.mxu0 %v4698
  %v5005 = vpop.f32.mrf.mxu0
  %v5006 = vadd.f32 0.0, %v5005
  %5007 = vmatmul.f32.gmra.mxu0 %v4701
  %v5008 = vpop.f32.mrf.mxu0
  %v5009 = vadd.f32 0.0, %v5008
  %5010 = vmatmul.f32.gmra.mxu0 %v4704
  %v5011 = vpop.f32.mrf.mxu0
  %v5012 = vadd.f32 0.0, %v5011
  %5013 = vmatmul.f32.gmra.mxu0 %v4707
  %v5014 = vpop.f32.mrf.mxu0
  %v5015 = vadd.f32 0.0, %v5014
  %5016 = vmatmul.f32.gmra.mxu0 %v4710
  %v5017 = vpop.f32.mrf.mxu0
  %v5018 = vadd.f32 0.0, %v5017
  %5019 = vmatmul.f32.gmra.mxu0 %v4713
  %v5020 = vpop.f32.mrf.mxu0
  %v5021 = vadd.f32 0.0, %v5020
  %5022 = vmatmul.f32.gmra.mxu0 %v4716
  %v5023 = vpop.f32.mrf.mxu0
  %v5024 = vadd.f32 0.0, %v5023
  %5025 = vmatmul.f32.gmra.mxu0 %v4719
  %v5026 = vpop.f32.mrf.mxu0
  %v5027 = vadd.f32 0.0, %v5026
  %5028 = vmatmul.f32.gmra.mxu0 %v4722
  %v5029 = vpop.f32.mrf.mxu0
  %v5030 = vadd.f32 0.0, %v5029
  %5031 = vmatmul.f32.gmra.mxu0 %v4725
  %v5032 = vpop.f32.mrf.mxu0
  %v5033 = vadd.f32 0.0, %v5032
  %5034 = vmatmul.f32.gmra.mxu0 %v4728
  %v5035 = vpop.f32.mrf.mxu0
  %v5036 = vadd.f32 0.0, %v5035
  %5037 = vmatmul.f32.gmra.mxu0 %v4731
  %v5038 = vpop.f32.mrf.mxu0
  %v5039 = vadd.f32 0.0, %v5038
  %5040 = vmatmul.f32.gmra.mxu0 %v4734
  %v5041 = vpop.f32.mrf.mxu0
  %v5042 = vadd.f32 0.0, %v5041
  %5043 = vmatmul.f32.gmra.mxu0 %v4737
  %v5044 = vpop.f32.mrf.mxu0
  %v5045 = vadd.f32 0.0, %v5044
  %5046 = vmatmul.f32.gmra.mxu0 %v4740
  %v5047 = vpop.f32.mrf.mxu0
  %v5048 = vadd.f32 0.0, %v5047
  %5049 = vmatmul.f32.gmra.mxu0 %v4743
  %v5050 = vpop.f32.mrf.mxu0
  %v5051 = vadd.f32 0.0, %v5050
  %5052 = vmatmul.f32.gmra.mxu0 %v4746
  %v5053 = vpop.f32.mrf.mxu0
  %v5054 = vadd.f32 0.0, %v5053
  %5055 = vmatmul.f32.gmra.mxu0 %v4749
  %v5056 = vpop.f32.mrf.mxu0
  %v5057 = vadd.f32 0.0, %v5056
  %5058 = vmatmul.f32.gmra.mxu0 %v4752
  %v5059 = vpop.f32.mrf.mxu0
  %v5060 = vadd.f32 0.0, %v5059
  %5061 = vmatmul.f32.gmra.mxu0 %v4755
  %v5062 = vpop.f32.mrf.mxu0
  %v5063 = vadd.f32 0.0, %v5062
  %5064 = vmatmul.f32.gmra.mxu0 %v4758
  %v5065 = vpop.f32.mrf.mxu0
  %v5066 = vadd.f32 0.0, %v5065
  %5067 = vmatmul.f32.gmra.mxu0 %v4761
  %v5068 = vpop.f32.mrf.mxu0
  %v5069 = vadd.f32 0.0, %v5068
  %5070 = vmatmul.f32.gmra.mxu0 %v4764
  %v5071 = vpop.f32.mrf.mxu0
  %v5072 = vadd.f32 0.0, %v5071
  %5073 = vmatmul.f32.gmra.mxu0 %v4767
  %v5074 = vpop.f32.mrf.mxu0
  %v5075 = vadd.f32 0.0, %v5074
  %5076 = vmatmul.f32.gmra.mxu0 %v4770
  %v5077 = vpop.f32.mrf.mxu0
  %v5078 = vadd.f32 0.0, %v5077
  %5079 = vmatmul.f32.gmra.mxu0 %v4773
  %v5080 = vpop.f32.mrf.mxu0
  %v5081 = vadd.f32 0.0, %v5080
  %5082 = vmatmul.f32.gmra.mxu0 %v4776
  %v5083 = vpop.f32.mrf.mxu0
  %v5084 = vadd.f32 0.0, %v5083
  %5085 = vmatmul.f32.gmra.mxu0 %v4779
  %v5086 = vpop.f32.mrf.mxu0
  %v5087 = vadd.f32 0.0, %v5086
  %5088 = vmatmul.f32.gmra.mxu0 %v4782
  %v5089 = vpop.f32.mrf.mxu0
  %v5090 = vadd.f32 0.0, %v5089
  %5091 = vmatmul.f32.gmra.mxu0 %v4785
  %v5092 = vpop.f32.mrf.mxu0
  %v5093 = vadd.f32 0.0, %v5092
  %5094 = vmatmul.f32.gmra.mxu0 %v4788
  %v5095 = vpop.f32.mrf.mxu0
  %v5096 = vadd.f32 0.0, %v5095
  %5097 = vmatmul.f32.gmra.mxu0 %v4791
  %v5098 = vpop.f32.mrf.mxu0
  %v5099 = vadd.f32 0.0, %v5098
  %5100 = vmatmul.f32.gmra.mxu0 %v4794
  %v5101 = vpop.f32.mrf.mxu0
  %v5102 = vadd.f32 0.0, %v5101
  %5103 = vmatmul.f32.gmra.mxu0 %v4797
  %v5104 = vpop.f32.mrf.mxu0
  %v5105 = vadd.f32 0.0, %v5104
  %5106 = vmatmul.f32.gmra.mxu0 %v4800
  %v5107 = vpop.f32.mrf.mxu0
  %v5108 = vadd.f32 0.0, %v5107
  %5109 = vmatmul.f32.gmra.mxu0 %v4803
  %v5110 = vpop.f32.mrf.mxu0
  %v5111 = vadd.f32 0.0, %v5110
  %5112 = vmatmul.f32.gmra.mxu0 %v4806
  %v5113 = vpop.f32.mrf.mxu0
  %v5114 = vadd.f32 0.0, %v5113
  %5115 = vmatmul.f32.gmra.mxu0 %v4809
  %v5116 = vpop.f32.mrf.mxu0
  %v5117 = vadd.f32 0.0, %v5116
  %5118 = vmatmul.f32.gmra.mxu0 %v4812
  %v5119 = vpop.f32.mrf.mxu0
  %v5120 = vadd.f32 0.0, %v5119
  %5121 = vmatmul.f32.gmra.mxu0 %v4815
  %v5122 = vpop.f32.mrf.mxu0
  %v5123 = vadd.f32 0.0, %v5122
  %5124 = vmatmul.f32.gmra.mxu0 %v4818
  %v5125 = vpop.f32.mrf.mxu0
  %v5126 = vadd.f32 0.0, %v5125
  %5127 = vmatmul.f32.gmra.mxu0 %v4821
  %v5128 = vpop.f32.mrf.mxu0
  %v5129 = vadd.f32 0.0, %v5128
  %5130 = vmatmul.f32.gmra.mxu0 %v4824
  %v5131 = vpop.f32.mrf.mxu0
  %v5132 = vadd.f32 0.0, %v5131
  %5133 = vmatmul.f32.gmra.mxu0 %v4827
  %v5134 = vpop.f32.mrf.mxu0
  %v5135 = vadd.f32 0.0, %v5134
  %5136 = vmatmul.f32.gmra.mxu0 %v4830
  %v5137 = vpop.f32.mrf.mxu0
  %v5138 = vadd.f32 0.0, %v5137
  %5139 = vmatmul.f32.gmra.mxu0 %v4833
  %v5140 = vpop.f32.mrf.mxu0
  %v5141 = vadd.f32 0.0, %v5140
  %5142 = vmatmul.f32.gmra.mxu0 %v4836
  %v5143 = vpop.f32.mrf.mxu0
  %v5144 = vadd.f32 0.0, %v5143
  %5145 = vmatmul.f32.gmra.mxu0 %v4839
  %v5146 = vpop.f32.mrf.mxu0
  %v5147 = vadd.f32 0.0, %v5146
  %5148 = vmatmul.f32.gmra.mxu0 %v4842
  %v5149 = vpop.f32.mrf.mxu0
  %v5150 = vadd.f32 0.0, %v5149
  %5151 = vmatmul.f32.gmra.mxu0 %v4845
  %v5152 = vpop.f32.mrf.mxu0
  %v5153 = vadd.f32 0.0, %v5152
  %5154 = vmatmul.f32.gmra.mxu0 %v4848
  %v5155 = vpop.f32.mrf.mxu0
  %v5156 = vadd.f32 0.0, %v5155
  %5157 = vmatmul.f32.gmra.mxu0 %v4851
  %v5158 = vpop.f32.mrf.mxu0
  %v5159 = vadd.f32 0.0, %v5158
  %5160 = vdwg.mxu0
  %v5161 = vadd.f32 %v3959, %v4874
  %v5162 = vadd.f32 %v3960, %v4877
  %v5163 = vadd.f32 %v3961, %v4880
  %v5164 = vadd.f32 %v3962, %v4883
  %v5165 = vadd.f32 %v3963, %v4886
  %v5166 = vadd.f32 %v3964, %v4889
  %v5167 = vadd.f32 %v3965, %v4892
  %v5168 = vadd.f32 %v3966, %v4895
  %v5169 = vadd.f32 %v3967, %v4898
  %v5170 = vadd.f32 %v3968, %v4901
  %v5171 = vadd.f32 %v3969, %v4904
  %v5172 = vadd.f32 %v3970, %v4907
  %v5173 = vadd.f32 %v3971, %v4910
  %v5174 = vadd.f32 %v3972, %v4913
  %v5175 = vadd.f32 %v3973, %v4916
  %v5176 = vadd.f32 %v3974, %v4919
  %v5177 = vadd.f32 %v3975, %v4922
  %v5178 = vadd.f32 %v3976, %v4925
  %v5179 = vadd.f32 %v3977, %v4928
  %v5180 = vadd.f32 %v3978, %v4931
  %v5181 = vadd.f32 %v3979, %v4934
  %v5182 = vadd.f32 %v3980, %v4937
  %v5183 = vadd.f32 %v3981, %v4940
  %v5184 = vadd.f32 %v3982, %v4943
  %v5185 = vadd.f32 %v3983, %v4946
  %v5186 = vadd.f32 %v3984, %v4949
  %v5187 = vadd.f32 %v3985, %v4952
  %v5188 = vadd.f32 %v3986, %v4955
  %v5189 = vadd.f32 %v3987, %v4958
  %v5190 = vadd.f32 %v3988, %v4961
  %v5191 = vadd.f32 %v3989, %v4964
  %v5192 = vadd.f32 %v3990, %v4967
  %v5193 = vadd.f32 %v3991, %v4970
  %v5194 = vadd.f32 %v3992, %v4973
  %v5195 = vadd.f32 %v3993, %v4976
  %v5196 = vadd.f32 %v3994, %v4979
  %v5197 = vadd.f32 %v3995, %v4982
  %v5198 = vadd.f32 %v3996, %v4985
  %v5199 = vadd.f32 %v3997, %v4988
  %v5200 = vadd.f32 %v3998, %v4991
  %v5201 = vadd.f32 %v3999, %v4994
  %v5202 = vadd.f32 %v4000, %v4997
  %v5203 = vadd.f32 %v4001, %v5000
  %v5204 = vadd.f32 %v4002, %v5003
  %v5205 = vadd.f32 %v4003, %v5006
  %v5206 = vadd.f32 %v4004, %v5009
  %v5207 = vadd.f32 %v4005, %v5012
  %v5208 = vadd.f32 %v4006, %v5015
  %v5209 = vadd.f32 %v4007, %v5018
  %v5210 = vadd.f32 %v4008, %v5021
  %v5211 = vadd.f32 %v4009, %v5024
  %v5212 = vadd.f32 %v4010, %v5027
  %v5213 = vadd.f32 %v4011, %v5030
  %v5214 = vadd.f32 %v4012, %v5033
  %v5215 = vadd.f32 %v4013, %v5036
  %v5216 = vadd.f32 %v4014, %v5039
  %v5217 = vadd.f32 %v4015, %v5042
  %v5218 = vadd.f32 %v4016, %v5045
  %v5219 = vadd.f32 %v4017, %v5048
  %v5220 = vadd.f32 %v4018, %v5051
  %v5221 = vadd.f32 %v4019, %v5054
  %v5222 = vadd.f32 %v4020, %v5057
  %v5223 = vadd.f32 %v4021, %v5060
  %v5224 = vadd.f32 %v4022, %v5063
  %v5225 = vadd.f32 %v4023, %v5066
  %v5226 = vadd.f32 %v4024, %v5069
  %v5227 = vadd.f32 %v4025, %v5072
  %v5228 = vadd.f32 %v4026, %v5075
  %v5229 = vadd.f32 %v4027, %v5078
  %v5230 = vadd.f32 %v4028, %v5081
  %v5231 = vadd.f32 %v4029, %v5084
  %v5232 = vadd.f32 %v4030, %v5087
  %v5233 = vadd.f32 %v4031, %v5090
  %v5234 = vadd.f32 %v4032, %v5093
  %v5235 = vadd.f32 %v4033, %v5096
  %v5236 = vadd.f32 %v4034, %v5099
  %v5237 = vadd.f32 %v4035, %v5102
  %v5238 = vadd.f32 %v4036, %v5105
  %v5239 = vadd.f32 %v4037, %v5108
  %v5240 = vadd.f32 %v4038, %v5111
  %v5241 = vadd.f32 %v4039, %v5114
  %v5242 = vadd.f32 %v4040, %v5117
  %v5243 = vadd.f32 %v4041, %v5120
  %v5244 = vadd.f32 %v4042, %v5123
  %v5245 = vadd.f32 %v4043, %v5126
  %v5246 = vadd.f32 %v4044, %v5129
  %v5247 = vadd.f32 %v4045, %v5132
  %v5248 = vadd.f32 %v4046, %v5135
  %v5249 = vadd.f32 %v4047, %v5138
  %v5250 = vadd.f32 %v4048, %v5141
  %v5251 = vadd.f32 %v4049, %v5144
  %v5252 = vadd.f32 %v4050, %v5147
  %v5253 = vadd.f32 %v4051, %v5150
  %v5254 = vadd.f32 %v4052, %v5153
  %v5255 = vadd.f32 %v4053, %v5156
  %v5256 = vadd.f32 %v4054, %v5159
  %s5257 = scalar_lea.vmem %s1, 288
  %v5258 = vld [vmem:[%s5257] sm:$0xff]
  %v5259 = vld [vmem:[%s5257 + $0x8] sm:$0xff]
  %v5260 = vld [vmem:[%s5257 + $0x10] sm:$0xff]
  %v5261 = vld [vmem:[%s5257 + $0x18] sm:$0xf]
  %v5263 = vsel %vm534, %v5261, 0
  %5265 = vmatpush.msra.mxu0 0.0
  %5266 = vmatpush.msra.mxu0 0.0
  %5267 = vmatpush.msra.mxu0 0.0
  %5268 = vmatpush.msra.mxu0 0.0
  %5269 = vmatpush.msra.mxu0 0.0
  %5270 = vmatpush.msra.mxu0 0.0
  %5271 = vmatpush.msra.mxu0 0.0
  %5272 = vmatpush.msra.mxu0 0.0
  %5273 = vmatpush.msra.mxu0 0.0
  %5274 = vmatpush.msra.mxu0 0.0
  %5275 = vmatpush.msra.mxu0 0.0
  %5276 = vmatpush.msra.mxu0 0.0
  %5277 = vmatpush.msra.mxu0 %v5263
  %5278 = vmatpush.msra.mxu0 %v5260
  %5279 = vmatpush.msra.mxu0 %v5259
  %5280 = vmatpush.msra.mxu0 %v5258
  %5281 = vmatmul.f32.gmra.mxu0 %v4566
  %v5282 = vpop.f32.mrf.mxu0
  %v5283 = vadd.f32 0.0, %v5282
  %5284 = vmatmul.f32.gmra.mxu0 %v4569
  %v5285 = vpop.f32.mrf.mxu0
  %v5286 = vadd.f32 0.0, %v5285
  %5287 = vmatmul.f32.gmra.mxu0 %v4572
  %v5288 = vpop.f32.mrf.mxu0
  %v5289 = vadd.f32 0.0, %v5288
  %5290 = vmatmul.f32.gmra.mxu0 %v4575
  %v5291 = vpop.f32.mrf.mxu0
  %v5292 = vadd.f32 0.0, %v5291
  %5293 = vmatmul.f32.gmra.mxu0 %v4578
  %v5294 = vpop.f32.mrf.mxu0
  %v5295 = vadd.f32 0.0, %v5294
  %5296 = vmatmul.f32.gmra.mxu0 %v4581
  %v5297 = vpop.f32.mrf.mxu0
  %v5298 = vadd.f32 0.0, %v5297
  %5299 = vmatmul.f32.gmra.mxu0 %v4584
  %v5300 = vpop.f32.mrf.mxu0
  %v5301 = vadd.f32 0.0, %v5300
  %5302 = vmatmul.f32.gmra.mxu0 %v4587
  %v5303 = vpop.f32.mrf.mxu0
  %v5304 = vadd.f32 0.0, %v5303
  %5305 = vmatmul.f32.gmra.mxu0 %v4590
  %v5306 = vpop.f32.mrf.mxu0
  %v5307 = vadd.f32 0.0, %v5306
  %5308 = vmatmul.f32.gmra.mxu0 %v4593
  %v5309 = vpop.f32.mrf.mxu0
  %v5310 = vadd.f32 0.0, %v5309
  %5311 = vmatmul.f32.gmra.mxu0 %v4596
  %v5312 = vpop.f32.mrf.mxu0
  %v5313 = vadd.f32 0.0, %v5312
  %5314 = vmatmul.f32.gmra.mxu0 %v4599
  %v5315 = vpop.f32.mrf.mxu0
  %v5316 = vadd.f32 0.0, %v5315
  %5317 = vmatmul.f32.gmra.mxu0 %v4602
  %v5318 = vpop.f32.mrf.mxu0
  %v5319 = vadd.f32 0.0, %v5318
  %5320 = vmatmul.f32.gmra.mxu0 %v4605
  %v5321 = vpop.f32.mrf.mxu0
  %v5322 = vadd.f32 0.0, %v5321
  %5323 = vmatmul.f32.gmra.mxu0 %v4608
  %v5324 = vpop.f32.mrf.mxu0
  %v5325 = vadd.f32 0.0, %v5324
  %5326 = vmatmul.f32.gmra.mxu0 %v4611
  %v5327 = vpop.f32.mrf.mxu0
  %v5328 = vadd.f32 0.0, %v5327
  %5329 = vmatmul.f32.gmra.mxu0 %v4614
  %v5330 = vpop.f32.mrf.mxu0
  %v5331 = vadd.f32 0.0, %v5330
  %5332 = vmatmul.f32.gmra.mxu0 %v4617
  %v5333 = vpop.f32.mrf.mxu0
  %v5334 = vadd.f32 0.0, %v5333
  %5335 = vmatmul.f32.gmra.mxu0 %v4620
  %v5336 = vpop.f32.mrf.mxu0
  %v5337 = vadd.f32 0.0, %v5336
  %5338 = vmatmul.f32.gmra.mxu0 %v4623
  %v5339 = vpop.f32.mrf.mxu0
  %v5340 = vadd.f32 0.0, %v5339
  %5341 = vmatmul.f32.gmra.mxu0 %v4626
  %v5342 = vpop.f32.mrf.mxu0
  %v5343 = vadd.f32 0.0, %v5342
  %5344 = vmatmul.f32.gmra.mxu0 %v4629
  %v5345 = vpop.f32.mrf.mxu0
  %v5346 = vadd.f32 0.0, %v5345
  %5347 = vmatmul.f32.gmra.mxu0 %v4632
  %v5348 = vpop.f32.mrf.mxu0
  %v5349 = vadd.f32 0.0, %v5348
  %5350 = vmatmul.f32.gmra.mxu0 %v4635
  %v5351 = vpop.f32.mrf.mxu0
  %v5352 = vadd.f32 0.0, %v5351
  %5353 = vmatmul.f32.gmra.mxu0 %v4638
  %v5354 = vpop.f32.mrf.mxu0
  %v5355 = vadd.f32 0.0, %v5354
  %5356 = vmatmul.f32.gmra.mxu0 %v4641
  %v5357 = vpop.f32.mrf.mxu0
  %v5358 = vadd.f32 0.0, %v5357
  %5359 = vmatmul.f32.gmra.mxu0 %v4644
  %v5360 = vpop.f32.mrf.mxu0
  %v5361 = vadd.f32 0.0, %v5360
  %5362 = vmatmul.f32.gmra.mxu0 %v4647
  %v5363 = vpop.f32.mrf.mxu0
  %v5364 = vadd.f32 0.0, %v5363
  %5365 = vmatmul.f32.gmra.mxu0 %v4650
  %v5366 = vpop.f32.mrf.mxu0
  %v5367 = vadd.f32 0.0, %v5366
  %5368 = vmatmul.f32.gmra.mxu0 %v4653
  %v5369 = vpop.f32.mrf.mxu0
  %v5370 = vadd.f32 0.0, %v5369
  %5371 = vmatmul.f32.gmra.mxu0 %v4656
  %v5372 = vpop.f32.mrf.mxu0
  %v5373 = vadd.f32 0.0, %v5372
  %5374 = vmatmul.f32.gmra.mxu0 %v4659
  %v5375 = vpop.f32.mrf.mxu0
  %v5376 = vadd.f32 0.0, %v5375
  %5377 = vmatmul.f32.gmra.mxu0 %v4662
  %v5378 = vpop.f32.mrf.mxu0
  %v5379 = vadd.f32 0.0, %v5378
  %5380 = vmatmul.f32.gmra.mxu0 %v4665
  %v5381 = vpop.f32.mrf.mxu0
  %v5382 = vadd.f32 0.0, %v5381
  %5383 = vmatmul.f32.gmra.mxu0 %v4668
  %v5384 = vpop.f32.mrf.mxu0
  %v5385 = vadd.f32 0.0, %v5384
  %5386 = vmatmul.f32.gmra.mxu0 %v4671
  %v5387 = vpop.f32.mrf.mxu0
  %v5388 = vadd.f32 0.0, %v5387
  %5389 = vmatmul.f32.gmra.mxu0 %v4674
  %v5390 = vpop.f32.mrf.mxu0
  %v5391 = vadd.f32 0.0, %v5390
  %5392 = vmatmul.f32.gmra.mxu0 %v4677
  %v5393 = vpop.f32.mrf.mxu0
  %v5394 = vadd.f32 0.0, %v5393
  %5395 = vmatmul.f32.gmra.mxu0 %v4680
  %v5396 = vpop.f32.mrf.mxu0
  %v5397 = vadd.f32 0.0, %v5396
  %5398 = vmatmul.f32.gmra.mxu0 %v4683
  %v5399 = vpop.f32.mrf.mxu0
  %v5400 = vadd.f32 0.0, %v5399
  %5401 = vmatmul.f32.gmra.mxu0 %v4686
  %v5402 = vpop.f32.mrf.mxu0
  %v5403 = vadd.f32 0.0, %v5402
  %5404 = vmatmul.f32.gmra.mxu0 %v4689
  %v5405 = vpop.f32.mrf.mxu0
  %v5406 = vadd.f32 0.0, %v5405
  %5407 = vmatmul.f32.gmra.mxu0 %v4692
  %v5408 = vpop.f32.mrf.mxu0
  %v5409 = vadd.f32 0.0, %v5408
  %5410 = vmatmul.f32.gmra.mxu0 %v4695
  %v5411 = vpop.f32.mrf.mxu0
  %v5412 = vadd.f32 0.0, %v5411
  %5413 = vmatmul.f32.gmra.mxu0 %v4698
  %v5414 = vpop.f32.mrf.mxu0
  %v5415 = vadd.f32 0.0, %v5414
  %5416 = vmatmul.f32.gmra.mxu0 %v4701
  %v5417 = vpop.f32.mrf.mxu0
  %v5418 = vadd.f32 0.0, %v5417
  %5419 = vmatmul.f32.gmra.mxu0 %v4704
  %v5420 = vpop.f32.mrf.mxu0
  %v5421 = vadd.f32 0.0, %v5420
  %5422 = vmatmul.f32.gmra.mxu0 %v4707
  %v5423 = vpop.f32.mrf.mxu0
  %v5424 = vadd.f32 0.0, %v5423
  %5425 = vmatmul.f32.gmra.mxu0 %v4710
  %v5426 = vpop.f32.mrf.mxu0
  %v5427 = vadd.f32 0.0, %v5426
  %5428 = vmatmul.f32.gmra.mxu0 %v4713
  %v5429 = vpop.f32.mrf.mxu0
  %v5430 = vadd.f32 0.0, %v5429
  %5431 = vmatmul.f32.gmra.mxu0 %v4716
  %v5432 = vpop.f32.mrf.mxu0
  %v5433 = vadd.f32 0.0, %v5432
  %5434 = vmatmul.f32.gmra.mxu0 %v4719
  %v5435 = vpop.f32.mrf.mxu0
  %v5436 = vadd.f32 0.0, %v5435
  %5437 = vmatmul.f32.gmra.mxu0 %v4722
  %v5438 = vpop.f32.mrf.mxu0
  %v5439 = vadd.f32 0.0, %v5438
  %5440 = vmatmul.f32.gmra.mxu0 %v4725
  %v5441 = vpop.f32.mrf.mxu0
  %v5442 = vadd.f32 0.0, %v5441
  %5443 = vmatmul.f32.gmra.mxu0 %v4728
  %v5444 = vpop.f32.mrf.mxu0
  %v5445 = vadd.f32 0.0, %v5444
  %5446 = vmatmul.f32.gmra.mxu0 %v4731
  %v5447 = vpop.f32.mrf.mxu0
  %v5448 = vadd.f32 0.0, %v5447
  %5449 = vmatmul.f32.gmra.mxu0 %v4734
  %v5450 = vpop.f32.mrf.mxu0
  %v5451 = vadd.f32 0.0, %v5450
  %5452 = vmatmul.f32.gmra.mxu0 %v4737
  %v5453 = vpop.f32.mrf.mxu0
  %v5454 = vadd.f32 0.0, %v5453
  %5455 = vmatmul.f32.gmra.mxu0 %v4740
  %v5456 = vpop.f32.mrf.mxu0
  %v5457 = vadd.f32 0.0, %v5456
  %5458 = vmatmul.f32.gmra.mxu0 %v4743
  %v5459 = vpop.f32.mrf.mxu0
  %v5460 = vadd.f32 0.0, %v5459
  %5461 = vmatmul.f32.gmra.mxu0 %v4746
  %v5462 = vpop.f32.mrf.mxu0
  %v5463 = vadd.f32 0.0, %v5462
  %5464 = vmatmul.f32.gmra.mxu0 %v4749
  %v5465 = vpop.f32.mrf.mxu0
  %v5466 = vadd.f32 0.0, %v5465
  %5467 = vmatmul.f32.gmra.mxu0 %v4752
  %v5468 = vpop.f32.mrf.mxu0
  %v5469 = vadd.f32 0.0, %v5468
  %5470 = vmatmul.f32.gmra.mxu0 %v4755
  %v5471 = vpop.f32.mrf.mxu0
  %v5472 = vadd.f32 0.0, %v5471
  %5473 = vmatmul.f32.gmra.mxu0 %v4758
  %v5474 = vpop.f32.mrf.mxu0
  %v5475 = vadd.f32 0.0, %v5474
  %5476 = vmatmul.f32.gmra.mxu0 %v4761
  %v5477 = vpop.f32.mrf.mxu0
  %v5478 = vadd.f32 0.0, %v5477
  %5479 = vmatmul.f32.gmra.mxu0 %v4764
  %v5480 = vpop.f32.mrf.mxu0
  %v5481 = vadd.f32 0.0, %v5480
  %5482 = vmatmul.f32.gmra.mxu0 %v4767
  %v5483 = vpop.f32.mrf.mxu0
  %v5484 = vadd.f32 0.0, %v5483
  %5485 = vmatmul.f32.gmra.mxu0 %v4770
  %v5486 = vpop.f32.mrf.mxu0
  %v5487 = vadd.f32 0.0, %v5486
  %5488 = vmatmul.f32.gmra.mxu0 %v4773
  %v5489 = vpop.f32.mrf.mxu0
  %v5490 = vadd.f32 0.0, %v5489
  %5491 = vmatmul.f32.gmra.mxu0 %v4776
  %v5492 = vpop.f32.mrf.mxu0
  %v5493 = vadd.f32 0.0, %v5492
  %5494 = vmatmul.f32.gmra.mxu0 %v4779
  %v5495 = vpop.f32.mrf.mxu0
  %v5496 = vadd.f32 0.0, %v5495
  %5497 = vmatmul.f32.gmra.mxu0 %v4782
  %v5498 = vpop.f32.mrf.mxu0
  %v5499 = vadd.f32 0.0, %v5498
  %5500 = vmatmul.f32.gmra.mxu0 %v4785
  %v5501 = vpop.f32.mrf.mxu0
  %v5502 = vadd.f32 0.0, %v5501
  %5503 = vmatmul.f32.gmra.mxu0 %v4788
  %v5504 = vpop.f32.mrf.mxu0
  %v5505 = vadd.f32 0.0, %v5504
  %5506 = vmatmul.f32.gmra.mxu0 %v4791
  %v5507 = vpop.f32.mrf.mxu0
  %v5508 = vadd.f32 0.0, %v5507
  %5509 = vmatmul.f32.gmra.mxu0 %v4794
  %v5510 = vpop.f32.mrf.mxu0
  %v5511 = vadd.f32 0.0, %v5510
  %5512 = vmatmul.f32.gmra.mxu0 %v4797
  %v5513 = vpop.f32.mrf.mxu0
  %v5514 = vadd.f32 0.0, %v5513
  %5515 = vmatmul.f32.gmra.mxu0 %v4800
  %v5516 = vpop.f32.mrf.mxu0
  %v5517 = vadd.f32 0.0, %v5516
  %5518 = vmatmul.f32.gmra.mxu0 %v4803
  %v5519 = vpop.f32.mrf.mxu0
  %v5520 = vadd.f32 0.0, %v5519
  %5521 = vmatmul.f32.gmra.mxu0 %v4806
  %v5522 = vpop.f32.mrf.mxu0
  %v5523 = vadd.f32 0.0, %v5522
  %5524 = vmatmul.f32.gmra.mxu0 %v4809
  %v5525 = vpop.f32.mrf.mxu0
  %v5526 = vadd.f32 0.0, %v5525
  %5527 = vmatmul.f32.gmra.mxu0 %v4812
  %v5528 = vpop.f32.mrf.mxu0
  %v5529 = vadd.f32 0.0, %v5528
  %5530 = vmatmul.f32.gmra.mxu0 %v4815
  %v5531 = vpop.f32.mrf.mxu0
  %v5532 = vadd.f32 0.0, %v5531
  %5533 = vmatmul.f32.gmra.mxu0 %v4818
  %v5534 = vpop.f32.mrf.mxu0
  %v5535 = vadd.f32 0.0, %v5534
  %5536 = vmatmul.f32.gmra.mxu0 %v4821
  %v5537 = vpop.f32.mrf.mxu0
  %v5538 = vadd.f32 0.0, %v5537
  %5539 = vmatmul.f32.gmra.mxu0 %v4824
  %v5540 = vpop.f32.mrf.mxu0
  %v5541 = vadd.f32 0.0, %v5540
  %5542 = vmatmul.f32.gmra.mxu0 %v4827
  %v5543 = vpop.f32.mrf.mxu0
  %v5544 = vadd.f32 0.0, %v5543
  %5545 = vmatmul.f32.gmra.mxu0 %v4830
  %v5546 = vpop.f32.mrf.mxu0
  %v5547 = vadd.f32 0.0, %v5546
  %5548 = vmatmul.f32.gmra.mxu0 %v4833
  %v5549 = vpop.f32.mrf.mxu0
  %v5550 = vadd.f32 0.0, %v5549
  %5551 = vmatmul.f32.gmra.mxu0 %v4836
  %v5552 = vpop.f32.mrf.mxu0
  %v5553 = vadd.f32 0.0, %v5552
  %5554 = vmatmul.f32.gmra.mxu0 %v4839
  %v5555 = vpop.f32.mrf.mxu0
  %v5556 = vadd.f32 0.0, %v5555
  %5557 = vmatmul.f32.gmra.mxu0 %v4842
  %v5558 = vpop.f32.mrf.mxu0
  %v5559 = vadd.f32 0.0, %v5558
  %5560 = vmatmul.f32.gmra.mxu0 %v4845
  %v5561 = vpop.f32.mrf.mxu0
  %v5562 = vadd.f32 0.0, %v5561
  %5563 = vmatmul.f32.gmra.mxu0 %v4848
  %v5564 = vpop.f32.mrf.mxu0
  %v5565 = vadd.f32 0.0, %v5564
  %5566 = vmatmul.f32.gmra.mxu0 %v4851
  %v5567 = vpop.f32.mrf.mxu0
  %v5568 = vadd.f32 0.0, %v5567
  %5569 = vdwg.mxu0
  %v5570 = vadd.f32 %v4368, %v5283
  %v5571 = vadd.f32 %v4369, %v5286
  %v5572 = vadd.f32 %v4370, %v5289
  %v5573 = vadd.f32 %v4371, %v5292
  %v5574 = vadd.f32 %v4372, %v5295
  %v5575 = vadd.f32 %v4373, %v5298
  %v5576 = vadd.f32 %v4374, %v5301
  %v5577 = vadd.f32 %v4375, %v5304
  %v5578 = vadd.f32 %v4376, %v5307
  %v5579 = vadd.f32 %v4377, %v5310
  %v5580 = vadd.f32 %v4378, %v5313
  %v5581 = vadd.f32 %v4379, %v5316
  %v5582 = vadd.f32 %v4380, %v5319
  %v5583 = vadd.f32 %v4381, %v5322
  %v5584 = vadd.f32 %v4382, %v5325
  %v5585 = vadd.f32 %v4383, %v5328
  %v5586 = vadd.f32 %v4384, %v5331
  %v5587 = vadd.f32 %v4385, %v5334
  %v5588 = vadd.f32 %v4386, %v5337
  %v5589 = vadd.f32 %v4387, %v5340
  %v5590 = vadd.f32 %v4388, %v5343
  %v5591 = vadd.f32 %v4389, %v5346
  %v5592 = vadd.f32 %v4390, %v5349
  %v5593 = vadd.f32 %v4391, %v5352
  %v5594 = vadd.f32 %v4392, %v5355
  %v5595 = vadd.f32 %v4393, %v5358
  %v5596 = vadd.f32 %v4394, %v5361
  %v5597 = vadd.f32 %v4395, %v5364
  %v5598 = vadd.f32 %v4396, %v5367
  %v5599 = vadd.f32 %v4397, %v5370
  %v5600 = vadd.f32 %v4398, %v5373
  %v5601 = vadd.f32 %v4399, %v5376
  %v5602 = vadd.f32 %v4400, %v5379
  %v5603 = vadd.f32 %v4401, %v5382
  %v5604 = vadd.f32 %v4402, %v5385
  %v5605 = vadd.f32 %v4403, %v5388
  %v5606 = vadd.f32 %v4404, %v5391
  %v5607 = vadd.f32 %v4405, %v5394
  %v5608 = vadd.f32 %v4406, %v5397
  %v5609 = vadd.f32 %v4407, %v5400
  %v5610 = vadd.f32 %v4408, %v5403
  %v5611 = vadd.f32 %v4409, %v5406
  %v5612 = vadd.f32 %v4410, %v5409
  %v5613 = vadd.f32 %v4411, %v5412
  %v5614 = vadd.f32 %v4412, %v5415
  %v5615 = vadd.f32 %v4413, %v5418
  %v5616 = vadd.f32 %v4414, %v5421
  %v5617 = vadd.f32 %v4415, %v5424
  %v5618 = vadd.f32 %v4416, %v5427
  %v5619 = vadd.f32 %v4417, %v5430
  %v5620 = vadd.f32 %v4418, %v5433
  %v5621 = vadd.f32 %v4419, %v5436
  %v5622 = vadd.f32 %v4420, %v5439
  %v5623 = vadd.f32 %v4421, %v5442
  %v5624 = vadd.f32 %v4422, %v5445
  %v5625 = vadd.f32 %v4423, %v5448
  %v5626 = vadd.f32 %v4424, %v5451
  %v5627 = vadd.f32 %v4425, %v5454
  %v5628 = vadd.f32 %v4426, %v5457
  %v5629 = vadd.f32 %v4427, %v5460
  %v5630 = vadd.f32 %v4428, %v5463
  %v5631 = vadd.f32 %v4429, %v5466
  %v5632 = vadd.f32 %v4430, %v5469
  %v5633 = vadd.f32 %v4431, %v5472
  %v5634 = vadd.f32 %v4432, %v5475
  %v5635 = vadd.f32 %v4433, %v5478
  %v5636 = vadd.f32 %v4434, %v5481
  %v5637 = vadd.f32 %v4435, %v5484
  %v5638 = vadd.f32 %v4436, %v5487
  %v5639 = vadd.f32 %v4437, %v5490
  %v5640 = vadd.f32 %v4438, %v5493
  %v5641 = vadd.f32 %v4439, %v5496
  %v5642 = vadd.f32 %v4440, %v5499
  %v5643 = vadd.f32 %v4441, %v5502
  %v5644 = vadd.f32 %v4442, %v5505
  %v5645 = vadd.f32 %v4443, %v5508
  %v5646 = vadd.f32 %v4444, %v5511
  %v5647 = vadd.f32 %v4445, %v5514
  %v5648 = vadd.f32 %v4446, %v5517
  %v5649 = vadd.f32 %v4447, %v5520
  %v5650 = vadd.f32 %v4448, %v5523
  %v5651 = vadd.f32 %v4449, %v5526
  %v5652 = vadd.f32 %v4450, %v5529
  %v5653 = vadd.f32 %v4451, %v5532
  %v5654 = vadd.f32 %v4452, %v5535
  %v5655 = vadd.f32 %v4453, %v5538
  %v5656 = vadd.f32 %v4454, %v5541
  %v5657 = vadd.f32 %v4455, %v5544
  %v5658 = vadd.f32 %v4456, %v5547
  %v5659 = vadd.f32 %v4457, %v5550
  %v5660 = vadd.f32 %v4458, %v5553
  %v5661 = vadd.f32 %v4459, %v5556
  %v5662 = vadd.f32 %v4460, %v5559
  %v5663 = vadd.f32 %v4461, %v5562
  %v5664 = vadd.f32 %v4462, %v5565
  %v5665 = vadd.f32 %v4463, %v5568
  %v5666 = vmax.f32 %v5161, %v5570
  %v5667 = vmax.f32 %v5162, %v5571
  %v5668 = vmax.f32 %v5163, %v5572
  %v5669 = vmax.f32 %v5164, %v5573
  %v5670 = vmax.f32 %v5165, %v5574
  %v5671 = vmax.f32 %v5166, %v5575
  %v5672 = vmax.f32 %v5167, %v5576
  %v5673 = vmax.f32 %v5168, %v5577
  %v5674 = vmax.f32 %v5169, %v5578
  %v5675 = vmax.f32 %v5170, %v5579
  %v5676 = vmax.f32 %v5171, %v5580
  %v5677 = vmax.f32 %v5172, %v5581
  %v5678 = vmax.f32 %v5173, %v5582
  %v5679 = vmax.f32 %v5174, %v5583
  %v5680 = vmax.f32 %v5175, %v5584
  %v5681 = vmax.f32 %v5176, %v5585
  %v5682 = vmax.f32 %v5177, %v5586
  %v5683 = vmax.f32 %v5178, %v5587
  %v5684 = vmax.f32 %v5179, %v5588
  %v5685 = vmax.f32 %v5180, %v5589
  %v5686 = vmax.f32 %v5181, %v5590
  %v5687 = vmax.f32 %v5182, %v5591
  %v5688 = vmax.f32 %v5183, %v5592
  %v5689 = vmax.f32 %v5184, %v5593
  %v5690 = vmax.f32 %v5185, %v5594
  %v5691 = vmax.f32 %v5186, %v5595
  %v5692 = vmax.f32 %v5187, %v5596
  %v5693 = vmax.f32 %v5188, %v5597
  %v5694 = vmax.f32 %v5189, %v5598
  %v5695 = vmax.f32 %v5190, %v5599
  %v5696 = vmax.f32 %v5191, %v5600
  %v5697 = vmax.f32 %v5192, %v5601
  %v5698 = vmax.f32 %v5193, %v5602
  %v5699 = vmax.f32 %v5194, %v5603
  %v5700 = vmax.f32 %v5195, %v5604
  %v5701 = vmax.f32 %v5196, %v5605
  %v5702 = vmax.f32 %v5197, %v5606
  %v5703 = vmax.f32 %v5198, %v5607
  %v5704 = vmax.f32 %v5199, %v5608
  %v5705 = vmax.f32 %v5200, %v5609
  %v5706 = vmax.f32 %v5201, %v5610
  %v5707 = vmax.f32 %v5202, %v5611
  %v5708 = vmax.f32 %v5203, %v5612
  %v5709 = vmax.f32 %v5204, %v5613
  %v5710 = vmax.f32 %v5205, %v5614
  %v5711 = vmax.f32 %v5206, %v5615
  %v5712 = vmax.f32 %v5207, %v5616
  %v5713 = vmax.f32 %v5208, %v5617
  %v5714 = vmax.f32 %v5209, %v5618
  %v5715 = vmax.f32 %v5210, %v5619
  %v5716 = vmax.f32 %v5211, %v5620
  %v5717 = vmax.f32 %v5212, %v5621
  %v5718 = vmax.f32 %v5213, %v5622
  %v5719 = vmax.f32 %v5214, %v5623
  %v5720 = vmax.f32 %v5215, %v5624
  %v5721 = vmax.f32 %v5216, %v5625
  %v5722 = vmax.f32 %v5217, %v5626
  %v5723 = vmax.f32 %v5218, %v5627
  %v5724 = vmax.f32 %v5219, %v5628
  %v5725 = vmax.f32 %v5220, %v5629
  %v5726 = vmax.f32 %v5221, %v5630
  %v5727 = vmax.f32 %v5222, %v5631
  %v5728 = vmax.f32 %v5223, %v5632
  %v5729 = vmax.f32 %v5224, %v5633
  %v5730 = vmax.f32 %v5225, %v5634
  %v5731 = vmax.f32 %v5226, %v5635
  %v5732 = vmax.f32 %v5227, %v5636
  %v5733 = vmax.f32 %v5228, %v5637
  %v5734 = vmax.f32 %v5229, %v5638
  %v5735 = vmax.f32 %v5230, %v5639
  %v5736 = vmax.f32 %v5231, %v5640
  %v5737 = vmax.f32 %v5232, %v5641
  %v5738 = vmax.f32 %v5233, %v5642
  %v5739 = vmax.f32 %v5234, %v5643
  %v5740 = vmax.f32 %v5235, %v5644
  %v5741 = vmax.f32 %v5236, %v5645
  %v5742 = vmax.f32 %v5237, %v5646
  %v5743 = vmax.f32 %v5238, %v5647
  %v5744 = vmax.f32 %v5239, %v5648
  %v5745 = vmax.f32 %v5240, %v5649
  %v5746 = vmax.f32 %v5241, %v5650
  %v5747 = vmax.f32 %v5242, %v5651
  %v5748 = vmax.f32 %v5243, %v5652
  %v5749 = vmax.f32 %v5244, %v5653
  %v5750 = vmax.f32 %v5245, %v5654
  %v5751 = vmax.f32 %v5246, %v5655
  %v5752 = vmax.f32 %v5247, %v5656
  %v5753 = vmax.f32 %v5248, %v5657
  %v5754 = vmax.f32 %v5249, %v5658
  %v5755 = vmax.f32 %v5250, %v5659
  %v5756 = vmax.f32 %v5251, %v5660
  %v5757 = vmax.f32 %v5252, %v5661
  %v5758 = vmax.f32 %v5253, %v5662
  %v5759 = vmax.f32 %v5254, %v5663
  %v5760 = vmax.f32 %v5255, %v5664
  %v5761 = vmax.f32 %v5256, %v5665
  %v5794 = vrot.slane %v5666, 1
  %v5795 = vrot.slane %v5669, 1
  %v5796 = vrot.slane %v5672, 1
  %v5797 = vrot.slane %v5675, 1
  %v5798 = vrot.slane %v5678, 1
  %v5799 = vrot.slane %v5681, 1
  %v5800 = vrot.slane %v5684, 1
  %v5801 = vrot.slane %v5687, 1
  %v5802 = vrot.slane %v5690, 1
  %v5803 = vrot.slane %v5693, 1
  %v5804 = vrot.slane %v5696, 1
  %v5805 = vrot.slane %v5699, 1
  %v5806 = vrot.slane %v5702, 1
  %v5807 = vrot.slane %v5705, 1
  %v5808 = vrot.slane %v5708, 1
  %v5809 = vrot.slane %v5711, 1
  %v5810 = vrot.slane %v5714, 1
  %v5811 = vrot.slane %v5717, 1
  %v5812 = vrot.slane %v5720, 1
  %v5813 = vrot.slane %v5723, 1
  %v5814 = vrot.slane %v5726, 1
  %v5815 = vrot.slane %v5729, 1
  %v5816 = vrot.slane %v5732, 1
  %v5817 = vrot.slane %v5735, 1
  %v5818 = vrot.slane %v5738, 1
  %v5819 = vrot.slane %v5741, 1
  %v5820 = vrot.slane %v5744, 1
  %v5821 = vrot.slane %v5747, 1
  %v5822 = vrot.slane %v5750, 1
  %v5823 = vrot.slane %v5753, 1
  %v5824 = vrot.slane %v5756, 1
  %v5825 = vrot.slane %v5759, 1
  %v5858 = vmax.f32 %v5666, %v5794
  %v5859 = vmax.f32 %v5669, %v5795
  %v5860 = vmax.f32 %v5672, %v5796
  %v5861 = vmax.f32 %v5675, %v5797
  %v5862 = vmax.f32 %v5678, %v5798
  %v5863 = vmax.f32 %v5681, %v5799
  %v5864 = vmax.f32 %v5684, %v5800
  %v5865 = vmax.f32 %v5687, %v5801
  %v5866 = vmax.f32 %v5690, %v5802
  %v5867 = vmax.f32 %v5693, %v5803
  %v5868 = vmax.f32 %v5696, %v5804
  %v5869 = vmax.f32 %v5699, %v5805
  %v5870 = vmax.f32 %v5702, %v5806
  %v5871 = vmax.f32 %v5705, %v5807
  %v5872 = vmax.f32 %v5708, %v5808
  %v5873 = vmax.f32 %v5711, %v5809
  %v5874 = vmax.f32 %v5714, %v5810
  %v5875 = vmax.f32 %v5717, %v5811
  %v5876 = vmax.f32 %v5720, %v5812
  %v5877 = vmax.f32 %v5723, %v5813
  %v5878 = vmax.f32 %v5726, %v5814
  %v5879 = vmax.f32 %v5729, %v5815
  %v5880 = vmax.f32 %v5732, %v5816
  %v5881 = vmax.f32 %v5735, %v5817
  %v5882 = vmax.f32 %v5738, %v5818
  %v5883 = vmax.f32 %v5741, %v5819
  %v5884 = vmax.f32 %v5744, %v5820
  %v5885 = vmax.f32 %v5747, %v5821
  %v5886 = vmax.f32 %v5750, %v5822
  %v5887 = vmax.f32 %v5753, %v5823
  %v5888 = vmax.f32 %v5756, %v5824
  %v5889 = vmax.f32 %v5759, %v5825
  %v5922 = vrot.slane %v5667, 1
  %v5923 = vrot.slane %v5670, 1
  %v5924 = vrot.slane %v5673, 1
  %v5925 = vrot.slane %v5676, 1
  %v5926 = vrot.slane %v5679, 1
  %v5927 = vrot.slane %v5682, 1
  %v5928 = vrot.slane %v5685, 1
  %v5929 = vrot.slane %v5688, 1
  %v5930 = vrot.slane %v5691, 1
  %v5931 = vrot.slane %v5694, 1
  %v5932 = vrot.slane %v5697, 1
  %v5933 = vrot.slane %v5700, 1
  %v5934 = vrot.slane %v5703, 1
  %v5935 = vrot.slane %v5706, 1
  %v5936 = vrot.slane %v5709, 1
  %v5937 = vrot.slane %v5712, 1
  %v5938 = vrot.slane %v5715, 1
  %v5939 = vrot.slane %v5718, 1
  %v5940 = vrot.slane %v5721, 1
  %v5941 = vrot.slane %v5724, 1
  %v5942 = vrot.slane %v5727, 1
  %v5943 = vrot.slane %v5730, 1
  %v5944 = vrot.slane %v5733, 1
  %v5945 = vrot.slane %v5736, 1
  %v5946 = vrot.slane %v5739, 1
  %v5947 = vrot.slane %v5742, 1
  %v5948 = vrot.slane %v5745, 1
  %v5949 = vrot.slane %v5748, 1
  %v5950 = vrot.slane %v5751, 1
  %v5951 = vrot.slane %v5754, 1
  %v5952 = vrot.slane %v5757, 1
  %v5953 = vrot.slane %v5760, 1
  %v5986 = vmax.f32 %v5667, %v5922
  %v5987 = vmax.f32 %v5670, %v5923
  %v5988 = vmax.f32 %v5673, %v5924
  %v5989 = vmax.f32 %v5676, %v5925
  %v5990 = vmax.f32 %v5679, %v5926
  %v5991 = vmax.f32 %v5682, %v5927
  %v5992 = vmax.f32 %v5685, %v5928
  %v5993 = vmax.f32 %v5688, %v5929
  %v5994 = vmax.f32 %v5691, %v5930
  %v5995 = vmax.f32 %v5694, %v5931
  %v5996 = vmax.f32 %v5697, %v5932
  %v5997 = vmax.f32 %v5700, %v5933
  %v5998 = vmax.f32 %v5703, %v5934
  %v5999 = vmax.f32 %v5706, %v5935
  %v6000 = vmax.f32 %v5709, %v5936
  %v6001 = vmax.f32 %v5712, %v5937
  %v6002 = vmax.f32 %v5715, %v5938
  %v6003 = vmax.f32 %v5718, %v5939
  %v6004 = vmax.f32 %v5721, %v5940
  %v6005 = vmax.f32 %v5724, %v5941
  %v6006 = vmax.f32 %v5727, %v5942
  %v6007 = vmax.f32 %v5730, %v5943
  %v6008 = vmax.f32 %v5733, %v5944
  %v6009 = vmax.f32 %v5736, %v5945
  %v6010 = vmax.f32 %v5739, %v5946
  %v6011 = vmax.f32 %v5742, %v5947
  %v6012 = vmax.f32 %v5745, %v5948
  %v6013 = vmax.f32 %v5748, %v5949
  %v6014 = vmax.f32 %v5751, %v5950
  %v6015 = vmax.f32 %v5754, %v5951
  %v6016 = vmax.f32 %v5757, %v5952
  %v6017 = vmax.f32 %v5760, %v5953
  %v6050 = vrot.slane %v5668, 1
  %v6051 = vrot.slane %v5671, 1
  %v6052 = vrot.slane %v5674, 1
  %v6053 = vrot.slane %v5677, 1
  %v6054 = vrot.slane %v5680, 1
  %v6055 = vrot.slane %v5683, 1
  %v6056 = vrot.slane %v5686, 1
  %v6057 = vrot.slane %v5689, 1
  %v6058 = vrot.slane %v5692, 1
  %v6059 = vrot.slane %v5695, 1
  %v6060 = vrot.slane %v5698, 1
  %v6061 = vrot.slane %v5701, 1
  %v6062 = vrot.slane %v5704, 1
  %v6063 = vrot.slane %v5707, 1
  %v6064 = vrot.slane %v5710, 1
  %v6065 = vrot.slane %v5713, 1
  %v6066 = vrot.slane %v5716, 1
  %v6067 = vrot.slane %v5719, 1
  %v6068 = vrot.slane %v5722, 1
  %v6069 = vrot.slane %v5725, 1
  %v6070 = vrot.slane %v5728, 1
  %v6071 = vrot.slane %v5731, 1
  %v6072 = vrot.slane %v5734, 1
  %v6073 = vrot.slane %v5737, 1
  %v6074 = vrot.slane %v5740, 1
  %v6075 = vrot.slane %v5743, 1
  %v6076 = vrot.slane %v5746, 1
  %v6077 = vrot.slane %v5749, 1
  %v6078 = vrot.slane %v5752, 1
  %v6079 = vrot.slane %v5755, 1
  %v6080 = vrot.slane %v5758, 1
  %v6081 = vrot.slane %v5761, 1
  %v6114 = vmax.f32 %v5668, %v6050
  %v6115 = vmax.f32 %v5671, %v6051
  %v6116 = vmax.f32 %v5674, %v6052
  %v6117 = vmax.f32 %v5677, %v6053
  %v6118 = vmax.f32 %v5680, %v6054
  %v6119 = vmax.f32 %v5683, %v6055
  %v6120 = vmax.f32 %v5686, %v6056
  %v6121 = vmax.f32 %v5689, %v6057
  %v6122 = vmax.f32 %v5692, %v6058
  %v6123 = vmax.f32 %v5695, %v6059
  %v6124 = vmax.f32 %v5698, %v6060
  %v6125 = vmax.f32 %v5701, %v6061
  %v6126 = vmax.f32 %v5704, %v6062
  %v6127 = vmax.f32 %v5707, %v6063
  %v6128 = vmax.f32 %v5710, %v6064
  %v6129 = vmax.f32 %v5713, %v6065
  %v6130 = vmax.f32 %v5716, %v6066
  %v6131 = vmax.f32 %v5719, %v6067
  %v6132 = vmax.f32 %v5722, %v6068
  %v6133 = vmax.f32 %v5725, %v6069
  %v6134 = vmax.f32 %v5728, %v6070
  %v6135 = vmax.f32 %v5731, %v6071
  %v6136 = vmax.f32 %v5734, %v6072
  %v6137 = vmax.f32 %v5737, %v6073
  %v6138 = vmax.f32 %v5740, %v6074
  %v6139 = vmax.f32 %v5743, %v6075
  %v6140 = vmax.f32 %v5746, %v6076
  %v6141 = vmax.f32 %v5749, %v6077
  %v6142 = vmax.f32 %v5752, %v6078
  %v6143 = vmax.f32 %v5755, %v6079
  %v6144 = vmax.f32 %v5758, %v6080
  %v6145 = vmax.f32 %v5761, %v6081
  %v6178 = vrot.slane %v5858, 1
  %v6179 = vrot.slane %v5859, 1
  %v6180 = vrot.slane %v5860, 1
  %v6181 = vrot.slane %v5861, 1
  %v6182 = vrot.slane %v5862, 1
  %v6183 = vrot.slane %v5863, 1
  %v6184 = vrot.slane %v5864, 1
  %v6185 = vrot.slane %v5865, 1
  %v6186 = vrot.slane %v5866, 1
  %v6187 = vrot.slane %v5867, 1
  %v6188 = vrot.slane %v5868, 1
  %v6189 = vrot.slane %v5869, 1
  %v6190 = vrot.slane %v5870, 1
  %v6191 = vrot.slane %v5871, 1
  %v6192 = vrot.slane %v5872, 1
  %v6193 = vrot.slane %v5873, 1
  %v6194 = vrot.slane %v5874, 1
  %v6195 = vrot.slane %v5875, 1
  %v6196 = vrot.slane %v5876, 1
  %v6197 = vrot.slane %v5877, 1
  %v6198 = vrot.slane %v5878, 1
  %v6199 = vrot.slane %v5879, 1
  %v6200 = vrot.slane %v5880, 1
  %v6201 = vrot.slane %v5881, 1
  %v6202 = vrot.slane %v5882, 1
  %v6203 = vrot.slane %v5883, 1
  %v6204 = vrot.slane %v5884, 1
  %v6205 = vrot.slane %v5885, 1
  %v6206 = vrot.slane %v5886, 1
  %v6207 = vrot.slane %v5887, 1
  %v6208 = vrot.slane %v5888, 1
  %v6209 = vrot.slane %v5889, 1
  %v6242 = vrot.slane %v5858, 2
  %v6243 = vrot.slane %v5859, 2
  %v6244 = vrot.slane %v5860, 2
  %v6245 = vrot.slane %v5861, 2
  %v6246 = vrot.slane %v5862, 2
  %v6247 = vrot.slane %v5863, 2
  %v6248 = vrot.slane %v5864, 2
  %v6249 = vrot.slane %v5865, 2
  %v6250 = vrot.slane %v5866, 2
  %v6251 = vrot.slane %v5867, 2
  %v6252 = vrot.slane %v5868, 2
  %v6253 = vrot.slane %v5869, 2
  %v6254 = vrot.slane %v5870, 2
  %v6255 = vrot.slane %v5871, 2
  %v6256 = vrot.slane %v5872, 2
  %v6257 = vrot.slane %v5873, 2
  %v6258 = vrot.slane %v5874, 2
  %v6259 = vrot.slane %v5875, 2
  %v6260 = vrot.slane %v5876, 2
  %v6261 = vrot.slane %v5877, 2
  %v6262 = vrot.slane %v5878, 2
  %v6263 = vrot.slane %v5879, 2
  %v6264 = vrot.slane %v5880, 2
  %v6265 = vrot.slane %v5881, 2
  %v6266 = vrot.slane %v5882, 2
  %v6267 = vrot.slane %v5883, 2
  %v6268 = vrot.slane %v5884, 2
  %v6269 = vrot.slane %v5885, 2
  %v6270 = vrot.slane %v5886, 2
  %v6271 = vrot.slane %v5887, 2
  %v6272 = vrot.slane %v5888, 2
  %v6273 = vrot.slane %v5889, 2
  %v6306 = vrot.slane %v5858, 3
  %v6307 = vrot.slane %v5859, 3
  %v6308 = vrot.slane %v5860, 3
  %v6309 = vrot.slane %v5861, 3
  %v6310 = vrot.slane %v5862, 3
  %v6311 = vrot.slane %v5863, 3
  %v6312 = vrot.slane %v5864, 3
  %v6313 = vrot.slane %v5865, 3
  %v6314 = vrot.slane %v5866, 3
  %v6315 = vrot.slane %v5867, 3
  %v6316 = vrot.slane %v5868, 3
  %v6317 = vrot.slane %v5869, 3
  %v6318 = vrot.slane %v5870, 3
  %v6319 = vrot.slane %v5871, 3
  %v6320 = vrot.slane %v5872, 3
  %v6321 = vrot.slane %v5873, 3
  %v6322 = vrot.slane %v5874, 3
  %v6323 = vrot.slane %v5875, 3
  %v6324 = vrot.slane %v5876, 3
  %v6325 = vrot.slane %v5877, 3
  %v6326 = vrot.slane %v5878, 3
  %v6327 = vrot.slane %v5879, 3
  %v6328 = vrot.slane %v5880, 3
  %v6329 = vrot.slane %v5881, 3
  %v6330 = vrot.slane %v5882, 3
  %v6331 = vrot.slane %v5883, 3
  %v6332 = vrot.slane %v5884, 3
  %v6333 = vrot.slane %v5885, 3
  %v6334 = vrot.slane %v5886, 3
  %v6335 = vrot.slane %v5887, 3
  %v6336 = vrot.slane %v5888, 3
  %v6337 = vrot.slane %v5889, 3
  %v6402 = vrot.slane %v5986, 4
  %v6403 = vrot.slane %v5987, 4
  %v6404 = vrot.slane %v5988, 4
  %v6405 = vrot.slane %v5989, 4
  %v6406 = vrot.slane %v5990, 4
  %v6407 = vrot.slane %v5991, 4
  %v6408 = vrot.slane %v5992, 4
  %v6409 = vrot.slane %v5993, 4
  %v6410 = vrot.slane %v5994, 4
  %v6411 = vrot.slane %v5995, 4
  %v6412 = vrot.slane %v5996, 4
  %v6413 = vrot.slane %v5997, 4
  %v6414 = vrot.slane %v5998, 4
  %v6415 = vrot.slane %v5999, 4
  %v6416 = vrot.slane %v6000, 4
  %v6417 = vrot.slane %v6001, 4
  %v6418 = vrot.slane %v6002, 4
  %v6419 = vrot.slane %v6003, 4
  %v6420 = vrot.slane %v6004, 4
  %v6421 = vrot.slane %v6005, 4
  %v6422 = vrot.slane %v6006, 4
  %v6423 = vrot.slane %v6007, 4
  %v6424 = vrot.slane %v6008, 4
  %v6425 = vrot.slane %v6009, 4
  %v6426 = vrot.slane %v6010, 4
  %v6427 = vrot.slane %v6011, 4
  %v6428 = vrot.slane %v6012, 4
  %v6429 = vrot.slane %v6013, 4
  %v6430 = vrot.slane %v6014, 4
  %v6431 = vrot.slane %v6015, 4
  %v6432 = vrot.slane %v6016, 4
  %v6433 = vrot.slane %v6017, 4
  %v6466 = vrot.slane %v5986, 5
  %v6467 = vrot.slane %v5987, 5
  %v6468 = vrot.slane %v5988, 5
  %v6469 = vrot.slane %v5989, 5
  %v6470 = vrot.slane %v5990, 5
  %v6471 = vrot.slane %v5991, 5
  %v6472 = vrot.slane %v5992, 5
  %v6473 = vrot.slane %v5993, 5
  %v6474 = vrot.slane %v5994, 5
  %v6475 = vrot.slane %v5995, 5
  %v6476 = vrot.slane %v5996, 5
  %v6477 = vrot.slane %v5997, 5
  %v6478 = vrot.slane %v5998, 5
  %v6479 = vrot.slane %v5999, 5
  %v6480 = vrot.slane %v6000, 5
  %v6481 = vrot.slane %v6001, 5
  %v6482 = vrot.slane %v6002, 5
  %v6483 = vrot.slane %v6003, 5
  %v6484 = vrot.slane %v6004, 5
  %v6485 = vrot.slane %v6005, 5
  %v6486 = vrot.slane %v6006, 5
  %v6487 = vrot.slane %v6007, 5
  %v6488 = vrot.slane %v6008, 5
  %v6489 = vrot.slane %v6009, 5
  %v6490 = vrot.slane %v6010, 5
  %v6491 = vrot.slane %v6011, 5
  %v6492 = vrot.slane %v6012, 5
  %v6493 = vrot.slane %v6013, 5
  %v6494 = vrot.slane %v6014, 5
  %v6495 = vrot.slane %v6015, 5
  %v6496 = vrot.slane %v6016, 5
  %v6497 = vrot.slane %v6017, 5
  %v6530 = vrot.slane %v5986, 6
  %v6531 = vrot.slane %v5987, 6
  %v6532 = vrot.slane %v5988, 6
  %v6533 = vrot.slane %v5989, 6
  %v6534 = vrot.slane %v5990, 6
  %v6535 = vrot.slane %v5991, 6
  %v6536 = vrot.slane %v5992, 6
  %v6537 = vrot.slane %v5993, 6
  %v6538 = vrot.slane %v5994, 6
  %v6539 = vrot.slane %v5995, 6
  %v6540 = vrot.slane %v5996, 6
  %v6541 = vrot.slane %v5997, 6
  %v6542 = vrot.slane %v5998, 6
  %v6543 = vrot.slane %v5999, 6
  %v6544 = vrot.slane %v6000, 6
  %v6545 = vrot.slane %v6001, 6
  %v6546 = vrot.slane %v6002, 6
  %v6547 = vrot.slane %v6003, 6
  %v6548 = vrot.slane %v6004, 6
  %v6549 = vrot.slane %v6005, 6
  %v6550 = vrot.slane %v6006, 6
  %v6551 = vrot.slane %v6007, 6
  %v6552 = vrot.slane %v6008, 6
  %v6553 = vrot.slane %v6009, 6
  %v6554 = vrot.slane %v6010, 6
  %v6555 = vrot.slane %v6011, 6
  %v6556 = vrot.slane %v6012, 6
  %v6557 = vrot.slane %v6013, 6
  %v6558 = vrot.slane %v6014, 6
  %v6559 = vrot.slane %v6015, 6
  %v6560 = vrot.slane %v6016, 6
  %v6561 = vrot.slane %v6017, 6
  %v6594 = vrot.slane %v5986, 7
  %v6595 = vrot.slane %v5987, 7
  %v6596 = vrot.slane %v5988, 7
  %v6597 = vrot.slane %v5989, 7
  %v6598 = vrot.slane %v5990, 7
  %v6599 = vrot.slane %v5991, 7
  %v6600 = vrot.slane %v5992, 7
  %v6601 = vrot.slane %v5993, 7
  %v6602 = vrot.slane %v5994, 7
  %v6603 = vrot.slane %v5995, 7
  %v6604 = vrot.slane %v5996, 7
  %v6605 = vrot.slane %v5997, 7
  %v6606 = vrot.slane %v5998, 7
  %v6607 = vrot.slane %v5999, 7
  %v6608 = vrot.slane %v6000, 7
  %v6609 = vrot.slane %v6001, 7
  %v6610 = vrot.slane %v6002, 7
  %v6611 = vrot.slane %v6003, 7
  %v6612 = vrot.slane %v6004, 7
  %v6613 = vrot.slane %v6005, 7
  %v6614 = vrot.slane %v6006, 7
  %v6615 = vrot.slane %v6007, 7
  %v6616 = vrot.slane %v6008, 7
  %v6617 = vrot.slane %v6009, 7
  %v6618 = vrot.slane %v6010, 7
  %v6619 = vrot.slane %v6011, 7
  %v6620 = vrot.slane %v6012, 7
  %v6621 = vrot.slane %v6013, 7
  %v6622 = vrot.slane %v6014, 7
  %v6623 = vrot.slane %v6015, 7
  %v6624 = vrot.slane %v6016, 7
  %v6625 = vrot.slane %v6017, 7
  %v6690 = vrot.slane %v6114, 1
  %v6691 = vrot.slane %v6115, 1
  %v6692 = vrot.slane %v6116, 1
  %v6693 = vrot.slane %v6117, 1
  %v6694 = vrot.slane %v6118, 1
  %v6695 = vrot.slane %v6119, 1
  %v6696 = vrot.slane %v6120, 1
  %v6697 = vrot.slane %v6121, 1
  %v6698 = vrot.slane %v6122, 1
  %v6699 = vrot.slane %v6123, 1
  %v6700 = vrot.slane %v6124, 1
  %v6701 = vrot.slane %v6125, 1
  %v6702 = vrot.slane %v6126, 1
  %v6703 = vrot.slane %v6127, 1
  %v6704 = vrot.slane %v6128, 1
  %v6705 = vrot.slane %v6129, 1
  %v6706 = vrot.slane %v6130, 1
  %v6707 = vrot.slane %v6131, 1
  %v6708 = vrot.slane %v6132, 1
  %v6709 = vrot.slane %v6133, 1
  %v6710 = vrot.slane %v6134, 1
  %v6711 = vrot.slane %v6135, 1
  %v6712 = vrot.slane %v6136, 1
  %v6713 = vrot.slane %v6137, 1
  %v6714 = vrot.slane %v6138, 1
  %v6715 = vrot.slane %v6139, 1
  %v6716 = vrot.slane %v6140, 1
  %v6717 = vrot.slane %v6141, 1
  %v6718 = vrot.slane %v6142, 1
  %v6719 = vrot.slane %v6143, 1
  %v6720 = vrot.slane %v6144, 1
  %v6721 = vrot.slane %v6145, 1
  %v6754 = vrot.slane %v6114, 2
  %v6755 = vrot.slane %v6115, 2
  %v6756 = vrot.slane %v6116, 2
  %v6757 = vrot.slane %v6117, 2
  %v6758 = vrot.slane %v6118, 2
  %v6759 = vrot.slane %v6119, 2
  %v6760 = vrot.slane %v6120, 2
  %v6761 = vrot.slane %v6121, 2
  %v6762 = vrot.slane %v6122, 2
  %v6763 = vrot.slane %v6123, 2
  %v6764 = vrot.slane %v6124, 2
  %v6765 = vrot.slane %v6125, 2
  %v6766 = vrot.slane %v6126, 2
  %v6767 = vrot.slane %v6127, 2
  %v6768 = vrot.slane %v6128, 2
  %v6769 = vrot.slane %v6129, 2
  %v6770 = vrot.slane %v6130, 2
  %v6771 = vrot.slane %v6131, 2
  %v6772 = vrot.slane %v6132, 2
  %v6773 = vrot.slane %v6133, 2
  %v6774 = vrot.slane %v6134, 2
  %v6775 = vrot.slane %v6135, 2
  %v6776 = vrot.slane %v6136, 2
  %v6777 = vrot.slane %v6137, 2
  %v6778 = vrot.slane %v6138, 2
  %v6779 = vrot.slane %v6139, 2
  %v6780 = vrot.slane %v6140, 2
  %v6781 = vrot.slane %v6141, 2
  %v6782 = vrot.slane %v6142, 2
  %v6783 = vrot.slane %v6143, 2
  %v6784 = vrot.slane %v6144, 2
  %v6785 = vrot.slane %v6145, 2
  %v6818 = vrot.slane %v6114, 3
  %v6819 = vrot.slane %v6115, 3
  %v6820 = vrot.slane %v6116, 3
  %v6821 = vrot.slane %v6117, 3
  %v6822 = vrot.slane %v6118, 3
  %v6823 = vrot.slane %v6119, 3
  %v6824 = vrot.slane %v6120, 3
  %v6825 = vrot.slane %v6121, 3
  %v6826 = vrot.slane %v6122, 3
  %v6827 = vrot.slane %v6123, 3
  %v6828 = vrot.slane %v6124, 3
  %v6829 = vrot.slane %v6125, 3
  %v6830 = vrot.slane %v6126, 3
  %v6831 = vrot.slane %v6127, 3
  %v6832 = vrot.slane %v6128, 3
  %v6833 = vrot.slane %v6129, 3
  %v6834 = vrot.slane %v6130, 3
  %v6835 = vrot.slane %v6131, 3
  %v6836 = vrot.slane %v6132, 3
  %v6837 = vrot.slane %v6133, 3
  %v6838 = vrot.slane %v6134, 3
  %v6839 = vrot.slane %v6135, 3
  %v6840 = vrot.slane %v6136, 3
  %v6841 = vrot.slane %v6137, 3
  %v6842 = vrot.slane %v6138, 3
  %v6843 = vrot.slane %v6139, 3
  %v6844 = vrot.slane %v6140, 3
  %v6845 = vrot.slane %v6141, 3
  %v6846 = vrot.slane %v6142, 3
  %v6847 = vrot.slane %v6143, 3
  %v6848 = vrot.slane %v6144, 3
  %v6849 = vrot.slane %v6145, 3
  %vm6882 = vcmask 1040384
  %v6883 = vsel %vm6882, %v5858, %v6178
  %v6884 = vsel %vm6882, %v5859, %v6179
  %v6885 = vsel %vm6882, %v5860, %v6180
  %v6886 = vsel %vm6882, %v5861, %v6181
  %v6887 = vsel %vm6882, %v5862, %v6182
  %v6888 = vsel %vm6882, %v5863, %v6183
  %v6889 = vsel %vm6882, %v5864, %v6184
  %v6890 = vsel %vm6882, %v5865, %v6185
  %v6891 = vsel %vm6882, %v5866, %v6186
  %v6892 = vsel %vm6882, %v5867, %v6187
  %v6893 = vsel %vm6882, %v5868, %v6188
  %v6894 = vsel %vm6882, %v5869, %v6189
  %v6895 = vsel %vm6882, %v5870, %v6190
  %v6896 = vsel %vm6882, %v5871, %v6191
  %v6897 = vsel %vm6882, %v5872, %v6192
  %v6898 = vsel %vm6882, %v5873, %v6193
  %v6899 = vsel %vm6882, %v5874, %v6194
  %v6900 = vsel %vm6882, %v5875, %v6195
  %v6901 = vsel %vm6882, %v5876, %v6196
  %v6902 = vsel %vm6882, %v5877, %v6197
  %v6903 = vsel %vm6882, %v5878, %v6198
  %v6904 = vsel %vm6882, %v5879, %v6199
  %v6905 = vsel %vm6882, %v5880, %v6200
  %v6906 = vsel %vm6882, %v5881, %v6201
  %v6907 = vsel %vm6882, %v5882, %v6202
  %v6908 = vsel %vm6882, %v5883, %v6203
  %v6909 = vsel %vm6882, %v5884, %v6204
  %v6910 = vsel %vm6882, %v5885, %v6205
  %v6911 = vsel %vm6882, %v5886, %v6206
  %v6912 = vsel %vm6882, %v5887, %v6207
  %v6913 = vsel %vm6882, %v5888, %v6208
  %v6914 = vsel %vm6882, %v5889, %v6209
  %vm6915 = vcmask 1041408
  %v6916 = vsel %vm6915, %v6883, %v6242
  %v6917 = vsel %vm6915, %v6884, %v6243
  %v6918 = vsel %vm6915, %v6885, %v6244
  %v6919 = vsel %vm6915, %v6886, %v6245
  %v6920 = vsel %vm6915, %v6887, %v6246
  %v6921 = vsel %vm6915, %v6888, %v6247
  %v6922 = vsel %vm6915, %v6889, %v6248
  %v6923 = vsel %vm6915, %v6890, %v6249
  %v6924 = vsel %vm6915, %v6891, %v6250
  %v6925 = vsel %vm6915, %v6892, %v6251
  %v6926 = vsel %vm6915, %v6893, %v6252
  %v6927 = vsel %vm6915, %v6894, %v6253
  %v6928 = vsel %vm6915, %v6895, %v6254
  %v6929 = vsel %vm6915, %v6896, %v6255
  %v6930 = vsel %vm6915, %v6897, %v6256
  %v6931 = vsel %vm6915, %v6898, %v6257
  %v6932 = vsel %vm6915, %v6899, %v6258
  %v6933 = vsel %vm6915, %v6900, %v6259
  %v6934 = vsel %vm6915, %v6901, %v6260
  %v6935 = vsel %vm6915, %v6902, %v6261
  %v6936 = vsel %vm6915, %v6903, %v6262
  %v6937 = vsel %vm6915, %v6904, %v6263
  %v6938 = vsel %vm6915, %v6905, %v6264
  %v6939 = vsel %vm6915, %v6906, %v6265
  %v6940 = vsel %vm6915, %v6907, %v6266
  %v6941 = vsel %vm6915, %v6908, %v6267
  %v6942 = vsel %vm6915, %v6909, %v6268
  %v6943 = vsel %vm6915, %v6910, %v6269
  %v6944 = vsel %vm6915, %v6911, %v6270
  %v6945 = vsel %vm6915, %v6912, %v6271
  %v6946 = vsel %vm6915, %v6913, %v6272
  %v6947 = vsel %vm6915, %v6914, %v6273
  %vm6948 = vcmask 1042432
  %v6949 = vsel %vm6948, %v6916, %v6306
  %v6950 = vsel %vm6948, %v6917, %v6307
  %v6951 = vsel %vm6948, %v6918, %v6308
  %v6952 = vsel %vm6948, %v6919, %v6309
  %v6953 = vsel %vm6948, %v6920, %v6310
  %v6954 = vsel %vm6948, %v6921, %v6311
  %v6955 = vsel %vm6948, %v6922, %v6312
  %v6956 = vsel %vm6948, %v6923, %v6313
  %v6957 = vsel %vm6948, %v6924, %v6314
  %v6958 = vsel %vm6948, %v6925, %v6315
  %v6959 = vsel %vm6948, %v6926, %v6316
  %v6960 = vsel %vm6948, %v6927, %v6317
  %v6961 = vsel %vm6948, %v6928, %v6318
  %v6962 = vsel %vm6948, %v6929, %v6319
  %v6963 = vsel %vm6948, %v6930, %v6320
  %v6964 = vsel %vm6948, %v6931, %v6321
  %v6965 = vsel %vm6948, %v6932, %v6322
  %v6966 = vsel %vm6948, %v6933, %v6323
  %v6967 = vsel %vm6948, %v6934, %v6324
  %v6968 = vsel %vm6948, %v6935, %v6325
  %v6969 = vsel %vm6948, %v6936, %v6326
  %v6970 = vsel %vm6948, %v6937, %v6327
  %v6971 = vsel %vm6948, %v6938, %v6328
  %v6972 = vsel %vm6948, %v6939, %v6329
  %v6973 = vsel %vm6948, %v6940, %v6330
  %v6974 = vsel %vm6948, %v6941, %v6331
  %v6975 = vsel %vm6948, %v6942, %v6332
  %v6976 = vsel %vm6948, %v6943, %v6333
  %v6977 = vsel %vm6948, %v6944, %v6334
  %v6978 = vsel %vm6948, %v6945, %v6335
  %v6979 = vsel %vm6948, %v6946, %v6336
  %v6980 = vsel %vm6948, %v6947, %v6337
  %v6981 = vsel %vm534, %v6949, %v6402
  %v6982 = vsel %vm534, %v6950, %v6403
  %v6983 = vsel %vm534, %v6951, %v6404
  %v6984 = vsel %vm534, %v6952, %v6405
  %v6985 = vsel %vm534, %v6953, %v6406
  %v6986 = vsel %vm534, %v6954, %v6407
  %v6987 = vsel %vm534, %v6955, %v6408
  %v6988 = vsel %vm534, %v6956, %v6409
  %v6989 = vsel %vm534, %v6957, %v6410
  %v6990 = vsel %vm534, %v6958, %v6411
  %v6991 = vsel %vm534, %v6959, %v6412
  %v6992 = vsel %vm534, %v6960, %v6413
  %v6993 = vsel %vm534, %v6961, %v6414
  %v6994 = vsel %vm534, %v6962, %v6415
  %v6995 = vsel %vm534, %v6963, %v6416
  %v6996 = vsel %vm534, %v6964, %v6417
  %v6997 = vsel %vm534, %v6965, %v6418
  %v6998 = vsel %vm534, %v6966, %v6419
  %v6999 = vsel %vm534, %v6967, %v6420
  %v7000 = vsel %vm534, %v6968, %v6421
  %v7001 = vsel %vm534, %v6969, %v6422
  %v7002 = vsel %vm534, %v6970, %v6423
  %v7003 = vsel %vm534, %v6971, %v6424
  %v7004 = vsel %vm534, %v6972, %v6425
  %v7005 = vsel %vm534, %v6973, %v6426
  %v7006 = vsel %vm534, %v6974, %v6427
  %v7007 = vsel %vm534, %v6975, %v6428
  %v7008 = vsel %vm534, %v6976, %v6429
  %v7009 = vsel %vm534, %v6977, %v6430
  %v7010 = vsel %vm534, %v6978, %v6431
  %v7011 = vsel %vm534, %v6979, %v6432
  %v7012 = vsel %vm534, %v6980, %v6433
  %vm7013 = vcmask 1044480
  %v7014 = vsel %vm7013, %v6981, %v6466
  %v7015 = vsel %vm7013, %v6982, %v6467
  %v7016 = vsel %vm7013, %v6983, %v6468
  %v7017 = vsel %vm7013, %v6984, %v6469
  %v7018 = vsel %vm7013, %v6985, %v6470
  %v7019 = vsel %vm7013, %v6986, %v6471
  %v7020 = vsel %vm7013, %v6987, %v6472
  %v7021 = vsel %vm7013, %v6988, %v6473
  %v7022 = vsel %vm7013, %v6989, %v6474
  %v7023 = vsel %vm7013, %v6990, %v6475
  %v7024 = vsel %vm7013, %v6991, %v6476
  %v7025 = vsel %vm7013, %v6992, %v6477
  %v7026 = vsel %vm7013, %v6993, %v6478
  %v7027 = vsel %vm7013, %v6994, %v6479
  %v7028 = vsel %vm7013, %v6995, %v6480
  %v7029 = vsel %vm7013, %v6996, %v6481
  %v7030 = vsel %vm7013, %v6997, %v6482
  %v7031 = vsel %vm7013, %v6998, %v6483
  %v7032 = vsel %vm7013, %v6999, %v6484
  %v7033 = vsel %vm7013, %v7000, %v6485
  %v7034 = vsel %vm7013, %v7001, %v6486
  %v7035 = vsel %vm7013, %v7002, %v6487
  %v7036 = vsel %vm7013, %v7003, %v6488
  %v7037 = vsel %vm7013, %v7004, %v6489
  %v7038 = vsel %vm7013, %v7005, %v6490
  %v7039 = vsel %vm7013, %v7006, %v6491
  %v7040 = vsel %vm7013, %v7007, %v6492
  %v7041 = vsel %vm7013, %v7008, %v6493
  %v7042 = vsel %vm7013, %v7009, %v6494
  %v7043 = vsel %vm7013, %v7010, %v6495
  %v7044 = vsel %vm7013, %v7011, %v6496
  %v7045 = vsel %vm7013, %v7012, %v6497
  %vm7046 = vcmask 1045504
  %v7047 = vsel %vm7046, %v7014, %v6530
  %v7048 = vsel %vm7046, %v7015, %v6531
  %v7049 = vsel %vm7046, %v7016, %v6532
  %v7050 = vsel %vm7046, %v7017, %v6533
  %v7051 = vsel %vm7046, %v7018, %v6534
  %v7052 = vsel %vm7046, %v7019, %v6535
  %v7053 = vsel %vm7046, %v7020, %v6536
  %v7054 = vsel %vm7046, %v7021, %v6537
  %v7055 = vsel %vm7046, %v7022, %v6538
  %v7056 = vsel %vm7046, %v7023, %v6539
  %v7057 = vsel %vm7046, %v7024, %v6540
  %v7058 = vsel %vm7046, %v7025, %v6541
  %v7059 = vsel %vm7046, %v7026, %v6542
  %v7060 = vsel %vm7046, %v7027, %v6543
  %v7061 = vsel %vm7046, %v7028, %v6544
  %v7062 = vsel %vm7046, %v7029, %v6545
  %v7063 = vsel %vm7046, %v7030, %v6546
  %v7064 = vsel %vm7046, %v7031, %v6547
  %v7065 = vsel %vm7046, %v7032, %v6548
  %v7066 = vsel %vm7046, %v7033, %v6549
  %v7067 = vsel %vm7046, %v7034, %v6550
  %v7068 = vsel %vm7046, %v7035, %v6551
  %v7069 = vsel %vm7046, %v7036, %v6552
  %v7070 = vsel %vm7046, %v7037, %v6553
  %v7071 = vsel %vm7046, %v7038, %v6554
  %v7072 = vsel %vm7046, %v7039, %v6555
  %v7073 = vsel %vm7046, %v7040, %v6556
  %v7074 = vsel %vm7046, %v7041, %v6557
  %v7075 = vsel %vm7046, %v7042, %v6558
  %v7076 = vsel %vm7046, %v7043, %v6559
  %v7077 = vsel %vm7046, %v7044, %v6560
  %v7078 = vsel %vm7046, %v7045, %v6561
  %vm7079 = vcmask 1046528
  %v7080 = vsel %vm7079, %v7047, %v6594
  %v7081 = vsel %vm7079, %v7048, %v6595
  %v7082 = vsel %vm7079, %v7049, %v6596
  %v7083 = vsel %vm7079, %v7050, %v6597
  %v7084 = vsel %vm7079, %v7051, %v6598
  %v7085 = vsel %vm7079, %v7052, %v6599
  %v7086 = vsel %vm7079, %v7053, %v6600
  %v7087 = vsel %vm7079, %v7054, %v6601
  %v7088 = vsel %vm7079, %v7055, %v6602
  %v7089 = vsel %vm7079, %v7056, %v6603
  %v7090 = vsel %vm7079, %v7057, %v6604
  %v7091 = vsel %vm7079, %v7058, %v6605
  %v7092 = vsel %vm7079, %v7059, %v6606
  %v7093 = vsel %vm7079, %v7060, %v6607
  %v7094 = vsel %vm7079, %v7061, %v6608
  %v7095 = vsel %vm7079, %v7062, %v6609
  %v7096 = vsel %vm7079, %v7063, %v6610
  %v7097 = vsel %vm7079, %v7064, %v6611
  %v7098 = vsel %vm7079, %v7065, %v6612
  %v7099 = vsel %vm7079, %v7066, %v6613
  %v7100 = vsel %vm7079, %v7067, %v6614
  %v7101 = vsel %vm7079, %v7068, %v6615
  %v7102 = vsel %vm7079, %v7069, %v6616
  %v7103 = vsel %vm7079, %v7070, %v6617
  %v7104 = vsel %vm7079, %v7071, %v6618
  %v7105 = vsel %vm7079, %v7072, %v6619
  %v7106 = vsel %vm7079, %v7073, %v6620
  %v7107 = vsel %vm7079, %v7074, %v6621
  %v7108 = vsel %vm7079, %v7075, %v6622
  %v7109 = vsel %vm7079, %v7076, %v6623
  %v7110 = vsel %vm7079, %v7077, %v6624
  %v7111 = vsel %vm7079, %v7078, %v6625
  %v7112 = vsel %vm6882, %v6114, %v6690
  %v7113 = vsel %vm6882, %v6115, %v6691
  %v7114 = vsel %vm6882, %v6116, %v6692
  %v7115 = vsel %vm6882, %v6117, %v6693
  %v7116 = vsel %vm6882, %v6118, %v6694
  %v7117 = vsel %vm6882, %v6119, %v6695
  %v7118 = vsel %vm6882, %v6120, %v6696
  %v7119 = vsel %vm6882, %v6121, %v6697
  %v7120 = vsel %vm6882, %v6122, %v6698
  %v7121 = vsel %vm6882, %v6123, %v6699
  %v7122 = vsel %vm6882, %v6124, %v6700
  %v7123 = vsel %vm6882, %v6125, %v6701
  %v7124 = vsel %vm6882, %v6126, %v6702
  %v7125 = vsel %vm6882, %v6127, %v6703
  %v7126 = vsel %vm6882, %v6128, %v6704
  %v7127 = vsel %vm6882, %v6129, %v6705
  %v7128 = vsel %vm6882, %v6130, %v6706
  %v7129 = vsel %vm6882, %v6131, %v6707
  %v7130 = vsel %vm6882, %v6132, %v6708
  %v7131 = vsel %vm6882, %v6133, %v6709
  %v7132 = vsel %vm6882, %v6134, %v6710
  %v7133 = vsel %vm6882, %v6135, %v6711
  %v7134 = vsel %vm6882, %v6136, %v6712
  %v7135 = vsel %vm6882, %v6137, %v6713
  %v7136 = vsel %vm6882, %v6138, %v6714
  %v7137 = vsel %vm6882, %v6139, %v6715
  %v7138 = vsel %vm6882, %v6140, %v6716
  %v7139 = vsel %vm6882, %v6141, %v6717
  %v7140 = vsel %vm6882, %v6142, %v6718
  %v7141 = vsel %vm6882, %v6143, %v6719
  %v7142 = vsel %vm6882, %v6144, %v6720
  %v7143 = vsel %vm6882, %v6145, %v6721
  %v7144 = vsel %vm6915, %v7112, %v6754
  %v7145 = vsel %vm6915, %v7113, %v6755
  %v7146 = vsel %vm6915, %v7114, %v6756
  %v7147 = vsel %vm6915, %v7115, %v6757
  %v7148 = vsel %vm6915, %v7116, %v6758
  %v7149 = vsel %vm6915, %v7117, %v6759
  %v7150 = vsel %vm6915, %v7118, %v6760
  %v7151 = vsel %vm6915, %v7119, %v6761
  %v7152 = vsel %vm6915, %v7120, %v6762
  %v7153 = vsel %vm6915, %v7121, %v6763
  %v7154 = vsel %vm6915, %v7122, %v6764
  %v7155 = vsel %vm6915, %v7123, %v6765
  %v7156 = vsel %vm6915, %v7124, %v6766
  %v7157 = vsel %vm6915, %v7125, %v6767
  %v7158 = vsel %vm6915, %v7126, %v6768
  %v7159 = vsel %vm6915, %v7127, %v6769
  %v7160 = vsel %vm6915, %v7128, %v6770
  %v7161 = vsel %vm6915, %v7129, %v6771
  %v7162 = vsel %vm6915, %v7130, %v6772
  %v7163 = vsel %vm6915, %v7131, %v6773
  %v7164 = vsel %vm6915, %v7132, %v6774
  %v7165 = vsel %vm6915, %v7133, %v6775
  %v7166 = vsel %vm6915, %v7134, %v6776
  %v7167 = vsel %vm6915, %v7135, %v6777
  %v7168 = vsel %vm6915, %v7136, %v6778
  %v7169 = vsel %vm6915, %v7137, %v6779
  %v7170 = vsel %vm6915, %v7138, %v6780
  %v7171 = vsel %vm6915, %v7139, %v6781
  %v7172 = vsel %vm6915, %v7140, %v6782
  %v7173 = vsel %vm6915, %v7141, %v6783
  %v7174 = vsel %vm6915, %v7142, %v6784
  %v7175 = vsel %vm6915, %v7143, %v6785
  %v7176 = vsel %vm6948, %v7144, %v6818
  %v7177 = vsel %vm6948, %v7145, %v6819
  %v7178 = vsel %vm6948, %v7146, %v6820
  %v7179 = vsel %vm6948, %v7147, %v6821
  %v7180 = vsel %vm6948, %v7148, %v6822
  %v7181 = vsel %vm6948, %v7149, %v6823
  %v7182 = vsel %vm6948, %v7150, %v6824
  %v7183 = vsel %vm6948, %v7151, %v6825
  %v7184 = vsel %vm6948, %v7152, %v6826
  %v7185 = vsel %vm6948, %v7153, %v6827
  %v7186 = vsel %vm6948, %v7154, %v6828
  %v7187 = vsel %vm6948, %v7155, %v6829
  %v7188 = vsel %vm6948, %v7156, %v6830
  %v7189 = vsel %vm6948, %v7157, %v6831
  %v7190 = vsel %vm6948, %v7158, %v6832
  %v7191 = vsel %vm6948, %v7159, %v6833
  %v7192 = vsel %vm6948, %v7160, %v6834
  %v7193 = vsel %vm6948, %v7161, %v6835
  %v7194 = vsel %vm6948, %v7162, %v6836
  %v7195 = vsel %vm6948, %v7163, %v6837
  %v7196 = vsel %vm6948, %v7164, %v6838
  %v7197 = vsel %vm6948, %v7165, %v6839
  %v7198 = vsel %vm6948, %v7166, %v6840
  %v7199 = vsel %vm6948, %v7167, %v6841
  %v7200 = vsel %vm6948, %v7168, %v6842
  %v7201 = vsel %vm6948, %v7169, %v6843
  %v7202 = vsel %vm6948, %v7170, %v6844
  %v7203 = vsel %vm6948, %v7171, %v6845
  %v7204 = vsel %vm6948, %v7172, %v6846
  %v7205 = vsel %vm6948, %v7173, %v6847
  %v7206 = vsel %vm6948, %v7174, %v6848
  %v7207 = vsel %vm6948, %v7175, %v6849
  %v7208 = vld [vmem:[%s2] sm:$0x1]
  %v7210 = vperm.slane %v7208, 0
  %v7212 = vadd.f32 %v7080, %v7210
  %v7213 = vadd.f32 %v7176, %v7210
  %v7214 = vadd.f32 %v7081, %v7210
  %v7215 = vadd.f32 %v7177, %v7210
  %v7216 = vadd.f32 %v7082, %v7210
  %v7217 = vadd.f32 %v7178, %v7210
  %v7218 = vadd.f32 %v7083, %v7210
  %v7219 = vadd.f32 %v7179, %v7210
  %v7220 = vadd.f32 %v7084, %v7210
  %v7221 = vadd.f32 %v7180, %v7210
  %v7222 = vadd.f32 %v7085, %v7210
  %v7223 = vadd.f32 %v7181, %v7210
  %v7224 = vadd.f32 %v7086, %v7210
  %v7225 = vadd.f32 %v7182, %v7210
  %v7226 = vadd.f32 %v7087, %v7210
  %v7227 = vadd.f32 %v7183, %v7210
  %v7228 = vadd.f32 %v7088, %v7210
  %v7229 = vadd.f32 %v7184, %v7210
  %v7230 = vadd.f32 %v7089, %v7210
  %v7231 = vadd.f32 %v7185, %v7210
  %v7232 = vadd.f32 %v7090, %v7210
  %v7233 = vadd.f32 %v7186, %v7210
  %v7234 = vadd.f32 %v7091, %v7210
  %v7235 = vadd.f32 %v7187, %v7210
  %v7236 = vadd.f32 %v7092, %v7210
  %v7237 = vadd.f32 %v7188, %v7210
  %v7238 = vadd.f32 %v7093, %v7210
  %v7239 = vadd.f32 %v7189, %v7210
  %v7240 = vadd.f32 %v7094, %v7210
  %v7241 = vadd.f32 %v7190, %v7210
  %v7242 = vadd.f32 %v7095, %v7210
  %v7243 = vadd.f32 %v7191, %v7210
  %v7244 = vadd.f32 %v7096, %v7210
  %v7245 = vadd.f32 %v7192, %v7210
  %v7246 = vadd.f32 %v7097, %v7210
  %v7247 = vadd.f32 %v7193, %v7210
  %v7248 = vadd.f32 %v7098, %v7210
  %v7249 = vadd.f32 %v7194, %v7210
  %v7250 = vadd.f32 %v7099, %v7210
  %v7251 = vadd.f32 %v7195, %v7210
  %v7252 = vadd.f32 %v7100, %v7210
  %v7253 = vadd.f32 %v7196, %v7210
  %v7254 = vadd.f32 %v7101, %v7210
  %v7255 = vadd.f32 %v7197, %v7210
  %v7256 = vadd.f32 %v7102, %v7210
  %v7257 = vadd.f32 %v7198, %v7210
  %v7258 = vadd.f32 %v7103, %v7210
  %v7259 = vadd.f32 %v7199, %v7210
  %v7260 = vadd.f32 %v7104, %v7210
  %v7261 = vadd.f32 %v7200, %v7210
  %v7262 = vadd.f32 %v7105, %v7210
  %v7263 = vadd.f32 %v7201, %v7210
  %v7264 = vadd.f32 %v7106, %v7210
  %v7265 = vadd.f32 %v7202, %v7210
  %v7266 = vadd.f32 %v7107, %v7210
  %v7267 = vadd.f32 %v7203, %v7210
  %v7268 = vadd.f32 %v7108, %v7210
  %v7269 = vadd.f32 %v7204, %v7210
  %v7270 = vadd.f32 %v7109, %v7210
  %v7271 = vadd.f32 %v7205, %v7210
  %v7272 = vadd.f32 %v7110, %v7210
  %v7273 = vadd.f32 %v7206, %v7210
  %v7274 = vadd.f32 %v7111, %v7210
  %v7275 = vadd.f32 %v7207, %v7210
  %v7276 = vmax.f32 %v7212, 0.0
  %v7277 = vmax.f32 %v7213, 0.0
  %v7278 = vmax.f32 %v7214, 0.0
  %v7279 = vmax.f32 %v7215, 0.0
  %v7280 = vmax.f32 %v7216, 0.0
  %v7281 = vmax.f32 %v7217, 0.0
  %v7282 = vmax.f32 %v7218, 0.0
  %v7283 = vmax.f32 %v7219, 0.0
  %v7284 = vmax.f32 %v7220, 0.0
  %v7285 = vmax.f32 %v7221, 0.0
  %v7286 = vmax.f32 %v7222, 0.0
  %v7287 = vmax.f32 %v7223, 0.0
  %v7288 = vmax.f32 %v7224, 0.0
  %v7289 = vmax.f32 %v7225, 0.0
  %v7290 = vmax.f32 %v7226, 0.0
  %v7291 = vmax.f32 %v7227, 0.0
  %v7292 = vmax.f32 %v7228, 0.0
  %v7293 = vmax.f32 %v7229, 0.0
  %v7294 = vmax.f32 %v7230, 0.0
  %v7295 = vmax.f32 %v7231, 0.0
  %v7296 = vmax.f32 %v7232, 0.0
  %v7297 = vmax.f32 %v7233, 0.0
  %v7298 = vmax.f32 %v7234, 0.0
  %v7299 = vmax.f32 %v7235, 0.0
  %v7300 = vmax.f32 %v7236, 0.0
  %v7301 = vmax.f32 %v7237, 0.0
  %v7302 = vmax.f32 %v7238, 0.0
  %v7303 = vmax.f32 %v7239, 0.0
  %v7304 = vmax.f32 %v7240, 0.0
  %v7305 = vmax.f32 %v7241, 0.0
  %v7306 = vmax.f32 %v7242, 0.0
  %v7307 = vmax.f32 %v7243, 0.0
  %v7308 = vmax.f32 %v7244, 0.0
  %v7309 = vmax.f32 %v7245, 0.0
  %v7310 = vmax.f32 %v7246, 0.0
  %v7311 = vmax.f32 %v7247, 0.0
  %v7312 = vmax.f32 %v7248, 0.0
  %v7313 = vmax.f32 %v7249, 0.0
  %v7314 = vmax.f32 %v7250, 0.0
  %v7315 = vmax.f32 %v7251, 0.0
  %v7316 = vmax.f32 %v7252, 0.0
  %v7317 = vmax.f32 %v7253, 0.0
  %v7318 = vmax.f32 %v7254, 0.0
  %v7319 = vmax.f32 %v7255, 0.0
  %v7320 = vmax.f32 %v7256, 0.0
  %v7321 = vmax.f32 %v7257, 0.0
  %v7322 = vmax.f32 %v7258, 0.0
  %v7323 = vmax.f32 %v7259, 0.0
  %v7324 = vmax.f32 %v7260, 0.0
  %v7325 = vmax.f32 %v7261, 0.0
  %v7326 = vmax.f32 %v7262, 0.0
  %v7327 = vmax.f32 %v7263, 0.0
  %v7328 = vmax.f32 %v7264, 0.0
  %v7329 = vmax.f32 %v7265, 0.0
  %v7330 = vmax.f32 %v7266, 0.0
  %v7331 = vmax.f32 %v7267, 0.0
  %v7332 = vmax.f32 %v7268, 0.0
  %v7333 = vmax.f32 %v7269, 0.0
  %v7334 = vmax.f32 %v7270, 0.0
  %v7335 = vmax.f32 %v7271, 0.0
  %v7336 = vmax.f32 %v7272, 0.0
  %v7337 = vmax.f32 %v7273, 0.0
  %v7338 = vmax.f32 %v7274, 0.0
  %v7339 = vmax.f32 %v7275, 0.0
  %v7340 = vpack.c.bf16 %v7278, %v7276
  %v7341 = vpack.c.bf16 %v7282, %v7280
  %v7342 = vpack.c.bf16 %v7286, %v7284
  %v7343 = vpack.c.bf16 %v7290, %v7288
  %v7344 = vpack.c.bf16 %v7294, %v7292
  %v7345 = vpack.c.bf16 %v7298, %v7296
  %v7346 = vpack.c.bf16 %v7302, %v7300
  %v7347 = vpack.c.bf16 %v7306, %v7304
  %v7348 = vpack.c.bf16 %v7310, %v7308
  %v7349 = vpack.c.bf16 %v7314, %v7312
  %v7350 = vpack.c.bf16 %v7318, %v7316
  %v7351 = vpack.c.bf16 %v7322, %v7320
  %v7352 = vpack.c.bf16 %v7326, %v7324
  %v7353 = vpack.c.bf16 %v7330, %v7328
  %v7354 = vpack.c.bf16 %v7334, %v7332
  %v7355 = vpack.c.bf16 %v7338, %v7336
  %v7356 = vld [vmem:[%s3] sm:$0xf]
  %v7357 = vld [vmem:[%s3 + $0x4] sm:$0xf]
  %v7358 = vld [vmem:[%s3 + $0x8] sm:$0xf]
  %v7359 = vld [vmem:[%s3 + $0xc] sm:$0xf]
  %v7360 = vld [vmem:[%s3 + $0x10] sm:$0xf]
  %v7361 = vld [vmem:[%s3 + $0x14] sm:$0xf]
  %v7362 = vld [vmem:[%s3 + $0x18] sm:$0xf]
  %v7363 = vld [vmem:[%s3 + $0x1c] sm:$0xf]
  %v7364 = vld [vmem:[%s3 + $0x20] sm:$0xf]
  %v7365 = vld [vmem:[%s3 + $0x24] sm:$0xf]
  %v7366 = vld [vmem:[%s3 + $0x28] sm:$0xf]
  %v7367 = vld [vmem:[%s3 + $0x2c] sm:$0xf]
  %s7368 = scalar_lea.vmem %s3, 240
  %v7369 = vld [vmem:[%s7368] sm:$0xf]
  %v7370 = vld [vmem:[%s7368 + $0x4] sm:$0xf]
  %v7371 = vld [vmem:[%s7368 + $0x8] sm:$0xf]
  %v7372 = vld [vmem:[%s7368 + $0xc] sm:$0xf]
  %v7373 = vld [vmem:[%s7368 + $0x10] sm:$0xf]
  %v7374 = vld [vmem:[%s7368 + $0x14] sm:$0xf]
  %v7375 = vld [vmem:[%s7368 + $0x18] sm:$0xf]
  %v7376 = vld [vmem:[%s7368 + $0x1c] sm:$0xf]
  %v7377 = vld [vmem:[%s7368 + $0x20] sm:$0xf]
  %v7378 = vld [vmem:[%s7368 + $0x24] sm:$0xf]
  %v7379 = vld [vmem:[%s7368 + $0x28] sm:$0xf]
  %v7380 = vld [vmem:[%s7368 + $0x2c] sm:$0xf]
  %v7445 = vrot.slane %v7276, 1
  %v7446 = vrot.slane %v7277, 1
  %v7447 = vsel %vm7079, %v7445, %v7446
  %v7448 = vrot.slane %v7278, 1
  %v7449 = vrot.slane %v7279, 1
  %v7450 = vsel %vm7079, %v7448, %v7449
  %v7451 = vrot.slane %v7280, 1
  %v7452 = vrot.slane %v7281, 1
  %v7453 = vsel %vm7079, %v7451, %v7452
  %v7454 = vrot.slane %v7282, 1
  %v7455 = vrot.slane %v7283, 1
  %v7456 = vsel %vm7079, %v7454, %v7455
  %v7457 = vrot.slane %v7284, 1
  %v7458 = vrot.slane %v7285, 1
  %v7459 = vsel %vm7079, %v7457, %v7458
  %v7460 = vrot.slane %v7286, 1
  %v7461 = vrot.slane %v7287, 1
  %v7462 = vsel %vm7079, %v7460, %v7461
  %v7463 = vrot.slane %v7288, 1
  %v7464 = vrot.slane %v7289, 1
  %v7465 = vsel %vm7079, %v7463, %v7464
  %v7466 = vrot.slane %v7290, 1
  %v7467 = vrot.slane %v7291, 1
  %v7468 = vsel %vm7079, %v7466, %v7467
  %v7469 = vrot.slane %v7292, 1
  %v7470 = vrot.slane %v7293, 1
  %v7471 = vsel %vm7079, %v7469, %v7470
  %v7472 = vrot.slane %v7294, 1
  %v7473 = vrot.slane %v7295, 1
  %v7474 = vsel %vm7079, %v7472, %v7473
  %v7475 = vrot.slane %v7296, 1
  %v7476 = vrot.slane %v7297, 1
  %v7477 = vsel %vm7079, %v7475, %v7476
  %v7478 = vrot.slane %v7298, 1
  %v7479 = vrot.slane %v7299, 1
  %v7480 = vsel %vm7079, %v7478, %v7479
  %v7481 = vrot.slane %v7300, 1
  %v7482 = vrot.slane %v7301, 1
  %v7483 = vsel %vm7079, %v7481, %v7482
  %v7484 = vrot.slane %v7302, 1
  %v7485 = vrot.slane %v7303, 1
  %v7486 = vsel %vm7079, %v7484, %v7485
  %v7487 = vrot.slane %v7304, 1
  %v7488 = vrot.slane %v7305, 1
  %v7489 = vsel %vm7079, %v7487, %v7488
  %v7490 = vrot.slane %v7306, 1
  %v7491 = vrot.slane %v7307, 1
  %v7492 = vsel %vm7079, %v7490, %v7491
  %v7493 = vrot.slane %v7308, 1
  %v7494 = vrot.slane %v7309, 1
  %v7495 = vsel %vm7079, %v7493, %v7494
  %v7496 = vrot.slane %v7310, 1
  %v7497 = vrot.slane %v7311, 1
  %v7498 = vsel %vm7079, %v7496, %v7497
  %v7499 = vrot.slane %v7312, 1
  %v7500 = vrot.slane %v7313, 1
  %v7501 = vsel %vm7079, %v7499, %v7500
  %v7502 = vrot.slane %v7314, 1
  %v7503 = vrot.slane %v7315, 1
  %v7504 = vsel %vm7079, %v7502, %v7503
  %v7505 = vrot.slane %v7316, 1
  %v7506 = vrot.slane %v7317, 1
  %v7507 = vsel %vm7079, %v7505, %v7506
  %v7508 = vrot.slane %v7318, 1
  %v7509 = vrot.slane %v7319, 1
  %v7510 = vsel %vm7079, %v7508, %v7509
  %v7511 = vrot.slane %v7320, 1
  %v7512 = vrot.slane %v7321, 1
  %v7513 = vsel %vm7079, %v7511, %v7512
  %v7514 = vrot.slane %v7322, 1
  %v7515 = vrot.slane %v7323, 1
  %v7516 = vsel %vm7079, %v7514, %v7515
  %v7517 = vrot.slane %v7324, 1
  %v7518 = vrot.slane %v7325, 1
  %v7519 = vsel %vm7079, %v7517, %v7518
  %v7520 = vrot.slane %v7326, 1
  %v7521 = vrot.slane %v7327, 1
  %v7522 = vsel %vm7079, %v7520, %v7521
  %v7523 = vrot.slane %v7328, 1
  %v7524 = vrot.slane %v7329, 1
  %v7525 = vsel %vm7079, %v7523, %v7524
  %v7526 = vrot.slane %v7330, 1
  %v7527 = vrot.slane %v7331, 1
  %v7528 = vsel %vm7079, %v7526, %v7527
  %v7529 = vrot.slane %v7332, 1
  %v7530 = vrot.slane %v7333, 1
  %v7531 = vsel %vm7079, %v7529, %v7530
  %v7532 = vrot.slane %v7334, 1
  %v7533 = vrot.slane %v7335, 1
  %v7534 = vsel %vm7079, %v7532, %v7533
  %v7535 = vrot.slane %v7336, 1
  %v7536 = vrot.slane %v7337, 1
  %v7537 = vsel %vm7079, %v7535, %v7536
  %v7538 = vrot.slane %v7338, 1
  %v7539 = vrot.slane %v7339, 1
  %v7540 = vsel %vm7079, %v7538, %v7539
  %v7573 = vpack.c.bf16 %v7450, %v7447
  %v7574 = vpack.c.bf16 %v7456, %v7453
  %v7575 = vpack.c.bf16 %v7462, %v7459
  %v7576 = vpack.c.bf16 %v7468, %v7465
  %v7577 = vpack.c.bf16 %v7474, %v7471
  %v7578 = vpack.c.bf16 %v7480, %v7477
  %v7579 = vpack.c.bf16 %v7486, %v7483
  %v7580 = vpack.c.bf16 %v7492, %v7489
  %v7581 = vpack.c.bf16 %v7498, %v7495
  %v7582 = vpack.c.bf16 %v7504, %v7501
  %v7583 = vpack.c.bf16 %v7510, %v7507
  %v7584 = vpack.c.bf16 %v7516, %v7513
  %v7585 = vpack.c.bf16 %v7522, %v7519
  %v7586 = vpack.c.bf16 %v7528, %v7525
  %v7587 = vpack.c.bf16 %v7534, %v7531
  %v7588 = vpack.c.bf16 %v7540, %v7537
  %s7589 = scalar_lea.vmem %s3, 48
  %v7590 = vld [vmem:[%s7589] sm:$0xf]
  %v7591 = vld [vmem:[%s7589 + $0x4] sm:$0xf]
  %v7592 = vld [vmem:[%s7589 + $0x8] sm:$0xf]
  %v7593 = vld [vmem:[%s7589 + $0xc] sm:$0xf]
  %v7594 = vld [vmem:[%s7589 + $0x10] sm:$0xf]
  %v7595 = vld [vmem:[%s7589 + $0x14] sm:$0xf]
  %v7596 = vld [vmem:[%s7589 + $0x18] sm:$0xf]
  %v7597 = vld [vmem:[%s7589 + $0x1c] sm:$0xf]
  %v7598 = vld [vmem:[%s7589 + $0x20] sm:$0xf]
  %v7599 = vld [vmem:[%s7589 + $0x24] sm:$0xf]
  %v7600 = vld [vmem:[%s7589 + $0x28] sm:$0xf]
  %v7601 = vld [vmem:[%s7589 + $0x2c] sm:$0xf]
  %v7614 = vunpack.c.l.b16 %v7590
  %v7615 = vunpack.c.l.b16 %v7591
  %v7616 = vunpack.c.l.b16 %v7592
  %v7617 = vunpack.c.l.b16 %v7593
  %v7618 = vunpack.c.l.b16 %v7594
  %v7619 = vunpack.c.l.b16 %v7595
  %v7620 = vunpack.c.l.b16 %v7596
  %v7621 = vunpack.c.l.b16 %v7597
  %v7622 = vunpack.c.l.b16 %v7598
  %v7623 = vunpack.c.l.b16 %v7599
  %v7624 = vunpack.c.l.b16 %v7600
  %v7625 = vunpack.c.l.b16 %v7601
  %v7626 = vpack.c.b16 %v7615, %v7614
  %v7627 = vpack.c.b16 %v7617, %v7616
  %v7628 = vpack.c.b16 %v7619, %v7618
  %v7629 = vpack.c.b16 %v7621, %v7620
  %v7630 = vpack.c.b16 %v7623, %v7622
  %v7631 = vpack.c.b16 %v7625, %v7624
  %vm7638 = vcmask 785408
  %v7640 = vsel %vm7638, %v7573, 0
  %v7643 = vsel %vm7638, %v7574, 0
  %v7646 = vsel %vm7638, %v7575, 0
  %v7649 = vsel %vm7638, %v7576, 0
  %v7652 = vsel %vm7638, %v7577, 0
  %v7655 = vsel %vm7638, %v7578, 0
  %v7658 = vsel %vm7638, %v7579, 0
  %v7661 = vsel %vm7638, %v7580, 0
  %v7664 = vsel %vm7638, %v7581, 0
  %v7667 = vsel %vm7638, %v7582, 0
  %v7670 = vsel %vm7638, %v7583, 0
  %v7673 = vsel %vm7638, %v7584, 0
  %v7676 = vsel %vm7638, %v7585, 0
  %v7679 = vsel %vm7638, %v7586, 0
  %v7682 = vsel %vm7638, %v7587, 0
  %v7685 = vsel %vm7638, %v7588, 0
  %7687 = vmatpush.bf16.msra.mxu0 0
  %7688 = vmatpush.bf16.msra.mxu0 0
  %7689 = vmatpush.bf16.msra.mxu0 %v7631
  %7690 = vmatpush.bf16.msra.mxu0 %v7630
  %7691 = vmatpush.bf16.msra.mxu0 %v7629
  %7692 = vmatpush.bf16.msra.mxu0 %v7628
  %7693 = vmatpush.bf16.msra.mxu0 %v7627
  %7694 = vmatpush.bf16.msra.mxu0 %v7626
  %7695 = vmatmul.bf16.gmra.mxu0 %v7640
  %v7696 = vpop.f32.mrf.mxu0
  %v7697 = vadd.f32 0.0, %v7696
  %v7698 = vpop.f32.mrf.mxu0
  %v7699 = vadd.f32 0.0, %v7698
  %7700 = vmatmul.bf16.gmra.mxu0 %v7643
  %v7701 = vpop.f32.mrf.mxu0
  %v7702 = vadd.f32 0.0, %v7701
  %v7703 = vpop.f32.mrf.mxu0
  %v7704 = vadd.f32 0.0, %v7703
  %7705 = vmatmul.bf16.gmra.mxu0 %v7646
  %v7706 = vpop.f32.mrf.mxu0
  %v7707 = vadd.f32 0.0, %v7706
  %v7708 = vpop.f32.mrf.mxu0
  %v7709 = vadd.f32 0.0, %v7708
  %7710 = vmatmul.bf16.gmra.mxu0 %v7649
  %v7711 = vpop.f32.mrf.mxu0
  %v7712 = vadd.f32 0.0, %v7711
  %v7713 = vpop.f32.mrf.mxu0
  %v7714 = vadd.f32 0.0, %v7713
  %7715 = vmatmul.bf16.gmra.mxu0 %v7652
  %v7716 = vpop.f32.mrf.mxu0
  %v7717 = vadd.f32 0.0, %v7716
  %v7718 = vpop.f32.mrf.mxu0
  %v7719 = vadd.f32 0.0, %v7718
  %7720 = vmatmul.bf16.gmra.mxu0 %v7655
  %v7721 = vpop.f32.mrf.mxu0
  %v7722 = vadd.f32 0.0, %v7721
  %v7723 = vpop.f32.mrf.mxu0
  %v7724 = vadd.f32 0.0, %v7723
  %7725 = vmatmul.bf16.gmra.mxu0 %v7658
  %v7726 = vpop.f32.mrf.mxu0
  %v7727 = vadd.f32 0.0, %v7726
  %v7728 = vpop.f32.mrf.mxu0
  %v7729 = vadd.f32 0.0, %v7728
  %7730 = vmatmul.bf16.gmra.mxu0 %v7661
  %v7731 = vpop.f32.mrf.mxu0
  %v7732 = vadd.f32 0.0, %v7731
  %v7733 = vpop.f32.mrf.mxu0
  %v7734 = vadd.f32 0.0, %v7733
  %7735 = vmatmul.bf16.gmra.mxu0 %v7664
  %v7736 = vpop.f32.mrf.mxu0
  %v7737 = vadd.f32 0.0, %v7736
  %v7738 = vpop.f32.mrf.mxu0
  %v7739 = vadd.f32 0.0, %v7738
  %7740 = vmatmul.bf16.gmra.mxu0 %v7667
  %v7741 = vpop.f32.mrf.mxu0
  %v7742 = vadd.f32 0.0, %v7741
  %v7743 = vpop.f32.mrf.mxu0
  %v7744 = vadd.f32 0.0, %v7743
  %7745 = vmatmul.bf16.gmra.mxu0 %v7670
  %v7746 = vpop.f32.mrf.mxu0
  %v7747 = vadd.f32 0.0, %v7746
  %v7748 = vpop.f32.mrf.mxu0
  %v7749 = vadd.f32 0.0, %v7748
  %7750 = vmatmul.bf16.gmra.mxu0 %v7673
  %v7751 = vpop.f32.mrf.mxu0
  %v7752 = vadd.f32 0.0, %v7751
  %v7753 = vpop.f32.mrf.mxu0
  %v7754 = vadd.f32 0.0, %v7753
  %7755 = vmatmul.bf16.gmra.mxu0 %v7676
  %v7756 = vpop.f32.mrf.mxu0
  %v7757 = vadd.f32 0.0, %v7756
  %v7758 = vpop.f32.mrf.mxu0
  %v7759 = vadd.f32 0.0, %v7758
  %7760 = vmatmul.bf16.gmra.mxu0 %v7679
  %v7761 = vpop.f32.mrf.mxu0
  %v7762 = vadd.f32 0.0, %v7761
  %v7763 = vpop.f32.mrf.mxu0
  %v7764 = vadd.f32 0.0, %v7763
  %7765 = vmatmul.bf16.gmra.mxu0 %v7682
  %v7766 = vpop.f32.mrf.mxu0
  %v7767 = vadd.f32 0.0, %v7766
  %v7768 = vpop.f32.mrf.mxu0
  %v7769 = vadd.f32 0.0, %v7768
  %7770 = vmatmul.bf16.gmra.mxu0 %v7685
  %v7771 = vpop.f32.mrf.mxu0
  %v7772 = vadd.f32 0.0, %v7771
  %v7773 = vpop.f32.mrf.mxu0
  %v7774 = vadd.f32 0.0, %v7773
  %7775 = vdwg.mxu0
  %v7788 = vunpack.c.l.b16 %v7356
  %v7789 = vunpack.c.l.b16 %v7357
  %v7790 = vunpack.c.l.b16 %v7358
  %v7791 = vunpack.c.l.b16 %v7359
  %v7792 = vunpack.c.l.b16 %v7360
  %v7793 = vunpack.c.l.b16 %v7361
  %v7794 = vunpack.c.l.b16 %v7362
  %v7795 = vunpack.c.l.b16 %v7363
  %v7796 = vunpack.c.l.b16 %v7364
  %v7797 = vunpack.c.l.b16 %v7365
  %v7798 = vunpack.c.l.b16 %v7366
  %v7799 = vunpack.c.l.b16 %v7367
  %v7800 = vpack.c.b16 %v7789, %v7788
  %v7801 = vpack.c.b16 %v7791, %v7790
  %v7802 = vpack.c.b16 %v7793, %v7792
  %v7803 = vpack.c.b16 %v7795, %v7794
  %v7804 = vpack.c.b16 %v7797, %v7796
  %v7805 = vpack.c.b16 %v7799, %v7798
  %v7813 = vsel %vm7638, %v7340, 0
  %v7816 = vsel %vm7638, %v7341, 0
  %v7819 = vsel %vm7638, %v7342, 0
  %v7822 = vsel %vm7638, %v7343, 0
  %v7825 = vsel %vm7638, %v7344, 0
  %v7828 = vsel %vm7638, %v7345, 0
  %v7831 = vsel %vm7638, %v7346, 0
  %v7834 = vsel %vm7638, %v7347, 0
  %v7837 = vsel %vm7638, %v7348, 0
  %v7840 = vsel %vm7638, %v7349, 0
  %v7843 = vsel %vm7638, %v7350, 0
  %v7846 = vsel %vm7638, %v7351, 0
  %v7849 = vsel %vm7638, %v7352, 0
  %v7852 = vsel %vm7638, %v7353, 0
  %v7855 = vsel %vm7638, %v7354, 0
  %v7858 = vsel %vm7638, %v7355, 0
  %7860 = vmatpush.bf16.msra.mxu0 0
  %7861 = vmatpush.bf16.msra.mxu0 0
  %7862 = vmatpush.bf16.msra.mxu0 %v7805
  %7863 = vmatpush.bf16.msra.mxu0 %v7804
  %7864 = vmatpush.bf16.msra.mxu0 %v7803
  %7865 = vmatpush.bf16.msra.mxu0 %v7802
  %7866 = vmatpush.bf16.msra.mxu0 %v7801
  %7867 = vmatpush.bf16.msra.mxu0 %v7800
  %7868 = vmatmul.bf16.gmra.mxu0 %v7813
  %v7869 = vpop.f32.mrf.mxu0
  %v7870 = vadd.f32 %v7697, %v7869
  %v7871 = vpop.f32.mrf.mxu0
  %v7872 = vadd.f32 %v7699, %v7871
  %7873 = vmatmul.bf16.gmra.mxu0 %v7816
  %v7874 = vpop.f32.mrf.mxu0
  %v7875 = vadd.f32 %v7702, %v7874
  %v7876 = vpop.f32.mrf.mxu0
  %v7877 = vadd.f32 %v7704, %v7876
  %7878 = vmatmul.bf16.gmra.mxu0 %v7819
  %v7879 = vpop.f32.mrf.mxu0
  %v7880 = vadd.f32 %v7707, %v7879
  %v7881 = vpop.f32.mrf.mxu0
  %v7882 = vadd.f32 %v7709, %v7881
  %7883 = vmatmul.bf16.gmra.mxu0 %v7822
  %v7884 = vpop.f32.mrf.mxu0
  %v7885 = vadd.f32 %v7712, %v7884
  %v7886 = vpop.f32.mrf.mxu0
  %v7887 = vadd.f32 %v7714, %v7886
  %7888 = vmatmul.bf16.gmra.mxu0 %v7825
  %v7889 = vpop.f32.mrf.mxu0
  %v7890 = vadd.f32 %v7717, %v7889
  %v7891 = vpop.f32.mrf.mxu0
  %v7892 = vadd.f32 %v7719, %v7891
  %7893 = vmatmul.bf16.gmra.mxu0 %v7828
  %v7894 = vpop.f32.mrf.mxu0
  %v7895 = vadd.f32 %v7722, %v7894
  %v7896 = vpop.f32.mrf.mxu0
  %v7897 = vadd.f32 %v7724, %v7896
  %7898 = vmatmul.bf16.gmra.mxu0 %v7831
  %v7899 = vpop.f32.mrf.mxu0
  %v7900 = vadd.f32 %v7727, %v7899
  %v7901 = vpop.f32.mrf.mxu0
  %v7902 = vadd.f32 %v7729, %v7901
  %7903 = vmatmul.bf16.gmra.mxu0 %v7834
  %v7904 = vpop.f32.mrf.mxu0
  %v7905 = vadd.f32 %v7732, %v7904
  %v7906 = vpop.f32.mrf.mxu0
  %v7907 = vadd.f32 %v7734, %v7906
  %7908 = vmatmul.bf16.gmra.mxu0 %v7837
  %v7909 = vpop.f32.mrf.mxu0
  %v7910 = vadd.f32 %v7737, %v7909
  %v7911 = vpop.f32.mrf.mxu0
  %v7912 = vadd.f32 %v7739, %v7911
  %7913 = vmatmul.bf16.gmra.mxu0 %v7840
  %v7914 = vpop.f32.mrf.mxu0
  %v7915 = vadd.f32 %v7742, %v7914
  %v7916 = vpop.f32.mrf.mxu0
  %v7917 = vadd.f32 %v7744, %v7916
  %7918 = vmatmul.bf16.gmra.mxu0 %v7843
  %v7919 = vpop.f32.mrf.mxu0
  %v7920 = vadd.f32 %v7747, %v7919
  %v7921 = vpop.f32.mrf.mxu0
  %v7922 = vadd.f32 %v7749, %v7921
  %7923 = vmatmul.bf16.gmra.mxu0 %v7846
  %v7924 = vpop.f32.mrf.mxu0
  %v7925 = vadd.f32 %v7752, %v7924
  %v7926 = vpop.f32.mrf.mxu0
  %v7927 = vadd.f32 %v7754, %v7926
  %7928 = vmatmul.bf16.gmra.mxu0 %v7849
  %v7929 = vpop.f32.mrf.mxu0
  %v7930 = vadd.f32 %v7757, %v7929
  %v7931 = vpop.f32.mrf.mxu0
  %v7932 = vadd.f32 %v7759, %v7931
  %7933 = vmatmul.bf16.gmra.mxu0 %v7852
  %v7934 = vpop.f32.mrf.mxu0
  %v7935 = vadd.f32 %v7762, %v7934
  %v7936 = vpop.f32.mrf.mxu0
  %v7937 = vadd.f32 %v7764, %v7936
  %7938 = vmatmul.bf16.gmra.mxu0 %v7855
  %v7939 = vpop.f32.mrf.mxu0
  %v7940 = vadd.f32 %v7767, %v7939
  %v7941 = vpop.f32.mrf.mxu0
  %v7942 = vadd.f32 %v7769, %v7941
  %7943 = vmatmul.bf16.gmra.mxu0 %v7858
  %v7944 = vpop.f32.mrf.mxu0
  %v7945 = vadd.f32 %v7772, %v7944
  %v7946 = vpop.f32.mrf.mxu0
  %v7947 = vadd.f32 %v7774, %v7946
  %7948 = vdwg.mxu0
  %s7949 = scalar_lea.vmem %s3, 288
  %v7950 = vld [vmem:[%s7949] sm:$0xf]
  %v7951 = vld [vmem:[%s7949 + $0x4] sm:$0xf]
  %v7952 = vld [vmem:[%s7949 + $0x8] sm:$0xf]
  %v7953 = vld [vmem:[%s7949 + $0xc] sm:$0xf]
  %v7954 = vld [vmem:[%s7949 + $0x10] sm:$0xf]
  %v7955 = vld [vmem:[%s7949 + $0x14] sm:$0xf]
  %v7956 = vld [vmem:[%s7949 + $0x18] sm:$0xf]
  %v7957 = vld [vmem:[%s7949 + $0x1c] sm:$0xf]
  %v7958 = vld [vmem:[%s7949 + $0x20] sm:$0xf]
  %v7959 = vld [vmem:[%s7949 + $0x24] sm:$0xf]
  %v7960 = vld [vmem:[%s7949 + $0x28] sm:$0xf]
  %v7961 = vld [vmem:[%s7949 + $0x2c] sm:$0xf]
  %v7974 = vunpack.c.l.b16 %v7950
  %v7975 = vunpack.c.l.b16 %v7951
  %v7976 = vunpack.c.l.b16 %v7952
  %v7977 = vunpack.c.l.b16 %v7953
  %v7978 = vunpack.c.l.b16 %v7954
  %v7979 = vunpack.c.l.b16 %v7955
  %v7980 = vunpack.c.l.b16 %v7956
  %v7981 = vunpack.c.l.b16 %v7957
  %v7982 = vunpack.c.l.b16 %v7958
  %v7983 = vunpack.c.l.b16 %v7959
  %v7984 = vunpack.c.l.b16 %v7960
  %v7985 = vunpack.c.l.b16 %v7961
  %v7986 = vpack.c.b16 %v7975, %v7974
  %v7987 = vpack.c.b16 %v7977, %v7976
  %v7988 = vpack.c.b16 %v7979, %v7978
  %v7989 = vpack.c.b16 %v7981, %v7980
  %v7990 = vpack.c.b16 %v7983, %v7982
  %v7991 = vpack.c.b16 %v7985, %v7984
  %7998 = vmatpush.bf16.msra.mxu0 0
  %7999 = vmatpush.bf16.msra.mxu0 0
  %8000 = vmatpush.bf16.msra.mxu0 %v7991
  %8001 = vmatpush.bf16.msra.mxu0 %v7990
  %8002 = vmatpush.bf16.msra.mxu0 %v7989
  %8003 = vmatpush.bf16.msra.mxu0 %v7988
  %8004 = vmatpush.bf16.msra.mxu0 %v7987
  %8005 = vmatpush.bf16.msra.mxu0 %v7986
  %8006 = vmatmul.bf16.gmra.mxu0 %v7640
  %v8007 = vpop.f32.mrf.mxu0
  %v8008 = vadd.f32 0.0, %v8007
  %v8009 = vpop.f32.mrf.mxu0
  %v8010 = vadd.f32 0.0, %v8009
  %8011 = vmatmul.bf16.gmra.mxu0 %v7643
  %v8012 = vpop.f32.mrf.mxu0
  %v8013 = vadd.f32 0.0, %v8012
  %v8014 = vpop.f32.mrf.mxu0
  %v8015 = vadd.f32 0.0, %v8014
  %8016 = vmatmul.bf16.gmra.mxu0 %v7646
  %v8017 = vpop.f32.mrf.mxu0
  %v8018 = vadd.f32 0.0, %v8017
  %v8019 = vpop.f32.mrf.mxu0
  %v8020 = vadd.f32 0.0, %v8019
  %8021 = vmatmul.bf16.gmra.mxu0 %v7649
  %v8022 = vpop.f32.mrf.mxu0
  %v8023 = vadd.f32 0.0, %v8022
  %v8024 = vpop.f32.mrf.mxu0
  %v8025 = vadd.f32 0.0, %v8024
  %8026 = vmatmul.bf16.gmra.mxu0 %v7652
  %v8027 = vpop.f32.mrf.mxu0
  %v8028 = vadd.f32 0.0, %v8027
  %v8029 = vpop.f32.mrf.mxu0
  %v8030 = vadd.f32 0.0, %v8029
  %8031 = vmatmul.bf16.gmra.mxu0 %v7655
  %v8032 = vpop.f32.mrf.mxu0
  %v8033 = vadd.f32 0.0, %v8032
  %v8034 = vpop.f32.mrf.mxu0
  %v8035 = vadd.f32 0.0, %v8034
  %8036 = vmatmul.bf16.gmra.mxu0 %v7658
  %v8037 = vpop.f32.mrf.mxu0
  %v8038 = vadd.f32 0.0, %v8037
  %v8039 = vpop.f32.mrf.mxu0
  %v8040 = vadd.f32 0.0, %v8039
  %8041 = vmatmul.bf16.gmra.mxu0 %v7661
  %v8042 = vpop.f32.mrf.mxu0
  %v8043 = vadd.f32 0.0, %v8042
  %v8044 = vpop.f32.mrf.mxu0
  %v8045 = vadd.f32 0.0, %v8044
  %8046 = vmatmul.bf16.gmra.mxu0 %v7664
  %v8047 = vpop.f32.mrf.mxu0
  %v8048 = vadd.f32 0.0, %v8047
  %v8049 = vpop.f32.mrf.mxu0
  %v8050 = vadd.f32 0.0, %v8049
  %8051 = vmatmul.bf16.gmra.mxu0 %v7667
  %v8052 = vpop.f32.mrf.mxu0
  %v8053 = vadd.f32 0.0, %v8052
  %v8054 = vpop.f32.mrf.mxu0
  %v8055 = vadd.f32 0.0, %v8054
  %8056 = vmatmul.bf16.gmra.mxu0 %v7670
  %v8057 = vpop.f32.mrf.mxu0
  %v8058 = vadd.f32 0.0, %v8057
  %v8059 = vpop.f32.mrf.mxu0
  %v8060 = vadd.f32 0.0, %v8059
  %8061 = vmatmul.bf16.gmra.mxu0 %v7673
  %v8062 = vpop.f32.mrf.mxu0
  %v8063 = vadd.f32 0.0, %v8062
  %v8064 = vpop.f32.mrf.mxu0
  %v8065 = vadd.f32 0.0, %v8064
  %8066 = vmatmul.bf16.gmra.mxu0 %v7676
  %v8067 = vpop.f32.mrf.mxu0
  %v8068 = vadd.f32 0.0, %v8067
  %v8069 = vpop.f32.mrf.mxu0
  %v8070 = vadd.f32 0.0, %v8069
  %8071 = vmatmul.bf16.gmra.mxu0 %v7679
  %v8072 = vpop.f32.mrf.mxu0
  %v8073 = vadd.f32 0.0, %v8072
  %v8074 = vpop.f32.mrf.mxu0
  %v8075 = vadd.f32 0.0, %v8074
  %8076 = vmatmul.bf16.gmra.mxu0 %v7682
  %v8077 = vpop.f32.mrf.mxu0
  %v8078 = vadd.f32 0.0, %v8077
  %v8079 = vpop.f32.mrf.mxu0
  %v8080 = vadd.f32 0.0, %v8079
  %8081 = vmatmul.bf16.gmra.mxu0 %v7685
  %v8082 = vpop.f32.mrf.mxu0
  %v8083 = vadd.f32 0.0, %v8082
  %v8084 = vpop.f32.mrf.mxu0
  %v8085 = vadd.f32 0.0, %v8084
  %8086 = vdwg.mxu0
  %v8099 = vunpack.c.l.b16 %v7369
  %v8100 = vunpack.c.l.b16 %v7370
  %v8101 = vunpack.c.l.b16 %v7371
  %v8102 = vunpack.c.l.b16 %v7372
  %v8103 = vunpack.c.l.b16 %v7373
  %v8104 = vunpack.c.l.b16 %v7374
  %v8105 = vunpack.c.l.b16 %v7375
  %v8106 = vunpack.c.l.b16 %v7376
  %v8107 = vunpack.c.l.b16 %v7377
  %v8108 = vunpack.c.l.b16 %v7378
  %v8109 = vunpack.c.l.b16 %v7379
  %v8110 = vunpack.c.l.b16 %v7380
  %v8111 = vpack.c.b16 %v8100, %v8099
  %v8112 = vpack.c.b16 %v8102, %v8101
  %v8113 = vpack.c.b16 %v8104, %v8103
  %v8114 = vpack.c.b16 %v8106, %v8105
  %v8115 = vpack.c.b16 %v8108, %v8107
  %v8116 = vpack.c.b16 %v8110, %v8109
  %8123 = vmatpush.bf16.msra.mxu0 0
  %8124 = vmatpush.bf16.msra.mxu0 0
  %8125 = vmatpush.bf16.msra.mxu0 %v8116
  %8126 = vmatpush.bf16.msra.mxu0 %v8115
  %8127 = vmatpush.bf16.msra.mxu0 %v8114
  %8128 = vmatpush.bf16.msra.mxu0 %v8113
  %8129 = vmatpush.bf16.msra.mxu0 %v8112
  %8130 = vmatpush.bf16.msra.mxu0 %v8111
  %8131 = vmatmul.bf16.gmra.mxu0 %v7813
  %v8132 = vpop.f32.mrf.mxu0
  %v8133 = vadd.f32 %v8008, %v8132
  %v8134 = vpop.f32.mrf.mxu0
  %v8135 = vadd.f32 %v8010, %v8134
  %8136 = vmatmul.bf16.gmra.mxu0 %v7816
  %v8137 = vpop.f32.mrf.mxu0
  %v8138 = vadd.f32 %v8013, %v8137
  %v8139 = vpop.f32.mrf.mxu0
  %v8140 = vadd.f32 %v8015, %v8139
  %8141 = vmatmul.bf16.gmra.mxu0 %v7819
  %v8142 = vpop.f32.mrf.mxu0
  %v8143 = vadd.f32 %v8018, %v8142
  %v8144 = vpop.f32.mrf.mxu0
  %v8145 = vadd.f32 %v8020, %v8144
  %8146 = vmatmul.bf16.gmra.mxu0 %v7822
  %v8147 = vpop.f32.mrf.mxu0
  %v8148 = vadd.f32 %v8023, %v8147
  %v8149 = vpop.f32.mrf.mxu0
  %v8150 = vadd.f32 %v8025, %v8149
  %8151 = vmatmul.bf16.gmra.mxu0 %v7825
  %v8152 = vpop.f32.mrf.mxu0
  %v8153 = vadd.f32 %v8028, %v8152
  %v8154 = vpop.f32.mrf.mxu0
  %v8155 = vadd.f32 %v8030, %v8154
  %8156 = vmatmul.bf16.gmra.mxu0 %v7828
  %v8157 = vpop.f32.mrf.mxu0
  %v8158 = vadd.f32 %v8033, %v8157
  %v8159 = vpop.f32.mrf.mxu0
  %v8160 = vadd.f32 %v8035, %v8159
  %8161 = vmatmul.bf16.gmra.mxu0 %v7831
  %v8162 = vpop.f32.mrf.mxu0
  %v8163 = vadd.f32 %v8038, %v8162
  %v8164 = vpop.f32.mrf.mxu0
  %v8165 = vadd.f32 %v8040, %v8164
  %8166 = vmatmul.bf16.gmra.mxu0 %v7834
  %v8167 = vpop.f32.mrf.mxu0
  %v8168 = vadd.f32 %v8043, %v8167
  %v8169 = vpop.f32.mrf.mxu0
  %v8170 = vadd.f32 %v8045, %v8169
  %8171 = vmatmul.bf16.gmra.mxu0 %v7837
  %v8172 = vpop.f32.mrf.mxu0
  %v8173 = vadd.f32 %v8048, %v8172
  %v8174 = vpop.f32.mrf.mxu0
  %v8175 = vadd.f32 %v8050, %v8174
  %8176 = vmatmul.bf16.gmra.mxu0 %v7840
  %v8177 = vpop.f32.mrf.mxu0
  %v8178 = vadd.f32 %v8053, %v8177
  %v8179 = vpop.f32.mrf.mxu0
  %v8180 = vadd.f32 %v8055, %v8179
  %8181 = vmatmul.bf16.gmra.mxu0 %v7843
  %v8182 = vpop.f32.mrf.mxu0
  %v8183 = vadd.f32 %v8058, %v8182
  %v8184 = vpop.f32.mrf.mxu0
  %v8185 = vadd.f32 %v8060, %v8184
  %8186 = vmatmul.bf16.gmra.mxu0 %v7846
  %v8187 = vpop.f32.mrf.mxu0
  %v8188 = vadd.f32 %v8063, %v8187
  %v8189 = vpop.f32.mrf.mxu0
  %v8190 = vadd.f32 %v8065, %v8189
  %8191 = vmatmul.bf16.gmra.mxu0 %v7849
  %v8192 = vpop.f32.mrf.mxu0
  %v8193 = vadd.f32 %v8068, %v8192
  %v8194 = vpop.f32.mrf.mxu0
  %v8195 = vadd.f32 %v8070, %v8194
  %8196 = vmatmul.bf16.gmra.mxu0 %v7852
  %v8197 = vpop.f32.mrf.mxu0
  %v8198 = vadd.f32 %v8073, %v8197
  %v8199 = vpop.f32.mrf.mxu0
  %v8200 = vadd.f32 %v8075, %v8199
  %8201 = vmatmul.bf16.gmra.mxu0 %v7855
  %v8202 = vpop.f32.mrf.mxu0
  %v8203 = vadd.f32 %v8078, %v8202
  %v8204 = vpop.f32.mrf.mxu0
  %v8205 = vadd.f32 %v8080, %v8204
  %8206 = vmatmul.bf16.gmra.mxu0 %v7858
  %v8207 = vpop.f32.mrf.mxu0
  %v8208 = vadd.f32 %v8083, %v8207
  %v8209 = vpop.f32.mrf.mxu0
  %v8210 = vadd.f32 %v8085, %v8209
  %8211 = vdwg.mxu0
  %v8212 = vrot.slane %v7276, 2
  %v8213 = vrot.slane %v7277, 2
  %v8214 = vsel %vm7046, %v8212, %v8213
  %v8215 = vrot.slane %v7278, 2
  %v8216 = vrot.slane %v7279, 2
  %v8217 = vsel %vm7046, %v8215, %v8216
  %v8218 = vrot.slane %v7280, 2
  %v8219 = vrot.slane %v7281, 2
  %v8220 = vsel %vm7046, %v8218, %v8219
  %v8221 = vrot.slane %v7282, 2
  %v8222 = vrot.slane %v7283, 2
  %v8223 = vsel %vm7046, %v8221, %v8222
  %v8224 = vrot.slane %v7284, 2
  %v8225 = vrot.slane %v7285, 2
  %v8226 = vsel %vm7046, %v8224, %v8225
  %v8227 = vrot.slane %v7286, 2
  %v8228 = vrot.slane %v7287, 2
  %v8229 = vsel %vm7046, %v8227, %v8228
  %v8230 = vrot.slane %v7288, 2
  %v8231 = vrot.slane %v7289, 2
  %v8232 = vsel %vm7046, %v8230, %v8231
  %v8233 = vrot.slane %v7290, 2
  %v8234 = vrot.slane %v7291, 2
  %v8235 = vsel %vm7046, %v8233, %v8234
  %v8236 = vrot.slane %v7292, 2
  %v8237 = vrot.slane %v7293, 2
  %v8238 = vsel %vm7046, %v8236, %v8237
  %v8239 = vrot.slane %v7294, 2
  %v8240 = vrot.slane %v7295, 2
  %v8241 = vsel %vm7046, %v8239, %v8240
  %v8242 = vrot.slane %v7296, 2
  %v8243 = vrot.slane %v7297, 2
  %v8244 = vsel %vm7046, %v8242, %v8243
  %v8245 = vrot.slane %v7298, 2
  %v8246 = vrot.slane %v7299, 2
  %v8247 = vsel %vm7046, %v8245, %v8246
  %v8248 = vrot.slane %v7300, 2
  %v8249 = vrot.slane %v7301, 2
  %v8250 = vsel %vm7046, %v8248, %v8249
  %v8251 = vrot.slane %v7302, 2
  %v8252 = vrot.slane %v7303, 2
  %v8253 = vsel %vm7046, %v8251, %v8252
  %v8254 = vrot.slane %v7304, 2
  %v8255 = vrot.slane %v7305, 2
  %v8256 = vsel %vm7046, %v8254, %v8255
  %v8257 = vrot.slane %v7306, 2
  %v8258 = vrot.slane %v7307, 2
  %v8259 = vsel %vm7046, %v8257, %v8258
  %v8260 = vrot.slane %v7308, 2
  %v8261 = vrot.slane %v7309, 2
  %v8262 = vsel %vm7046, %v8260, %v8261
  %v8263 = vrot.slane %v7310, 2
  %v8264 = vrot.slane %v7311, 2
  %v8265 = vsel %vm7046, %v8263, %v8264
  %v8266 = vrot.slane %v7312, 2
  %v8267 = vrot.slane %v7313, 2
  %v8268 = vsel %vm7046, %v8266, %v8267
  %v8269 = vrot.slane %v7314, 2
  %v8270 = vrot.slane %v7315, 2
  %v8271 = vsel %vm7046, %v8269, %v8270
  %v8272 = vrot.slane %v7316, 2
  %v8273 = vrot.slane %v7317, 2
  %v8274 = vsel %vm7046, %v8272, %v8273
  %v8275 = vrot.slane %v7318, 2
  %v8276 = vrot.slane %v7319, 2
  %v8277 = vsel %vm7046, %v8275, %v8276
  %v8278 = vrot.slane %v7320, 2
  %v8279 = vrot.slane %v7321, 2
  %v8280 = vsel %vm7046, %v8278, %v8279
  %v8281 = vrot.slane %v7322, 2
  %v8282 = vrot.slane %v7323, 2
  %v8283 = vsel %vm7046, %v8281, %v8282
  %v8284 = vrot.slane %v7324, 2
  %v8285 = vrot.slane %v7325, 2
  %v8286 = vsel %vm7046, %v8284, %v8285
  %v8287 = vrot.slane %v7326, 2
  %v8288 = vrot.slane %v7327, 2
  %v8289 = vsel %vm7046, %v8287, %v8288
  %v8290 = vrot.slane %v7328, 2
  %v8291 = vrot.slane %v7329, 2
  %v8292 = vsel %vm7046, %v8290, %v8291
  %v8293 = vrot.slane %v7330, 2
  %v8294 = vrot.slane %v7331, 2
  %v8295 = vsel %vm7046, %v8293, %v8294
  %v8296 = vrot.slane %v7332, 2
  %v8297 = vrot.slane %v7333, 2
  %v8298 = vsel %vm7046, %v8296, %v8297
  %v8299 = vrot.slane %v7334, 2
  %v8300 = vrot.slane %v7335, 2
  %v8301 = vsel %vm7046, %v8299, %v8300
  %v8302 = vrot.slane %v7336, 2
  %v8303 = vrot.slane %v7337, 2
  %v8304 = vsel %vm7046, %v8302, %v8303
  %v8305 = vrot.slane %v7338, 2
  %v8306 = vrot.slane %v7339, 2
  %v8307 = vsel %vm7046, %v8305, %v8306
  %v8340 = vpack.c.bf16 %v8217, %v8214
  %v8341 = vpack.c.bf16 %v8223, %v8220
  %v8342 = vpack.c.bf16 %v8229, %v8226
  %v8343 = vpack.c.bf16 %v8235, %v8232
  %v8344 = vpack.c.bf16 %v8241, %v8238
  %v8345 = vpack.c.bf16 %v8247, %v8244
  %v8346 = vpack.c.bf16 %v8253, %v8250
  %v8347 = vpack.c.bf16 %v8259, %v8256
  %v8348 = vpack.c.bf16 %v8265, %v8262
  %v8349 = vpack.c.bf16 %v8271, %v8268
  %v8350 = vpack.c.bf16 %v8277, %v8274
  %v8351 = vpack.c.bf16 %v8283, %v8280
  %v8352 = vpack.c.bf16 %v8289, %v8286
  %v8353 = vpack.c.bf16 %v8295, %v8292
  %v8354 = vpack.c.bf16 %v8301, %v8298
  %v8355 = vpack.c.bf16 %v8307, %v8304
  %s8356 = scalar_lea.vmem %s3, 96
  %v8357 = vld [vmem:[%s8356] sm:$0xf]
  %v8358 = vld [vmem:[%s8356 + $0x4] sm:$0xf]
  %v8359 = vld [vmem:[%s8356 + $0x8] sm:$0xf]
  %v8360 = vld [vmem:[%s8356 + $0xc] sm:$0xf]
  %v8361 = vld [vmem:[%s8356 + $0x10] sm:$0xf]
  %v8362 = vld [vmem:[%s8356 + $0x14] sm:$0xf]
  %v8363 = vld [vmem:[%s8356 + $0x18] sm:$0xf]
  %v8364 = vld [vmem:[%s8356 + $0x1c] sm:$0xf]
  %v8365 = vld [vmem:[%s8356 + $0x20] sm:$0xf]
  %v8366 = vld [vmem:[%s8356 + $0x24] sm:$0xf]
  %v8367 = vld [vmem:[%s8356 + $0x28] sm:$0xf]
  %v8368 = vld [vmem:[%s8356 + $0x2c] sm:$0xf]
  %v8381 = vunpack.c.l.b16 %v8357
  %v8382 = vunpack.c.l.b16 %v8358
  %v8383 = vunpack.c.l.b16 %v8359
  %v8384 = vunpack.c.l.b16 %v8360
  %v8385 = vunpack.c.l.b16 %v8361
  %v8386 = vunpack.c.l.b16 %v8362
  %v8387 = vunpack.c.l.b16 %v8363
  %v8388 = vunpack.c.l.b16 %v8364
  %v8389 = vunpack.c.l.b16 %v8365
  %v8390 = vunpack.c.l.b16 %v8366
  %v8391 = vunpack.c.l.b16 %v8367
  %v8392 = vunpack.c.l.b16 %v8368
  %v8393 = vpack.c.b16 %v8382, %v8381
  %v8394 = vpack.c.b16 %v8384, %v8383
  %v8395 = vpack.c.b16 %v8386, %v8385
  %v8396 = vpack.c.b16 %v8388, %v8387
  %v8397 = vpack.c.b16 %v8390, %v8389
  %v8398 = vpack.c.b16 %v8392, %v8391
  %v8406 = vsel %vm7638, %v8340, 0
  %v8409 = vsel %vm7638, %v8341, 0
  %v8412 = vsel %vm7638, %v8342, 0
  %v8415 = vsel %vm7638, %v8343, 0
  %v8418 = vsel %vm7638, %v8344, 0
  %v8421 = vsel %vm7638, %v8345, 0
  %v8424 = vsel %vm7638, %v8346, 0
  %v8427 = vsel %vm7638, %v8347, 0
  %v8430 = vsel %vm7638, %v8348, 0
  %v8433 = vsel %vm7638, %v8349, 0
  %v8436 = vsel %vm7638, %v8350, 0
  %v8439 = vsel %vm7638, %v8351, 0
  %v8442 = vsel %vm7638, %v8352, 0
  %v8445 = vsel %vm7638, %v8353, 0
  %v8448 = vsel %vm7638, %v8354, 0
  %v8451 = vsel %vm7638, %v8355, 0
  %8453 = vmatpush.bf16.msra.mxu0 0
  %8454 = vmatpush.bf16.msra.mxu0 0
  %8455 = vmatpush.bf16.msra.mxu0 %v8398
  %8456 = vmatpush.bf16.msra.mxu0 %v8397
  %8457 = vmatpush.bf16.msra.mxu0 %v8396
  %8458 = vmatpush.bf16.msra.mxu0 %v8395
  %8459 = vmatpush.bf16.msra.mxu0 %v8394
  %8460 = vmatpush.bf16.msra.mxu0 %v8393
  %8461 = vmatmul.bf16.gmra.mxu0 %v8406
  %v8462 = vpop.f32.mrf.mxu0
  %v8463 = vadd.f32 0.0, %v8462
  %v8464 = vpop.f32.mrf.mxu0
  %v8465 = vadd.f32 0.0, %v8464
  %8466 = vmatmul.bf16.gmra.mxu0 %v8409
  %v8467 = vpop.f32.mrf.mxu0
  %v8468 = vadd.f32 0.0, %v8467
  %v8469 = vpop.f32.mrf.mxu0
  %v8470 = vadd.f32 0.0, %v8469
  %8471 = vmatmul.bf16.gmra.mxu0 %v8412
  %v8472 = vpop.f32.mrf.mxu0
  %v8473 = vadd.f32 0.0, %v8472
  %v8474 = vpop.f32.mrf.mxu0
  %v8475 = vadd.f32 0.0, %v8474
  %8476 = vmatmul.bf16.gmra.mxu0 %v8415
  %v8477 = vpop.f32.mrf.mxu0
  %v8478 = vadd.f32 0.0, %v8477
  %v8479 = vpop.f32.mrf.mxu0
  %v8480 = vadd.f32 0.0, %v8479
  %8481 = vmatmul.bf16.gmra.mxu0 %v8418
  %v8482 = vpop.f32.mrf.mxu0
  %v8483 = vadd.f32 0.0, %v8482
  %v8484 = vpop.f32.mrf.mxu0
  %v8485 = vadd.f32 0.0, %v8484
  %8486 = vmatmul.bf16.gmra.mxu0 %v8421
  %v8487 = vpop.f32.mrf.mxu0
  %v8488 = vadd.f32 0.0, %v8487
  %v8489 = vpop.f32.mrf.mxu0
  %v8490 = vadd.f32 0.0, %v8489
  %8491 = vmatmul.bf16.gmra.mxu0 %v8424
  %v8492 = vpop.f32.mrf.mxu0
  %v8493 = vadd.f32 0.0, %v8492
  %v8494 = vpop.f32.mrf.mxu0
  %v8495 = vadd.f32 0.0, %v8494
  %8496 = vmatmul.bf16.gmra.mxu0 %v8427
  %v8497 = vpop.f32.mrf.mxu0
  %v8498 = vadd.f32 0.0, %v8497
  %v8499 = vpop.f32.mrf.mxu0
  %v8500 = vadd.f32 0.0, %v8499
  %8501 = vmatmul.bf16.gmra.mxu0 %v8430
  %v8502 = vpop.f32.mrf.mxu0
  %v8503 = vadd.f32 0.0, %v8502
  %v8504 = vpop.f32.mrf.mxu0
  %v8505 = vadd.f32 0.0, %v8504
  %8506 = vmatmul.bf16.gmra.mxu0 %v8433
  %v8507 = vpop.f32.mrf.mxu0
  %v8508 = vadd.f32 0.0, %v8507
  %v8509 = vpop.f32.mrf.mxu0
  %v8510 = vadd.f32 0.0, %v8509
  %8511 = vmatmul.bf16.gmra.mxu0 %v8436
  %v8512 = vpop.f32.mrf.mxu0
  %v8513 = vadd.f32 0.0, %v8512
  %v8514 = vpop.f32.mrf.mxu0
  %v8515 = vadd.f32 0.0, %v8514
  %8516 = vmatmul.bf16.gmra.mxu0 %v8439
  %v8517 = vpop.f32.mrf.mxu0
  %v8518 = vadd.f32 0.0, %v8517
  %v8519 = vpop.f32.mrf.mxu0
  %v8520 = vadd.f32 0.0, %v8519
  %8521 = vmatmul.bf16.gmra.mxu0 %v8442
  %v8522 = vpop.f32.mrf.mxu0
  %v8523 = vadd.f32 0.0, %v8522
  %v8524 = vpop.f32.mrf.mxu0
  %v8525 = vadd.f32 0.0, %v8524
  %8526 = vmatmul.bf16.gmra.mxu0 %v8445
  %v8527 = vpop.f32.mrf.mxu0
  %v8528 = vadd.f32 0.0, %v8527
  %v8529 = vpop.f32.mrf.mxu0
  %v8530 = vadd.f32 0.0, %v8529
  %8531 = vmatmul.bf16.gmra.mxu0 %v8448
  %v8532 = vpop.f32.mrf.mxu0
  %v8533 = vadd.f32 0.0, %v8532
  %v8534 = vpop.f32.mrf.mxu0
  %v8535 = vadd.f32 0.0, %v8534
  %8536 = vmatmul.bf16.gmra.mxu0 %v8451
  %v8537 = vpop.f32.mrf.mxu0
  %v8538 = vadd.f32 0.0, %v8537
  %v8539 = vpop.f32.mrf.mxu0
  %v8540 = vadd.f32 0.0, %v8539
  %8541 = vdwg.mxu0
  %v8542 = vadd.f32 %v7870, %v8463
  %v8543 = vadd.f32 %v7872, %v8465
  %v8544 = vadd.f32 %v7875, %v8468
  %v8545 = vadd.f32 %v7877, %v8470
  %v8546 = vadd.f32 %v7880, %v8473
  %v8547 = vadd.f32 %v7882, %v8475
  %v8548 = vadd.f32 %v7885, %v8478
  %v8549 = vadd.f32 %v7887, %v8480
  %v8550 = vadd.f32 %v7890, %v8483
  %v8551 = vadd.f32 %v7892, %v8485
  %v8552 = vadd.f32 %v7895, %v8488
  %v8553 = vadd.f32 %v7897, %v8490
  %v8554 = vadd.f32 %v7900, %v8493
  %v8555 = vadd.f32 %v7902, %v8495
  %v8556 = vadd.f32 %v7905, %v8498
  %v8557 = vadd.f32 %v7907, %v8500
  %v8558 = vadd.f32 %v7910, %v8503
  %v8559 = vadd.f32 %v7912, %v8505
  %v8560 = vadd.f32 %v7915, %v8508
  %v8561 = vadd.f32 %v7917, %v8510
  %v8562 = vadd.f32 %v7920, %v8513
  %v8563 = vadd.f32 %v7922, %v8515
  %v8564 = vadd.f32 %v7925, %v8518
  %v8565 = vadd.f32 %v7927, %v8520
  %v8566 = vadd.f32 %v7930, %v8523
  %v8567 = vadd.f32 %v7932, %v8525
  %v8568 = vadd.f32 %v7935, %v8528
  %v8569 = vadd.f32 %v7937, %v8530
  %v8570 = vadd.f32 %v7940, %v8533
  %v8571 = vadd.f32 %v7942, %v8535
  %v8572 = vadd.f32 %v7945, %v8538
  %v8573 = vadd.f32 %v7947, %v8540
  %s8574 = scalar_lea.vmem %s3, 336
  %v8575 = vld [vmem:[%s8574] sm:$0xf]
  %v8576 = vld [vmem:[%s8574 + $0x4] sm:$0xf]
  %v8577 = vld [vmem:[%s8574 + $0x8] sm:$0xf]
  %v8578 = vld [vmem:[%s8574 + $0xc] sm:$0xf]
  %v8579 = vld [vmem:[%s8574 + $0x10] sm:$0xf]
  %v8580 = vld [vmem:[%s8574 + $0x14] sm:$0xf]
  %v8581 = vld [vmem:[%s8574 + $0x18] sm:$0xf]
  %v8582 = vld [vmem:[%s8574 + $0x1c] sm:$0xf]
  %v8583 = vld [vmem:[%s8574 + $0x20] sm:$0xf]
  %v8584 = vld [vmem:[%s8574 + $0x24] sm:$0xf]
  %v8585 = vld [vmem:[%s8574 + $0x28] sm:$0xf]
  %v8586 = vld [vmem:[%s8574 + $0x2c] sm:$0xf]
  %v8599 = vunpack.c.l.b16 %v8575
  %v8600 = vunpack.c.l.b16 %v8576
  %v8601 = vunpack.c.l.b16 %v8577
  %v8602 = vunpack.c.l.b16 %v8578
  %v8603 = vunpack.c.l.b16 %v8579
  %v8604 = vunpack.c.l.b16 %v8580
  %v8605 = vunpack.c.l.b16 %v8581
  %v8606 = vunpack.c.l.b16 %v8582
  %v8607 = vunpack.c.l.b16 %v8583
  %v8608 = vunpack.c.l.b16 %v8584
  %v8609 = vunpack.c.l.b16 %v8585
  %v8610 = vunpack.c.l.b16 %v8586
  %v8611 = vpack.c.b16 %v8600, %v8599
  %v8612 = vpack.c.b16 %v8602, %v8601
  %v8613 = vpack.c.b16 %v8604, %v8603
  %v8614 = vpack.c.b16 %v8606, %v8605
  %v8615 = vpack.c.b16 %v8608, %v8607
  %v8616 = vpack.c.b16 %v8610, %v8609
  %8623 = vmatpush.bf16.msra.mxu0 0
  %8624 = vmatpush.bf16.msra.mxu0 0
  %8625 = vmatpush.bf16.msra.mxu0 %v8616
  %8626 = vmatpush.bf16.msra.mxu0 %v8615
  %8627 = vmatpush.bf16.msra.mxu0 %v8614
  %8628 = vmatpush.bf16.msra.mxu0 %v8613
  %8629 = vmatpush.bf16.msra.mxu0 %v8612
  %8630 = vmatpush.bf16.msra.mxu0 %v8611
  %8631 = vmatmul.bf16.gmra.mxu0 %v8406
  %v8632 = vpop.f32.mrf.mxu0
  %v8633 = vadd.f32 0.0, %v8632
  %v8634 = vpop.f32.mrf.mxu0
  %v8635 = vadd.f32 0.0, %v8634
  %8636 = vmatmul.bf16.gmra.mxu0 %v8409
  %v8637 = vpop.f32.mrf.mxu0
  %v8638 = vadd.f32 0.0, %v8637
  %v8639 = vpop.f32.mrf.mxu0
  %v8640 = vadd.f32 0.0, %v8639
  %8641 = vmatmul.bf16.gmra.mxu0 %v8412
  %v8642 = vpop.f32.mrf.mxu0
  %v8643 = vadd.f32 0.0, %v8642
  %v8644 = vpop.f32.mrf.mxu0
  %v8645 = vadd.f32 0.0, %v8644
  %8646 = vmatmul.bf16.gmra.mxu0 %v8415
  %v8647 = vpop.f32.mrf.mxu0
  %v8648 = vadd.f32 0.0, %v8647
  %v8649 = vpop.f32.mrf.mxu0
  %v8650 = vadd.f32 0.0, %v8649
  %8651 = vmatmul.bf16.gmra.mxu0 %v8418
  %v8652 = vpop.f32.mrf.mxu0
  %v8653 = vadd.f32 0.0, %v8652
  %v8654 = vpop.f32.mrf.mxu0
  %v8655 = vadd.f32 0.0, %v8654
  %8656 = vmatmul.bf16.gmra.mxu0 %v8421
  %v8657 = vpop.f32.mrf.mxu0
  %v8658 = vadd.f32 0.0, %v8657
  %v8659 = vpop.f32.mrf.mxu0
  %v8660 = vadd.f32 0.0, %v8659
  %8661 = vmatmul.bf16.gmra.mxu0 %v8424
  %v8662 = vpop.f32.mrf.mxu0
  %v8663 = vadd.f32 0.0, %v8662
  %v8664 = vpop.f32.mrf.mxu0
  %v8665 = vadd.f32 0.0, %v8664
  %8666 = vmatmul.bf16.gmra.mxu0 %v8427
  %v8667 = vpop.f32.mrf.mxu0
  %v8668 = vadd.f32 0.0, %v8667
  %v8669 = vpop.f32.mrf.mxu0
  %v8670 = vadd.f32 0.0, %v8669
  %8671 = vmatmul.bf16.gmra.mxu0 %v8430
  %v8672 = vpop.f32.mrf.mxu0
  %v8673 = vadd.f32 0.0, %v8672
  %v8674 = vpop.f32.mrf.mxu0
  %v8675 = vadd.f32 0.0, %v8674
  %8676 = vmatmul.bf16.gmra.mxu0 %v8433
  %v8677 = vpop.f32.mrf.mxu0
  %v8678 = vadd.f32 0.0, %v8677
  %v8679 = vpop.f32.mrf.mxu0
  %v8680 = vadd.f32 0.0, %v8679
  %8681 = vmatmul.bf16.gmra.mxu0 %v8436
  %v8682 = vpop.f32.mrf.mxu0
  %v8683 = vadd.f32 0.0, %v8682
  %v8684 = vpop.f32.mrf.mxu0
  %v8685 = vadd.f32 0.0, %v8684
  %8686 = vmatmul.bf16.gmra.mxu0 %v8439
  %v8687 = vpop.f32.mrf.mxu0
  %v8688 = vadd.f32 0.0, %v8687
  %v8689 = vpop.f32.mrf.mxu0
  %v8690 = vadd.f32 0.0, %v8689
  %8691 = vmatmul.bf16.gmra.mxu0 %v8442
  %v8692 = vpop.f32.mrf.mxu0
  %v8693 = vadd.f32 0.0, %v8692
  %v8694 = vpop.f32.mrf.mxu0
  %v8695 = vadd.f32 0.0, %v8694
  %8696 = vmatmul.bf16.gmra.mxu0 %v8445
  %v8697 = vpop.f32.mrf.mxu0
  %v8698 = vadd.f32 0.0, %v8697
  %v8699 = vpop.f32.mrf.mxu0
  %v8700 = vadd.f32 0.0, %v8699
  %8701 = vmatmul.bf16.gmra.mxu0 %v8448
  %v8702 = vpop.f32.mrf.mxu0
  %v8703 = vadd.f32 0.0, %v8702
  %v8704 = vpop.f32.mrf.mxu0
  %v8705 = vadd.f32 0.0, %v8704
  %8706 = vmatmul.bf16.gmra.mxu0 %v8451
  %v8707 = vpop.f32.mrf.mxu0
  %v8708 = vadd.f32 0.0, %v8707
  %v8709 = vpop.f32.mrf.mxu0
  %v8710 = vadd.f32 0.0, %v8709
  %8711 = vdwg.mxu0
  %v8712 = vadd.f32 %v8133, %v8633
  %v8713 = vadd.f32 %v8135, %v8635
  %v8714 = vadd.f32 %v8138, %v8638
  %v8715 = vadd.f32 %v8140, %v8640
  %v8716 = vadd.f32 %v8143, %v8643
  %v8717 = vadd.f32 %v8145, %v8645
  %v8718 = vadd.f32 %v8148, %v8648
  %v8719 = vadd.f32 %v8150, %v8650
  %v8720 = vadd.f32 %v8153, %v8653
  %v8721 = vadd.f32 %v8155, %v8655
  %v8722 = vadd.f32 %v8158, %v8658
  %v8723 = vadd.f32 %v8160, %v8660
  %v8724 = vadd.f32 %v8163, %v8663
  %v8725 = vadd.f32 %v8165, %v8665
  %v8726 = vadd.f32 %v8168, %v8668
  %v8727 = vadd.f32 %v8170, %v8670
  %v8728 = vadd.f32 %v8173, %v8673
  %v8729 = vadd.f32 %v8175, %v8675
  %v8730 = vadd.f32 %v8178, %v8678
  %v8731 = vadd.f32 %v8180, %v8680
  %v8732 = vadd.f32 %v8183, %v8683
  %v8733 = vadd.f32 %v8185, %v8685
  %v8734 = vadd.f32 %v8188, %v8688
  %v8735 = vadd.f32 %v8190, %v8690
  %v8736 = vadd.f32 %v8193, %v8693
  %v8737 = vadd.f32 %v8195, %v8695
  %v8738 = vadd.f32 %v8198, %v8698
  %v8739 = vadd.f32 %v8200, %v8700
  %v8740 = vadd.f32 %v8203, %v8703
  %v8741 = vadd.f32 %v8205, %v8705
  %v8742 = vadd.f32 %v8208, %v8708
  %v8743 = vadd.f32 %v8210, %v8710
  %v8744 = vrot.slane %v7276, 3
  %v8745 = vrot.slane %v7277, 3
  %v8746 = vsel %vm7013, %v8744, %v8745
  %v8747 = vrot.slane %v7278, 3
  %v8748 = vrot.slane %v7279, 3
  %v8749 = vsel %vm7013, %v8747, %v8748
  %v8750 = vrot.slane %v7280, 3
  %v8751 = vrot.slane %v7281, 3
  %v8752 = vsel %vm7013, %v8750, %v8751
  %v8753 = vrot.slane %v7282, 3
  %v8754 = vrot.slane %v7283, 3
  %v8755 = vsel %vm7013, %v8753, %v8754
  %v8756 = vrot.slane %v7284, 3
  %v8757 = vrot.slane %v7285, 3
  %v8758 = vsel %vm7013, %v8756, %v8757
  %v8759 = vrot.slane %v7286, 3
  %v8760 = vrot.slane %v7287, 3
  %v8761 = vsel %vm7013, %v8759, %v8760
  %v8762 = vrot.slane %v7288, 3
  %v8763 = vrot.slane %v7289, 3
  %v8764 = vsel %vm7013, %v8762, %v8763
  %v8765 = vrot.slane %v7290, 3
  %v8766 = vrot.slane %v7291, 3
  %v8767 = vsel %vm7013, %v8765, %v8766
  %v8768 = vrot.slane %v7292, 3
  %v8769 = vrot.slane %v7293, 3
  %v8770 = vsel %vm7013, %v8768, %v8769
  %v8771 = vrot.slane %v7294, 3
  %v8772 = vrot.slane %v7295, 3
  %v8773 = vsel %vm7013, %v8771, %v8772
  %v8774 = vrot.slane %v7296, 3
  %v8775 = vrot.slane %v7297, 3
  %v8776 = vsel %vm7013, %v8774, %v8775
  %v8777 = vrot.slane %v7298, 3
  %v8778 = vrot.slane %v7299, 3
  %v8779 = vsel %vm7013, %v8777, %v8778
  %v8780 = vrot.slane %v7300, 3
  %v8781 = vrot.slane %v7301, 3
  %v8782 = vsel %vm7013, %v8780, %v8781
  %v8783 = vrot.slane %v7302, 3
  %v8784 = vrot.slane %v7303, 3
  %v8785 = vsel %vm7013, %v8783, %v8784
  %v8786 = vrot.slane %v7304, 3
  %v8787 = vrot.slane %v7305, 3
  %v8788 = vsel %vm7013, %v8786, %v8787
  %v8789 = vrot.slane %v7306, 3
  %v8790 = vrot.slane %v7307, 3
  %v8791 = vsel %vm7013, %v8789, %v8790
  %v8792 = vrot.slane %v7308, 3
  %v8793 = vrot.slane %v7309, 3
  %v8794 = vsel %vm7013, %v8792, %v8793
  %v8795 = vrot.slane %v7310, 3
  %v8796 = vrot.slane %v7311, 3
  %v8797 = vsel %vm7013, %v8795, %v8796
  %v8798 = vrot.slane %v7312, 3
  %v8799 = vrot.slane %v7313, 3
  %v8800 = vsel %vm7013, %v8798, %v8799
  %v8801 = vrot.slane %v7314, 3
  %v8802 = vrot.slane %v7315, 3
  %v8803 = vsel %vm7013, %v8801, %v8802
  %v8804 = vrot.slane %v7316, 3
  %v8805 = vrot.slane %v7317, 3
  %v8806 = vsel %vm7013, %v8804, %v8805
  %v8807 = vrot.slane %v7318, 3
  %v8808 = vrot.slane %v7319, 3
  %v8809 = vsel %vm7013, %v8807, %v8808
  %v8810 = vrot.slane %v7320, 3
  %v8811 = vrot.slane %v7321, 3
  %v8812 = vsel %vm7013, %v8810, %v8811
  %v8813 = vrot.slane %v7322, 3
  %v8814 = vrot.slane %v7323, 3
  %v8815 = vsel %vm7013, %v8813, %v8814
  %v8816 = vrot.slane %v7324, 3
  %v8817 = vrot.slane %v7325, 3
  %v8818 = vsel %vm7013, %v8816, %v8817
  %v8819 = vrot.slane %v7326, 3
  %v8820 = vrot.slane %v7327, 3
  %v8821 = vsel %vm7013, %v8819, %v8820
  %v8822 = vrot.slane %v7328, 3
  %v8823 = vrot.slane %v7329, 3
  %v8824 = vsel %vm7013, %v8822, %v8823
  %v8825 = vrot.slane %v7330, 3
  %v8826 = vrot.slane %v7331, 3
  %v8827 = vsel %vm7013, %v8825, %v8826
  %v8828 = vrot.slane %v7332, 3
  %v8829 = vrot.slane %v7333, 3
  %v8830 = vsel %vm7013, %v8828, %v8829
  %v8831 = vrot.slane %v7334, 3
  %v8832 = vrot.slane %v7335, 3
  %v8833 = vsel %vm7013, %v8831, %v8832
  %v8834 = vrot.slane %v7336, 3
  %v8835 = vrot.slane %v7337, 3
  %v8836 = vsel %vm7013, %v8834, %v8835
  %v8837 = vrot.slane %v7338, 3
  %v8838 = vrot.slane %v7339, 3
  %v8839 = vsel %vm7013, %v8837, %v8838
  %v8872 = vpack.c.bf16 %v8749, %v8746
  %v8873 = vpack.c.bf16 %v8755, %v8752
  %v8874 = vpack.c.bf16 %v8761, %v8758
  %v8875 = vpack.c.bf16 %v8767, %v8764
  %v8876 = vpack.c.bf16 %v8773, %v8770
  %v8877 = vpack.c.bf16 %v8779, %v8776
  %v8878 = vpack.c.bf16 %v8785, %v8782
  %v8879 = vpack.c.bf16 %v8791, %v8788
  %v8880 = vpack.c.bf16 %v8797, %v8794
  %v8881 = vpack.c.bf16 %v8803, %v8800
  %v8882 = vpack.c.bf16 %v8809, %v8806
  %v8883 = vpack.c.bf16 %v8815, %v8812
  %v8884 = vpack.c.bf16 %v8821, %v8818
  %v8885 = vpack.c.bf16 %v8827, %v8824
  %v8886 = vpack.c.bf16 %v8833, %v8830
  %v8887 = vpack.c.bf16 %v8839, %v8836
  %s8888 = scalar_lea.vmem %s3, 144
  %v8889 = vld [vmem:[%s8888] sm:$0xf]
  %v8890 = vld [vmem:[%s8888 + $0x4] sm:$0xf]
  %v8891 = vld [vmem:[%s8888 + $0x8] sm:$0xf]
  %v8892 = vld [vmem:[%s8888 + $0xc] sm:$0xf]
  %v8893 = vld [vmem:[%s8888 + $0x10] sm:$0xf]
  %v8894 = vld [vmem:[%s8888 + $0x14] sm:$0xf]
  %v8895 = vld [vmem:[%s8888 + $0x18] sm:$0xf]
  %v8896 = vld [vmem:[%s8888 + $0x1c] sm:$0xf]
  %v8897 = vld [vmem:[%s8888 + $0x20] sm:$0xf]
  %v8898 = vld [vmem:[%s8888 + $0x24] sm:$0xf]
  %v8899 = vld [vmem:[%s8888 + $0x28] sm:$0xf]
  %v8900 = vld [vmem:[%s8888 + $0x2c] sm:$0xf]
  %v8913 = vunpack.c.l.b16 %v8889
  %v8914 = vunpack.c.l.b16 %v8890
  %v8915 = vunpack.c.l.b16 %v8891
  %v8916 = vunpack.c.l.b16 %v8892
  %v8917 = vunpack.c.l.b16 %v8893
  %v8918 = vunpack.c.l.b16 %v8894
  %v8919 = vunpack.c.l.b16 %v8895
  %v8920 = vunpack.c.l.b16 %v8896
  %v8921 = vunpack.c.l.b16 %v8897
  %v8922 = vunpack.c.l.b16 %v8898
  %v8923 = vunpack.c.l.b16 %v8899
  %v8924 = vunpack.c.l.b16 %v8900
  %v8925 = vpack.c.b16 %v8914, %v8913
  %v8926 = vpack.c.b16 %v8916, %v8915
  %v8927 = vpack.c.b16 %v8918, %v8917
  %v8928 = vpack.c.b16 %v8920, %v8919
  %v8929 = vpack.c.b16 %v8922, %v8921
  %v8930 = vpack.c.b16 %v8924, %v8923
  %v8938 = vsel %vm7638, %v8872, 0
  %v8941 = vsel %vm7638, %v8873, 0
  %v8944 = vsel %vm7638, %v8874, 0
  %v8947 = vsel %vm7638, %v8875, 0
  %v8950 = vsel %vm7638, %v8876, 0
  %v8953 = vsel %vm7638, %v8877, 0
  %v8956 = vsel %vm7638, %v8878, 0
  %v8959 = vsel %vm7638, %v8879, 0
  %v8962 = vsel %vm7638, %v8880, 0
  %v8965 = vsel %vm7638, %v8881, 0
  %v8968 = vsel %vm7638, %v8882, 0
  %v8971 = vsel %vm7638, %v8883, 0
  %v8974 = vsel %vm7638, %v8884, 0
  %v8977 = vsel %vm7638, %v8885, 0
  %v8980 = vsel %vm7638, %v8886, 0
  %v8983 = vsel %vm7638, %v8887, 0
  %8985 = vmatpush.bf16.msra.mxu0 0
  %8986 = vmatpush.bf16.msra.mxu0 0
  %8987 = vmatpush.bf16.msra.mxu0 %v8930
  %8988 = vmatpush.bf16.msra.mxu0 %v8929
  %8989 = vmatpush.bf16.msra.mxu0 %v8928
  %8990 = vmatpush.bf16.msra.mxu0 %v8927
  %8991 = vmatpush.bf16.msra.mxu0 %v8926
  %8992 = vmatpush.bf16.msra.mxu0 %v8925
  %8993 = vmatmul.bf16.gmra.mxu0 %v8938
  %v8994 = vpop.f32.mrf.mxu0
  %v8995 = vadd.f32 0.0, %v8994
  %v8996 = vpop.f32.mrf.mxu0
  %v8997 = vadd.f32 0.0, %v8996
  %8998 = vmatmul.bf16.gmra.mxu0 %v8941
  %v8999 = vpop.f32.mrf.mxu0
  %v9000 = vadd.f32 0.0, %v8999
  %v9001 = vpop.f32.mrf.mxu0
  %v9002 = vadd.f32 0.0, %v9001
  %9003 = vmatmul.bf16.gmra.mxu0 %v8944
  %v9004 = vpop.f32.mrf.mxu0
  %v9005 = vadd.f32 0.0, %v9004
  %v9006 = vpop.f32.mrf.mxu0
  %v9007 = vadd.f32 0.0, %v9006
  %9008 = vmatmul.bf16.gmra.mxu0 %v8947
  %v9009 = vpop.f32.mrf.mxu0
  %v9010 = vadd.f32 0.0, %v9009
  %v9011 = vpop.f32.mrf.mxu0
  %v9012 = vadd.f32 0.0, %v9011
  %9013 = vmatmul.bf16.gmra.mxu0 %v8950
  %v9014 = vpop.f32.mrf.mxu0
  %v9015 = vadd.f32 0.0, %v9014
  %v9016 = vpop.f32.mrf.mxu0
  %v9017 = vadd.f32 0.0, %v9016
  %9018 = vmatmul.bf16.gmra.mxu0 %v8953
  %v9019 = vpop.f32.mrf.mxu0
  %v9020 = vadd.f32 0.0, %v9019
  %v9021 = vpop.f32.mrf.mxu0
  %v9022 = vadd.f32 0.0, %v9021
  %9023 = vmatmul.bf16.gmra.mxu0 %v8956
  %v9024 = vpop.f32.mrf.mxu0
  %v9025 = vadd.f32 0.0, %v9024
  %v9026 = vpop.f32.mrf.mxu0
  %v9027 = vadd.f32 0.0, %v9026
  %9028 = vmatmul.bf16.gmra.mxu0 %v8959
  %v9029 = vpop.f32.mrf.mxu0
  %v9030 = vadd.f32 0.0, %v9029
  %v9031 = vpop.f32.mrf.mxu0
  %v9032 = vadd.f32 0.0, %v9031
  %9033 = vmatmul.bf16.gmra.mxu0 %v8962
  %v9034 = vpop.f32.mrf.mxu0
  %v9035 = vadd.f32 0.0, %v9034
  %v9036 = vpop.f32.mrf.mxu0
  %v9037 = vadd.f32 0.0, %v9036
  %9038 = vmatmul.bf16.gmra.mxu0 %v8965
  %v9039 = vpop.f32.mrf.mxu0
  %v9040 = vadd.f32 0.0, %v9039
  %v9041 = vpop.f32.mrf.mxu0
  %v9042 = vadd.f32 0.0, %v9041
  %9043 = vmatmul.bf16.gmra.mxu0 %v8968
  %v9044 = vpop.f32.mrf.mxu0
  %v9045 = vadd.f32 0.0, %v9044
  %v9046 = vpop.f32.mrf.mxu0
  %v9047 = vadd.f32 0.0, %v9046
  %9048 = vmatmul.bf16.gmra.mxu0 %v8971
  %v9049 = vpop.f32.mrf.mxu0
  %v9050 = vadd.f32 0.0, %v9049
  %v9051 = vpop.f32.mrf.mxu0
  %v9052 = vadd.f32 0.0, %v9051
  %9053 = vmatmul.bf16.gmra.mxu0 %v8974
  %v9054 = vpop.f32.mrf.mxu0
  %v9055 = vadd.f32 0.0, %v9054
  %v9056 = vpop.f32.mrf.mxu0
  %v9057 = vadd.f32 0.0, %v9056
  %9058 = vmatmul.bf16.gmra.mxu0 %v8977
  %v9059 = vpop.f32.mrf.mxu0
  %v9060 = vadd.f32 0.0, %v9059
  %v9061 = vpop.f32.mrf.mxu0
  %v9062 = vadd.f32 0.0, %v9061
  %9063 = vmatmul.bf16.gmra.mxu0 %v8980
  %v9064 = vpop.f32.mrf.mxu0
  %v9065 = vadd.f32 0.0, %v9064
  %v9066 = vpop.f32.mrf.mxu0
  %v9067 = vadd.f32 0.0, %v9066
  %9068 = vmatmul.bf16.gmra.mxu0 %v8983
  %v9069 = vpop.f32.mrf.mxu0
  %v9070 = vadd.f32 0.0, %v9069
  %v9071 = vpop.f32.mrf.mxu0
  %v9072 = vadd.f32 0.0, %v9071
  %9073 = vdwg.mxu0
  %v9074 = vadd.f32 %v8542, %v8995
  %v9075 = vadd.f32 %v8543, %v8997
  %v9076 = vadd.f32 %v8544, %v9000
  %v9077 = vadd.f32 %v8545, %v9002
  %v9078 = vadd.f32 %v8546, %v9005
  %v9079 = vadd.f32 %v8547, %v9007
  %v9080 = vadd.f32 %v8548, %v9010
  %v9081 = vadd.f32 %v8549, %v9012
  %v9082 = vadd.f32 %v8550, %v9015
  %v9083 = vadd.f32 %v8551, %v9017
  %v9084 = vadd.f32 %v8552, %v9020
  %v9085 = vadd.f32 %v8553, %v9022
  %v9086 = vadd.f32 %v8554, %v9025
  %v9087 = vadd.f32 %v8555, %v9027
  %v9088 = vadd.f32 %v8556, %v9030
  %v9089 = vadd.f32 %v8557, %v9032
  %v9090 = vadd.f32 %v8558, %v9035
  %v9091 = vadd.f32 %v8559, %v9037
  %v9092 = vadd.f32 %v8560, %v9040
  %v9093 = vadd.f32 %v8561, %v9042
  %v9094 = vadd.f32 %v8562, %v9045
  %v9095 = vadd.f32 %v8563, %v9047
  %v9096 = vadd.f32 %v8564, %v9050
  %v9097 = vadd.f32 %v8565, %v9052
  %v9098 = vadd.f32 %v8566, %v9055
  %v9099 = vadd.f32 %v8567, %v9057
  %v9100 = vadd.f32 %v8568, %v9060
  %v9101 = vadd.f32 %v8569, %v9062
  %v9102 = vadd.f32 %v8570, %v9065
  %v9103 = vadd.f32 %v8571, %v9067
  %v9104 = vadd.f32 %v8572, %v9070
  %v9105 = vadd.f32 %v8573, %v9072
  %s9106 = scalar_lea.vmem %s3, 384
  %v9107 = vld [vmem:[%s9106] sm:$0xf]
  %v9108 = vld [vmem:[%s9106 + $0x4] sm:$0xf]
  %v9109 = vld [vmem:[%s9106 + $0x8] sm:$0xf]
  %v9110 = vld [vmem:[%s9106 + $0xc] sm:$0xf]
  %v9111 = vld [vmem:[%s9106 + $0x10] sm:$0xf]
  %v9112 = vld [vmem:[%s9106 + $0x14] sm:$0xf]
  %v9113 = vld [vmem:[%s9106 + $0x18] sm:$0xf]
  %v9114 = vld [vmem:[%s9106 + $0x1c] sm:$0xf]
  %v9115 = vld [vmem:[%s9106 + $0x20] sm:$0xf]
  %v9116 = vld [vmem:[%s9106 + $0x24] sm:$0xf]
  %v9117 = vld [vmem:[%s9106 + $0x28] sm:$0xf]
  %v9118 = vld [vmem:[%s9106 + $0x2c] sm:$0xf]
  %v9131 = vunpack.c.l.b16 %v9107
  %v9132 = vunpack.c.l.b16 %v9108
  %v9133 = vunpack.c.l.b16 %v9109
  %v9134 = vunpack.c.l.b16 %v9110
  %v9135 = vunpack.c.l.b16 %v9111
  %v9136 = vunpack.c.l.b16 %v9112
  %v9137 = vunpack.c.l.b16 %v9113
  %v9138 = vunpack.c.l.b16 %v9114
  %v9139 = vunpack.c.l.b16 %v9115
  %v9140 = vunpack.c.l.b16 %v9116
  %v9141 = vunpack.c.l.b16 %v9117
  %v9142 = vunpack.c.l.b16 %v9118
  %v9143 = vpack.c.b16 %v9132, %v9131
  %v9144 = vpack.c.b16 %v9134, %v9133
  %v9145 = vpack.c.b16 %v9136, %v9135
  %v9146 = vpack.c.b16 %v9138, %v9137
  %v9147 = vpack.c.b16 %v9140, %v9139
  %v9148 = vpack.c.b16 %v9142, %v9141
  %9155 = vmatpush.bf16.msra.mxu0 0
  %9156 = vmatpush.bf16.msra.mxu0 0
  %9157 = vmatpush.bf16.msra.mxu0 %v9148
  %9158 = vmatpush.bf16.msra.mxu0 %v9147
  %9159 = vmatpush.bf16.msra.mxu0 %v9146
  %9160 = vmatpush.bf16.msra.mxu0 %v9145
  %9161 = vmatpush.bf16.msra.mxu0 %v9144
  %9162 = vmatpush.bf16.msra.mxu0 %v9143
  %9163 = vmatmul.bf16.gmra.mxu0 %v8938
  %v9164 = vpop.f32.mrf.mxu0
  %v9165 = vadd.f32 0.0, %v9164
  %v9166 = vpop.f32.mrf.mxu0
  %v9167 = vadd.f32 0.0, %v9166
  %9168 = vmatmul.bf16.gmra.mxu0 %v8941
  %v9169 = vpop.f32.mrf.mxu0
  %v9170 = vadd.f32 0.0, %v9169
  %v9171 = vpop.f32.mrf.mxu0
  %v9172 = vadd.f32 0.0, %v9171
  %9173 = vmatmul.bf16.gmra.mxu0 %v8944
  %v9174 = vpop.f32.mrf.mxu0
  %v9175 = vadd.f32 0.0, %v9174
  %v9176 = vpop.f32.mrf.mxu0
  %v9177 = vadd.f32 0.0, %v9176
  %9178 = vmatmul.bf16.gmra.mxu0 %v8947
  %v9179 = vpop.f32.mrf.mxu0
  %v9180 = vadd.f32 0.0, %v9179
  %v9181 = vpop.f32.mrf.mxu0
  %v9182 = vadd.f32 0.0, %v9181
  %9183 = vmatmul.bf16.gmra.mxu0 %v8950
  %v9184 = vpop.f32.mrf.mxu0
  %v9185 = vadd.f32 0.0, %v9184
  %v9186 = vpop.f32.mrf.mxu0
  %v9187 = vadd.f32 0.0, %v9186
  %9188 = vmatmul.bf16.gmra.mxu0 %v8953
  %v9189 = vpop.f32.mrf.mxu0
  %v9190 = vadd.f32 0.0, %v9189
  %v9191 = vpop.f32.mrf.mxu0
  %v9192 = vadd.f32 0.0, %v9191
  %9193 = vmatmul.bf16.gmra.mxu0 %v8956
  %v9194 = vpop.f32.mrf.mxu0
  %v9195 = vadd.f32 0.0, %v9194
  %v9196 = vpop.f32.mrf.mxu0
  %v9197 = vadd.f32 0.0, %v9196
  %9198 = vmatmul.bf16.gmra.mxu0 %v8959
  %v9199 = vpop.f32.mrf.mxu0
  %v9200 = vadd.f32 0.0, %v9199
  %v9201 = vpop.f32.mrf.mxu0
  %v9202 = vadd.f32 0.0, %v9201
  %9203 = vmatmul.bf16.gmra.mxu0 %v8962
  %v9204 = vpop.f32.mrf.mxu0
  %v9205 = vadd.f32 0.0, %v9204
  %v9206 = vpop.f32.mrf.mxu0
  %v9207 = vadd.f32 0.0, %v9206
  %9208 = vmatmul.bf16.gmra.mxu0 %v8965
  %v9209 = vpop.f32.mrf.mxu0
  %v9210 = vadd.f32 0.0, %v9209
  %v9211 = vpop.f32.mrf.mxu0
  %v9212 = vadd.f32 0.0, %v9211
  %9213 = vmatmul.bf16.gmra.mxu0 %v8968
  %v9214 = vpop.f32.mrf.mxu0
  %v9215 = vadd.f32 0.0, %v9214
  %v9216 = vpop.f32.mrf.mxu0
  %v9217 = vadd.f32 0.0, %v9216
  %9218 = vmatmul.bf16.gmra.mxu0 %v8971
  %v9219 = vpop.f32.mrf.mxu0
  %v9220 = vadd.f32 0.0, %v9219
  %v9221 = vpop.f32.mrf.mxu0
  %v9222 = vadd.f32 0.0, %v9221
  %9223 = vmatmul.bf16.gmra.mxu0 %v8974
  %v9224 = vpop.f32.mrf.mxu0
  %v9225 = vadd.f32 0.0, %v9224
  %v9226 = vpop.f32.mrf.mxu0
  %v9227 = vadd.f32 0.0, %v9226
  %9228 = vmatmul.bf16.gmra.mxu0 %v8977
  %v9229 = vpop.f32.mrf.mxu0
  %v9230 = vadd.f32 0.0, %v9229
  %v9231 = vpop.f32.mrf.mxu0
  %v9232 = vadd.f32 0.0, %v9231
  %9233 = vmatmul.bf16.gmra.mxu0 %v8980
  %v9234 = vpop.f32.mrf.mxu0
  %v9235 = vadd.f32 0.0, %v9234
  %v9236 = vpop.f32.mrf.mxu0
  %v9237 = vadd.f32 0.0, %v9236
  %9238 = vmatmul.bf16.gmra.mxu0 %v8983
  %v9239 = vpop.f32.mrf.mxu0
  %v9240 = vadd.f32 0.0, %v9239
  %v9241 = vpop.f32.mrf.mxu0
  %v9242 = vadd.f32 0.0, %v9241
  %9243 = vdwg.mxu0
  %v9244 = vadd.f32 %v8712, %v9165
  %v9245 = vadd.f32 %v8713, %v9167
  %v9246 = vadd.f32 %v8714, %v9170
  %v9247 = vadd.f32 %v8715, %v9172
  %v9248 = vadd.f32 %v8716, %v9175
  %v9249 = vadd.f32 %v8717, %v9177
  %v9250 = vadd.f32 %v8718, %v9180
  %v9251 = vadd.f32 %v8719, %v9182
  %v9252 = vadd.f32 %v8720, %v9185
  %v9253 = vadd.f32 %v8721, %v9187
  %v9254 = vadd.f32 %v8722, %v9190
  %v9255 = vadd.f32 %v8723, %v9192
  %v9256 = vadd.f32 %v8724, %v9195
  %v9257 = vadd.f32 %v8725, %v9197
  %v9258 = vadd.f32 %v8726, %v9200
  %v9259 = vadd.f32 %v8727, %v9202
  %v9260 = vadd.f32 %v8728, %v9205
  %v9261 = vadd.f32 %v8729, %v9207
  %v9262 = vadd.f32 %v8730, %v9210
  %v9263 = vadd.f32 %v8731, %v9212
  %v9264 = vadd.f32 %v8732, %v9215
  %v9265 = vadd.f32 %v8733, %v9217
  %v9266 = vadd.f32 %v8734, %v9220
  %v9267 = vadd.f32 %v8735, %v9222
  %v9268 = vadd.f32 %v8736, %v9225
  %v9269 = vadd.f32 %v8737, %v9227
  %v9270 = vadd.f32 %v8738, %v9230
  %v9271 = vadd.f32 %v8739, %v9232
  %v9272 = vadd.f32 %v8740, %v9235
  %v9273 = vadd.f32 %v8741, %v9237
  %v9274 = vadd.f32 %v8742, %v9240
  %v9275 = vadd.f32 %v8743, %v9242
  %v9276 = vrot.slane %v7276, 4
  %v9277 = vrot.slane %v7277, 4
  %v9278 = vsel %vm534, %v9276, %v9277
  %v9279 = vrot.slane %v7278, 4
  %v9280 = vrot.slane %v7279, 4
  %v9281 = vsel %vm534, %v9279, %v9280
  %v9282 = vrot.slane %v7280, 4
  %v9283 = vrot.slane %v7281, 4
  %v9284 = vsel %vm534, %v9282, %v9283
  %v9285 = vrot.slane %v7282, 4
  %v9286 = vrot.slane %v7283, 4
  %v9287 = vsel %vm534, %v9285, %v9286
  %v9288 = vrot.slane %v7284, 4
  %v9289 = vrot.slane %v7285, 4
  %v9290 = vsel %vm534, %v9288, %v9289
  %v9291 = vrot.slane %v7286, 4
  %v9292 = vrot.slane %v7287, 4
  %v9293 = vsel %vm534, %v9291, %v9292
  %v9294 = vrot.slane %v7288, 4
  %v9295 = vrot.slane %v7289, 4
  %v9296 = vsel %vm534, %v9294, %v9295
  %v9297 = vrot.slane %v7290, 4
  %v9298 = vrot.slane %v7291, 4
  %v9299 = vsel %vm534, %v9297, %v9298
  %v9300 = vrot.slane %v7292, 4
  %v9301 = vrot.slane %v7293, 4
  %v9302 = vsel %vm534, %v9300, %v9301
  %v9303 = vrot.slane %v7294, 4
  %v9304 = vrot.slane %v7295, 4
  %v9305 = vsel %vm534, %v9303, %v9304
  %v9306 = vrot.slane %v7296, 4
  %v9307 = vrot.slane %v7297, 4
  %v9308 = vsel %vm534, %v9306, %v9307
  %v9309 = vrot.slane %v7298, 4
  %v9310 = vrot.slane %v7299, 4
  %v9311 = vsel %vm534, %v9309, %v9310
  %v9312 = vrot.slane %v7300, 4
  %v9313 = vrot.slane %v7301, 4
  %v9314 = vsel %vm534, %v9312, %v9313
  %v9315 = vrot.slane %v7302, 4
  %v9316 = vrot.slane %v7303, 4
  %v9317 = vsel %vm534, %v9315, %v9316
  %v9318 = vrot.slane %v7304, 4
  %v9319 = vrot.slane %v7305, 4
  %v9320 = vsel %vm534, %v9318, %v9319
  %v9321 = vrot.slane %v7306, 4
  %v9322 = vrot.slane %v7307, 4
  %v9323 = vsel %vm534, %v9321, %v9322
  %v9324 = vrot.slane %v7308, 4
  %v9325 = vrot.slane %v7309, 4
  %v9326 = vsel %vm534, %v9324, %v9325
  %v9327 = vrot.slane %v7310, 4
  %v9328 = vrot.slane %v7311, 4
  %v9329 = vsel %vm534, %v9327, %v9328
  %v9330 = vrot.slane %v7312, 4
  %v9331 = vrot.slane %v7313, 4
  %v9332 = vsel %vm534, %v9330, %v9331
  %v9333 = vrot.slane %v7314, 4
  %v9334 = vrot.slane %v7315, 4
  %v9335 = vsel %vm534, %v9333, %v9334
  %v9336 = vrot.slane %v7316, 4
  %v9337 = vrot.slane %v7317, 4
  %v9338 = vsel %vm534, %v9336, %v9337
  %v9339 = vrot.slane %v7318, 4
  %v9340 = vrot.slane %v7319, 4
  %v9341 = vsel %vm534, %v9339, %v9340
  %v9342 = vrot.slane %v7320, 4
  %v9343 = vrot.slane %v7321, 4
  %v9344 = vsel %vm534, %v9342, %v9343
  %v9345 = vrot.slane %v7322, 4
  %v9346 = vrot.slane %v7323, 4
  %v9347 = vsel %vm534, %v9345, %v9346
  %v9348 = vrot.slane %v7324, 4
  %v9349 = vrot.slane %v7325, 4
  %v9350 = vsel %vm534, %v9348, %v9349
  %v9351 = vrot.slane %v7326, 4
  %v9352 = vrot.slane %v7327, 4
  %v9353 = vsel %vm534, %v9351, %v9352
  %v9354 = vrot.slane %v7328, 4
  %v9355 = vrot.slane %v7329, 4
  %v9356 = vsel %vm534, %v9354, %v9355
  %v9357 = vrot.slane %v7330, 4
  %v9358 = vrot.slane %v7331, 4
  %v9359 = vsel %vm534, %v9357, %v9358
  %v9360 = vrot.slane %v7332, 4
  %v9361 = vrot.slane %v7333, 4
  %v9362 = vsel %vm534, %v9360, %v9361
  %v9363 = vrot.slane %v7334, 4
  %v9364 = vrot.slane %v7335, 4
  %v9365 = vsel %vm534, %v9363, %v9364
  %v9366 = vrot.slane %v7336, 4
  %v9367 = vrot.slane %v7337, 4
  %v9368 = vsel %vm534, %v9366, %v9367
  %v9369 = vrot.slane %v7338, 4
  %v9370 = vrot.slane %v7339, 4
  %v9371 = vsel %vm534, %v9369, %v9370
  %v9404 = vpack.c.bf16 %v9281, %v9278
  %v9405 = vpack.c.bf16 %v9287, %v9284
  %v9406 = vpack.c.bf16 %v9293, %v9290
  %v9407 = vpack.c.bf16 %v9299, %v9296
  %v9408 = vpack.c.bf16 %v9305, %v9302
  %v9409 = vpack.c.bf16 %v9311, %v9308
  %v9410 = vpack.c.bf16 %v9317, %v9314
  %v9411 = vpack.c.bf16 %v9323, %v9320
  %v9412 = vpack.c.bf16 %v9329, %v9326
  %v9413 = vpack.c.bf16 %v9335, %v9332
  %v9414 = vpack.c.bf16 %v9341, %v9338
  %v9415 = vpack.c.bf16 %v9347, %v9344
  %v9416 = vpack.c.bf16 %v9353, %v9350
  %v9417 = vpack.c.bf16 %v9359, %v9356
  %v9418 = vpack.c.bf16 %v9365, %v9362
  %v9419 = vpack.c.bf16 %v9371, %v9368
  %s9420 = scalar_lea.vmem %s3, 192
  %v9421 = vld [vmem:[%s9420] sm:$0xf]
  %v9422 = vld [vmem:[%s9420 + $0x4] sm:$0xf]
  %v9423 = vld [vmem:[%s9420 + $0x8] sm:$0xf]
  %v9424 = vld [vmem:[%s9420 + $0xc] sm:$0xf]
  %v9425 = vld [vmem:[%s9420 + $0x10] sm:$0xf]
  %v9426 = vld [vmem:[%s9420 + $0x14] sm:$0xf]
  %v9427 = vld [vmem:[%s9420 + $0x18] sm:$0xf]
  %v9428 = vld [vmem:[%s9420 + $0x1c] sm:$0xf]
  %v9429 = vld [vmem:[%s9420 + $0x20] sm:$0xf]
  %v9430 = vld [vmem:[%s9420 + $0x24] sm:$0xf]
  %v9431 = vld [vmem:[%s9420 + $0x28] sm:$0xf]
  %v9432 = vld [vmem:[%s9420 + $0x2c] sm:$0xf]
  %v9445 = vunpack.c.l.b16 %v9421
  %v9446 = vunpack.c.l.b16 %v9422
  %v9447 = vunpack.c.l.b16 %v9423
  %v9448 = vunpack.c.l.b16 %v9424
  %v9449 = vunpack.c.l.b16 %v9425
  %v9450 = vunpack.c.l.b16 %v9426
  %v9451 = vunpack.c.l.b16 %v9427
  %v9452 = vunpack.c.l.b16 %v9428
  %v9453 = vunpack.c.l.b16 %v9429
  %v9454 = vunpack.c.l.b16 %v9430
  %v9455 = vunpack.c.l.b16 %v9431
  %v9456 = vunpack.c.l.b16 %v9432
  %v9457 = vpack.c.b16 %v9446, %v9445
  %v9458 = vpack.c.b16 %v9448, %v9447
  %v9459 = vpack.c.b16 %v9450, %v9449
  %v9460 = vpack.c.b16 %v9452, %v9451
  %v9461 = vpack.c.b16 %v9454, %v9453
  %v9462 = vpack.c.b16 %v9456, %v9455
  %v9470 = vsel %vm7638, %v9404, 0
  %v9473 = vsel %vm7638, %v9405, 0
  %v9476 = vsel %vm7638, %v9406, 0
  %v9479 = vsel %vm7638, %v9407, 0
  %v9482 = vsel %vm7638, %v9408, 0
  %v9485 = vsel %vm7638, %v9409, 0
  %v9488 = vsel %vm7638, %v9410, 0
  %v9491 = vsel %vm7638, %v9411, 0
  %v9494 = vsel %vm7638, %v9412, 0
  %v9497 = vsel %vm7638, %v9413, 0
  %v9500 = vsel %vm7638, %v9414, 0
  %v9503 = vsel %vm7638, %v9415, 0
  %v9506 = vsel %vm7638, %v9416, 0
  %v9509 = vsel %vm7638, %v9417, 0
  %v9512 = vsel %vm7638, %v9418, 0
  %v9515 = vsel %vm7638, %v9419, 0
  %9517 = vmatpush.bf16.msra.mxu0 0
  %9518 = vmatpush.bf16.msra.mxu0 0
  %9519 = vmatpush.bf16.msra.mxu0 %v9462
  %9520 = vmatpush.bf16.msra.mxu0 %v9461
  %9521 = vmatpush.bf16.msra.mxu0 %v9460
  %9522 = vmatpush.bf16.msra.mxu0 %v9459
  %9523 = vmatpush.bf16.msra.mxu0 %v9458
  %9524 = vmatpush.bf16.msra.mxu0 %v9457
  %9525 = vmatmul.bf16.gmra.mxu0 %v9470
  %v9526 = vpop.f32.mrf.mxu0
  %v9527 = vadd.f32 0.0, %v9526
  %v9528 = vpop.f32.mrf.mxu0
  %v9529 = vadd.f32 0.0, %v9528
  %9530 = vmatmul.bf16.gmra.mxu0 %v9473
  %v9531 = vpop.f32.mrf.mxu0
  %v9532 = vadd.f32 0.0, %v9531
  %v9533 = vpop.f32.mrf.mxu0
  %v9534 = vadd.f32 0.0, %v9533
  %9535 = vmatmul.bf16.gmra.mxu0 %v9476
  %v9536 = vpop.f32.mrf.mxu0
  %v9537 = vadd.f32 0.0, %v9536
  %v9538 = vpop.f32.mrf.mxu0
  %v9539 = vadd.f32 0.0, %v9538
  %9540 = vmatmul.bf16.gmra.mxu0 %v9479
  %v9541 = vpop.f32.mrf.mxu0
  %v9542 = vadd.f32 0.0, %v9541
  %v9543 = vpop.f32.mrf.mxu0
  %v9544 = vadd.f32 0.0, %v9543
  %9545 = vmatmul.bf16.gmra.mxu0 %v9482
  %v9546 = vpop.f32.mrf.mxu0
  %v9547 = vadd.f32 0.0, %v9546
  %v9548 = vpop.f32.mrf.mxu0
  %v9549 = vadd.f32 0.0, %v9548
  %9550 = vmatmul.bf16.gmra.mxu0 %v9485
  %v9551 = vpop.f32.mrf.mxu0
  %v9552 = vadd.f32 0.0, %v9551
  %v9553 = vpop.f32.mrf.mxu0
  %v9554 = vadd.f32 0.0, %v9553
  %9555 = vmatmul.bf16.gmra.mxu0 %v9488
  %v9556 = vpop.f32.mrf.mxu0
  %v9557 = vadd.f32 0.0, %v9556
  %v9558 = vpop.f32.mrf.mxu0
  %v9559 = vadd.f32 0.0, %v9558
  %9560 = vmatmul.bf16.gmra.mxu0 %v9491
  %v9561 = vpop.f32.mrf.mxu0
  %v9562 = vadd.f32 0.0, %v9561
  %v9563 = vpop.f32.mrf.mxu0
  %v9564 = vadd.f32 0.0, %v9563
  %9565 = vmatmul.bf16.gmra.mxu0 %v9494
  %v9566 = vpop.f32.mrf.mxu0
  %v9567 = vadd.f32 0.0, %v9566
  %v9568 = vpop.f32.mrf.mxu0
  %v9569 = vadd.f32 0.0, %v9568
  %9570 = vmatmul.bf16.gmra.mxu0 %v9497
  %v9571 = vpop.f32.mrf.mxu0
  %v9572 = vadd.f32 0.0, %v9571
  %v9573 = vpop.f32.mrf.mxu0
  %v9574 = vadd.f32 0.0, %v9573
  %9575 = vmatmul.bf16.gmra.mxu0 %v9500
  %v9576 = vpop.f32.mrf.mxu0
  %v9577 = vadd.f32 0.0, %v9576
  %v9578 = vpop.f32.mrf.mxu0
  %v9579 = vadd.f32 0.0, %v9578
  %9580 = vmatmul.bf16.gmra.mxu0 %v9503
  %v9581 = vpop.f32.mrf.mxu0
  %v9582 = vadd.f32 0.0, %v9581
  %v9583 = vpop.f32.mrf.mxu0
  %v9584 = vadd.f32 0.0, %v9583
  %9585 = vmatmul.bf16.gmra.mxu0 %v9506
  %v9586 = vpop.f32.mrf.mxu0
  %v9587 = vadd.f32 0.0, %v9586
  %v9588 = vpop.f32.mrf.mxu0
  %v9589 = vadd.f32 0.0, %v9588
  %9590 = vmatmul.bf16.gmra.mxu0 %v9509
  %v9591 = vpop.f32.mrf.mxu0
  %v9592 = vadd.f32 0.0, %v9591
  %v9593 = vpop.f32.mrf.mxu0
  %v9594 = vadd.f32 0.0, %v9593
  %9595 = vmatmul.bf16.gmra.mxu0 %v9512
  %v9596 = vpop.f32.mrf.mxu0
  %v9597 = vadd.f32 0.0, %v9596
  %v9598 = vpop.f32.mrf.mxu0
  %v9599 = vadd.f32 0.0, %v9598
  %9600 = vmatmul.bf16.gmra.mxu0 %v9515
  %v9601 = vpop.f32.mrf.mxu0
  %v9602 = vadd.f32 0.0, %v9601
  %v9603 = vpop.f32.mrf.mxu0
  %v9604 = vadd.f32 0.0, %v9603
  %9605 = vdwg.mxu0
  %v9606 = vadd.f32 %v9074, %v9527
  %v9607 = vadd.f32 %v9075, %v9529
  %v9608 = vadd.f32 %v9076, %v9532
  %v9609 = vadd.f32 %v9077, %v9534
  %v9610 = vadd.f32 %v9078, %v9537
  %v9611 = vadd.f32 %v9079, %v9539
  %v9612 = vadd.f32 %v9080, %v9542
  %v9613 = vadd.f32 %v9081, %v9544
  %v9614 = vadd.f32 %v9082, %v9547
  %v9615 = vadd.f32 %v9083, %v9549
  %v9616 = vadd.f32 %v9084, %v9552
  %v9617 = vadd.f32 %v9085, %v9554
  %v9618 = vadd.f32 %v9086, %v9557
  %v9619 = vadd.f32 %v9087, %v9559
  %v9620 = vadd.f32 %v9088, %v9562
  %v9621 = vadd.f32 %v9089, %v9564
  %v9622 = vadd.f32 %v9090, %v9567
  %v9623 = vadd.f32 %v9091, %v9569
  %v9624 = vadd.f32 %v9092, %v9572
  %v9625 = vadd.f32 %v9093, %v9574
  %v9626 = vadd.f32 %v9094, %v9577
  %v9627 = vadd.f32 %v9095, %v9579
  %v9628 = vadd.f32 %v9096, %v9582
  %v9629 = vadd.f32 %v9097, %v9584
  %v9630 = vadd.f32 %v9098, %v9587
  %v9631 = vadd.f32 %v9099, %v9589
  %v9632 = vadd.f32 %v9100, %v9592
  %v9633 = vadd.f32 %v9101, %v9594
  %v9634 = vadd.f32 %v9102, %v9597
  %v9635 = vadd.f32 %v9103, %v9599
  %v9636 = vadd.f32 %v9104, %v9602
  %v9637 = vadd.f32 %v9105, %v9604
  %s9638 = scalar_lea.vmem %s3, 432
  %v9639 = vld [vmem:[%s9638] sm:$0xf]
  %v9640 = vld [vmem:[%s9638 + $0x4] sm:$0xf]
  %v9641 = vld [vmem:[%s9638 + $0x8] sm:$0xf]
  %v9642 = vld [vmem:[%s9638 + $0xc] sm:$0xf]
  %v9643 = vld [vmem:[%s9638 + $0x10] sm:$0xf]
  %v9644 = vld [vmem:[%s9638 + $0x14] sm:$0xf]
  %v9645 = vld [vmem:[%s9638 + $0x18] sm:$0xf]
  %v9646 = vld [vmem:[%s9638 + $0x1c] sm:$0xf]
  %v9647 = vld [vmem:[%s9638 + $0x20] sm:$0xf]
  %v9648 = vld [vmem:[%s9638 + $0x24] sm:$0xf]
  %v9649 = vld [vmem:[%s9638 + $0x28] sm:$0xf]
  %v9650 = vld [vmem:[%s9638 + $0x2c] sm:$0xf]
  %v9663 = vunpack.c.l.b16 %v9639
  %v9664 = vunpack.c.l.b16 %v9640
  %v9665 = vunpack.c.l.b16 %v9641
  %v9666 = vunpack.c.l.b16 %v9642
  %v9667 = vunpack.c.l.b16 %v9643
  %v9668 = vunpack.c.l.b16 %v9644
  %v9669 = vunpack.c.l.b16 %v9645
  %v9670 = vunpack.c.l.b16 %v9646
  %v9671 = vunpack.c.l.b16 %v9647
  %v9672 = vunpack.c.l.b16 %v9648
  %v9673 = vunpack.c.l.b16 %v9649
  %v9674 = vunpack.c.l.b16 %v9650
  %v9675 = vpack.c.b16 %v9664, %v9663
  %v9676 = vpack.c.b16 %v9666, %v9665
  %v9677 = vpack.c.b16 %v9668, %v9667
  %v9678 = vpack.c.b16 %v9670, %v9669
  %v9679 = vpack.c.b16 %v9672, %v9671
  %v9680 = vpack.c.b16 %v9674, %v9673
  %9687 = vmatpush.bf16.msra.mxu0 0
  %9688 = vmatpush.bf16.msra.mxu0 0
  %9689 = vmatpush.bf16.msra.mxu0 %v9680
  %9690 = vmatpush.bf16.msra.mxu0 %v9679
  %9691 = vmatpush.bf16.msra.mxu0 %v9678
  %9692 = vmatpush.bf16.msra.mxu0 %v9677
  %9693 = vmatpush.bf16.msra.mxu0 %v9676
  %9694 = vmatpush.bf16.msra.mxu0 %v9675
  %9695 = vmatmul.bf16.gmra.mxu0 %v9470
  %v9696 = vpop.f32.mrf.mxu0
  %v9697 = vadd.f32 0.0, %v9696
  %v9698 = vpop.f32.mrf.mxu0
  %v9699 = vadd.f32 0.0, %v9698
  %9700 = vmatmul.bf16.gmra.mxu0 %v9473
  %v9701 = vpop.f32.mrf.mxu0
  %v9702 = vadd.f32 0.0, %v9701
  %v9703 = vpop.f32.mrf.mxu0
  %v9704 = vadd.f32 0.0, %v9703
  %9705 = vmatmul.bf16.gmra.mxu0 %v9476
  %v9706 = vpop.f32.mrf.mxu0
  %v9707 = vadd.f32 0.0, %v9706
  %v9708 = vpop.f32.mrf.mxu0
  %v9709 = vadd.f32 0.0, %v9708
  %9710 = vmatmul.bf16.gmra.mxu0 %v9479
  %v9711 = vpop.f32.mrf.mxu0
  %v9712 = vadd.f32 0.0, %v9711
  %v9713 = vpop.f32.mrf.mxu0
  %v9714 = vadd.f32 0.0, %v9713
  %9715 = vmatmul.bf16.gmra.mxu0 %v9482
  %v9716 = vpop.f32.mrf.mxu0
  %v9717 = vadd.f32 0.0, %v9716
  %v9718 = vpop.f32.mrf.mxu0
  %v9719 = vadd.f32 0.0, %v9718
  %9720 = vmatmul.bf16.gmra.mxu0 %v9485
  %v9721 = vpop.f32.mrf.mxu0
  %v9722 = vadd.f32 0.0, %v9721
  %v9723 = vpop.f32.mrf.mxu0
  %v9724 = vadd.f32 0.0, %v9723
  %9725 = vmatmul.bf16.gmra.mxu0 %v9488
  %v9726 = vpop.f32.mrf.mxu0
  %v9727 = vadd.f32 0.0, %v9726
  %v9728 = vpop.f32.mrf.mxu0
  %v9729 = vadd.f32 0.0, %v9728
  %9730 = vmatmul.bf16.gmra.mxu0 %v9491
  %v9731 = vpop.f32.mrf.mxu0
  %v9732 = vadd.f32 0.0, %v9731
  %v9733 = vpop.f32.mrf.mxu0
  %v9734 = vadd.f32 0.0, %v9733
  %9735 = vmatmul.bf16.gmra.mxu0 %v9494
  %v9736 = vpop.f32.mrf.mxu0
  %v9737 = vadd.f32 0.0, %v9736
  %v9738 = vpop.f32.mrf.mxu0
  %v9739 = vadd.f32 0.0, %v9738
  %9740 = vmatmul.bf16.gmra.mxu0 %v9497
  %v9741 = vpop.f32.mrf.mxu0
  %v9742 = vadd.f32 0.0, %v9741
  %v9743 = vpop.f32.mrf.mxu0
  %v9744 = vadd.f32 0.0, %v9743
  %9745 = vmatmul.bf16.gmra.mxu0 %v9500
  %v9746 = vpop.f32.mrf.mxu0
  %v9747 = vadd.f32 0.0, %v9746
  %v9748 = vpop.f32.mrf.mxu0
  %v9749 = vadd.f32 0.0, %v9748
  %9750 = vmatmul.bf16.gmra.mxu0 %v9503
  %v9751 = vpop.f32.mrf.mxu0
  %v9752 = vadd.f32 0.0, %v9751
  %v9753 = vpop.f32.mrf.mxu0
  %v9754 = vadd.f32 0.0, %v9753
  %9755 = vmatmul.bf16.gmra.mxu0 %v9506
  %v9756 = vpop.f32.mrf.mxu0
  %v9757 = vadd.f32 0.0, %v9756
  %v9758 = vpop.f32.mrf.mxu0
  %v9759 = vadd.f32 0.0, %v9758
  %9760 = vmatmul.bf16.gmra.mxu0 %v9509
  %v9761 = vpop.f32.mrf.mxu0
  %v9762 = vadd.f32 0.0, %v9761
  %v9763 = vpop.f32.mrf.mxu0
  %v9764 = vadd.f32 0.0, %v9763
  %9765 = vmatmul.bf16.gmra.mxu0 %v9512
  %v9766 = vpop.f32.mrf.mxu0
  %v9767 = vadd.f32 0.0, %v9766
  %v9768 = vpop.f32.mrf.mxu0
  %v9769 = vadd.f32 0.0, %v9768
  %9770 = vmatmul.bf16.gmra.mxu0 %v9515
  %v9771 = vpop.f32.mrf.mxu0
  %v9772 = vadd.f32 0.0, %v9771
  %v9773 = vpop.f32.mrf.mxu0
  %v9774 = vadd.f32 0.0, %v9773
  %9775 = vdwg.mxu0
  %v9776 = vadd.f32 %v9244, %v9697
  %v9777 = vadd.f32 %v9245, %v9699
  %v9778 = vadd.f32 %v9246, %v9702
  %v9779 = vadd.f32 %v9247, %v9704
  %v9780 = vadd.f32 %v9248, %v9707
  %v9781 = vadd.f32 %v9249, %v9709
  %v9782 = vadd.f32 %v9250, %v9712
  %v9783 = vadd.f32 %v9251, %v9714
  %v9784 = vadd.f32 %v9252, %v9717
  %v9785 = vadd.f32 %v9253, %v9719
  %v9786 = vadd.f32 %v9254, %v9722
  %v9787 = vadd.f32 %v9255, %v9724
  %v9788 = vadd.f32 %v9256, %v9727
  %v9789 = vadd.f32 %v9257, %v9729
  %v9790 = vadd.f32 %v9258, %v9732
  %v9791 = vadd.f32 %v9259, %v9734
  %v9792 = vadd.f32 %v9260, %v9737
  %v9793 = vadd.f32 %v9261, %v9739
  %v9794 = vadd.f32 %v9262, %v9742
  %v9795 = vadd.f32 %v9263, %v9744
  %v9796 = vadd.f32 %v9264, %v9747
  %v9797 = vadd.f32 %v9265, %v9749
  %v9798 = vadd.f32 %v9266, %v9752
  %v9799 = vadd.f32 %v9267, %v9754
  %v9800 = vadd.f32 %v9268, %v9757
  %v9801 = vadd.f32 %v9269, %v9759
  %v9802 = vadd.f32 %v9270, %v9762
  %v9803 = vadd.f32 %v9271, %v9764
  %v9804 = vadd.f32 %v9272, %v9767
  %v9805 = vadd.f32 %v9273, %v9769
  %v9806 = vadd.f32 %v9274, %v9772
  %v9807 = vadd.f32 %v9275, %v9774
  %v9808 = vmax.f32 %v9606, %v9776
  %v9809 = vmax.f32 %v9607, %v9777
  %v9810 = vmax.f32 %v9608, %v9778
  %v9811 = vmax.f32 %v9609, %v9779
  %v9812 = vmax.f32 %v9610, %v9780
  %v9813 = vmax.f32 %v9611, %v9781
  %v9814 = vmax.f32 %v9612, %v9782
  %v9815 = vmax.f32 %v9613, %v9783
  %v9816 = vmax.f32 %v9614, %v9784
  %v9817 = vmax.f32 %v9615, %v9785
  %v9818 = vmax.f32 %v9616, %v9786
  %v9819 = vmax.f32 %v9617, %v9787
  %v9820 = vmax.f32 %v9618, %v9788
  %v9821 = vmax.f32 %v9619, %v9789
  %v9822 = vmax.f32 %v9620, %v9790
  %v9823 = vmax.f32 %v9621, %v9791
  %v9824 = vmax.f32 %v9622, %v9792
  %v9825 = vmax.f32 %v9623, %v9793
  %v9826 = vmax.f32 %v9624, %v9794
  %v9827 = vmax.f32 %v9625, %v9795
  %v9828 = vmax.f32 %v9626, %v9796
  %v9829 = vmax.f32 %v9627, %v9797
  %v9830 = vmax.f32 %v9628, %v9798
  %v9831 = vmax.f32 %v9629, %v9799
  %v9832 = vmax.f32 %v9630, %v9800
  %v9833 = vmax.f32 %v9631, %v9801
  %v9834 = vmax.f32 %v9632, %v9802
  %v9835 = vmax.f32 %v9633, %v9803
  %v9836 = vmax.f32 %v9634, %v9804
  %v9837 = vmax.f32 %v9635, %v9805
  %v9838 = vmax.f32 %v9636, %v9806
  %v9839 = vmax.f32 %v9637, %v9807
  %v9872 = vrot.slane %v9808, 1
  %v9873 = vrot.slane %v9809, 1
  %v9874 = vrot.slane %v9810, 1
  %v9875 = vrot.slane %v9811, 1
  %v9876 = vrot.slane %v9812, 1
  %v9877 = vrot.slane %v9813, 1
  %v9878 = vrot.slane %v9814, 1
  %v9879 = vrot.slane %v9815, 1
  %v9880 = vrot.slane %v9816, 1
  %v9881 = vrot.slane %v9817, 1
  %v9882 = vrot.slane %v9818, 1
  %v9883 = vrot.slane %v9819, 1
  %v9884 = vrot.slane %v9820, 1
  %v9885 = vrot.slane %v9821, 1
  %v9886 = vrot.slane %v9822, 1
  %v9887 = vrot.slane %v9823, 1
  %v9888 = vrot.slane %v9824, 1
  %v9889 = vrot.slane %v9825, 1
  %v9890 = vrot.slane %v9826, 1
  %v9891 = vrot.slane %v9827, 1
  %v9892 = vrot.slane %v9828, 1
  %v9893 = vrot.slane %v9829, 1
  %v9894 = vrot.slane %v9830, 1
  %v9895 = vrot.slane %v9831, 1
  %v9896 = vrot.slane %v9832, 1
  %v9897 = vrot.slane %v9833, 1
  %v9898 = vrot.slane %v9834, 1
  %v9899 = vrot.slane %v9835, 1
  %v9900 = vrot.slane %v9836, 1
  %v9901 = vrot.slane %v9837, 1
  %v9902 = vrot.slane %v9838, 1
  %v9903 = vrot.slane %v9839, 1
  %v9936 = vmax.f32 %v9808, %v9872
  %v9937 = vmax.f32 %v9809, %v9873
  %v9938 = vmax.f32 %v9810, %v9874
  %v9939 = vmax.f32 %v9811, %v9875
  %v9940 = vmax.f32 %v9812, %v9876
  %v9941 = vmax.f32 %v9813, %v9877
  %v9942 = vmax.f32 %v9814, %v9878
  %v9943 = vmax.f32 %v9815, %v9879
  %v9944 = vmax.f32 %v9816, %v9880
  %v9945 = vmax.f32 %v9817, %v9881
  %v9946 = vmax.f32 %v9818, %v9882
  %v9947 = vmax.f32 %v9819, %v9883
  %v9948 = vmax.f32 %v9820, %v9884
  %v9949 = vmax.f32 %v9821, %v9885
  %v9950 = vmax.f32 %v9822, %v9886
  %v9951 = vmax.f32 %v9823, %v9887
  %v9952 = vmax.f32 %v9824, %v9888
  %v9953 = vmax.f32 %v9825, %v9889
  %v9954 = vmax.f32 %v9826, %v9890
  %v9955 = vmax.f32 %v9827, %v9891
  %v9956 = vmax.f32 %v9828, %v9892
  %v9957 = vmax.f32 %v9829, %v9893
  %v9958 = vmax.f32 %v9830, %v9894
  %v9959 = vmax.f32 %v9831, %v9895
  %v9960 = vmax.f32 %v9832, %v9896
  %v9961 = vmax.f32 %v9833, %v9897
  %v9962 = vmax.f32 %v9834, %v9898
  %v9963 = vmax.f32 %v9835, %v9899
  %v9964 = vmax.f32 %v9836, %v9900
  %v9965 = vmax.f32 %v9837, %v9901
  %v9966 = vmax.f32 %v9838, %v9902
  %v9967 = vmax.f32 %v9839, %v9903
  %v10000 = vrot.slane %v9936, 1
  %v10001 = vrot.slane %v9937, 1
  %v10002 = vrot.slane %v9938, 1
  %v10003 = vrot.slane %v9939, 1
  %v10004 = vrot.slane %v9940, 1
  %v10005 = vrot.slane %v9941, 1
  %v10006 = vrot.slane %v9942, 1
  %v10007 = vrot.slane %v9943, 1
  %v10008 = vrot.slane %v9944, 1
  %v10009 = vrot.slane %v9945, 1
  %v10010 = vrot.slane %v9946, 1
  %v10011 = vrot.slane %v9947, 1
  %v10012 = vrot.slane %v9948, 1
  %v10013 = vrot.slane %v9949, 1
  %v10014 = vrot.slane %v9950, 1
  %v10015 = vrot.slane %v9951, 1
  %v10016 = vrot.slane %v9952, 1
  %v10017 = vrot.slane %v9953, 1
  %v10018 = vrot.slane %v9954, 1
  %v10019 = vrot.slane %v9955, 1
  %v10020 = vrot.slane %v9956, 1
  %v10021 = vrot.slane %v9957, 1
  %v10022 = vrot.slane %v9958, 1
  %v10023 = vrot.slane %v9959, 1
  %v10024 = vrot.slane %v9960, 1
  %v10025 = vrot.slane %v9961, 1
  %v10026 = vrot.slane %v9962, 1
  %v10027 = vrot.slane %v9963, 1
  %v10028 = vrot.slane %v9964, 1
  %v10029 = vrot.slane %v9965, 1
  %v10030 = vrot.slane %v9966, 1
  %v10031 = vrot.slane %v9967, 1
  %v10064 = vrot.slane %v9936, 2
  %v10065 = vrot.slane %v9937, 2
  %v10066 = vrot.slane %v9938, 2
  %v10067 = vrot.slane %v9939, 2
  %v10068 = vrot.slane %v9940, 2
  %v10069 = vrot.slane %v9941, 2
  %v10070 = vrot.slane %v9942, 2
  %v10071 = vrot.slane %v9943, 2
  %v10072 = vrot.slane %v9944, 2
  %v10073 = vrot.slane %v9945, 2
  %v10074 = vrot.slane %v9946, 2
  %v10075 = vrot.slane %v9947, 2
  %v10076 = vrot.slane %v9948, 2
  %v10077 = vrot.slane %v9949, 2
  %v10078 = vrot.slane %v9950, 2
  %v10079 = vrot.slane %v9951, 2
  %v10080 = vrot.slane %v9952, 2
  %v10081 = vrot.slane %v9953, 2
  %v10082 = vrot.slane %v9954, 2
  %v10083 = vrot.slane %v9955, 2
  %v10084 = vrot.slane %v9956, 2
  %v10085 = vrot.slane %v9957, 2
  %v10086 = vrot.slane %v9958, 2
  %v10087 = vrot.slane %v9959, 2
  %v10088 = vrot.slane %v9960, 2
  %v10089 = vrot.slane %v9961, 2
  %v10090 = vrot.slane %v9962, 2
  %v10091 = vrot.slane %v9963, 2
  %v10092 = vrot.slane %v9964, 2
  %v10093 = vrot.slane %v9965, 2
  %v10094 = vrot.slane %v9966, 2
  %v10095 = vrot.slane %v9967, 2
  %v10128 = vrot.slane %v9936, 3
  %v10129 = vrot.slane %v9937, 3
  %v10130 = vrot.slane %v9938, 3
  %v10131 = vrot.slane %v9939, 3
  %v10132 = vrot.slane %v9940, 3
  %v10133 = vrot.slane %v9941, 3
  %v10134 = vrot.slane %v9942, 3
  %v10135 = vrot.slane %v9943, 3
  %v10136 = vrot.slane %v9944, 3
  %v10137 = vrot.slane %v9945, 3
  %v10138 = vrot.slane %v9946, 3
  %v10139 = vrot.slane %v9947, 3
  %v10140 = vrot.slane %v9948, 3
  %v10141 = vrot.slane %v9949, 3
  %v10142 = vrot.slane %v9950, 3
  %v10143 = vrot.slane %v9951, 3
  %v10144 = vrot.slane %v9952, 3
  %v10145 = vrot.slane %v9953, 3
  %v10146 = vrot.slane %v9954, 3
  %v10147 = vrot.slane %v9955, 3
  %v10148 = vrot.slane %v9956, 3
  %v10149 = vrot.slane %v9957, 3
  %v10150 = vrot.slane %v9958, 3
  %v10151 = vrot.slane %v9959, 3
  %v10152 = vrot.slane %v9960, 3
  %v10153 = vrot.slane %v9961, 3
  %v10154 = vrot.slane %v9962, 3
  %v10155 = vrot.slane %v9963, 3
  %v10156 = vrot.slane %v9964, 3
  %v10157 = vrot.slane %v9965, 3
  %v10158 = vrot.slane %v9966, 3
  %v10159 = vrot.slane %v9967, 3
  %v10192 = vsel %vm6882, %v9936, %v10000
  %v10193 = vsel %vm6882, %v9937, %v10001
  %v10194 = vsel %vm6882, %v9938, %v10002
  %v10195 = vsel %vm6882, %v9939, %v10003
  %v10196 = vsel %vm6882, %v9940, %v10004
  %v10197 = vsel %vm6882, %v9941, %v10005
  %v10198 = vsel %vm6882, %v9942, %v10006
  %v10199 = vsel %vm6882, %v9943, %v10007
  %v10200 = vsel %vm6882, %v9944, %v10008
  %v10201 = vsel %vm6882, %v9945, %v10009
  %v10202 = vsel %vm6882, %v9946, %v10010
  %v10203 = vsel %vm6882, %v9947, %v10011
  %v10204 = vsel %vm6882, %v9948, %v10012
  %v10205 = vsel %vm6882, %v9949, %v10013
  %v10206 = vsel %vm6882, %v9950, %v10014
  %v10207 = vsel %vm6882, %v9951, %v10015
  %v10208 = vsel %vm6882, %v9952, %v10016
  %v10209 = vsel %vm6882, %v9953, %v10017
  %v10210 = vsel %vm6882, %v9954, %v10018
  %v10211 = vsel %vm6882, %v9955, %v10019
  %v10212 = vsel %vm6882, %v9956, %v10020
  %v10213 = vsel %vm6882, %v9957, %v10021
  %v10214 = vsel %vm6882, %v9958, %v10022
  %v10215 = vsel %vm6882, %v9959, %v10023
  %v10216 = vsel %vm6882, %v9960, %v10024
  %v10217 = vsel %vm6882, %v9961, %v10025
  %v10218 = vsel %vm6882, %v9962, %v10026
  %v10219 = vsel %vm6882, %v9963, %v10027
  %v10220 = vsel %vm6882, %v9964, %v10028
  %v10221 = vsel %vm6882, %v9965, %v10029
  %v10222 = vsel %vm6882, %v9966, %v10030
  %v10223 = vsel %vm6882, %v9967, %v10031
  %v10224 = vsel %vm6915, %v10192, %v10064
  %v10225 = vsel %vm6915, %v10193, %v10065
  %v10226 = vsel %vm6915, %v10194, %v10066
  %v10227 = vsel %vm6915, %v10195, %v10067
  %v10228 = vsel %vm6915, %v10196, %v10068
  %v10229 = vsel %vm6915, %v10197, %v10069
  %v10230 = vsel %vm6915, %v10198, %v10070
  %v10231 = vsel %vm6915, %v10199, %v10071
  %v10232 = vsel %vm6915, %v10200, %v10072
  %v10233 = vsel %vm6915, %v10201, %v10073
  %v10234 = vsel %vm6915, %v10202, %v10074
  %v10235 = vsel %vm6915, %v10203, %v10075
  %v10236 = vsel %vm6915, %v10204, %v10076
  %v10237 = vsel %vm6915, %v10205, %v10077
  %v10238 = vsel %vm6915, %v10206, %v10078
  %v10239 = vsel %vm6915, %v10207, %v10079
  %v10240 = vsel %vm6915, %v10208, %v10080
  %v10241 = vsel %vm6915, %v10209, %v10081
  %v10242 = vsel %vm6915, %v10210, %v10082
  %v10243 = vsel %vm6915, %v10211, %v10083
  %v10244 = vsel %vm6915, %v10212, %v10084
  %v10245 = vsel %vm6915, %v10213, %v10085
  %v10246 = vsel %vm6915, %v10214, %v10086
  %v10247 = vsel %vm6915, %v10215, %v10087
  %v10248 = vsel %vm6915, %v10216, %v10088
  %v10249 = vsel %vm6915, %v10217, %v10089
  %v10250 = vsel %vm6915, %v10218, %v10090
  %v10251 = vsel %vm6915, %v10219, %v10091
  %v10252 = vsel %vm6915, %v10220, %v10092
  %v10253 = vsel %vm6915, %v10221, %v10093
  %v10254 = vsel %vm6915, %v10222, %v10094
  %v10255 = vsel %vm6915, %v10223, %v10095
  %v10256 = vsel %vm6948, %v10224, %v10128
  %v10257 = vsel %vm6948, %v10225, %v10129
  %v10258 = vsel %vm6948, %v10226, %v10130
  %v10259 = vsel %vm6948, %v10227, %v10131
  %v10260 = vsel %vm6948, %v10228, %v10132
  %v10261 = vsel %vm6948, %v10229, %v10133
  %v10262 = vsel %vm6948, %v10230, %v10134
  %v10263 = vsel %vm6948, %v10231, %v10135
  %v10264 = vsel %vm6948, %v10232, %v10136
  %v10265 = vsel %vm6948, %v10233, %v10137
  %v10266 = vsel %vm6948, %v10234, %v10138
  %v10267 = vsel %vm6948, %v10235, %v10139
  %v10268 = vsel %vm6948, %v10236, %v10140
  %v10269 = vsel %vm6948, %v10237, %v10141
  %v10270 = vsel %vm6948, %v10238, %v10142
  %v10271 = vsel %vm6948, %v10239, %v10143
  %v10272 = vsel %vm6948, %v10240, %v10144
  %v10273 = vsel %vm6948, %v10241, %v10145
  %v10274 = vsel %vm6948, %v10242, %v10146
  %v10275 = vsel %vm6948, %v10243, %v10147
  %v10276 = vsel %vm6948, %v10244, %v10148
  %v10277 = vsel %vm6948, %v10245, %v10149
  %v10278 = vsel %vm6948, %v10246, %v10150
  %v10279 = vsel %vm6948, %v10247, %v10151
  %v10280 = vsel %vm6948, %v10248, %v10152
  %v10281 = vsel %vm6948, %v10249, %v10153
  %v10282 = vsel %vm6948, %v10250, %v10154
  %v10283 = vsel %vm6948, %v10251, %v10155
  %v10284 = vsel %vm6948, %v10252, %v10156
  %v10285 = vsel %vm6948, %v10253, %v10157
  %v10286 = vsel %vm6948, %v10254, %v10158
  %v10287 = vsel %vm6948, %v10255, %v10159
  %v10288 = vld [vmem:[%s4] sm:$0x1]
  %v10290 = vperm.slane %v10288, 0
  %v10292 = vadd.f32 %v10256, %v10290
  %v10293 = vadd.f32 %v10257, %v10290
  %v10294 = vadd.f32 %v10258, %v10290
  %v10295 = vadd.f32 %v10259, %v10290
  %v10296 = vadd.f32 %v10260, %v10290
  %v10297 = vadd.f32 %v10261, %v10290
  %v10298 = vadd.f32 %v10262, %v10290
  %v10299 = vadd.f32 %v10263, %v10290
  %v10300 = vadd.f32 %v10264, %v10290
  %v10301 = vadd.f32 %v10265, %v10290
  %v10302 = vadd.f32 %v10266, %v10290
  %v10303 = vadd.f32 %v10267, %v10290
  %v10304 = vadd.f32 %v10268, %v10290
  %v10305 = vadd.f32 %v10269, %v10290
  %v10306 = vadd.f32 %v10270, %v10290
  %v10307 = vadd.f32 %v10271, %v10290
  %v10308 = vadd.f32 %v10272, %v10290
  %v10309 = vadd.f32 %v10273, %v10290
  %v10310 = vadd.f32 %v10274, %v10290
  %v10311 = vadd.f32 %v10275, %v10290
  %v10312 = vadd.f32 %v10276, %v10290
  %v10313 = vadd.f32 %v10277, %v10290
  %v10314 = vadd.f32 %v10278, %v10290
  %v10315 = vadd.f32 %v10279, %v10290
  %v10316 = vadd.f32 %v10280, %v10290
  %v10317 = vadd.f32 %v10281, %v10290
  %v10318 = vadd.f32 %v10282, %v10290
  %v10319 = vadd.f32 %v10283, %v10290
  %v10320 = vadd.f32 %v10284, %v10290
  %v10321 = vadd.f32 %v10285, %v10290
  %v10322 = vadd.f32 %v10286, %v10290
  %v10323 = vadd.f32 %v10287, %v10290
  %v10324 = vmax.f32 %v10292, 0.0
  %v10325 = vmax.f32 %v10293, 0.0
  %v10326 = vmax.f32 %v10294, 0.0
  %v10327 = vmax.f32 %v10295, 0.0
  %v10328 = vmax.f32 %v10296, 0.0
  %v10329 = vmax.f32 %v10297, 0.0
  %v10330 = vmax.f32 %v10298, 0.0
  %v10331 = vmax.f32 %v10299, 0.0
  %v10332 = vmax.f32 %v10300, 0.0
  %v10333 = vmax.f32 %v10301, 0.0
  %v10334 = vmax.f32 %v10302, 0.0
  %v10335 = vmax.f32 %v10303, 0.0
  %v10336 = vmax.f32 %v10304, 0.0
  %v10337 = vmax.f32 %v10305, 0.0
  %v10338 = vmax.f32 %v10306, 0.0
  %v10339 = vmax.f32 %v10307, 0.0
  %v10340 = vmax.f32 %v10308, 0.0
  %v10341 = vmax.f32 %v10309, 0.0
  %v10342 = vmax.f32 %v10310, 0.0
  %v10343 = vmax.f32 %v10311, 0.0
  %v10344 = vmax.f32 %v10312, 0.0
  %v10345 = vmax.f32 %v10313, 0.0
  %v10346 = vmax.f32 %v10314, 0.0
  %v10347 = vmax.f32 %v10315, 0.0
  %v10348 = vmax.f32 %v10316, 0.0
  %v10349 = vmax.f32 %v10317, 0.0
  %v10350 = vmax.f32 %v10318, 0.0
  %v10351 = vmax.f32 %v10319, 0.0
  %v10352 = vmax.f32 %v10320, 0.0
  %v10353 = vmax.f32 %v10321, 0.0
  %v10354 = vmax.f32 %v10322, 0.0
  %v10355 = vmax.f32 %v10323, 0.0
  %v10356 = vpack.c.bf16 %v10324, %v10324
  %v10357 = vpack.c.bf16 %v10325, %v10325
  %v10358 = vpack.c.bf16 %v10326, %v10326
  %v10359 = vpack.c.bf16 %v10327, %v10327
  %v10360 = vpack.c.bf16 %v10328, %v10328
  %v10361 = vpack.c.bf16 %v10329, %v10329
  %v10362 = vpack.c.bf16 %v10330, %v10330
  %v10363 = vpack.c.bf16 %v10331, %v10331
  %v10364 = vpack.c.bf16 %v10332, %v10332
  %v10365 = vpack.c.bf16 %v10333, %v10333
  %v10366 = vpack.c.bf16 %v10334, %v10334
  %v10367 = vpack.c.bf16 %v10335, %v10335
  %v10368 = vpack.c.bf16 %v10336, %v10336
  %v10369 = vpack.c.bf16 %v10337, %v10337
  %v10370 = vpack.c.bf16 %v10338, %v10338
  %v10371 = vpack.c.bf16 %v10339, %v10339
  %v10372 = vpack.c.bf16 %v10340, %v10340
  %v10373 = vpack.c.bf16 %v10341, %v10341
  %v10374 = vpack.c.bf16 %v10342, %v10342
  %v10375 = vpack.c.bf16 %v10343, %v10343
  %v10376 = vpack.c.bf16 %v10344, %v10344
  %v10377 = vpack.c.bf16 %v10345, %v10345
  %v10378 = vpack.c.bf16 %v10346, %v10346
  %v10379 = vpack.c.bf16 %v10347, %v10347
  %v10380 = vpack.c.bf16 %v10348, %v10348
  %v10381 = vpack.c.bf16 %v10349, %v10349
  %v10382 = vpack.c.bf16 %v10350, %v10350
  %v10383 = vpack.c.bf16 %v10351, %v10351
  %v10384 = vpack.c.bf16 %v10352, %v10352
  %v10385 = vpack.c.bf16 %v10353, %v10353
  %v10386 = vpack.c.bf16 %v10354, %v10354
  %v10387 = vpack.c.bf16 %v10355, %v10355
  %v10388 = vld [vmem:[%s5] sm:$0xf]
  %v10389 = vld [vmem:[%s5 + $0x4] sm:$0xf]
  %v10390 = vld [vmem:[%s5 + $0x8] sm:$0xf]
  %v10391 = vld [vmem:[%s5 + $0xc] sm:$0xf]
  %v10392 = vld [vmem:[%s5 + $0x10] sm:$0xf]
  %v10393 = vld [vmem:[%s5 + $0x14] sm:$0xf]
  %v10394 = vld [vmem:[%s5 + $0x18] sm:$0xf]
  %v10395 = vld [vmem:[%s5 + $0x1c] sm:$0xf]
  %s10396 = scalar_lea.vmem %s5, 32
  %v10397 = vld [vmem:[%s10396] sm:$0xf]
  %v10398 = vld [vmem:[%s10396 + $0x4] sm:$0xf]
  %v10399 = vld [vmem:[%s10396 + $0x8] sm:$0xf]
  %v10400 = vld [vmem:[%s10396 + $0xc] sm:$0xf]
  %v10401 = vld [vmem:[%s10396 + $0x10] sm:$0xf]
  %v10402 = vld [vmem:[%s10396 + $0x14] sm:$0xf]
  %v10403 = vld [vmem:[%s10396 + $0x18] sm:$0xf]
  %v10404 = vld [vmem:[%s10396 + $0x1c] sm:$0xf]
  %v10437 = vunpack.c.l.b16 %v10356
  %v10438 = vunpack.c.l.b16 %v10357
  %v10439 = vunpack.c.l.b16 %v10358
  %v10440 = vunpack.c.l.b16 %v10359
  %v10441 = vunpack.c.l.b16 %v10360
  %v10442 = vunpack.c.l.b16 %v10361
  %v10443 = vunpack.c.l.b16 %v10362
  %v10444 = vunpack.c.l.b16 %v10363
  %v10445 = vunpack.c.l.b16 %v10364
  %v10446 = vunpack.c.l.b16 %v10365
  %v10447 = vunpack.c.l.b16 %v10366
  %v10448 = vunpack.c.l.b16 %v10367
  %v10449 = vunpack.c.l.b16 %v10368
  %v10450 = vunpack.c.l.b16 %v10369
  %v10451 = vunpack.c.l.b16 %v10370
  %v10452 = vunpack.c.l.b16 %v10371
  %v10453 = vunpack.c.l.b16 %v10372
  %v10454 = vunpack.c.l.b16 %v10373
  %v10455 = vunpack.c.l.b16 %v10374
  %v10456 = vunpack.c.l.b16 %v10375
  %v10457 = vunpack.c.l.b16 %v10376
  %v10458 = vunpack.c.l.b16 %v10377
  %v10459 = vunpack.c.l.b16 %v10378
  %v10460 = vunpack.c.l.b16 %v10379
  %v10461 = vunpack.c.l.b16 %v10380
  %v10462 = vunpack.c.l.b16 %v10381
  %v10463 = vunpack.c.l.b16 %v10382
  %v10464 = vunpack.c.l.b16 %v10383
  %v10465 = vunpack.c.l.b16 %v10384
  %v10466 = vunpack.c.l.b16 %v10385
  %v10467 = vunpack.c.l.b16 %v10386
  %v10468 = vunpack.c.l.b16 %v10387
  %v10469 = vrot.slane %v10437, 1
  %vm10470 = vcmask 1041409
  %v10471 = vsel %vm10470, %v10438, %v10469
  %v10472 = vrot.slane %v10439, 7
  %vm10473 = vcmask 1042434
  %v10474 = vsel %vm10473, %v10472, %v10471
  %v10475 = vrot.slane %v10440, 6
  %vm10476 = vcmask 1043459
  %v10477 = vsel %vm10476, %v10475, %v10474
  %v10478 = vrot.slane %v10441, 5
  %vm10479 = vcmask 1044484
  %v10480 = vsel %vm10479, %v10478, %v10477
  %v10481 = vrot.slane %v10442, 4
  %vm10482 = vcmask 1045509
  %v10483 = vsel %vm10482, %v10481, %v10480
  %v10484 = vrot.slane %v10443, 3
  %vm10485 = vcmask 1046534
  %v10486 = vsel %vm10485, %v10484, %v10483
  %v10487 = vrot.slane %v10444, 2
  %vm10488 = vcmask 1047559
  %v10489 = vsel %vm10488, %v10487, %v10486
  %v10490 = vrot.slane %v10445, 1
  %v10491 = vsel %vm10470, %v10446, %v10490
  %v10492 = vrot.slane %v10447, 7
  %v10493 = vsel %vm10473, %v10492, %v10491
  %v10494 = vrot.slane %v10448, 6
  %v10495 = vsel %vm10476, %v10494, %v10493
  %v10496 = vrot.slane %v10449, 5
  %v10497 = vsel %vm10479, %v10496, %v10495
  %v10498 = vrot.slane %v10450, 4
  %v10499 = vsel %vm10482, %v10498, %v10497
  %v10500 = vrot.slane %v10451, 3
  %v10501 = vsel %vm10485, %v10500, %v10499
  %v10502 = vrot.slane %v10452, 2
  %v10503 = vsel %vm10488, %v10502, %v10501
  %v10504 = vrot.slane %v10453, 1
  %v10505 = vsel %vm10470, %v10454, %v10504
  %v10506 = vrot.slane %v10455, 7
  %v10507 = vsel %vm10473, %v10506, %v10505
  %v10508 = vrot.slane %v10456, 6
  %v10509 = vsel %vm10476, %v10508, %v10507
  %v10510 = vrot.slane %v10457, 5
  %v10511 = vsel %vm10479, %v10510, %v10509
  %v10512 = vrot.slane %v10458, 4
  %v10513 = vsel %vm10482, %v10512, %v10511
  %v10514 = vrot.slane %v10459, 3
  %v10515 = vsel %vm10485, %v10514, %v10513
  %v10516 = vrot.slane %v10460, 2
  %v10517 = vsel %vm10488, %v10516, %v10515
  %v10518 = vrot.slane %v10461, 1
  %v10519 = vsel %vm10470, %v10462, %v10518
  %v10520 = vrot.slane %v10463, 7
  %v10521 = vsel %vm10473, %v10520, %v10519
  %v10522 = vrot.slane %v10464, 6
  %v10523 = vsel %vm10476, %v10522, %v10521
  %v10524 = vrot.slane %v10465, 5
  %v10525 = vsel %vm10479, %v10524, %v10523
  %v10526 = vrot.slane %v10466, 4
  %v10527 = vsel %vm10482, %v10526, %v10525
  %v10528 = vrot.slane %v10467, 3
  %v10529 = vsel %vm10485, %v10528, %v10527
  %v10530 = vrot.slane %v10468, 2
  %v10531 = vsel %vm10488, %v10530, %v10529
  %v10532 = vpack.c.b16 %v10503, %v10489
  %v10533 = vpack.c.b16 %v10531, %v10517
  %v10542 = vunpack.c.l.b16 %v10397
  %v10543 = vunpack.c.l.b16 %v10398
  %v10544 = vunpack.c.l.b16 %v10399
  %v10545 = vunpack.c.l.b16 %v10400
  %v10546 = vunpack.c.l.b16 %v10401
  %v10547 = vunpack.c.l.b16 %v10402
  %v10548 = vunpack.c.l.b16 %v10403
  %v10549 = vunpack.c.l.b16 %v10404
  %v10550 = vpack.c.b16 %v10543, %v10542
  %v10551 = vpack.c.b16 %v10545, %v10544
  %v10552 = vpack.c.b16 %v10547, %v10546
  %v10553 = vpack.c.b16 %v10549, %v10548
  %vm10558 = vcmask 523264
  %v10560 = vsel %vm10558, %v10532, 0
  %v10563 = vsel %vm10558, %v10533, 0
  %10565 = vmatpush.bf16.msra.mxu0 0
  %10566 = vmatpush.bf16.msra.mxu0 0
  %10567 = vmatpush.bf16.msra.mxu0 0
  %10568 = vmatpush.bf16.msra.mxu0 0
  %10569 = vmatpush.bf16.msra.mxu0 %v10553
  %10570 = vmatpush.bf16.msra.mxu0 %v10552
  %10571 = vmatpush.bf16.msra.mxu0 %v10551
  %10572 = vmatpush.bf16.msra.mxu0 %v10550
  %10573 = vmatmul.bf16.gmra.mxu0 %v10560
  %v10574 = vpop.f32.mrf.mxu0
  %v10575 = vadd.f32 0.0, %v10574
  %v10576 = vpop.f32.mrf.mxu0
  %v10577 = vadd.f32 0.0, %v10576
  %10578 = vmatmul.bf16.gmra.mxu0 %v10563
  %v10579 = vpop.f32.mrf.mxu0
  %v10580 = vadd.f32 0.0, %v10579
  %v10581 = vpop.f32.mrf.mxu0
  %v10582 = vadd.f32 0.0, %v10581
  %10583 = vdwg.mxu0
  %v10584 = vrot.slane %v10438, 7
  %v10585 = vsel %vm10470, %v10584, %v10437
  %v10586 = vrot.slane %v10439, 6
  %v10587 = vsel %vm10473, %v10586, %v10585
  %v10588 = vrot.slane %v10440, 5
  %v10589 = vsel %vm10476, %v10588, %v10587
  %v10590 = vrot.slane %v10441, 4
  %v10591 = vsel %vm10479, %v10590, %v10589
  %v10592 = vrot.slane %v10442, 3
  %v10593 = vsel %vm10482, %v10592, %v10591
  %v10594 = vrot.slane %v10443, 2
  %v10595 = vsel %vm10485, %v10594, %v10593
  %v10596 = vrot.slane %v10444, 1
  %v10597 = vsel %vm10488, %v10596, %v10595
  %v10598 = vrot.slane %v10446, 7
  %v10599 = vsel %vm10470, %v10598, %v10445
  %v10600 = vrot.slane %v10447, 6
  %v10601 = vsel %vm10473, %v10600, %v10599
  %v10602 = vrot.slane %v10448, 5
  %v10603 = vsel %vm10476, %v10602, %v10601
  %v10604 = vrot.slane %v10449, 4
  %v10605 = vsel %vm10479, %v10604, %v10603
  %v10606 = vrot.slane %v10450, 3
  %v10607 = vsel %vm10482, %v10606, %v10605
  %v10608 = vrot.slane %v10451, 2
  %v10609 = vsel %vm10485, %v10608, %v10607
  %v10610 = vrot.slane %v10452, 1
  %v10611 = vsel %vm10488, %v10610, %v10609
  %v10612 = vrot.slane %v10454, 7
  %v10613 = vsel %vm10470, %v10612, %v10453
  %v10614 = vrot.slane %v10455, 6
  %v10615 = vsel %vm10473, %v10614, %v10613
  %v10616 = vrot.slane %v10456, 5
  %v10617 = vsel %vm10476, %v10616, %v10615
  %v10618 = vrot.slane %v10457, 4
  %v10619 = vsel %vm10479, %v10618, %v10617
  %v10620 = vrot.slane %v10458, 3
  %v10621 = vsel %vm10482, %v10620, %v10619
  %v10622 = vrot.slane %v10459, 2
  %v10623 = vsel %vm10485, %v10622, %v10621
  %v10624 = vrot.slane %v10460, 1
  %v10625 = vsel %vm10488, %v10624, %v10623
  %v10626 = vrot.slane %v10462, 7
  %v10627 = vsel %vm10470, %v10626, %v10461
  %v10628 = vrot.slane %v10463, 6
  %v10629 = vsel %vm10473, %v10628, %v10627
  %v10630 = vrot.slane %v10464, 5
  %v10631 = vsel %vm10476, %v10630, %v10629
  %v10632 = vrot.slane %v10465, 4
  %v10633 = vsel %vm10479, %v10632, %v10631
  %v10634 = vrot.slane %v10466, 3
  %v10635 = vsel %vm10482, %v10634, %v10633
  %v10636 = vrot.slane %v10467, 2
  %v10637 = vsel %vm10485, %v10636, %v10635
  %v10638 = vrot.slane %v10468, 1
  %v10639 = vsel %vm10488, %v10638, %v10637
  %v10640 = vpack.c.b16 %v10611, %v10597
  %v10641 = vpack.c.b16 %v10639, %v10625
  %v10650 = vunpack.c.l.b16 %v10388
  %v10651 = vunpack.c.l.b16 %v10389
  %v10652 = vunpack.c.l.b16 %v10390
  %v10653 = vunpack.c.l.b16 %v10391
  %v10654 = vunpack.c.l.b16 %v10392
  %v10655 = vunpack.c.l.b16 %v10393
  %v10656 = vunpack.c.l.b16 %v10394
  %v10657 = vunpack.c.l.b16 %v10395
  %v10658 = vpack.c.b16 %v10651, %v10650
  %v10659 = vpack.c.b16 %v10653, %v10652
  %v10660 = vpack.c.b16 %v10655, %v10654
  %v10661 = vpack.c.b16 %v10657, %v10656
  %v10667 = vsel %vm10558, %v10640, 0
  %v10670 = vsel %vm10558, %v10641, 0
  %10672 = vmatpush.bf16.msra.mxu0 0
  %10673 = vmatpush.bf16.msra.mxu0 0
  %10674 = vmatpush.bf16.msra.mxu0 0
  %10675 = vmatpush.bf16.msra.mxu0 0
  %10676 = vmatpush.bf16.msra.mxu0 %v10661
  %10677 = vmatpush.bf16.msra.mxu0 %v10660
  %10678 = vmatpush.bf16.msra.mxu0 %v10659
  %10679 = vmatpush.bf16.msra.mxu0 %v10658
  %10680 = vmatmul.bf16.gmra.mxu0 %v10667
  %v10681 = vpop.f32.mrf.mxu0
  %v10682 = vadd.f32 %v10575, %v10681
  %v10683 = vpop.f32.mrf.mxu0
  %v10684 = vadd.f32 %v10577, %v10683
  %10685 = vmatmul.bf16.gmra.mxu0 %v10670
  %v10686 = vpop.f32.mrf.mxu0
  %v10687 = vadd.f32 %v10580, %v10686
  %v10688 = vpop.f32.mrf.mxu0
  %v10689 = vadd.f32 %v10582, %v10688
  %10690 = vdwg.mxu0
  %s10691 = scalar_lea.vmem %s5, 64
  %v10692 = vld [vmem:[%s10691] sm:$0xf]
  %v10693 = vld [vmem:[%s10691 + $0x4] sm:$0xf]
  %v10694 = vld [vmem:[%s10691 + $0x8] sm:$0xf]
  %v10695 = vld [vmem:[%s10691 + $0xc] sm:$0xf]
  %v10696 = vld [vmem:[%s10691 + $0x10] sm:$0xf]
  %v10697 = vld [vmem:[%s10691 + $0x14] sm:$0xf]
  %v10698 = vld [vmem:[%s10691 + $0x18] sm:$0xf]
  %v10699 = vld [vmem:[%s10691 + $0x1c] sm:$0xf]
  %v10700 = vrot.slane %v10437, 2
  %v10701 = vrot.slane %v10438, 1
  %v10702 = vsel %vm10470, %v10701, %v10700
  %v10703 = vsel %vm10473, %v10439, %v10702
  %v10704 = vrot.slane %v10440, 7
  %v10705 = vsel %vm10476, %v10704, %v10703
  %v10706 = vrot.slane %v10441, 6
  %v10707 = vsel %vm10479, %v10706, %v10705
  %v10708 = vrot.slane %v10442, 5
  %v10709 = vsel %vm10482, %v10708, %v10707
  %v10710 = vrot.slane %v10443, 4
  %v10711 = vsel %vm10485, %v10710, %v10709
  %v10712 = vrot.slane %v10444, 3
  %v10713 = vsel %vm10488, %v10712, %v10711
  %v10714 = vrot.slane %v10445, 2
  %v10715 = vrot.slane %v10446, 1
  %v10716 = vsel %vm10470, %v10715, %v10714
  %v10717 = vsel %vm10473, %v10447, %v10716
  %v10718 = vrot.slane %v10448, 7
  %v10719 = vsel %vm10476, %v10718, %v10717
  %v10720 = vrot.slane %v10449, 6
  %v10721 = vsel %vm10479, %v10720, %v10719
  %v10722 = vrot.slane %v10450, 5
  %v10723 = vsel %vm10482, %v10722, %v10721
  %v10724 = vrot.slane %v10451, 4
  %v10725 = vsel %vm10485, %v10724, %v10723
  %v10726 = vrot.slane %v10452, 3
  %v10727 = vsel %vm10488, %v10726, %v10725
  %v10728 = vrot.slane %v10453, 2
  %v10729 = vrot.slane %v10454, 1
  %v10730 = vsel %vm10470, %v10729, %v10728
  %v10731 = vsel %vm10473, %v10455, %v10730
  %v10732 = vrot.slane %v10456, 7
  %v10733 = vsel %vm10476, %v10732, %v10731
  %v10734 = vrot.slane %v10457, 6
  %v10735 = vsel %vm10479, %v10734, %v10733
  %v10736 = vrot.slane %v10458, 5
  %v10737 = vsel %vm10482, %v10736, %v10735
  %v10738 = vrot.slane %v10459, 4
  %v10739 = vsel %vm10485, %v10738, %v10737
  %v10740 = vrot.slane %v10460, 3
  %v10741 = vsel %vm10488, %v10740, %v10739
  %v10742 = vrot.slane %v10461, 2
  %v10743 = vrot.slane %v10462, 1
  %v10744 = vsel %vm10470, %v10743, %v10742
  %v10745 = vsel %vm10473, %v10463, %v10744
  %v10746 = vrot.slane %v10464, 7
  %v10747 = vsel %vm10476, %v10746, %v10745
  %v10748 = vrot.slane %v10465, 6
  %v10749 = vsel %vm10479, %v10748, %v10747
  %v10750 = vrot.slane %v10466, 5
  %v10751 = vsel %vm10482, %v10750, %v10749
  %v10752 = vrot.slane %v10467, 4
  %v10753 = vsel %vm10485, %v10752, %v10751
  %v10754 = vrot.slane %v10468, 3
  %v10755 = vsel %vm10488, %v10754, %v10753
  %v10756 = vpack.c.b16 %v10727, %v10713
  %v10757 = vpack.c.b16 %v10755, %v10741
  %v10766 = vunpack.c.l.b16 %v10692
  %v10767 = vunpack.c.l.b16 %v10693
  %v10768 = vunpack.c.l.b16 %v10694
  %v10769 = vunpack.c.l.b16 %v10695
  %v10770 = vunpack.c.l.b16 %v10696
  %v10771 = vunpack.c.l.b16 %v10697
  %v10772 = vunpack.c.l.b16 %v10698
  %v10773 = vunpack.c.l.b16 %v10699
  %v10774 = vpack.c.b16 %v10767, %v10766
  %v10775 = vpack.c.b16 %v10769, %v10768
  %v10776 = vpack.c.b16 %v10771, %v10770
  %v10777 = vpack.c.b16 %v10773, %v10772
  %v10783 = vsel %vm10558, %v10756, 0
  %v10786 = vsel %vm10558, %v10757, 0
  %10788 = vmatpush.bf16.msra.mxu0 0
  %10789 = vmatpush.bf16.msra.mxu0 0
  %10790 = vmatpush.bf16.msra.mxu0 0
  %10791 = vmatpush.bf16.msra.mxu0 0
  %10792 = vmatpush.bf16.msra.mxu0 %v10777
  %10793 = vmatpush.bf16.msra.mxu0 %v10776
  %10794 = vmatpush.bf16.msra.mxu0 %v10775
  %10795 = vmatpush.bf16.msra.mxu0 %v10774
  %10796 = vmatmul.bf16.gmra.mxu0 %v10783
  %v10797 = vpop.f32.mrf.mxu0
  %v10798 = vadd.f32 0.0, %v10797
  %v10799 = vpop.f32.mrf.mxu0
  %v10800 = vadd.f32 0.0, %v10799
  %10801 = vmatmul.bf16.gmra.mxu0 %v10786
  %v10802 = vpop.f32.mrf.mxu0
  %v10803 = vadd.f32 0.0, %v10802
  %v10804 = vpop.f32.mrf.mxu0
  %v10805 = vadd.f32 0.0, %v10804
  %10806 = vdwg.mxu0
  %v10807 = vadd.f32 %v10682, %v10798
  %v10808 = vadd.f32 %v10684, %v10800
  %v10809 = vadd.f32 %v10687, %v10803
  %v10810 = vadd.f32 %v10689, %v10805
  %s10811 = scalar_lea.vmem %s5, 96
  %v10812 = vld [vmem:[%s10811] sm:$0xf]
  %v10813 = vld [vmem:[%s10811 + $0x4] sm:$0xf]
  %v10814 = vld [vmem:[%s10811 + $0x8] sm:$0xf]
  %v10815 = vld [vmem:[%s10811 + $0xc] sm:$0xf]
  %v10816 = vld [vmem:[%s10811 + $0x10] sm:$0xf]
  %v10817 = vld [vmem:[%s10811 + $0x14] sm:$0xf]
  %v10818 = vld [vmem:[%s10811 + $0x18] sm:$0xf]
  %v10819 = vld [vmem:[%s10811 + $0x1c] sm:$0xf]
  %v10820 = vrot.slane %v10437, 3
  %v10821 = vrot.slane %v10438, 2
  %v10822 = vsel %vm10470, %v10821, %v10820
  %v10823 = vrot.slane %v10439, 1
  %v10824 = vsel %vm10473, %v10823, %v10822
  %v10825 = vsel %vm10476, %v10440, %v10824
  %v10826 = vrot.slane %v10441, 7
  %v10827 = vsel %vm10479, %v10826, %v10825
  %v10828 = vrot.slane %v10442, 6
  %v10829 = vsel %vm10482, %v10828, %v10827
  %v10830 = vrot.slane %v10443, 5
  %v10831 = vsel %vm10485, %v10830, %v10829
  %v10832 = vrot.slane %v10444, 4
  %v10833 = vsel %vm10488, %v10832, %v10831
  %v10834 = vrot.slane %v10445, 3
  %v10835 = vrot.slane %v10446, 2
  %v10836 = vsel %vm10470, %v10835, %v10834
  %v10837 = vrot.slane %v10447, 1
  %v10838 = vsel %vm10473, %v10837, %v10836
  %v10839 = vsel %vm10476, %v10448, %v10838
  %v10840 = vrot.slane %v10449, 7
  %v10841 = vsel %vm10479, %v10840, %v10839
  %v10842 = vrot.slane %v10450, 6
  %v10843 = vsel %vm10482, %v10842, %v10841
  %v10844 = vrot.slane %v10451, 5
  %v10845 = vsel %vm10485, %v10844, %v10843
  %v10846 = vrot.slane %v10452, 4
  %v10847 = vsel %vm10488, %v10846, %v10845
  %v10848 = vrot.slane %v10453, 3
  %v10849 = vrot.slane %v10454, 2
  %v10850 = vsel %vm10470, %v10849, %v10848
  %v10851 = vrot.slane %v10455, 1
  %v10852 = vsel %vm10473, %v10851, %v10850
  %v10853 = vsel %vm10476, %v10456, %v10852
  %v10854 = vrot.slane %v10457, 7
  %v10855 = vsel %vm10479, %v10854, %v10853
  %v10856 = vrot.slane %v10458, 6
  %v10857 = vsel %vm10482, %v10856, %v10855
  %v10858 = vrot.slane %v10459, 5
  %v10859 = vsel %vm10485, %v10858, %v10857
  %v10860 = vrot.slane %v10460, 4
  %v10861 = vsel %vm10488, %v10860, %v10859
  %v10862 = vrot.slane %v10461, 3
  %v10863 = vrot.slane %v10462, 2
  %v10864 = vsel %vm10470, %v10863, %v10862
  %v10865 = vrot.slane %v10463, 1
  %v10866 = vsel %vm10473, %v10865, %v10864
  %v10867 = vsel %vm10476, %v10464, %v10866
  %v10868 = vrot.slane %v10465, 7
  %v10869 = vsel %vm10479, %v10868, %v10867
  %v10870 = vrot.slane %v10466, 6
  %v10871 = vsel %vm10482, %v10870, %v10869
  %v10872 = vrot.slane %v10467, 5
  %v10873 = vsel %vm10485, %v10872, %v10871
  %v10874 = vrot.slane %v10468, 4
  %v10875 = vsel %vm10488, %v10874, %v10873
  %v10876 = vpack.c.b16 %v10847, %v10833
  %v10877 = vpack.c.b16 %v10875, %v10861
  %v10886 = vunpack.c.l.b16 %v10812
  %v10887 = vunpack.c.l.b16 %v10813
  %v10888 = vunpack.c.l.b16 %v10814
  %v10889 = vunpack.c.l.b16 %v10815
  %v10890 = vunpack.c.l.b16 %v10816
  %v10891 = vunpack.c.l.b16 %v10817
  %v10892 = vunpack.c.l.b16 %v10818
  %v10893 = vunpack.c.l.b16 %v10819
  %v10894 = vpack.c.b16 %v10887, %v10886
  %v10895 = vpack.c.b16 %v10889, %v10888
  %v10896 = vpack.c.b16 %v10891, %v10890
  %v10897 = vpack.c.b16 %v10893, %v10892
  %v10903 = vsel %vm10558, %v10876, 0
  %v10906 = vsel %vm10558, %v10877, 0
  %10908 = vmatpush.bf16.msra.mxu0 0
  %10909 = vmatpush.bf16.msra.mxu0 0
  %10910 = vmatpush.bf16.msra.mxu0 0
  %10911 = vmatpush.bf16.msra.mxu0 0
  %10912 = vmatpush.bf16.msra.mxu0 %v10897
  %10913 = vmatpush.bf16.msra.mxu0 %v10896
  %10914 = vmatpush.bf16.msra.mxu0 %v10895
  %10915 = vmatpush.bf16.msra.mxu0 %v10894
  %10916 = vmatmul.bf16.gmra.mxu0 %v10903
  %v10917 = vpop.f32.mrf.mxu0
  %v10918 = vadd.f32 0.0, %v10917
  %v10919 = vpop.f32.mrf.mxu0
  %v10920 = vadd.f32 0.0, %v10919
  %10921 = vmatmul.bf16.gmra.mxu0 %v10906
  %v10922 = vpop.f32.mrf.mxu0
  %v10923 = vadd.f32 0.0, %v10922
  %v10924 = vpop.f32.mrf.mxu0
  %v10925 = vadd.f32 0.0, %v10924
  %10926 = vdwg.mxu0
  %v10927 = vadd.f32 %v10807, %v10918
  %v10928 = vadd.f32 %v10808, %v10920
  %v10929 = vadd.f32 %v10809, %v10923
  %v10930 = vadd.f32 %v10810, %v10925
  %v10931 = vld [vmem:[%s6] sm:$0x1]
  %v10933 = vperm.slane %v10931, 0
  %v10935 = vadd.f32 %v10927, %v10933
  %v10936 = vadd.f32 %v10928, %v10933
  %v10937 = vadd.f32 %v10929, %v10933
  %v10938 = vadd.f32 %v10930, %v10933
  %v10939 = vmax.f32 %v10935, 0.0
  %v10940 = vmax.f32 %v10936, 0.0
  %v10941 = vmax.f32 %v10937, 0.0
  %v10942 = vmax.f32 %v10938, 0.0
  %v10943 = vpack.c.bf16 %v10940, %v10939
  %v10944 = vpack.c.bf16 %v10942, %v10941
  %v10945 = vld [vmem:[%s7] sm:$0xf]
  %v10946 = vld [vmem:[%s7 + $0x4] sm:$0xf]
  %v10947 = vld [vmem:[%s7 + $0x8] sm:$0xf]
  %v10948 = vld [vmem:[%s7 + $0xc] sm:$0xf]
  %v10949 = vld [vmem:[%s7 + $0x10] sm:$0xf]
  %v10950 = vld [vmem:[%s7 + $0x14] sm:$0xf]
  %v10951 = vld [vmem:[%s7 + $0x18] sm:$0xf]
  %v10952 = vld [vmem:[%s7 + $0x1c] sm:$0xf]
  %v10953 = vld [vmem:[%s7 + $0x20] sm:$0xf]
  %v10954 = vld [vmem:[%s7 + $0x24] sm:$0xf]
  %v10955 = vld [vmem:[%s7 + $0x28] sm:$0xf]
  %v10956 = vld [vmem:[%s7 + $0x2c] sm:$0xf]
  %v10957 = vld [vmem:[%s7 + $0x30] sm:$0xf]
  %v10958 = vld [vmem:[%s7 + $0x34] sm:$0xf]
  %v10959 = vld [vmem:[%s7 + $0x38] sm:$0xf]
  %v10960 = vld [vmem:[%s7 + $0x3c] sm:$0xf]
  %v10961 = vld [vmem:[%s8] sm:$0x1]
  %v10963 = vperm.slane %v10961, 0
  %v10981 = vunpack.c.l.b16 %v10945
  %v10982 = vunpack.c.l.b16 %v10946
  %v10983 = vunpack.c.l.b16 %v10947
  %v10984 = vunpack.c.l.b16 %v10948
  %v10985 = vunpack.c.l.b16 %v10949
  %v10986 = vunpack.c.l.b16 %v10950
  %v10987 = vunpack.c.l.b16 %v10951
  %v10988 = vunpack.c.l.b16 %v10952
  %v10989 = vunpack.c.l.b16 %v10953
  %v10990 = vunpack.c.l.b16 %v10954
  %v10991 = vunpack.c.l.b16 %v10955
  %v10992 = vunpack.c.l.b16 %v10956
  %v10993 = vunpack.c.l.b16 %v10957
  %v10994 = vunpack.c.l.b16 %v10958
  %v10995 = vunpack.c.l.b16 %v10959
  %v10996 = vunpack.c.l.b16 %v10960
  %v10997 = vpack.c.b16 %v10982, %v10981
  %v10998 = vpack.c.b16 %v10984, %v10983
  %v10999 = vpack.c.b16 %v10986, %v10985
  %v11000 = vpack.c.b16 %v10988, %v10987
  %v11001 = vpack.c.b16 %v10990, %v10989
  %v11002 = vpack.c.b16 %v10992, %v10991
  %v11003 = vpack.c.b16 %v10994, %v10993
  %v11004 = vpack.c.b16 %v10996, %v10995
  %11013 = vmatpush.bf16.msra.mxu0 %v11004
  %11014 = vmatpush.bf16.msra.mxu0 %v11003
  %11015 = vmatpush.bf16.msra.mxu0 %v11002
  %11016 = vmatpush.bf16.msra.mxu0 %v11001
  %11017 = vmatpush.bf16.msra.mxu0 %v11000
  %11018 = vmatpush.bf16.msra.mxu0 %v10999
  %11019 = vmatpush.bf16.msra.mxu0 %v10998
  %11020 = vmatpush.bf16.msra.mxu0 %v10997
  %11021 = vmatmul.bf16.gmra.mxu0 %v10943
  %v11022 = vpop.f32.mrf.mxu0
  %v11023 = vadd.f32 %v10963, %v11022
  %v11024 = vpop.f32.mrf.mxu0
  %v11025 = vadd.f32 %v10963, %v11024
  %11026 = vmatmul.bf16.gmra.mxu0 %v10944
  %v11027 = vpop.f32.mrf.mxu0
  %v11028 = vadd.f32 %v10963, %v11027
  %v11029 = vpop.f32.mrf.mxu0
  %v11030 = vadd.f32 %v10963, %v11029
  %11031 = vdwg.mxu0
  %v11032 = vmax.f32 %v11023, 0.0
  %v11033 = vmax.f32 %v11025, 0.0
  %v11034 = vmax.f32 %v11028, 0.0
  %v11035 = vmax.f32 %v11030, 0.0
  %v11036 = vpack.c.bf16 %v11033, %v11032
  %v11037 = vpack.c.bf16 %v11035, %v11034
  %v11038 = vld [vmem:[%s9] sm:$0xf]
  %v11039 = vld [vmem:[%s9 + $0x4] sm:$0xf]
  %v11040 = vld [vmem:[%s9 + $0x8] sm:$0xf]
  %v11041 = vld [vmem:[%s9 + $0xc] sm:$0xf]
  %v11042 = vld [vmem:[%s9 + $0x10] sm:$0xf]
  %v11043 = vld [vmem:[%s9 + $0x14] sm:$0xf]
  %v11044 = vld [vmem:[%s9 + $0x18] sm:$0xf]
  %v11045 = vld [vmem:[%s9 + $0x1c] sm:$0xf]
  %v11046 = vld [vmem:[%s9 + $0x20] sm:$0xf]
  %v11047 = vld [vmem:[%s9 + $0x24] sm:$0xf]
  %v11048 = vld [vmem:[%s9 + $0x28] sm:$0xf]
  %v11049 = vld [vmem:[%s9 + $0x2c] sm:$0xf]
  %v11050 = vld [vmem:[%s9 + $0x30] sm:$0xf]
  %v11051 = vld [vmem:[%s9 + $0x34] sm:$0xf]
  %v11052 = vld [vmem:[%s9 + $0x38] sm:$0xf]
  %v11053 = vld [vmem:[%s9 + $0x3c] sm:$0xf]
  %v11054 = vld [vmem:[%s10] sm:$0x1]
  %v11056 = vperm.slane %v11054, 0
  %v11074 = vunpack.c.l.b16 %v11038
  %v11075 = vunpack.c.l.b16 %v11039
  %v11076 = vunpack.c.l.b16 %v11040
  %v11077 = vunpack.c.l.b16 %v11041
  %v11078 = vunpack.c.l.b16 %v11042
  %v11079 = vunpack.c.l.b16 %v11043
  %v11080 = vunpack.c.l.b16 %v11044
  %v11081 = vunpack.c.l.b16 %v11045
  %v11082 = vunpack.c.l.b16 %v11046
  %v11083 = vunpack.c.l.b16 %v11047
  %v11084 = vunpack.c.l.b16 %v11048
  %v11085 = vunpack.c.l.b16 %v11049
  %v11086 = vunpack.c.l.b16 %v11050
  %v11087 = vunpack.c.l.b16 %v11051
  %v11088 = vunpack.c.l.b16 %v11052
  %v11089 = vunpack.c.l.b16 %v11053
  %v11090 = vpack.c.b16 %v11075, %v11074
  %v11091 = vpack.c.b16 %v11077, %v11076
  %v11092 = vpack.c.b16 %v11079, %v11078
  %v11093 = vpack.c.b16 %v11081, %v11080
  %v11094 = vpack.c.b16 %v11083, %v11082
  %v11095 = vpack.c.b16 %v11085, %v11084
  %v11096 = vpack.c.b16 %v11087, %v11086
  %v11097 = vpack.c.b16 %v11089, %v11088
  %11106 = vmatpush.bf16.msra.mxu0 %v11097
  %11107 = vmatpush.bf16.msra.mxu0 %v11096
  %11108 = vmatpush.bf16.msra.mxu0 %v11095
  %11109 = vmatpush.bf16.msra.mxu0 %v11094
  %11110 = vmatpush.bf16.msra.mxu0 %v11093
  %11111 = vmatpush.bf16.msra.mxu0 %v11092
  %11112 = vmatpush.bf16.msra.mxu0 %v11091
  %11113 = vmatpush.bf16.msra.mxu0 %v11090
  %11114 = vmatmul.bf16.gmra.mxu0 %v11036
  %v11115 = vpop.f32.mrf.mxu0
  %v11116 = vadd.f32 %v11056, %v11115
  %v11117 = vpop.f32.mrf.mxu0
  %v11118 = vadd.f32 %v11056, %v11117
  %11119 = vmatmul.bf16.gmra.mxu0 %v11037
  %v11120 = vpop.f32.mrf.mxu0
  %v11121 = vadd.f32 %v11056, %v11120
  %v11122 = vpop.f32.mrf.mxu0
  %v11123 = vadd.f32 %v11056, %v11122
  %11124 = vdwg.mxu0
  %11125 = vst [vmem:[%s11] sm:$0xff] %v11116
  %11126 = vst [vmem:[%s11 + $0x8] sm:$0xff] %v11118
  %11127 = vst [vmem:[%s11 + $0x10] sm:$0xff] %v11121
  %11128 = vst [vmem:[%s11 + $0x18] sm:$0xff] %v11123
  // Predicated region
  $region46: #{lenet_forward.1} parent=0 // pred_check
    _
  $region47: #{lenet_forward.1} parent=0 // pred_check_branch
    %11130 = sbr.rel (0) target = $region49
  $region48: #{lenet_forward.1} parent=0 // pred_region
    _
  $region49: #{lenet_forward.1} parent=0 // pred_fallthru
    _
  // Predicated region
  $region50: #{lenet_forward.1} parent=0 // pred_check
    _
  $region51: #{lenet_forward.1} parent=0 // pred_check_branch
    %11132 = sbr.rel (0) target = $region53
  $region52: #{lenet_forward.1} parent=0 // pred_region
    _
  $region53: #{lenet_forward.1} parent=0 // pred_fallthru
    _

</llo_original>
